<compile_context>
chip_gen: v6e
topology: v6e:2x2x1
jax: 0.10.0
libtpu: 0.0.40
codegen_flags: <defaults>
</compile_context>

<pallas_src>
import functools

import jax
import jax.numpy as jnp
from jax import lax
from jax.experimental import pallas as pl
from jax.experimental.pallas import tpu as pltpu

LANES = 128


def _round_up(x, m):
    return (x + m - 1) // m * m


# ---------------------------- Pallas kernels --------------------------------

def _matmul_bias_kernel(x_ref, w_ref, b_ref, o_ref, *, relu):
    acc = jnp.dot(x_ref[...], w_ref[...], preferred_element_type=jnp.float32)
    acc = acc + b_ref[...]
    if relu:
        acc = jnp.maximum(acc, 0.0)
    o_ref[...] = acc.astype(o_ref.dtype)


def matmul_bias(x, w, b, relu=False):
    """y = x @ w + b (optional ReLU).  K and N are zero-padded to multiples of
    128 so MXU feeds and output stores are lane-dense.  Returns the PADDED
    (M, Np) result; the caller keeps/slices the valid columns."""
    M, K = x.shape
    K2, N = w.shape
    assert K == K2
    Kp = _round_up(K, LANES)
    Np = _round_up(N, LANES)

    xp = jnp.pad(x, ((0, 0), (0, Kp - K))) if Kp != K else x
    wp = jnp.pad(w, ((0, Kp - K), (0, Np - N)))
    bp = jnp.pad(b, (0, Np - N)).reshape(1, Np)

    # 2-step parallel grid over rows when it divides cleanly: uses both
    # TensorCores on v7x; only ~0.35us extra on the single-core v5e/v6e.
    gm = 2 if (M % 2 == 0 and (M // 2) % 8 == 0) else 1
    tm = M // gm

    kernel = functools.partial(_matmul_bias_kernel, relu=relu)
    return pl.pallas_call(
        kernel,
        out_shape=jax.ShapeDtypeStruct((M, Np), jnp.float32),
        grid=(gm,),
        in_specs=[
            pl.BlockSpec((tm, Kp), lambda i: (i, 0)),
            pl.BlockSpec((Kp, Np), lambda i: (0, 0)),
            pl.BlockSpec((1, Np), lambda i: (0, 0)),
        ],
        out_specs=pl.BlockSpec((tm, Np), lambda i: (i, 0)),
        compiler_params=pltpu.CompilerParams(
            dimension_semantics=("parallel",)),
    )(xp, wp, bp)


def _fc_fused_kernel(x_ref, w1_ref, b1_ref, w2_ref, b2_ref, w3_ref, b3_ref,
                     o_ref):
    h = jnp.dot(x_ref[...], w1_ref[...], preferred_element_type=jnp.float32)
    h = jnp.maximum(h + b1_ref[...], 0.0)
    h = jnp.dot(h, w2_ref[...], preferred_element_type=jnp.float32)
    h = jnp.maximum(h + b2_ref[...], 0.0)
    h = jnp.dot(h, w3_ref[...], preferred_element_type=jnp.float32)
    o_ref[...] = (h + b3_ref[...]).astype(o_ref.dtype)


def fc_stack(x, p):
    """Fused Linear(1920,120)+ReLU -> Linear(120,84)+ReLU -> Linear(84,10) in
    a single pallas_call.  All weights (<1 MiB padded) live in VMEM at once;
    intermediates stay in registers/VMEM.  Lane-dense: every width is padded
    to 128 with zeros (exact: zero rows/cols contribute nothing, ReLU(0)=0)."""
    M, K = x.shape
    d1, d2, d3 = p["f1w"].shape[1], p["f2w"].shape[1], p["f3w"].shape[1]
    Kp = _round_up(K, LANES)
    D1, D2, D3 = (_round_up(d, LANES) for d in (d1, d2, d3))

    xp = jnp.pad(x, ((0, 0), (0, Kp - K))) if Kp != K else x
    w1 = jnp.pad(p["f1w"], ((0, Kp - K), (0, D1 - d1)))
    b1 = jnp.pad(p["f1b"], (0, D1 - d1)).reshape(1, D1)
    w2 = jnp.pad(p["f2w"], ((0, D1 - d1), (0, D2 - d2)))
    b2 = jnp.pad(p["f2b"], (0, D2 - d2)).reshape(1, D2)
    w3 = jnp.pad(p["f3w"], ((0, D2 - d2), (0, D3 - d3)))
    b3 = jnp.pad(p["f3b"], (0, D3 - d3)).reshape(1, D3)

    out = pl.pallas_call(
        _fc_fused_kernel,
        out_shape=jax.ShapeDtypeStruct((M, D3), jnp.float32),
        grid=(1,),
        in_specs=[
            pl.BlockSpec((M, Kp), lambda i: (0, 0)),
            pl.BlockSpec((Kp, D1), lambda i: (0, 0)),
            pl.BlockSpec((1, D1), lambda i: (0, 0)),
            pl.BlockSpec((D1, D2), lambda i: (0, 0)),
            pl.BlockSpec((1, D2), lambda i: (0, 0)),
            pl.BlockSpec((D2, D3), lambda i: (0, 0)),
            pl.BlockSpec((1, D3), lambda i: (0, 0)),
        ],
        out_specs=pl.BlockSpec((M, D3), lambda i: (0, 0)),
        compiler_params=pltpu.CompilerParams(
            dimension_semantics=("arbitrary",)),
    )(xp, w1, b1, w2, b2, w3, b3)
    return out[:, :d3]


def _maxpool_kernel(x_ref, o_ref, *, c):
    x = x_ref[...]                              # (tb, 2, wo, 2*c)
    v = jnp.maximum(x[:, 0], x[:, 1])           # vertical max   (tb, wo, 2*c)
    o_ref[...] = jnp.maximum(v[..., :c], v[..., c:])   # horizontal (lane-aligned)


def maxpool2x2(x_nhwc):
    """MaxPool2d(2, stride=2) as a single-pass Pallas kernel.  A free,
    contiguous reshape exposes the 2x2 window; the kernel reads the data ONCE
    and does the 4-way max on the VPU."""
    n, h, w, c = x_nhwc.shape
    assert c % LANES == 0 and h % 2 == 0 and w % 2 == 0
    ho, wo = h // 2, w // 2
    rows = n * ho
    xr = x_nhwc.reshape(rows, 2, wo, 2 * c)     # [row, dy, ow, dx*c + ch]

    gm = 2 if rows % 2 == 0 else 1              # 2-way parallel for v7x
    tb = rows // gm
    out = pl.pallas_call(
        functools.partial(_maxpool_kernel, c=c),
        out_shape=jax.ShapeDtypeStruct((rows, wo, c), jnp.float32),
        grid=(gm,),
        in_specs=[pl.BlockSpec((tb, 2, wo, 2 * c), lambda i: (i, 0, 0, 0))],
        out_specs=pl.BlockSpec((tb, wo, c), lambda i: (i, 0, 0)),
        compiler_params=pltpu.CompilerParams(
            dimension_semantics=("parallel",)),
    )(xr)
    return out.reshape(n, ho, wo, c)


# ------------------------ conv-as-matmul glue -------------------------------

def _im2col(x_nhwc, kh, kw, pad):
    if pad:
        x_nhwc = jnp.pad(x_nhwc, ((0, 0), (pad, pad), (pad, pad), (0, 0)))
    n, h, w, c = x_nhwc.shape
    ho, wo = h - kh + 1, w - kw + 1
    patches = [x_nhwc[:, i:i + ho, j:j + wo, :]
               for i in range(kh) for j in range(kw)]
    cols = jnp.stack(patches, axis=3)           # (n, ho, wo, kh*kw, c)
    return cols.reshape(n * ho * wo, kh * kw * c), (n, ho, wo)


def conv2d_relu(x_nhwc, w_oihw, b, pad):
    """Conv2d(stride=1) + ReLU via im2col + lane-dense fused matmul kernel.
    Returns NHWC output with the channel dim zero-padded to 128 (padded
    channels are exactly zero)."""
    cout, cin, kh, kw = w_oihw.shape
    assert cout <= LANES
    cols, (n, ho, wo) = _im2col(x_nhwc, kh, kw, pad)
    # PyTorch weight (Cout,Cin,KH,KW) -> (KH,KW,Cin,Cout) -> (KH*KW*Cin, Cout)
    wmat = jnp.transpose(w_oihw, (2, 3, 1, 0)).reshape(kh * kw * cin, cout)
    y = matmul_bias(cols, wmat, b, relu=True)   # (n*ho*wo, 128)
    return y.reshape(n, ho, wo, LANES), cout


# ------------------------------ PyTeen forward ------------------------------

def pyteen_forward(x_nchw, p):
    x = jnp.transpose(x_nchw, (0, 2, 3, 1))                  # NCHW -> NHWC
    x, c1 = conv2d_relu(x, p["c1w"], p["c1b"], pad=2)        # Conv2d(3,6,5,p=2)+ReLU
    x = maxpool2x2(x)                                        # MaxPool2d(2,2)
    x, c2 = conv2d_relu(x[..., :c1], p["c2w"], p["c2b"], pad=0)  # Conv2d(6,16,5)+ReLU
    x = maxpool2x2(x)                                        # MaxPool2d(2,2)
    n = x.shape[0]
    # PyTorch NCHW flatten order: keep the c2 valid channels, NHWC -> NCHW.
    x = jnp.transpose(x[..., :c2], (0, 3, 1, 2)).reshape(n, -1)   # (N, 1920)
    return fc_stack(x, p)                                    # fused FC chain -> (N, 10)


# ------------------------- pure-JAX reference -------------------------------

def reference_forward(x_nchw, p):
    x = jnp.transpose(x_nchw, (0, 2, 3, 1))

    def conv(x, w, b, pad):
        w_hwio = jnp.transpose(w, (2, 3, 1, 0))
        y = lax.conv_general_dilated(
            x, w_hwio, window_strides=(1, 1),
            padding=[(pad, pad), (pad, pad)],
            dimension_numbers=("NHWC", "HWIO", "NHWC"))
        return jnp.maximum(y + b, 0.0)

    def pool(x):
        n, h, w, c = x.shape
        return x.reshape(n, h // 2, 2, w // 2, 2, c).max(axis=(2, 4))

    x = pool(conv(x, p["c1w"], p["c1b"], 2))
    x = pool(conv(x, p["c2w"], p["c2b"], 0))
    n = x.shape[0]
    x = jnp.transpose(x, (0, 3, 1, 2)).reshape(n, -1)
    x = jnp.maximum(x @ p["f1w"] + p["f1b"], 0.0)
    x = jnp.maximum(x @ p["f2w"] + p["f2b"], 0.0)
    return x @ p["f3w"] + p["f3b"]


if __name__ == "__main__":
    key = jax.random.PRNGKey(0)
    keys = jax.random.split(key, 11)

    def init(k, shape, fan_in):
        return jax.random.normal(k, shape, jnp.float32) / jnp.sqrt(
            jnp.float32(fan_in))

    # Deterministic synthetic parameters (shapes from PyTeen.__init__).
    params = {
        "c1w": init(keys[0], (6, 3, 5, 5), 75),      # Conv2d(3, 6, 5)
        "c1b": init(keys[1], (6,), 75),
        "c2w": init(keys[2], (16, 6, 5, 5), 150),    # Conv2d(6, 16, 5)
        "c2b": init(keys[3], (16,), 150),
        "f1w": init(keys[4], (1920, 120), 1920),     # Linear(1920, 120)
        "f1b": init(keys[5], (120,), 1920),
        "f2w": init(keys[6], (120, 84), 120),        # Linear(120, 84)
        "f2b": init(keys[7], (84,), 120),
        "f3w": init(keys[8], (84, 10), 84),          # Linear(84, 10)
        "f3b": init(keys[9], (10,), 84),
    }

    # batch=2, channels=3, H=56, W=48: after conv/pool stack the flatten is
    # 16 * 12 * 10 = 1920, matching nn.Linear(1920, 120) in the module.
    x = jax.random.normal(keys[10], (2, 3, 56, 48), jnp.float32)

    fwd = jax.jit(pyteen_forward)
    out = jax.block_until_ready(fwd(x, params))
    ref = jax.block_until_ready(reference_forward(x, params))

    assert out.shape == (2, 10), out.shape
    assert jnp.allclose(out, ref, atol=1e-4, rtol=1e-4), float(
        jnp.max(jnp.abs(out - ref)))
    print("KERNEL_OK")
</pallas_src>

<mosaic_0001>
module attributes {stable_mosaic.version = 11 : i64} {
  func.func @_matmul_bias_kernel(%arg0: i32, %arg1: memref<2688x128xf32, #tpu.memory_space<vmem>>, %arg2: memref<128x128xf32, #tpu.memory_space<vmem>>, %arg3: memref<1x128xf32, #tpu.memory_space<vmem>>, %arg4: memref<2688x128xf32, #tpu.memory_space<vmem>>) attributes {dimension_semantics = [#tpu.dimension_semantics<parallel>], iteration_bounds = array<i64: 2>, scalar_prefetch = 0 : i64, scratch_operands = 0 : i64, tpu.core_type = #tpu.core_type<tc>, window_params = [{transform_indices = @transform_0, window_bounds = array<i64: 2688, 128>}, {pipeline_mode = #tpu.pipeline_mode<synchronous>, transform_indices = @transform_1, window_bounds = array<i64: 128, 128>}, {pipeline_mode = #tpu.pipeline_mode<synchronous>, transform_indices = @transform_2, window_bounds = array<i64: 1, 128>}, {transform_indices = @transform_3, window_bounds = array<i64: 2688, 128>}]} {
    %c0 = arith.constant 0 : index
    %c0_0 = arith.constant 0 : index
    %0 = vector.load %arg1[%c0, %c0_0] : memref<2688x128xf32, #tpu.memory_space<vmem>>, vector<2688x128xf32>
    %c0_1 = arith.constant 0 : index
    %c0_2 = arith.constant 0 : index
    %1 = vector.load %arg2[%c0_1, %c0_2] : memref<128x128xf32, #tpu.memory_space<vmem>>, vector<128x128xf32>
    %cst = arith.constant dense<0.000000e+00> : vector<2688x128xf32>
    %2 = tpu.matmul %0, %1, %cst {dimension_numbers = #tpu.dot_dimension_numbers<[1], [0], [0], [1], [0, 0, 1, 1], [], []>} : vector<2688x128xf32>, vector<128x128xf32>, vector<2688x128xf32> -> vector<2688x128xf32>
    %c0_3 = arith.constant 0 : index
    %c0_4 = arith.constant 0 : index
    %3 = vector.load %arg3[%c0_3, %c0_4] : memref<1x128xf32, #tpu.memory_space<vmem>>, vector<1x128xf32>
    %4 = vector.broadcast %3 : vector<1x128xf32> to vector<2688x128xf32>
    %5 = arith.addf %2, %4 : vector<2688x128xf32>
    %cst_5 = arith.constant 0.000000e+00 : f32
    %6 = vector.broadcast %cst_5 : f32 to vector<2688x128xf32>
    %7 = arith.maximumf %5, %6 : vector<2688x128xf32>
    %c0_6 = arith.constant 0 : index
    %c0_7 = arith.constant 0 : index
    %8 = vector.load %arg4[%c0_6, %c0_7] : memref<2688x128xf32, #tpu.memory_space<vmem>>, vector<2688x128xf32>
    tpu.vector_store %arg4[%c0_6, %c0_7], %7 {strides = array<i32>} : memref<2688x128xf32, #tpu.memory_space<vmem>>, vector<2688x128xf32>,
    return
  }
  func.func @transform_0(%arg0: i32) -> (i32, i32) {
    %c0_i32 = arith.constant 0 : i32
    %c0_i32_0 = arith.constant 0 : i32
    return %arg0, %c0_i32 : i32, i32
  }
  func.func @transform_1(%arg0: i32) -> (i32, i32) {
    %c0_i32 = arith.constant 0 : i32
    %c0_i32_0 = arith.constant 0 : i32
    %c0_i32_1 = arith.constant 0 : i32
    return %c0_i32, %c0_i32_0 : i32, i32
  }
  func.func @transform_2(%arg0: i32) -> (i32, i32) {
    %c0_i32 = arith.constant 0 : i32
    %c0_i32_0 = arith.constant 0 : i32
    %c0_i32_1 = arith.constant 0 : i32
    return %c0_i32, %c0_i32_0 : i32, i32
  }
  func.func @transform_3(%arg0: i32) -> (i32, i32) {
    %c0_i32 = arith.constant 0 : i32
    %c0_i32_0 = arith.constant 0 : i32
    return %arg0, %c0_i32 : i32, i32
  }
}

module attributes {stable_mosaic.version = 11 : i64} {
  func.func @_maxpool_kernel(%arg0: i32, %arg1: memref<28x2x24x256xf32, #tpu.memory_space<vmem>>, %arg2: memref<28x24x128xf32, #tpu.memory_space<vmem>>) attributes {dimension_semantics = [#tpu.dimension_semantics<parallel>], iteration_bounds = array<i64: 2>, scalar_prefetch = 0 : i64, scratch_operands = 0 : i64, tpu.core_type = #tpu.core_type<tc>, window_params = [{transform_indices = @transform_0, window_bounds = array<i64: 28, 2, 24, 256>}, {transform_indices = @transform_1, window_bounds = array<i64: 28, 24, 128>}]} {
    %c0 = arith.constant 0 : index
    %c0_0 = arith.constant 0 : index
    %c0_1 = arith.constant 0 : index
    %c0_2 = arith.constant 0 : index
    %0 = vector.load %arg1[%c0, %c0_0, %c0_1, %c0_2] : memref<28x2x24x256xf32, #tpu.memory_space<vmem>>, vector<28x2x24x256xf32>
    %1 = vector.extract_strided_slice %0 {offsets = [0, 0, 0, 0], sizes = [28, 1, 24, 256], strides = [1, 1, 1, 1]} : vector<28x2x24x256xf32> to vector<28x1x24x256xf32>
    %2 = vector.shape_cast %1 : vector<28x1x24x256xf32> to vector<28x24x256xf32>
    %3 = vector.extract_strided_slice %0 {offsets = [0, 1, 0, 0], sizes = [28, 1, 24, 256], strides = [1, 1, 1, 1]} : vector<28x2x24x256xf32> to vector<28x1x24x256xf32>
    %4 = vector.shape_cast %3 : vector<28x1x24x256xf32> to vector<28x24x256xf32>
    %5 = arith.maximumf %2, %4 : vector<28x24x256xf32>
    %6 = vector.extract_strided_slice %5 {offsets = [0, 0, 0], sizes = [28, 24, 128], strides = [1, 1, 1]} : vector<28x24x256xf32> to vector<28x24x128xf32>
    %7 = vector.extract_strided_slice %5 {offsets = [0, 0, 128], sizes = [28, 24, 128], strides = [1, 1, 1]} : vector<28x24x256xf32> to vector<28x24x128xf32>
    %8 = arith.maximumf %6, %7 : vector<28x24x128xf32>
    %c0_3 = arith.constant 0 : index
    %c0_4 = arith.constant 0 : index
    %c0_5 = arith.constant 0 : index
    %9 = vector.load %arg2[%c0_3, %c0_4, %c0_5] : memref<28x24x128xf32, #tpu.memory_space<vmem>>, vector<28x24x128xf32>
    tpu.vector_store %arg2[%c0_3, %c0_4, %c0_5], %8 {strides = array<i32>} : memref<28x24x128xf32, #tpu.memory_space<vmem>>, vector<28x24x128xf32>,
    return
  }
  func.func @transform_0(%arg0: i32) -> (i32, i32, i32, i32) {
    %c0_i32 = arith.constant 0 : i32
    %c0_i32_0 = arith.constant 0 : i32
    %c0_i32_1 = arith.constant 0 : i32
    %c0_i32_2 = arith.constant 0 : i32
    return %arg0, %c0_i32, %c0_i32_0, %c0_i32_1 : i32, i32, i32, i32
  }
  func.func @transform_1(%arg0: i32) -> (i32, i32, i32) {
    %c0_i32 = arith.constant 0 : i32
    %c0_i32_0 = arith.constant 0 : i32
    %c0_i32_1 = arith.constant 0 : i32
    return %arg0, %c0_i32, %c0_i32_0 : i32, i32, i32
  }
}

module attributes {stable_mosaic.version = 11 : i64} {
  func.func @_matmul_bias_kernel(%arg0: i32, %arg1: memref<480x256xf32, #tpu.memory_space<vmem>>, %arg2: memref<256x128xf32, #tpu.memory_space<vmem>>, %arg3: memref<1x128xf32, #tpu.memory_space<vmem>>, %arg4: memref<480x128xf32, #tpu.memory_space<vmem>>) attributes {dimension_semantics = [#tpu.dimension_semantics<parallel>], iteration_bounds = array<i64: 2>, scalar_prefetch = 0 : i64, scratch_operands = 0 : i64, tpu.core_type = #tpu.core_type<tc>, window_params = [{transform_indices = @transform_0, window_bounds = array<i64: 480, 256>}, {pipeline_mode = #tpu.pipeline_mode<synchronous>, transform_indices = @transform_1, window_bounds = array<i64: 256, 128>}, {pipeline_mode = #tpu.pipeline_mode<synchronous>, transform_indices = @transform_2, window_bounds = array<i64: 1, 128>}, {transform_indices = @transform_3, window_bounds = array<i64: 480, 128>}]} {
    %c0 = arith.constant 0 : index
    %c0_0 = arith.constant 0 : index
    %0 = vector.load %arg1[%c0, %c0_0] : memref<480x256xf32, #tpu.memory_space<vmem>>, vector<480x256xf32>
    %c0_1 = arith.constant 0 : index
    %c0_2 = arith.constant 0 : index
    %1 = vector.load %arg2[%c0_1, %c0_2] : memref<256x128xf32, #tpu.memory_space<vmem>>, vector<256x128xf32>
    %cst = arith.constant dense<0.000000e+00> : vector<480x128xf32>
    %2 = tpu.matmul %0, %1, %cst {dimension_numbers = #tpu.dot_dimension_numbers<[1], [0], [0], [1], [0, 0, 1, 1], [], []>} : vector<480x256xf32>, vector<256x128xf32>, vector<480x128xf32> -> vector<480x128xf32>
    %c0_3 = arith.constant 0 : index
    %c0_4 = arith.constant 0 : index
    %3 = vector.load %arg3[%c0_3, %c0_4] : memref<1x128xf32, #tpu.memory_space<vmem>>, vector<1x128xf32>
    %4 = vector.broadcast %3 : vector<1x128xf32> to vector<480x128xf32>
    %5 = arith.addf %2, %4 : vector<480x128xf32>
    %cst_5 = arith.constant 0.000000e+00 : f32
    %6 = vector.broadcast %cst_5 : f32 to vector<480x128xf32>
    %7 = arith.maximumf %5, %6 : vector<480x128xf32>
    %c0_6 = arith.constant 0 : index
    %c0_7 = arith.constant 0 : index
    %8 = vector.load %arg4[%c0_6, %c0_7] : memref<480x128xf32, #tpu.memory_space<vmem>>, vector<480x128xf32>
    tpu.vector_store %arg4[%c0_6, %c0_7], %7 {strides = array<i32>} : memref<480x128xf32, #tpu.memory_space<vmem>>, vector<480x128xf32>,
    return
  }
  func.func @transform_0(%arg0: i32) -> (i32, i32) {
    %c0_i32 = arith.constant 0 : i32
    %c0_i32_0 = arith.constant 0 : i32
    return %arg0, %c0_i32 : i32, i32
  }
  func.func @transform_1(%arg0: i32) -> (i32, i32) {
    %c0_i32 = arith.constant 0 : i32
    %c0_i32_0 = arith.constant 0 : i32
    %c0_i32_1 = arith.constant 0 : i32
    return %c0_i32, %c0_i32_0 : i32, i32
  }
  func.func @transform_2(%arg0: i32) -> (i32, i32) {
    %c0_i32 = arith.constant 0 : i32
    %c0_i32_0 = arith.constant 0 : i32
    %c0_i32_1 = arith.constant 0 : i32
    return %c0_i32, %c0_i32_0 : i32, i32
  }
  func.func @transform_3(%arg0: i32) -> (i32, i32) {
    %c0_i32 = arith.constant 0 : i32
    %c0_i32_0 = arith.constant 0 : i32
    return %arg0, %c0_i32 : i32, i32
  }
}

module attributes {stable_mosaic.version = 11 : i64} {
  func.func @_maxpool_kernel(%arg0: i32, %arg1: memref<12x2x10x256xf32, #tpu.memory_space<vmem>>, %arg2: memref<12x10x128xf32, #tpu.memory_space<vmem>>) attributes {dimension_semantics = [#tpu.dimension_semantics<parallel>], iteration_bounds = array<i64: 2>, scalar_prefetch = 0 : i64, scratch_operands = 0 : i64, tpu.core_type = #tpu.core_type<tc>, window_params = [{transform_indices = @transform_0, window_bounds = array<i64: 12, 2, 10, 256>}, {transform_indices = @transform_1, window_bounds = array<i64: 12, 10, 128>}]} {
    %c0 = arith.constant 0 : index
    %c0_0 = arith.constant 0 : index
    %c0_1 = arith.constant 0 : index
    %c0_2 = arith.constant 0 : index
    %0 = vector.load %arg1[%c0, %c0_0, %c0_1, %c0_2] : memref<12x2x10x256xf32, #tpu.memory_space<vmem>>, vector<12x2x10x256xf32>
    %1 = vector.extract_strided_slice %0 {offsets = [0, 0, 0, 0], sizes = [12, 1, 10, 256], strides = [1, 1, 1, 1]} : vector<12x2x10x256xf32> to vector<12x1x10x256xf32>
    %2 = vector.shape_cast %1 : vector<12x1x10x256xf32> to vector<12x10x256xf32>
    %3 = vector.extract_strided_slice %0 {offsets = [0, 1, 0, 0], sizes = [12, 1, 10, 256], strides = [1, 1, 1, 1]} : vector<12x2x10x256xf32> to vector<12x1x10x256xf32>
    %4 = vector.shape_cast %3 : vector<12x1x10x256xf32> to vector<12x10x256xf32>
    %5 = arith.maximumf %2, %4 : vector<12x10x256xf32>
    %6 = vector.extract_strided_slice %5 {offsets = [0, 0, 0], sizes = [12, 10, 128], strides = [1, 1, 1]} : vector<12x10x256xf32> to vector<12x10x128xf32>
    %7 = vector.extract_strided_slice %5 {offsets = [0, 0, 128], sizes = [12, 10, 128], strides = [1, 1, 1]} : vector<12x10x256xf32> to vector<12x10x128xf32>
    %8 = arith.maximumf %6, %7 : vector<12x10x128xf32>
    %c0_3 = arith.constant 0 : index
    %c0_4 = arith.constant 0 : index
    %c0_5 = arith.constant 0 : index
    %9 = vector.load %arg2[%c0_3, %c0_4, %c0_5] : memref<12x10x128xf32, #tpu.memory_space<vmem>>, vector<12x10x128xf32>
    tpu.vector_store %arg2[%c0_3, %c0_4, %c0_5], %8 {strides = array<i32>} : memref<12x10x128xf32, #tpu.memory_space<vmem>>, vector<12x10x128xf32>,
    return
  }
  func.func @transform_0(%arg0: i32) -> (i32, i32, i32, i32) {
    %c0_i32 = arith.constant 0 : i32
    %c0_i32_0 = arith.constant 0 : i32
    %c0_i32_1 = arith.constant 0 : i32
    %c0_i32_2 = arith.constant 0 : i32
    return %arg0, %c0_i32, %c0_i32_0, %c0_i32_1 : i32, i32, i32, i32
  }
  func.func @transform_1(%arg0: i32) -> (i32, i32, i32) {
    %c0_i32 = arith.constant 0 : i32
    %c0_i32_0 = arith.constant 0 : i32
    %c0_i32_1 = arith.constant 0 : i32
    return %arg0, %c0_i32, %c0_i32_0 : i32, i32, i32
  }
}

module attributes {stable_mosaic.version = 11 : i64} {
  func.func @_fc_fused_kernel(%arg0: i32, %arg1: memref<2x1920xf32, #tpu.memory_space<vmem>>, %arg2: memref<1920x128xf32, #tpu.memory_space<vmem>>, %arg3: memref<1x128xf32, #tpu.memory_space<vmem>>, %arg4: memref<128x128xf32, #tpu.memory_space<vmem>>, %arg5: memref<1x128xf32, #tpu.memory_space<vmem>>, %arg6: memref<128x128xf32, #tpu.memory_space<vmem>>, %arg7: memref<1x128xf32, #tpu.memory_space<vmem>>, %arg8: memref<2x128xf32, #tpu.memory_space<vmem>>) attributes {dimension_semantics = [#tpu.dimension_semantics<arbitrary>], iteration_bounds = array<i64: 1>, scalar_prefetch = 0 : i64, scratch_operands = 0 : i64, tpu.core_type = #tpu.core_type<tc>, window_params = [{pipeline_mode = #tpu.pipeline_mode<synchronous>, transform_indices = @transform_0, window_bounds = array<i64: 2, 1920>}, {pipeline_mode = #tpu.pipeline_mode<synchronous>, transform_indices = @transform_1, window_bounds = array<i64: 1920, 128>}, {pipeline_mode = #tpu.pipeline_mode<synchronous>, transform_indices = @transform_2, window_bounds = array<i64: 1, 128>}, {pipeline_mode = #tpu.pipeline_mode<synchronous>, transform_indices = @transform_3, window_bounds = array<i64: 128, 128>}, {pipeline_mode = #tpu.pipeline_mode<synchronous>, transform_indices = @transform_4, window_bounds = array<i64: 1, 128>}, {pipeline_mode = #tpu.pipeline_mode<synchronous>, transform_indices = @transform_5, window_bounds = array<i64: 128, 128>}, {pipeline_mode = #tpu.pipeline_mode<synchronous>, transform_indices = @transform_6, window_bounds = array<i64: 1, 128>}, {pipeline_mode = #tpu.pipeline_mode<synchronous>, transform_indices = @transform_7, window_bounds = array<i64: 2, 128>}]} {
    %c0 = arith.constant 0 : index
    %c0_0 = arith.constant 0 : index
    %0 = vector.load %arg1[%c0, %c0_0] : memref<2x1920xf32, #tpu.memory_space<vmem>>, vector<2x1920xf32>
    %c0_1 = arith.constant 0 : index
    %c0_2 = arith.constant 0 : index
    %1 = vector.load %arg2[%c0_1, %c0_2] : memref<1920x128xf32, #tpu.memory_space<vmem>>, vector<1920x128xf32>
    %cst = arith.constant dense<0.000000e+00> : vector<2x128xf32>
    %2 = tpu.matmul %0, %1, %cst {dimension_numbers = #tpu.dot_dimension_numbers<[1], [0], [0], [1], [0, 0, 1, 1], [], []>} : vector<2x1920xf32>, vector<1920x128xf32>, vector<2x128xf32> -> vector<2x128xf32>
    %c0_3 = arith.constant 0 : index
    %c0_4 = arith.constant 0 : index
    %3 = vector.load %arg3[%c0_3, %c0_4] : memref<1x128xf32, #tpu.memory_space<vmem>>, vector<1x128xf32>
    %4 = vector.broadcast %3 : vector<1x128xf32> to vector<2x128xf32>
    %5 = arith.addf %2, %4 : vector<2x128xf32>
    %cst_5 = arith.constant 0.000000e+00 : f32
    %6 = vector.broadcast %cst_5 : f32 to vector<2x128xf32>
    %7 = arith.maximumf %5, %6 : vector<2x128xf32>
    %c0_6 = arith.constant 0 : index
    %c0_7 = arith.constant 0 : index
    %8 = vector.load %arg4[%c0_6, %c0_7] : memref<128x128xf32, #tpu.memory_space<vmem>>, vector<128x128xf32>
    %cst_8 = arith.constant dense<0.000000e+00> : vector<2x128xf32>
    %9 = tpu.matmul %7, %8, %cst_8 {dimension_numbers = #tpu.dot_dimension_numbers<[1], [0], [0], [1], [0, 0, 1, 1], [], []>} : vector<2x128xf32>, vector<128x128xf32>, vector<2x128xf32> -> vector<2x128xf32>
    %c0_9 = arith.constant 0 : index
    %c0_10 = arith.constant 0 : index
    %10 = vector.load %arg5[%c0_9, %c0_10] : memref<1x128xf32, #tpu.memory_space<vmem>>, vector<1x128xf32>
    %11 = vector.broadcast %10 : vector<1x128xf32> to vector<2x128xf32>
    %12 = arith.addf %9, %11 : vector<2x128xf32>
    %cst_11 = arith.constant 0.000000e+00 : f32
    %13 = vector.broadcast %cst_11 : f32 to vector<2x128xf32>
    %14 = arith.maximumf %12, %13 : vector<2x128xf32>
    %c0_12 = arith.constant 0 : index
    %c0_13 = arith.constant 0 : index
    %15 = vector.load %arg6[%c0_12, %c0_13] : memref<128x128xf32, #tpu.memory_space<vmem>>, vector<128x128xf32>
    %cst_14 = arith.constant dense<0.000000e+00> : vector<2x128xf32>
    %16 = tpu.matmul %14, %15, %cst_14 {dimension_numbers = #tpu.dot_dimension_numbers<[1], [0], [0], [1], [0, 0, 1, 1], [], []>} : vector<2x128xf32>, vector<128x128xf32>, vector<2x128xf32> -> vector<2x128xf32>
    %c0_15 = arith.constant 0 : index
    %c0_16 = arith.constant 0 : index
    %17 = vector.load %arg7[%c0_15, %c0_16] : memref<1x128xf32, #tpu.memory_space<vmem>>, vector<1x128xf32>
    %18 = vector.broadcast %17 : vector<1x128xf32> to vector<2x128xf32>
    %19 = arith.addf %16, %18 : vector<2x128xf32>
    %c0_17 = arith.constant 0 : index
    %c0_18 = arith.constant 0 : index
    %20 = vector.load %arg8[%c0_17, %c0_18] : memref<2x128xf32, #tpu.memory_space<vmem>>, vector<2x128xf32>
    tpu.vector_store %arg8[%c0_17, %c0_18], %19 {strides = array<i32>} : memref<2x128xf32, #tpu.memory_space<vmem>>, vector<2x128xf32>,
    return
  }
  func.func @transform_0(%arg0: i32) -> (i32, i32) {
    %c0_i32 = arith.constant 0 : i32
    %c0_i32_0 = arith.constant 0 : i32
    %c0_i32_1 = arith.constant 0 : i32
    return %c0_i32, %c0_i32_0 : i32, i32
  }
  func.func @transform_1(%arg0: i32) -> (i32, i32) {
    %c0_i32 = arith.constant 0 : i32
    %c0_i32_0 = arith.constant 0 : i32
    %c0_i32_1 = arith.constant 0 : i32
    return %c0_i32, %c0_i32_0 : i32, i32
  }
  func.func @transform_2(%arg0: i32) -> (i32, i32) {
    %c0_i32 = arith.constant 0 : i32
    %c0_i32_0 = arith.constant 0 : i32
    %c0_i32_1 = arith.constant 0 : i32
    return %c0_i32, %c0_i32_0 : i32, i32
  }
  func.func @transform_3(%arg0: i32) -> (i32, i32) {
    %c0_i32 = arith.constant 0 : i32
    %c0_i32_0 = arith.constant 0 : i32
    %c0_i32_1 = arith.constant 0 : i32
    return %c0_i32, %c0_i32_0 : i32, i32
  }
  func.func @transform_4(%arg0: i32) -> (i32, i32) {
    %c0_i32 = arith.constant 0 : i32
    %c0_i32_0 = arith.constant 0 : i32
    %c0_i32_1 = arith.constant 0 : i32
    return %c0_i32, %c0_i32_0 : i32, i32
  }
  func.func @transform_5(%arg0: i32) -> (i32, i32) {
    %c0_i32 = arith.constant 0 : i32
    %c0_i32_0 = arith.constant 0 : i32
    %c0_i32_1 = arith.constant 0 : i32
    return %c0_i32, %c0_i32_0 : i32, i32
  }
  func.func @transform_6(%arg0: i32) -> (i32, i32) {
    %c0_i32 = arith.constant 0 : i32
    %c0_i32_0 = arith.constant 0 : i32
    %c0_i32_1 = arith.constant 0 : i32
    return %c0_i32, %c0_i32_0 : i32, i32
  }
  func.func @transform_7(%arg0: i32) -> (i32, i32) {
    %c0_i32 = arith.constant 0 : i32
    %c0_i32_0 = arith.constant 0 : i32
    %c0_i32_1 = arith.constant 0 : i32
    return %c0_i32, %c0_i32_0 : i32, i32
  }
}

</mosaic_0001>

<llo_original>
// kernel: pyteen_forward.5
$region0: #{pyteen_forward.5}
  #allocation0 [shape = 'u32[]', space=smem, size = 0x4, offset = 0x4, fixed_abs, tag = 'smem constant byte address 0x4 - core index']
  #allocation1 [shape = 'u32[144,128]{1,0:T(1,128)}', space=vmem, size = 0x12000, scoped, tag = 'internal scratch']
  %s0 = inlined_call_operand.vmem [shape: f32[5376,128], index: 0, kind: input, shape index: {}]
  %s1 = inlined_call_operand.vmem [shape: f32[128,128], index: 1, kind: input, shape index: {}]
  %s2 = inlined_call_operand.vmem [shape: f32[1,128], index: 2, kind: input, shape index: {}]
  %s3 = inlined_call_operand.vmem [shape: f32[5376,128], index: 3, kind: output, shape index: {}]
  %s4 = sld [smem:[#allocation0]]
  $region45: #{pyteen_forward.5} parent=0
    _
  %s6 = ssub.s32 1, %s4
  %s7 = scalar_select 0, %s6, %s4
  loop: start=0, step=1, limit=4
  $region2: #{pyteen_forward.5} parent=0 // loop_pre_header
    _
  $region3: #{pyteen_forward.5} parent=0 // loop_header
    %s9 = sphi 0, %s13
    %p10 = scmp.ge.s32.totalorder %s9, 4
    %s19 = sphi 0, %s21
    %s22 = sphi 0, %s19
    %s23 = sphi 0, %s22
    %s39 = sphi 0, %s23
    %s43 = sphi 0, %s43
    %s45 = sphi 0, %s43
    %s46 = sphi 0, %s45
    %s60 = sphi 0, %s46
    %s64 = sphi 0, %s64
    %s66 = sphi 0, %s64
    %s67 = sphi 0, %s66
    %s81 = sphi 0, %s67
    %s87 = sphi 0, %s89
    %s90 = sphi 0, %s87
    %s91 = sphi 0, %s90
    %s107 = sphi 0, %s91
  $region4: #{pyteen_forward.5} parent=0 // loop_header_branch
    %12 = sbr.rel (%p10) target = $region8
  $region5: #{pyteen_forward.5} parent=0 // loop_body
    %s14 = ssub.s32 %s9, 1
    %s15 = ssub.s32 %s9, 2
    %s16 = sadd.s32 %s9, 1
    %s17 = ssub.s32 %s9, %s16
    %p18 = scmp.eq.s32.totalorder %s17, 0
    %s20 = sadd.s32 %s19, 1
    %s21 = scalar_select %p18, %s19, %s20
    %p24 = pneg %p18
    %p25 = scmp.eq.s32.totalorder %s9, 1
    %p26 = por %p24, %p25
    %p27 = scmp.ne.s32.totalorder %s19, %s22
    %p28 = scmp.eq.s32.totalorder %s9, 0
    %p29 = por %p27, %p28
    %p30 = scmp.ne.s32.totalorder %s19, %s22
    %p31 = scmp.eq.s32.totalorder %s14, 1
    %p32 = por %p30, %p31
    %p33 = scmp.ne.s32.totalorder %s22, %s23
    %p34 = scmp.eq.s32.totalorder %s14, 0
    %p35 = por %p33, %p34
    %p36 = scmp.ne.s32.totalorder %s22, %s23
    %p37 = scmp.eq.s32.totalorder %s15, 1
    %p38 = por %p36, %p37
    %p40 = scmp.ne.s32.totalorder %s23, %s39
    %p41 = scmp.eq.s32.totalorder %s15, 0
    %p42 = por %p40, %p41
    %s44 = sadd.s32 %s43, 1
    %p47 = scmp.eq.s32.totalorder %s9, 1
    %p48 = scmp.ne.s32.totalorder %s43, %s45
    %p49 = scmp.eq.s32.totalorder %s9, 0
    %p50 = por %p48, %p49
    %p51 = scmp.ne.s32.totalorder %s43, %s45
    %p52 = scmp.eq.s32.totalorder %s14, 1
    %p53 = por %p51, %p52
    %p54 = scmp.ne.s32.totalorder %s45, %s46
    %p55 = scmp.eq.s32.totalorder %s14, 0
    %p56 = por %p54, %p55
    %p57 = scmp.ne.s32.totalorder %s45, %s46
    %p58 = scmp.eq.s32.totalorder %s15, 1
    %p59 = por %p57, %p58
    %p61 = scmp.ne.s32.totalorder %s46, %s60
    %p62 = scmp.eq.s32.totalorder %s15, 0
    %p63 = por %p61, %p62
    %s65 = sadd.s32 %s64, 1
    %p68 = scmp.eq.s32.totalorder %s9, 1
    %p69 = scmp.ne.s32.totalorder %s64, %s66
    %p70 = scmp.eq.s32.totalorder %s9, 0
    %p71 = por %p69, %p70
    %p72 = scmp.ne.s32.totalorder %s64, %s66
    %p73 = scmp.eq.s32.totalorder %s14, 1
    %p74 = por %p72, %p73
    %p75 = scmp.ne.s32.totalorder %s66, %s67
    %p76 = scmp.eq.s32.totalorder %s14, 0
    %p77 = por %p75, %p76
    %p78 = scmp.ne.s32.totalorder %s66, %s67
    %p79 = scmp.eq.s32.totalorder %s15, 1
    %p80 = por %p78, %p79
    %p82 = scmp.ne.s32.totalorder %s67, %s81
    %p83 = scmp.eq.s32.totalorder %s15, 0
    %p84 = por %p82, %p83
    %s85 = ssub.s32 %s9, %s16
    %p86 = scmp.eq.s32.totalorder %s85, 0
    %s88 = sadd.s32 %s87, 1
    %s89 = scalar_select %p86, %s87, %s88
    %p92 = pneg %p86
    %p93 = scmp.eq.s32.totalorder %s9, 1
    %p94 = por %p92, %p93
    %p95 = scmp.ne.s32.totalorder %s87, %s90
    %p96 = scmp.eq.s32.totalorder %s9, 0
    %p97 = por %p95, %p96
    %p98 = scmp.ne.s32.totalorder %s87, %s90
    %p99 = scmp.eq.s32.totalorder %s14, 1
    %p100 = por %p98, %p99
    %p101 = scmp.ne.s32.totalorder %s90, %s91
    %p102 = scmp.eq.s32.totalorder %s14, 0
    %p103 = por %p101, %p102
    %p104 = scmp.ne.s32.totalorder %s90, %s91
    %p105 = scmp.eq.s32.totalorder %s15, 1
    %p106 = por %p104, %p105
    %p108 = scmp.ne.s32.totalorder %s91, %s107
    %p109 = scmp.eq.s32.totalorder %s15, 0
    %p110 = por %p108, %p109
    %p111 = scmp.le.s32.totalorder 1, %s9
    %p112 = scmp.lt.s32.totalorder %s9, 3
    %p113 = pnand %p111, %p112
    %p114 = pneg %p113
    // Predicated region
    $region9: #{pyteen_forward.5} parent=5 // pred_check
      _
    $region10: #{pyteen_forward.5} parent=5 // pred_check_branch
      %116 = sbr.rel (%p113) target = $region12
    $region11: #{pyteen_forward.5} parent=5 // pred_region
      %s117 = ssub.s32 %s9, 1
      // Predicated region
      $region13: #{pyteen_forward.5} parent=11 // pred_check
        %p118 = pneg %p56
      $region14: #{pyteen_forward.5} parent=11 // pred_check_branch
        %120 = sbr.rel (%p118) target = $region16
      $region15: #{pyteen_forward.5} parent=11 // pred_region
        _
      $region16: #{pyteen_forward.5} parent=11 // pred_fallthru
        _
      // Predicated region
      $region17: #{pyteen_forward.5} parent=11 // pred_check
        %p121 = pneg %p77
      $region18: #{pyteen_forward.5} parent=11 // pred_check_branch
        %123 = sbr.rel (%p121) target = $region20
      $region19: #{pyteen_forward.5} parent=11 // pred_region
        _
      $region20: #{pyteen_forward.5} parent=11 // pred_fallthru
        _
    $region12: #{pyteen_forward.5} parent=5 // pred_fallthru
      _
    %p124 = scmp.lt.s32.totalorder %s9, 2
    // Predicated region
    $region21: #{pyteen_forward.5} parent=5 // pred_check
      %p125 = pneg %p124
    $region22: #{pyteen_forward.5} parent=5 // pred_check_branch
      %127 = sbr.rel (%p125) target = $region24
    $region23: #{pyteen_forward.5} parent=5 // pred_region
      // Predicated region
      $region25: #{pyteen_forward.5} parent=23 // pred_check
        %p128 = pneg %p29
      $region26: #{pyteen_forward.5} parent=23 // pred_check_branch
        %130 = sbr.rel (%p128) target = $region28
      $region27: #{pyteen_forward.5} parent=23 // pred_region
        %s131 = smul.u32 336, %s9
        %p132 = scmp.lt.s32.totalorder %s131, 671
        %s133 = scalar_select %p132, %s131, 671
        %s134 = smul.addr %s133, 8
        %s135 = scalar_lea.vmem %s0, %s134
        %s136 = smul.u32 336, %s9
      $region28: #{pyteen_forward.5} parent=23 // pred_fallthru
        _
    $region24: #{pyteen_forward.5} parent=5 // pred_fallthru
      _
    %p137 = scmp.le.s32.totalorder 1, %s9
    %p138 = scmp.lt.s32.totalorder %s9, 3
    %p139 = pnand %p137, %p138
    %p140 = pneg %p139
    // Predicated region
    $region29: #{pyteen_forward.5} parent=5 // pred_check
      _
    $region30: #{pyteen_forward.5} parent=5 // pred_check_branch
      %142 = sbr.rel (%p139) target = $region32
    $region31: #{pyteen_forward.5} parent=5 // pred_region
      %s143 = ssub.s32 %s9, 1
      %s144 = smul.u32 336, %s14
      %p145 = scmp.lt.s32.totalorder %s144, 671
      %s146 = scalar_select %p145, %s144, 671
      %s147 = smul.addr %s146, 8
      %s148 = scalar_lea.vmem %s0, %s147
      %p149 = pneg %p35
      %p150 = pneg %p32
      %p151 = pneg %p56
      %p152 = pneg %p53
      %p153 = pneg %p77
      %p154 = pneg %p74
      %p155 = pneg %p103
      %p156 = pneg %p100
      %s157 = smul.u32 336, %s14
      %p158 = scmp.lt.s32.totalorder %s157, 671
      %s159 = scalar_select %p158, %s157, 671
      %s160 = smul.addr %s159, 8
      %s161 = scalar_lea.vmem %s3, %s160
      %s162 = smul.u32 336, %s14
      %p163 = scmp.lt.s32.totalorder %s162, 671
      %s164 = scalar_select %p163, %s162, 671
      %s165 = smul.addr %s164, 8
      %s166 = scalar_lea.vmem %s0, %s165
      %s167 = smul.u32 336, %s14
      %s168 = smul.u32 336, %s14
      %p169 = scmp.lt.s32.totalorder %s168, 671
      %s170 = scalar_select %p169, %s168, 671
      %s171 = smul.addr %s170, 8
      %s172 = scalar_lea.vmem %s3, %s171
      %s173 = smul.u32 336, %s14
      %v174 = vld [vmem:[%s166] sm:$0xff]
      %v175 = vld [vmem:[%s166 + $0x8] sm:$0xff]
      %v176 = vld [vmem:[%s166 + $0x10] sm:$0xff]
      %v177 = vld [vmem:[%s166 + $0x18] sm:$0xff]
      %v178 = vld [vmem:[%s166 + $0x20] sm:$0xff]
      %v179 = vld [vmem:[%s166 + $0x28] sm:$0xff]
      %v180 = vld [vmem:[%s166 + $0x30] sm:$0xff]
      %v181 = vld [vmem:[%s166 + $0x38] sm:$0xff]
      %v182 = vld [vmem:[%s166 + $0x40] sm:$0xff]
      %v183 = vld [vmem:[%s166 + $0x48] sm:$0xff]
      %v184 = vld [vmem:[%s166 + $0x50] sm:$0xff]
      %v185 = vld [vmem:[%s166 + $0x58] sm:$0xff]
      %v186 = vld [vmem:[%s166 + $0x60] sm:$0xff]
      %v187 = vld [vmem:[%s166 + $0x68] sm:$0xff]
      %v188 = vld [vmem:[%s166 + $0x70] sm:$0xff]
      %v189 = vld [vmem:[%s166 + $0x78] sm:$0xff]
      %v190 = vld [vmem:[%s166 + $0x80] sm:$0xff]
      %v191 = vld [vmem:[%s166 + $0x88] sm:$0xff]
      %v192 = vld [vmem:[%s166 + $0x90] sm:$0xff]
      %v193 = vld [vmem:[%s166 + $0x98] sm:$0xff]
      %v194 = vld [vmem:[%s166 + $0xa0] sm:$0xff]
      %v195 = vld [vmem:[%s166 + $0xa8] sm:$0xff]
      %v196 = vld [vmem:[%s166 + $0xb0] sm:$0xff]
      %v197 = vld [vmem:[%s166 + $0xb8] sm:$0xff]
      %v198 = vld [vmem:[%s166 + $0xc0] sm:$0xff]
      %v199 = vld [vmem:[%s166 + $0xc8] sm:$0xff]
      %v200 = vld [vmem:[%s166 + $0xd0] sm:$0xff]
      %v201 = vld [vmem:[%s166 + $0xd8] sm:$0xff]
      %v202 = vld [vmem:[%s166 + $0xe0] sm:$0xff]
      %v203 = vld [vmem:[%s166 + $0xe8] sm:$0xff]
      %v204 = vld [vmem:[%s166 + $0xf0] sm:$0xff]
      %v205 = vld [vmem:[%s166 + $0xf8] sm:$0xff]
      %v206 = vld [vmem:[%s166 + $0x100] sm:$0xff]
      %v207 = vld [vmem:[%s166 + $0x108] sm:$0xff]
      %v208 = vld [vmem:[%s166 + $0x110] sm:$0xff]
      %v209 = vld [vmem:[%s166 + $0x118] sm:$0xff]
      %v210 = vld [vmem:[%s166 + $0x120] sm:$0xff]
      %v211 = vld [vmem:[%s166 + $0x128] sm:$0xff]
      %v212 = vld [vmem:[%s166 + $0x130] sm:$0xff]
      %v213 = vld [vmem:[%s166 + $0x138] sm:$0xff]
      %v214 = vld [vmem:[%s166 + $0x140] sm:$0xff]
      %v215 = vld [vmem:[%s166 + $0x148] sm:$0xff]
      %v216 = vld [vmem:[%s166 + $0x150] sm:$0xff]
      %v217 = vld [vmem:[%s166 + $0x158] sm:$0xff]
      %v218 = vld [vmem:[%s166 + $0x160] sm:$0xff]
      %v219 = vld [vmem:[%s166 + $0x168] sm:$0xff]
      %v220 = vld [vmem:[%s166 + $0x170] sm:$0xff]
      %v221 = vld [vmem:[%s166 + $0x178] sm:$0xff]
      %v222 = vld [vmem:[%s166 + $0x180] sm:$0xff]
      %v223 = vld [vmem:[%s166 + $0x188] sm:$0xff]
      %v224 = vld [vmem:[%s166 + $0x190] sm:$0xff]
      %v225 = vld [vmem:[%s166 + $0x198] sm:$0xff]
      %v226 = vld [vmem:[%s166 + $0x1a0] sm:$0xff]
      %v227 = vld [vmem:[%s166 + $0x1a8] sm:$0xff]
      %v228 = vld [vmem:[%s166 + $0x1b0] sm:$0xff]
      %v229 = vld [vmem:[%s166 + $0x1b8] sm:$0xff]
      %v230 = vld [vmem:[%s166 + $0x1c0] sm:$0xff]
      %v231 = vld [vmem:[%s166 + $0x1c8] sm:$0xff]
      %v232 = vld [vmem:[%s166 + $0x1d0] sm:$0xff]
      %v233 = vld [vmem:[%s166 + $0x1d8] sm:$0xff]
      %v234 = vld [vmem:[%s166 + $0x1e0] sm:$0xff]
      %v235 = vld [vmem:[%s166 + $0x1e8] sm:$0xff]
      %v236 = vld [vmem:[%s166 + $0x1f0] sm:$0xff]
      %v237 = vld [vmem:[%s166 + $0x1f8] sm:$0xff]
      %v238 = vld [vmem:[%s166 + $0x200] sm:$0xff]
      %v239 = vld [vmem:[%s166 + $0x208] sm:$0xff]
      %v240 = vld [vmem:[%s166 + $0x210] sm:$0xff]
      %v241 = vld [vmem:[%s166 + $0x218] sm:$0xff]
      %v242 = vld [vmem:[%s166 + $0x220] sm:$0xff]
      %v243 = vld [vmem:[%s166 + $0x228] sm:$0xff]
      %v244 = vld [vmem:[%s166 + $0x230] sm:$0xff]
      %v245 = vld [vmem:[%s166 + $0x238] sm:$0xff]
      %v246 = vld [vmem:[%s166 + $0x240] sm:$0xff]
      %v247 = vld [vmem:[%s166 + $0x248] sm:$0xff]
      %v248 = vld [vmem:[%s166 + $0x250] sm:$0xff]
      %v249 = vld [vmem:[%s166 + $0x258] sm:$0xff]
      %v250 = vld [vmem:[%s166 + $0x260] sm:$0xff]
      %v251 = vld [vmem:[%s166 + $0x268] sm:$0xff]
      %v252 = vld [vmem:[%s166 + $0x270] sm:$0xff]
      %v253 = vld [vmem:[%s166 + $0x278] sm:$0xff]
      %v254 = vld [vmem:[%s166 + $0x280] sm:$0xff]
      %v255 = vld [vmem:[%s166 + $0x288] sm:$0xff]
      %v256 = vld [vmem:[%s166 + $0x290] sm:$0xff]
      %v257 = vld [vmem:[%s166 + $0x298] sm:$0xff]
      %v258 = vld [vmem:[%s166 + $0x2a0] sm:$0xff]
      %v259 = vld [vmem:[%s166 + $0x2a8] sm:$0xff]
      %v260 = vld [vmem:[%s166 + $0x2b0] sm:$0xff]
      %v261 = vld [vmem:[%s166 + $0x2b8] sm:$0xff]
      %v262 = vld [vmem:[%s166 + $0x2c0] sm:$0xff]
      %v263 = vld [vmem:[%s166 + $0x2c8] sm:$0xff]
      %v264 = vld [vmem:[%s166 + $0x2d0] sm:$0xff]
      %v265 = vld [vmem:[%s166 + $0x2d8] sm:$0xff]
      %v266 = vld [vmem:[%s166 + $0x2e0] sm:$0xff]
      %v267 = vld [vmem:[%s166 + $0x2e8] sm:$0xff]
      %v268 = vld [vmem:[%s166 + $0x2f0] sm:$0xff]
      %v269 = vld [vmem:[%s166 + $0x2f8] sm:$0xff]
      %v270 = vld [vmem:[%s166 + $0x300] sm:$0xff]
      %v271 = vld [vmem:[%s166 + $0x308] sm:$0xff]
      %v272 = vld [vmem:[%s166 + $0x310] sm:$0xff]
      %v273 = vld [vmem:[%s166 + $0x318] sm:$0xff]
      %v274 = vld [vmem:[%s166 + $0x320] sm:$0xff]
      %v275 = vld [vmem:[%s166 + $0x328] sm:$0xff]
      %v276 = vld [vmem:[%s166 + $0x330] sm:$0xff]
      %v277 = vld [vmem:[%s166 + $0x338] sm:$0xff]
      %v278 = vld [vmem:[%s166 + $0x340] sm:$0xff]
      %v279 = vld [vmem:[%s166 + $0x348] sm:$0xff]
      %v280 = vld [vmem:[%s166 + $0x350] sm:$0xff]
      %v281 = vld [vmem:[%s166 + $0x358] sm:$0xff]
      %v282 = vld [vmem:[%s166 + $0x360] sm:$0xff]
      %v283 = vld [vmem:[%s166 + $0x368] sm:$0xff]
      %v284 = vld [vmem:[%s166 + $0x370] sm:$0xff]
      %v285 = vld [vmem:[%s166 + $0x378] sm:$0xff]
      %v286 = vld [vmem:[%s166 + $0x380] sm:$0xff]
      %v287 = vld [vmem:[%s166 + $0x388] sm:$0xff]
      %v288 = vld [vmem:[%s166 + $0x390] sm:$0xff]
      %v289 = vld [vmem:[%s166 + $0x398] sm:$0xff]
      %v290 = vld [vmem:[%s166 + $0x3a0] sm:$0xff]
      %v291 = vld [vmem:[%s166 + $0x3a8] sm:$0xff]
      %v292 = vld [vmem:[%s166 + $0x3b0] sm:$0xff]
      %v293 = vld [vmem:[%s166 + $0x3b8] sm:$0xff]
      %v294 = vld [vmem:[%s166 + $0x3c0] sm:$0xff]
      %v295 = vld [vmem:[%s166 + $0x3c8] sm:$0xff]
      %v296 = vld [vmem:[%s166 + $0x3d0] sm:$0xff]
      %v297 = vld [vmem:[%s166 + $0x3d8] sm:$0xff]
      %v298 = vld [vmem:[%s166 + $0x3e0] sm:$0xff]
      %v299 = vld [vmem:[%s166 + $0x3e8] sm:$0xff]
      %v300 = vld [vmem:[%s166 + $0x3f0] sm:$0xff]
      %v301 = vld [vmem:[%s166 + $0x3f8] sm:$0xff]
      %v302 = vld [vmem:[%s166 + $0x400] sm:$0xff]
      %v303 = vld [vmem:[%s166 + $0x408] sm:$0xff]
      %v304 = vld [vmem:[%s166 + $0x410] sm:$0xff]
      %v305 = vld [vmem:[%s166 + $0x418] sm:$0xff]
      %v306 = vld [vmem:[%s166 + $0x420] sm:$0xff]
      %v307 = vld [vmem:[%s166 + $0x428] sm:$0xff]
      %v308 = vld [vmem:[%s166 + $0x430] sm:$0xff]
      %v309 = vld [vmem:[%s166 + $0x438] sm:$0xff]
      %v310 = vld [vmem:[%s166 + $0x440] sm:$0xff]
      %v311 = vld [vmem:[%s166 + $0x448] sm:$0xff]
      %v312 = vld [vmem:[%s166 + $0x450] sm:$0xff]
      %v313 = vld [vmem:[%s166 + $0x458] sm:$0xff]
      %v314 = vld [vmem:[%s166 + $0x460] sm:$0xff]
      %v315 = vld [vmem:[%s166 + $0x468] sm:$0xff]
      %v316 = vld [vmem:[%s166 + $0x470] sm:$0xff]
      %v317 = vld [vmem:[%s166 + $0x478] sm:$0xff]
      %v318 = vld [vmem:[%s166 + $0x480] sm:$0xff]
      %v319 = vld [vmem:[%s166 + $0x488] sm:$0xff]
      %v320 = vld [vmem:[%s166 + $0x490] sm:$0xff]
      %v321 = vld [vmem:[%s166 + $0x498] sm:$0xff]
      %v322 = vld [vmem:[%s166 + $0x4a0] sm:$0xff]
      %v323 = vld [vmem:[%s166 + $0x4a8] sm:$0xff]
      %v324 = vld [vmem:[%s166 + $0x4b0] sm:$0xff]
      %v325 = vld [vmem:[%s166 + $0x4b8] sm:$0xff]
      %v326 = vld [vmem:[%s166 + $0x4c0] sm:$0xff]
      %v327 = vld [vmem:[%s166 + $0x4c8] sm:$0xff]
      %v328 = vld [vmem:[%s166 + $0x4d0] sm:$0xff]
      %v329 = vld [vmem:[%s166 + $0x4d8] sm:$0xff]
      %v330 = vld [vmem:[%s166 + $0x4e0] sm:$0xff]
      %v331 = vld [vmem:[%s166 + $0x4e8] sm:$0xff]
      %v332 = vld [vmem:[%s166 + $0x4f0] sm:$0xff]
      %v333 = vld [vmem:[%s166 + $0x4f8] sm:$0xff]
      %v334 = vld [vmem:[%s166 + $0x500] sm:$0xff]
      %v335 = vld [vmem:[%s166 + $0x508] sm:$0xff]
      %v336 = vld [vmem:[%s166 + $0x510] sm:$0xff]
      %v337 = vld [vmem:[%s166 + $0x518] sm:$0xff]
      %v338 = vld [vmem:[%s166 + $0x520] sm:$0xff]
      %v339 = vld [vmem:[%s166 + $0x528] sm:$0xff]
      %v340 = vld [vmem:[%s166 + $0x530] sm:$0xff]
      %v341 = vld [vmem:[%s166 + $0x538] sm:$0xff]
      %v342 = vld [vmem:[%s166 + $0x540] sm:$0xff]
      %v343 = vld [vmem:[%s166 + $0x548] sm:$0xff]
      %v344 = vld [vmem:[%s166 + $0x550] sm:$0xff]
      %v345 = vld [vmem:[%s166 + $0x558] sm:$0xff]
      %v346 = vld [vmem:[%s166 + $0x560] sm:$0xff]
      %v347 = vld [vmem:[%s166 + $0x568] sm:$0xff]
      %v348 = vld [vmem:[%s166 + $0x570] sm:$0xff]
      %v349 = vld [vmem:[%s166 + $0x578] sm:$0xff]
      %v350 = vld [vmem:[%s166 + $0x580] sm:$0xff]
      %v351 = vld [vmem:[%s166 + $0x588] sm:$0xff]
      %v352 = vld [vmem:[%s166 + $0x590] sm:$0xff]
      %v353 = vld [vmem:[%s166 + $0x598] sm:$0xff]
      %v354 = vld [vmem:[%s166 + $0x5a0] sm:$0xff]
      %v355 = vld [vmem:[%s166 + $0x5a8] sm:$0xff]
      %v356 = vld [vmem:[%s166 + $0x5b0] sm:$0xff]
      %v357 = vld [vmem:[%s166 + $0x5b8] sm:$0xff]
      %v358 = vld [vmem:[%s166 + $0x5c0] sm:$0xff]
      %v359 = vld [vmem:[%s166 + $0x5c8] sm:$0xff]
      %v360 = vld [vmem:[%s166 + $0x5d0] sm:$0xff]
      %v361 = vld [vmem:[%s166 + $0x5d8] sm:$0xff]
      %v362 = vld [vmem:[%s166 + $0x5e0] sm:$0xff]
      %v363 = vld [vmem:[%s166 + $0x5e8] sm:$0xff]
      %v364 = vld [vmem:[%s166 + $0x5f0] sm:$0xff]
      %v365 = vld [vmem:[%s166 + $0x5f8] sm:$0xff]
      %v366 = vld [vmem:[%s166 + $0x600] sm:$0xff]
      %v367 = vld [vmem:[%s166 + $0x608] sm:$0xff]
      %v368 = vld [vmem:[%s166 + $0x610] sm:$0xff]
      %v369 = vld [vmem:[%s166 + $0x618] sm:$0xff]
      %v370 = vld [vmem:[%s166 + $0x620] sm:$0xff]
      %v371 = vld [vmem:[%s166 + $0x628] sm:$0xff]
      %v372 = vld [vmem:[%s166 + $0x630] sm:$0xff]
      %v373 = vld [vmem:[%s166 + $0x638] sm:$0xff]
      %v374 = vld [vmem:[%s166 + $0x640] sm:$0xff]
      %v375 = vld [vmem:[%s166 + $0x648] sm:$0xff]
      %v376 = vld [vmem:[%s166 + $0x650] sm:$0xff]
      %v377 = vld [vmem:[%s166 + $0x658] sm:$0xff]
      %v378 = vld [vmem:[%s166 + $0x660] sm:$0xff]
      %v379 = vld [vmem:[%s166 + $0x668] sm:$0xff]
      %v380 = vld [vmem:[%s166 + $0x670] sm:$0xff]
      %v381 = vld [vmem:[%s166 + $0x678] sm:$0xff]
      %v382 = vld [vmem:[%s166 + $0x680] sm:$0xff]
      %v383 = vld [vmem:[%s166 + $0x688] sm:$0xff]
      %v384 = vld [vmem:[%s166 + $0x690] sm:$0xff]
      %v385 = vld [vmem:[%s166 + $0x698] sm:$0xff]
      %v386 = vld [vmem:[%s166 + $0x6a0] sm:$0xff]
      %v387 = vld [vmem:[%s166 + $0x6a8] sm:$0xff]
      %v388 = vld [vmem:[%s166 + $0x6b0] sm:$0xff]
      %v389 = vld [vmem:[%s166 + $0x6b8] sm:$0xff]
      %v390 = vld [vmem:[%s166 + $0x6c0] sm:$0xff]
      %v391 = vld [vmem:[%s166 + $0x6c8] sm:$0xff]
      %v392 = vld [vmem:[%s166 + $0x6d0] sm:$0xff]
      %v393 = vld [vmem:[%s166 + $0x6d8] sm:$0xff]
      %v394 = vld [vmem:[%s166 + $0x6e0] sm:$0xff]
      %v395 = vld [vmem:[%s166 + $0x6e8] sm:$0xff]
      %v396 = vld [vmem:[%s166 + $0x6f0] sm:$0xff]
      %v397 = vld [vmem:[%s166 + $0x6f8] sm:$0xff]
      %v398 = vld [vmem:[%s166 + $0x700] sm:$0xff]
      %v399 = vld [vmem:[%s166 + $0x708] sm:$0xff]
      %v400 = vld [vmem:[%s166 + $0x710] sm:$0xff]
      %v401 = vld [vmem:[%s166 + $0x718] sm:$0xff]
      %v402 = vld [vmem:[%s166 + $0x720] sm:$0xff]
      %v403 = vld [vmem:[%s166 + $0x728] sm:$0xff]
      %v404 = vld [vmem:[%s166 + $0x730] sm:$0xff]
      %v405 = vld [vmem:[%s166 + $0x738] sm:$0xff]
      %v406 = vld [vmem:[%s166 + $0x740] sm:$0xff]
      %v407 = vld [vmem:[%s166 + $0x748] sm:$0xff]
      %v408 = vld [vmem:[%s166 + $0x750] sm:$0xff]
      %v409 = vld [vmem:[%s166 + $0x758] sm:$0xff]
      %v410 = vld [vmem:[%s166 + $0x760] sm:$0xff]
      %v411 = vld [vmem:[%s166 + $0x768] sm:$0xff]
      %v412 = vld [vmem:[%s166 + $0x770] sm:$0xff]
      %v413 = vld [vmem:[%s166 + $0x778] sm:$0xff]
      %v414 = vld [vmem:[%s166 + $0x780] sm:$0xff]
      %v415 = vld [vmem:[%s166 + $0x788] sm:$0xff]
      %v416 = vld [vmem:[%s166 + $0x790] sm:$0xff]
      %v417 = vld [vmem:[%s166 + $0x798] sm:$0xff]
      %v418 = vld [vmem:[%s166 + $0x7a0] sm:$0xff]
      %v419 = vld [vmem:[%s166 + $0x7a8] sm:$0xff]
      %v420 = vld [vmem:[%s166 + $0x7b0] sm:$0xff]
      %v421 = vld [vmem:[%s166 + $0x7b8] sm:$0xff]
      %v422 = vld [vmem:[%s166 + $0x7c0] sm:$0xff]
      %v423 = vld [vmem:[%s166 + $0x7c8] sm:$0xff]
      %v424 = vld [vmem:[%s166 + $0x7d0] sm:$0xff]
      %v425 = vld [vmem:[%s166 + $0x7d8] sm:$0xff]
      %v426 = vld [vmem:[%s166 + $0x7e0] sm:$0xff]
      %v427 = vld [vmem:[%s166 + $0x7e8] sm:$0xff]
      %v428 = vld [vmem:[%s166 + $0x7f0] sm:$0xff]
      %v429 = vld [vmem:[%s166 + $0x7f8] sm:$0xff]
      %v430 = vld [vmem:[%s166 + $0x800] sm:$0xff]
      %v431 = vld [vmem:[%s166 + $0x808] sm:$0xff]
      %v432 = vld [vmem:[%s166 + $0x810] sm:$0xff]
      %v433 = vld [vmem:[%s166 + $0x818] sm:$0xff]
      %v434 = vld [vmem:[%s166 + $0x820] sm:$0xff]
      %v435 = vld [vmem:[%s166 + $0x828] sm:$0xff]
      %v436 = vld [vmem:[%s166 + $0x830] sm:$0xff]
      %v437 = vld [vmem:[%s166 + $0x838] sm:$0xff]
      %v438 = vld [vmem:[%s166 + $0x840] sm:$0xff]
      %v439 = vld [vmem:[%s166 + $0x848] sm:$0xff]
      %v440 = vld [vmem:[%s166 + $0x850] sm:$0xff]
      %v441 = vld [vmem:[%s166 + $0x858] sm:$0xff]
      %v442 = vld [vmem:[%s166 + $0x860] sm:$0xff]
      %v443 = vld [vmem:[%s166 + $0x868] sm:$0xff]
      %v444 = vld [vmem:[%s166 + $0x870] sm:$0xff]
      %v445 = vld [vmem:[%s166 + $0x878] sm:$0xff]
      %v446 = vld [vmem:[%s166 + $0x880] sm:$0xff]
      %v447 = vld [vmem:[%s166 + $0x888] sm:$0xff]
      %v448 = vld [vmem:[%s166 + $0x890] sm:$0xff]
      %v449 = vld [vmem:[%s166 + $0x898] sm:$0xff]
      %v450 = vld [vmem:[%s166 + $0x8a0] sm:$0xff]
      %v451 = vld [vmem:[%s166 + $0x8a8] sm:$0xff]
      %v452 = vld [vmem:[%s166 + $0x8b0] sm:$0xff]
      %v453 = vld [vmem:[%s166 + $0x8b8] sm:$0xff]
      %v454 = vld [vmem:[%s166 + $0x8c0] sm:$0xff]
      %v455 = vld [vmem:[%s166 + $0x8c8] sm:$0xff]
      %v456 = vld [vmem:[%s166 + $0x8d0] sm:$0xff]
      %v457 = vld [vmem:[%s166 + $0x8d8] sm:$0xff]
      %v458 = vld [vmem:[%s166 + $0x8e0] sm:$0xff]
      %v459 = vld [vmem:[%s166 + $0x8e8] sm:$0xff]
      %v460 = vld [vmem:[%s166 + $0x8f0] sm:$0xff]
      %v461 = vld [vmem:[%s166 + $0x8f8] sm:$0xff]
      %v462 = vld [vmem:[%s166 + $0x900] sm:$0xff]
      %v463 = vld [vmem:[%s166 + $0x908] sm:$0xff]
      %v464 = vld [vmem:[%s166 + $0x910] sm:$0xff]
      %v465 = vld [vmem:[%s166 + $0x918] sm:$0xff]
      %v466 = vld [vmem:[%s166 + $0x920] sm:$0xff]
      %v467 = vld [vmem:[%s166 + $0x928] sm:$0xff]
      %v468 = vld [vmem:[%s166 + $0x930] sm:$0xff]
      %v469 = vld [vmem:[%s166 + $0x938] sm:$0xff]
      %v470 = vld [vmem:[%s166 + $0x940] sm:$0xff]
      %v471 = vld [vmem:[%s166 + $0x948] sm:$0xff]
      %v472 = vld [vmem:[%s166 + $0x950] sm:$0xff]
      %v473 = vld [vmem:[%s166 + $0x958] sm:$0xff]
      %v474 = vld [vmem:[%s166 + $0x960] sm:$0xff]
      %v475 = vld [vmem:[%s166 + $0x968] sm:$0xff]
      %v476 = vld [vmem:[%s166 + $0x970] sm:$0xff]
      %v477 = vld [vmem:[%s166 + $0x978] sm:$0xff]
      %v478 = vld [vmem:[%s166 + $0x980] sm:$0xff]
      %v479 = vld [vmem:[%s166 + $0x988] sm:$0xff]
      %v480 = vld [vmem:[%s166 + $0x990] sm:$0xff]
      %v481 = vld [vmem:[%s166 + $0x998] sm:$0xff]
      %v482 = vld [vmem:[%s166 + $0x9a0] sm:$0xff]
      %v483 = vld [vmem:[%s166 + $0x9a8] sm:$0xff]
      %v484 = vld [vmem:[%s166 + $0x9b0] sm:$0xff]
      %v485 = vld [vmem:[%s166 + $0x9b8] sm:$0xff]
      %v486 = vld [vmem:[%s166 + $0x9c0] sm:$0xff]
      %v487 = vld [vmem:[%s166 + $0x9c8] sm:$0xff]
      %v488 = vld [vmem:[%s166 + $0x9d0] sm:$0xff]
      %v489 = vld [vmem:[%s166 + $0x9d8] sm:$0xff]
      %v490 = vld [vmem:[%s166 + $0x9e0] sm:$0xff]
      %v491 = vld [vmem:[%s166 + $0x9e8] sm:$0xff]
      %v492 = vld [vmem:[%s166 + $0x9f0] sm:$0xff]
      %v493 = vld [vmem:[%s166 + $0x9f8] sm:$0xff]
      %v494 = vld [vmem:[%s166 + $0xa00] sm:$0xff]
      %v495 = vld [vmem:[%s166 + $0xa08] sm:$0xff]
      %v496 = vld [vmem:[%s166 + $0xa10] sm:$0xff]
      %v497 = vld [vmem:[%s166 + $0xa18] sm:$0xff]
      %v498 = vld [vmem:[%s166 + $0xa20] sm:$0xff]
      %v499 = vld [vmem:[%s166 + $0xa28] sm:$0xff]
      %v500 = vld [vmem:[%s166 + $0xa30] sm:$0xff]
      %v501 = vld [vmem:[%s166 + $0xa38] sm:$0xff]
      %v502 = vld [vmem:[%s166 + $0xa40] sm:$0xff]
      %v503 = vld [vmem:[%s166 + $0xa48] sm:$0xff]
      %v504 = vld [vmem:[%s166 + $0xa50] sm:$0xff]
      %v505 = vld [vmem:[%s166 + $0xa58] sm:$0xff]
      %v506 = vld [vmem:[%s166 + $0xa60] sm:$0xff]
      %v507 = vld [vmem:[%s166 + $0xa68] sm:$0xff]
      %v508 = vld [vmem:[%s166 + $0xa70] sm:$0xff]
      %v509 = vld [vmem:[%s166 + $0xa78] sm:$0xff]
      %v510 = vld [vmem:[%s1] sm:$0xff]
      %v511 = vld [vmem:[%s1 + $0x8] sm:$0xff]
      %v512 = vld [vmem:[%s1 + $0x10] sm:$0xff]
      %v513 = vld [vmem:[%s1 + $0x18] sm:$0xff]
      %v514 = vld [vmem:[%s1 + $0x20] sm:$0xff]
      %v515 = vld [vmem:[%s1 + $0x28] sm:$0xff]
      %v516 = vld [vmem:[%s1 + $0x30] sm:$0xff]
      %v517 = vld [vmem:[%s1 + $0x38] sm:$0xff]
      %v518 = vld [vmem:[%s1 + $0x40] sm:$0xff]
      %v519 = vld [vmem:[%s1 + $0x48] sm:$0xff]
      %v520 = vld [vmem:[%s1 + $0x50] sm:$0xff]
      %v521 = vld [vmem:[%s1 + $0x58] sm:$0xff]
      %v522 = vld [vmem:[%s1 + $0x60] sm:$0xff]
      %v523 = vld [vmem:[%s1 + $0x68] sm:$0xff]
      %v524 = vld [vmem:[%s1 + $0x70] sm:$0xff]
      %v525 = vld [vmem:[%s1 + $0x78] sm:$0xff]
      %v526 = vld [vmem:[%s2] sm:$0x1]
      %v528 = vlaneseq
      %v529 = vshrl.u32 %v528, 7
      %v530 = vsub.s32 0, %v529
      %v531 = vrot.slane %v526, %v530
      %533 = vmatprep.subr.mxu0 0.0
      %534 = vmatpush1.msra.mxu0 %v525
      %535 = vmatprep.subr.mxu0 0.0
      %536 = vmatpush1.msra.mxu0 %v524
      %537 = vmatprep.subr.mxu0 0.0
      %538 = vmatpush1.msra.mxu0 %v523
      %539 = vmatprep.subr.mxu0 0.0
      %540 = vmatpush1.msra.mxu0 %v522
      %541 = vmatprep.subr.mxu0 0.0
      %542 = vmatpush1.msra.mxu0 %v521
      %543 = vmatprep.subr.mxu0 0.0
      %544 = vmatpush1.msra.mxu0 %v520
      %545 = vmatprep.subr.mxu0 0.0
      %546 = vmatpush1.msra.mxu0 %v519
      %547 = vmatprep.subr.mxu0 0.0
      %548 = vmatpush1.msra.mxu0 %v518
      %549 = vmatprep.subr.mxu0 0.0
      %550 = vmatpush1.msra.mxu0 %v517
      %551 = vmatprep.subr.mxu0 0.0
      %552 = vmatpush1.msra.mxu0 %v516
      %553 = vmatprep.subr.mxu0 0.0
      %554 = vmatpush1.msra.mxu0 %v515
      %555 = vmatprep.subr.mxu0 0.0
      %556 = vmatpush1.msra.mxu0 %v514
      %557 = vmatprep.subr.mxu0 0.0
      %558 = vmatpush1.msra.mxu0 %v513
      %559 = vmatprep.subr.mxu0 0.0
      %560 = vmatpush1.msra.mxu0 %v512
      %561 = vmatprep.subr.mxu0 0.0
      %562 = vmatpush1.msra.mxu0 %v511
      %563 = vmatprep.subr.mxu0 0.0
      %564 = vmatpush1.msra.mxu0 %v510
      %565 = vmatprep.subr.mxu0 0.0
      %566 = vmatpush2.msra.mxu0 0.0
      %567 = vmatprep.subr.mxu0 0.0
      %568 = vmatpush2.msra.mxu0 0.0
      %569 = vmatprep.subr.mxu0 0.0
      %570 = vmatpush2.msra.mxu0 0.0
      %571 = vmatprep.subr.mxu0 0.0
      %572 = vmatpush2.msra.mxu0 0.0
      %573 = vmatprep.subr.mxu0 0.0
      %574 = vmatpush2.msra.mxu0 0.0
      %575 = vmatprep.subr.mxu0 0.0
      %576 = vmatpush2.msra.mxu0 0.0
      %577 = vmatprep.subr.mxu0 0.0
      %578 = vmatpush2.msra.mxu0 0.0
      %579 = vmatprep.subr.mxu0 0.0
      %580 = vmatpush2.msra.mxu0 0.0
      %581 = vmatprep.subr.mxu0 0.0
      %582 = vmatpush2.msra.mxu0 0.0
      %583 = vmatprep.subr.mxu0 0.0
      %584 = vmatpush2.msra.mxu0 0.0
      %585 = vmatprep.subr.mxu0 0.0
      %586 = vmatpush2.msra.mxu0 0.0
      %587 = vmatprep.subr.mxu0 0.0
      %588 = vmatpush2.msra.mxu0 0.0
      %589 = vmatprep.subr.mxu0 0.0
      %590 = vmatpush2.msra.mxu0 0.0
      %591 = vmatprep.subr.mxu0 0.0
      %592 = vmatpush2.msra.mxu0 0.0
      %593 = vmatprep.subr.mxu0 0.0
      %594 = vmatpush2.msra.mxu0 0.0
      %595 = vmatprep.subr.mxu0 0.0
      %596 = vmatpush2.msra.mxu0 0.0
      %597 = vmatprep.mubr.f32.mxu0 0.0
      %598 = vmatmul.mubr.f32.gmra.mxu0 %v174
      %v599 = vpop.f32.mrf.mxu0
      %v600 = vadd.f32 %v531, %v599
      %v601 = vpop.f32.mrf.mxu0
      %602 = vmatprep.mubr.f32.mxu0 0.0
      %603 = vmatmul.mubr.f32.gmra.mxu0 %v175
      %v604 = vpop.f32.mrf.mxu0
      %v605 = vadd.f32 %v531, %v604
      %v606 = vpop.f32.mrf.mxu0
      %607 = vmatprep.mubr.f32.mxu0 0.0
      %608 = vmatmul.mubr.f32.gmra.mxu0 %v176
      %v609 = vpop.f32.mrf.mxu0
      %v610 = vadd.f32 %v531, %v609
      %v611 = vpop.f32.mrf.mxu0
      %612 = vmatprep.mubr.f32.mxu0 0.0
      %613 = vmatmul.mubr.f32.gmra.mxu0 %v177
      %v614 = vpop.f32.mrf.mxu0
      %v615 = vadd.f32 %v531, %v614
      %v616 = vpop.f32.mrf.mxu0
      %617 = vmatprep.mubr.f32.mxu0 0.0
      %618 = vmatmul.mubr.f32.gmra.mxu0 %v178
      %v619 = vpop.f32.mrf.mxu0
      %v620 = vadd.f32 %v531, %v619
      %v621 = vpop.f32.mrf.mxu0
      %622 = vmatprep.mubr.f32.mxu0 0.0
      %623 = vmatmul.mubr.f32.gmra.mxu0 %v179
      %v624 = vpop.f32.mrf.mxu0
      %v625 = vadd.f32 %v531, %v624
      %v626 = vpop.f32.mrf.mxu0
      %627 = vmatprep.mubr.f32.mxu0 0.0
      %628 = vmatmul.mubr.f32.gmra.mxu0 %v180
      %v629 = vpop.f32.mrf.mxu0
      %v630 = vadd.f32 %v531, %v629
      %v631 = vpop.f32.mrf.mxu0
      %632 = vmatprep.mubr.f32.mxu0 0.0
      %633 = vmatmul.mubr.f32.gmra.mxu0 %v181
      %v634 = vpop.f32.mrf.mxu0
      %v635 = vadd.f32 %v531, %v634
      %v636 = vpop.f32.mrf.mxu0
      %637 = vmatprep.mubr.f32.mxu0 0.0
      %638 = vmatmul.mubr.f32.gmra.mxu0 %v182
      %v639 = vpop.f32.mrf.mxu0
      %v640 = vadd.f32 %v531, %v639
      %v641 = vpop.f32.mrf.mxu0
      %642 = vmatprep.mubr.f32.mxu0 0.0
      %643 = vmatmul.mubr.f32.gmra.mxu0 %v183
      %v644 = vpop.f32.mrf.mxu0
      %v645 = vadd.f32 %v531, %v644
      %v646 = vpop.f32.mrf.mxu0
      %647 = vmatprep.mubr.f32.mxu0 0.0
      %648 = vmatmul.mubr.f32.gmra.mxu0 %v184
      %v649 = vpop.f32.mrf.mxu0
      %v650 = vadd.f32 %v531, %v649
      %v651 = vpop.f32.mrf.mxu0
      %652 = vmatprep.mubr.f32.mxu0 0.0
      %653 = vmatmul.mubr.f32.gmra.mxu0 %v185
      %v654 = vpop.f32.mrf.mxu0
      %v655 = vadd.f32 %v531, %v654
      %v656 = vpop.f32.mrf.mxu0
      %657 = vmatprep.mubr.f32.mxu0 0.0
      %658 = vmatmul.mubr.f32.gmra.mxu0 %v186
      %v659 = vpop.f32.mrf.mxu0
      %v660 = vadd.f32 %v531, %v659
      %v661 = vpop.f32.mrf.mxu0
      %662 = vmatprep.mubr.f32.mxu0 0.0
      %663 = vmatmul.mubr.f32.gmra.mxu0 %v187
      %v664 = vpop.f32.mrf.mxu0
      %v665 = vadd.f32 %v531, %v664
      %v666 = vpop.f32.mrf.mxu0
      %667 = vmatprep.mubr.f32.mxu0 0.0
      %668 = vmatmul.mubr.f32.gmra.mxu0 %v188
      %v669 = vpop.f32.mrf.mxu0
      %v670 = vadd.f32 %v531, %v669
      %v671 = vpop.f32.mrf.mxu0
      %672 = vmatprep.mubr.f32.mxu0 0.0
      %673 = vmatmul.mubr.f32.gmra.mxu0 %v189
      %v674 = vpop.f32.mrf.mxu0
      %v675 = vadd.f32 %v531, %v674
      %v676 = vpop.f32.mrf.mxu0
      %677 = vmatprep.mubr.f32.mxu0 0.0
      %678 = vmatmul.mubr.f32.gmra.mxu0 %v190
      %v679 = vpop.f32.mrf.mxu0
      %v680 = vadd.f32 %v531, %v679
      %v681 = vpop.f32.mrf.mxu0
      %682 = vmatprep.mubr.f32.mxu0 0.0
      %683 = vmatmul.mubr.f32.gmra.mxu0 %v191
      %v684 = vpop.f32.mrf.mxu0
      %v685 = vadd.f32 %v531, %v684
      %v686 = vpop.f32.mrf.mxu0
      %687 = vmatprep.mubr.f32.mxu0 0.0
      %688 = vmatmul.mubr.f32.gmra.mxu0 %v192
      %v689 = vpop.f32.mrf.mxu0
      %v690 = vadd.f32 %v531, %v689
      %v691 = vpop.f32.mrf.mxu0
      %692 = vmatprep.mubr.f32.mxu0 0.0
      %693 = vmatmul.mubr.f32.gmra.mxu0 %v193
      %v694 = vpop.f32.mrf.mxu0
      %v695 = vadd.f32 %v531, %v694
      %v696 = vpop.f32.mrf.mxu0
      %697 = vmatprep.mubr.f32.mxu0 0.0
      %698 = vmatmul.mubr.f32.gmra.mxu0 %v194
      %v699 = vpop.f32.mrf.mxu0
      %v700 = vadd.f32 %v531, %v699
      %v701 = vpop.f32.mrf.mxu0
      %702 = vmatprep.mubr.f32.mxu0 0.0
      %703 = vmatmul.mubr.f32.gmra.mxu0 %v195
      %v704 = vpop.f32.mrf.mxu0
      %v705 = vadd.f32 %v531, %v704
      %v706 = vpop.f32.mrf.mxu0
      %707 = vmatprep.mubr.f32.mxu0 0.0
      %708 = vmatmul.mubr.f32.gmra.mxu0 %v196
      %v709 = vpop.f32.mrf.mxu0
      %v710 = vadd.f32 %v531, %v709
      %v711 = vpop.f32.mrf.mxu0
      %712 = vmatprep.mubr.f32.mxu0 0.0
      %713 = vmatmul.mubr.f32.gmra.mxu0 %v197
      %v714 = vpop.f32.mrf.mxu0
      %v715 = vadd.f32 %v531, %v714
      %v716 = vpop.f32.mrf.mxu0
      %717 = vmatprep.mubr.f32.mxu0 0.0
      %718 = vmatmul.mubr.f32.gmra.mxu0 %v198
      %v719 = vpop.f32.mrf.mxu0
      %v720 = vadd.f32 %v531, %v719
      %v721 = vpop.f32.mrf.mxu0
      %722 = vmatprep.mubr.f32.mxu0 0.0
      %723 = vmatmul.mubr.f32.gmra.mxu0 %v199
      %v724 = vpop.f32.mrf.mxu0
      %v725 = vadd.f32 %v531, %v724
      %v726 = vpop.f32.mrf.mxu0
      %727 = vmatprep.mubr.f32.mxu0 0.0
      %728 = vmatmul.mubr.f32.gmra.mxu0 %v200
      %v729 = vpop.f32.mrf.mxu0
      %v730 = vadd.f32 %v531, %v729
      %v731 = vpop.f32.mrf.mxu0
      %732 = vmatprep.mubr.f32.mxu0 0.0
      %733 = vmatmul.mubr.f32.gmra.mxu0 %v201
      %v734 = vpop.f32.mrf.mxu0
      %v735 = vadd.f32 %v531, %v734
      %v736 = vpop.f32.mrf.mxu0
      %737 = vmatprep.mubr.f32.mxu0 0.0
      %738 = vmatmul.mubr.f32.gmra.mxu0 %v202
      %v739 = vpop.f32.mrf.mxu0
      %v740 = vadd.f32 %v531, %v739
      %v741 = vpop.f32.mrf.mxu0
      %742 = vmatprep.mubr.f32.mxu0 0.0
      %743 = vmatmul.mubr.f32.gmra.mxu0 %v203
      %v744 = vpop.f32.mrf.mxu0
      %v745 = vadd.f32 %v531, %v744
      %v746 = vpop.f32.mrf.mxu0
      %747 = vmatprep.mubr.f32.mxu0 0.0
      %748 = vmatmul.mubr.f32.gmra.mxu0 %v204
      %v749 = vpop.f32.mrf.mxu0
      %v750 = vadd.f32 %v531, %v749
      %v751 = vpop.f32.mrf.mxu0
      %752 = vmatprep.mubr.f32.mxu0 0.0
      %753 = vmatmul.mubr.f32.gmra.mxu0 %v205
      %v754 = vpop.f32.mrf.mxu0
      %v755 = vadd.f32 %v531, %v754
      %v756 = vpop.f32.mrf.mxu0
      %757 = vmatprep.mubr.f32.mxu0 0.0
      %758 = vmatmul.mubr.f32.gmra.mxu0 %v206
      %v759 = vpop.f32.mrf.mxu0
      %v760 = vadd.f32 %v531, %v759
      %v761 = vpop.f32.mrf.mxu0
      %762 = vmatprep.mubr.f32.mxu0 0.0
      %763 = vmatmul.mubr.f32.gmra.mxu0 %v207
      %v764 = vpop.f32.mrf.mxu0
      %v765 = vadd.f32 %v531, %v764
      %v766 = vpop.f32.mrf.mxu0
      %767 = vmatprep.mubr.f32.mxu0 0.0
      %768 = vmatmul.mubr.f32.gmra.mxu0 %v208
      %v769 = vpop.f32.mrf.mxu0
      %v770 = vadd.f32 %v531, %v769
      %v771 = vpop.f32.mrf.mxu0
      %772 = vmatprep.mubr.f32.mxu0 0.0
      %773 = vmatmul.mubr.f32.gmra.mxu0 %v209
      %v774 = vpop.f32.mrf.mxu0
      %v775 = vadd.f32 %v531, %v774
      %v776 = vpop.f32.mrf.mxu0
      %777 = vmatprep.mubr.f32.mxu0 0.0
      %778 = vmatmul.mubr.f32.gmra.mxu0 %v210
      %v779 = vpop.f32.mrf.mxu0
      %v780 = vadd.f32 %v531, %v779
      %v781 = vpop.f32.mrf.mxu0
      %782 = vmatprep.mubr.f32.mxu0 0.0
      %783 = vmatmul.mubr.f32.gmra.mxu0 %v211
      %v784 = vpop.f32.mrf.mxu0
      %v785 = vadd.f32 %v531, %v784
      %v786 = vpop.f32.mrf.mxu0
      %787 = vmatprep.mubr.f32.mxu0 0.0
      %788 = vmatmul.mubr.f32.gmra.mxu0 %v212
      %v789 = vpop.f32.mrf.mxu0
      %v790 = vadd.f32 %v531, %v789
      %v791 = vpop.f32.mrf.mxu0
      %792 = vmatprep.mubr.f32.mxu0 0.0
      %793 = vmatmul.mubr.f32.gmra.mxu0 %v213
      %v794 = vpop.f32.mrf.mxu0
      %v795 = vadd.f32 %v531, %v794
      %v796 = vpop.f32.mrf.mxu0
      %797 = vmatprep.mubr.f32.mxu0 0.0
      %798 = vmatmul.mubr.f32.gmra.mxu0 %v214
      %v799 = vpop.f32.mrf.mxu0
      %v800 = vadd.f32 %v531, %v799
      %v801 = vpop.f32.mrf.mxu0
      %802 = vmatprep.mubr.f32.mxu0 0.0
      %803 = vmatmul.mubr.f32.gmra.mxu0 %v215
      %v804 = vpop.f32.mrf.mxu0
      %v805 = vadd.f32 %v531, %v804
      %v806 = vpop.f32.mrf.mxu0
      %807 = vmatprep.mubr.f32.mxu0 0.0
      %808 = vmatmul.mubr.f32.gmra.mxu0 %v216
      %v809 = vpop.f32.mrf.mxu0
      %v810 = vadd.f32 %v531, %v809
      %v811 = vpop.f32.mrf.mxu0
      %812 = vmatprep.mubr.f32.mxu0 0.0
      %813 = vmatmul.mubr.f32.gmra.mxu0 %v217
      %v814 = vpop.f32.mrf.mxu0
      %v815 = vadd.f32 %v531, %v814
      %v816 = vpop.f32.mrf.mxu0
      %817 = vmatprep.mubr.f32.mxu0 0.0
      %818 = vmatmul.mubr.f32.gmra.mxu0 %v218
      %v819 = vpop.f32.mrf.mxu0
      %v820 = vadd.f32 %v531, %v819
      %v821 = vpop.f32.mrf.mxu0
      %822 = vmatprep.mubr.f32.mxu0 0.0
      %823 = vmatmul.mubr.f32.gmra.mxu0 %v219
      %v824 = vpop.f32.mrf.mxu0
      %v825 = vadd.f32 %v531, %v824
      %v826 = vpop.f32.mrf.mxu0
      %827 = vmatprep.mubr.f32.mxu0 0.0
      %828 = vmatmul.mubr.f32.gmra.mxu0 %v220
      %v829 = vpop.f32.mrf.mxu0
      %v830 = vadd.f32 %v531, %v829
      %v831 = vpop.f32.mrf.mxu0
      %832 = vmatprep.mubr.f32.mxu0 0.0
      %833 = vmatmul.mubr.f32.gmra.mxu0 %v221
      %v834 = vpop.f32.mrf.mxu0
      %v835 = vadd.f32 %v531, %v834
      %v836 = vpop.f32.mrf.mxu0
      %837 = vmatprep.mubr.f32.mxu0 0.0
      %838 = vmatmul.mubr.f32.gmra.mxu0 %v222
      %v839 = vpop.f32.mrf.mxu0
      %v840 = vadd.f32 %v531, %v839
      %v841 = vpop.f32.mrf.mxu0
      %842 = vmatprep.mubr.f32.mxu0 0.0
      %843 = vmatmul.mubr.f32.gmra.mxu0 %v223
      %v844 = vpop.f32.mrf.mxu0
      %v845 = vadd.f32 %v531, %v844
      %v846 = vpop.f32.mrf.mxu0
      %847 = vmatprep.mubr.f32.mxu0 0.0
      %848 = vmatmul.mubr.f32.gmra.mxu0 %v224
      %v849 = vpop.f32.mrf.mxu0
      %v850 = vadd.f32 %v531, %v849
      %v851 = vpop.f32.mrf.mxu0
      %852 = vmatprep.mubr.f32.mxu0 0.0
      %853 = vmatmul.mubr.f32.gmra.mxu0 %v225
      %v854 = vpop.f32.mrf.mxu0
      %v855 = vadd.f32 %v531, %v854
      %v856 = vpop.f32.mrf.mxu0
      %857 = vmatprep.mubr.f32.mxu0 0.0
      %858 = vmatmul.mubr.f32.gmra.mxu0 %v226
      %v859 = vpop.f32.mrf.mxu0
      %v860 = vadd.f32 %v531, %v859
      %v861 = vpop.f32.mrf.mxu0
      %862 = vmatprep.mubr.f32.mxu0 0.0
      %863 = vmatmul.mubr.f32.gmra.mxu0 %v227
      %v864 = vpop.f32.mrf.mxu0
      %v865 = vadd.f32 %v531, %v864
      %v866 = vpop.f32.mrf.mxu0
      %867 = vmatprep.mubr.f32.mxu0 0.0
      %868 = vmatmul.mubr.f32.gmra.mxu0 %v228
      %v869 = vpop.f32.mrf.mxu0
      %v870 = vadd.f32 %v531, %v869
      %v871 = vpop.f32.mrf.mxu0
      %872 = vmatprep.mubr.f32.mxu0 0.0
      %873 = vmatmul.mubr.f32.gmra.mxu0 %v229
      %v874 = vpop.f32.mrf.mxu0
      %v875 = vadd.f32 %v531, %v874
      %v876 = vpop.f32.mrf.mxu0
      %877 = vmatprep.mubr.f32.mxu0 0.0
      %878 = vmatmul.mubr.f32.gmra.mxu0 %v230
      %v879 = vpop.f32.mrf.mxu0
      %v880 = vadd.f32 %v531, %v879
      %v881 = vpop.f32.mrf.mxu0
      %882 = vmatprep.mubr.f32.mxu0 0.0
      %883 = vmatmul.mubr.f32.gmra.mxu0 %v231
      %v884 = vpop.f32.mrf.mxu0
      %v885 = vadd.f32 %v531, %v884
      %v886 = vpop.f32.mrf.mxu0
      %887 = vmatprep.mubr.f32.mxu0 0.0
      %888 = vmatmul.mubr.f32.gmra.mxu0 %v232
      %v889 = vpop.f32.mrf.mxu0
      %v890 = vadd.f32 %v531, %v889
      %v891 = vpop.f32.mrf.mxu0
      %892 = vmatprep.mubr.f32.mxu0 0.0
      %893 = vmatmul.mubr.f32.gmra.mxu0 %v233
      %v894 = vpop.f32.mrf.mxu0
      %v895 = vadd.f32 %v531, %v894
      %v896 = vpop.f32.mrf.mxu0
      %897 = vmatprep.mubr.f32.mxu0 0.0
      %898 = vmatmul.mubr.f32.gmra.mxu0 %v234
      %v899 = vpop.f32.mrf.mxu0
      %v900 = vadd.f32 %v531, %v899
      %v901 = vpop.f32.mrf.mxu0
      %902 = vmatprep.mubr.f32.mxu0 0.0
      %903 = vmatmul.mubr.f32.gmra.mxu0 %v235
      %v904 = vpop.f32.mrf.mxu0
      %v905 = vadd.f32 %v531, %v904
      %v906 = vpop.f32.mrf.mxu0
      %907 = vmatprep.mubr.f32.mxu0 0.0
      %908 = vmatmul.mubr.f32.gmra.mxu0 %v236
      %v909 = vpop.f32.mrf.mxu0
      %v910 = vadd.f32 %v531, %v909
      %v911 = vpop.f32.mrf.mxu0
      %912 = vmatprep.mubr.f32.mxu0 0.0
      %913 = vmatmul.mubr.f32.gmra.mxu0 %v237
      %v914 = vpop.f32.mrf.mxu0
      %v915 = vadd.f32 %v531, %v914
      %v916 = vpop.f32.mrf.mxu0
      %917 = vmatprep.mubr.f32.mxu0 0.0
      %918 = vmatmul.mubr.f32.gmra.mxu0 %v238
      %v919 = vpop.f32.mrf.mxu0
      %v920 = vadd.f32 %v531, %v919
      %v921 = vpop.f32.mrf.mxu0
      %922 = vmatprep.mubr.f32.mxu0 0.0
      %923 = vmatmul.mubr.f32.gmra.mxu0 %v239
      %v924 = vpop.f32.mrf.mxu0
      %v925 = vadd.f32 %v531, %v924
      %v926 = vpop.f32.mrf.mxu0
      %927 = vmatprep.mubr.f32.mxu0 0.0
      %928 = vmatmul.mubr.f32.gmra.mxu0 %v240
      %v929 = vpop.f32.mrf.mxu0
      %v930 = vadd.f32 %v531, %v929
      %v931 = vpop.f32.mrf.mxu0
      %932 = vmatprep.mubr.f32.mxu0 0.0
      %933 = vmatmul.mubr.f32.gmra.mxu0 %v241
      %v934 = vpop.f32.mrf.mxu0
      %v935 = vadd.f32 %v531, %v934
      %v936 = vpop.f32.mrf.mxu0
      %937 = vmatprep.mubr.f32.mxu0 0.0
      %938 = vmatmul.mubr.f32.gmra.mxu0 %v242
      %v939 = vpop.f32.mrf.mxu0
      %v940 = vadd.f32 %v531, %v939
      %v941 = vpop.f32.mrf.mxu0
      %942 = vmatprep.mubr.f32.mxu0 0.0
      %943 = vmatmul.mubr.f32.gmra.mxu0 %v243
      %v944 = vpop.f32.mrf.mxu0
      %v945 = vadd.f32 %v531, %v944
      %v946 = vpop.f32.mrf.mxu0
      %947 = vmatprep.mubr.f32.mxu0 0.0
      %948 = vmatmul.mubr.f32.gmra.mxu0 %v244
      %v949 = vpop.f32.mrf.mxu0
      %v950 = vadd.f32 %v531, %v949
      %v951 = vpop.f32.mrf.mxu0
      %952 = vmatprep.mubr.f32.mxu0 0.0
      %953 = vmatmul.mubr.f32.gmra.mxu0 %v245
      %v954 = vpop.f32.mrf.mxu0
      %v955 = vadd.f32 %v531, %v954
      %v956 = vpop.f32.mrf.mxu0
      %957 = vmatprep.mubr.f32.mxu0 0.0
      %958 = vmatmul.mubr.f32.gmra.mxu0 %v246
      %v959 = vpop.f32.mrf.mxu0
      %v960 = vadd.f32 %v531, %v959
      %v961 = vpop.f32.mrf.mxu0
      %962 = vmatprep.mubr.f32.mxu0 0.0
      %963 = vmatmul.mubr.f32.gmra.mxu0 %v247
      %v964 = vpop.f32.mrf.mxu0
      %v965 = vadd.f32 %v531, %v964
      %v966 = vpop.f32.mrf.mxu0
      %967 = vmatprep.mubr.f32.mxu0 0.0
      %968 = vmatmul.mubr.f32.gmra.mxu0 %v248
      %v969 = vpop.f32.mrf.mxu0
      %v970 = vadd.f32 %v531, %v969
      %v971 = vpop.f32.mrf.mxu0
      %972 = vmatprep.mubr.f32.mxu0 0.0
      %973 = vmatmul.mubr.f32.gmra.mxu0 %v249
      %v974 = vpop.f32.mrf.mxu0
      %v975 = vadd.f32 %v531, %v974
      %v976 = vpop.f32.mrf.mxu0
      %977 = vmatprep.mubr.f32.mxu0 0.0
      %978 = vmatmul.mubr.f32.gmra.mxu0 %v250
      %v979 = vpop.f32.mrf.mxu0
      %v980 = vadd.f32 %v531, %v979
      %v981 = vpop.f32.mrf.mxu0
      %982 = vmatprep.mubr.f32.mxu0 0.0
      %983 = vmatmul.mubr.f32.gmra.mxu0 %v251
      %v984 = vpop.f32.mrf.mxu0
      %v985 = vadd.f32 %v531, %v984
      %v986 = vpop.f32.mrf.mxu0
      %987 = vmatprep.mubr.f32.mxu0 0.0
      %988 = vmatmul.mubr.f32.gmra.mxu0 %v252
      %v989 = vpop.f32.mrf.mxu0
      %v990 = vadd.f32 %v531, %v989
      %v991 = vpop.f32.mrf.mxu0
      %992 = vmatprep.mubr.f32.mxu0 0.0
      %993 = vmatmul.mubr.f32.gmra.mxu0 %v253
      %v994 = vpop.f32.mrf.mxu0
      %v995 = vadd.f32 %v531, %v994
      %v996 = vpop.f32.mrf.mxu0
      %997 = vmatprep.mubr.f32.mxu0 0.0
      %998 = vmatmul.mubr.f32.gmra.mxu0 %v254
      %v999 = vpop.f32.mrf.mxu0
      %v1000 = vadd.f32 %v531, %v999
      %v1001 = vpop.f32.mrf.mxu0
      %1002 = vmatprep.mubr.f32.mxu0 0.0
      %1003 = vmatmul.mubr.f32.gmra.mxu0 %v255
      %v1004 = vpop.f32.mrf.mxu0
      %v1005 = vadd.f32 %v531, %v1004
      %v1006 = vpop.f32.mrf.mxu0
      %1007 = vmatprep.mubr.f32.mxu0 0.0
      %1008 = vmatmul.mubr.f32.gmra.mxu0 %v256
      %v1009 = vpop.f32.mrf.mxu0
      %v1010 = vadd.f32 %v531, %v1009
      %v1011 = vpop.f32.mrf.mxu0
      %1012 = vmatprep.mubr.f32.mxu0 0.0
      %1013 = vmatmul.mubr.f32.gmra.mxu0 %v257
      %v1014 = vpop.f32.mrf.mxu0
      %v1015 = vadd.f32 %v531, %v1014
      %v1016 = vpop.f32.mrf.mxu0
      %1017 = vmatprep.mubr.f32.mxu0 0.0
      %1018 = vmatmul.mubr.f32.gmra.mxu0 %v258
      %v1019 = vpop.f32.mrf.mxu0
      %v1020 = vadd.f32 %v531, %v1019
      %v1021 = vpop.f32.mrf.mxu0
      %1022 = vmatprep.mubr.f32.mxu0 0.0
      %1023 = vmatmul.mubr.f32.gmra.mxu0 %v259
      %v1024 = vpop.f32.mrf.mxu0
      %v1025 = vadd.f32 %v531, %v1024
      %v1026 = vpop.f32.mrf.mxu0
      %1027 = vmatprep.mubr.f32.mxu0 0.0
      %1028 = vmatmul.mubr.f32.gmra.mxu0 %v260
      %v1029 = vpop.f32.mrf.mxu0
      %v1030 = vadd.f32 %v531, %v1029
      %v1031 = vpop.f32.mrf.mxu0
      %1032 = vmatprep.mubr.f32.mxu0 0.0
      %1033 = vmatmul.mubr.f32.gmra.mxu0 %v261
      %v1034 = vpop.f32.mrf.mxu0
      %v1035 = vadd.f32 %v531, %v1034
      %v1036 = vpop.f32.mrf.mxu0
      %1037 = vmatprep.mubr.f32.mxu0 0.0
      %1038 = vmatmul.mubr.f32.gmra.mxu0 %v262
      %v1039 = vpop.f32.mrf.mxu0
      %v1040 = vadd.f32 %v531, %v1039
      %v1041 = vpop.f32.mrf.mxu0
      %1042 = vmatprep.mubr.f32.mxu0 0.0
      %1043 = vmatmul.mubr.f32.gmra.mxu0 %v263
      %v1044 = vpop.f32.mrf.mxu0
      %v1045 = vadd.f32 %v531, %v1044
      %v1046 = vpop.f32.mrf.mxu0
      %1047 = vmatprep.mubr.f32.mxu0 0.0
      %1048 = vmatmul.mubr.f32.gmra.mxu0 %v264
      %v1049 = vpop.f32.mrf.mxu0
      %v1050 = vadd.f32 %v531, %v1049
      %v1051 = vpop.f32.mrf.mxu0
      %1052 = vmatprep.mubr.f32.mxu0 0.0
      %1053 = vmatmul.mubr.f32.gmra.mxu0 %v265
      %v1054 = vpop.f32.mrf.mxu0
      %v1055 = vadd.f32 %v531, %v1054
      %v1056 = vpop.f32.mrf.mxu0
      %1057 = vmatprep.mubr.f32.mxu0 0.0
      %1058 = vmatmul.mubr.f32.gmra.mxu0 %v266
      %v1059 = vpop.f32.mrf.mxu0
      %v1060 = vadd.f32 %v531, %v1059
      %v1061 = vpop.f32.mrf.mxu0
      %1062 = vmatprep.mubr.f32.mxu0 0.0
      %1063 = vmatmul.mubr.f32.gmra.mxu0 %v267
      %v1064 = vpop.f32.mrf.mxu0
      %v1065 = vadd.f32 %v531, %v1064
      %v1066 = vpop.f32.mrf.mxu0
      %1067 = vmatprep.mubr.f32.mxu0 0.0
      %1068 = vmatmul.mubr.f32.gmra.mxu0 %v268
      %v1069 = vpop.f32.mrf.mxu0
      %v1070 = vadd.f32 %v531, %v1069
      %v1071 = vpop.f32.mrf.mxu0
      %1072 = vmatprep.mubr.f32.mxu0 0.0
      %1073 = vmatmul.mubr.f32.gmra.mxu0 %v269
      %v1074 = vpop.f32.mrf.mxu0
      %v1075 = vadd.f32 %v531, %v1074
      %v1076 = vpop.f32.mrf.mxu0
      %1077 = vmatprep.mubr.f32.mxu0 0.0
      %1078 = vmatmul.mubr.f32.gmra.mxu0 %v270
      %v1079 = vpop.f32.mrf.mxu0
      %v1080 = vadd.f32 %v531, %v1079
      %v1081 = vpop.f32.mrf.mxu0
      %1082 = vmatprep.mubr.f32.mxu0 0.0
      %1083 = vmatmul.mubr.f32.gmra.mxu0 %v271
      %v1084 = vpop.f32.mrf.mxu0
      %v1085 = vadd.f32 %v531, %v1084
      %v1086 = vpop.f32.mrf.mxu0
      %1087 = vmatprep.mubr.f32.mxu0 0.0
      %1088 = vmatmul.mubr.f32.gmra.mxu0 %v272
      %v1089 = vpop.f32.mrf.mxu0
      %v1090 = vadd.f32 %v531, %v1089
      %v1091 = vpop.f32.mrf.mxu0
      %1092 = vmatprep.mubr.f32.mxu0 0.0
      %1093 = vmatmul.mubr.f32.gmra.mxu0 %v273
      %v1094 = vpop.f32.mrf.mxu0
      %v1095 = vadd.f32 %v531, %v1094
      %v1096 = vpop.f32.mrf.mxu0
      %1097 = vmatprep.mubr.f32.mxu0 0.0
      %1098 = vmatmul.mubr.f32.gmra.mxu0 %v274
      %v1099 = vpop.f32.mrf.mxu0
      %v1100 = vadd.f32 %v531, %v1099
      %v1101 = vpop.f32.mrf.mxu0
      %1102 = vmatprep.mubr.f32.mxu0 0.0
      %1103 = vmatmul.mubr.f32.gmra.mxu0 %v275
      %v1104 = vpop.f32.mrf.mxu0
      %v1105 = vadd.f32 %v531, %v1104
      %v1106 = vpop.f32.mrf.mxu0
      %1107 = vmatprep.mubr.f32.mxu0 0.0
      %1108 = vmatmul.mubr.f32.gmra.mxu0 %v276
      %v1109 = vpop.f32.mrf.mxu0
      %v1110 = vadd.f32 %v531, %v1109
      %v1111 = vpop.f32.mrf.mxu0
      %1112 = vmatprep.mubr.f32.mxu0 0.0
      %1113 = vmatmul.mubr.f32.gmra.mxu0 %v277
      %v1114 = vpop.f32.mrf.mxu0
      %v1115 = vadd.f32 %v531, %v1114
      %v1116 = vpop.f32.mrf.mxu0
      %1117 = vmatprep.mubr.f32.mxu0 0.0
      %1118 = vmatmul.mubr.f32.gmra.mxu0 %v278
      %v1119 = vpop.f32.mrf.mxu0
      %v1120 = vadd.f32 %v531, %v1119
      %v1121 = vpop.f32.mrf.mxu0
      %1122 = vmatprep.mubr.f32.mxu0 0.0
      %1123 = vmatmul.mubr.f32.gmra.mxu0 %v279
      %v1124 = vpop.f32.mrf.mxu0
      %v1125 = vadd.f32 %v531, %v1124
      %v1126 = vpop.f32.mrf.mxu0
      %1127 = vmatprep.mubr.f32.mxu0 0.0
      %1128 = vmatmul.mubr.f32.gmra.mxu0 %v280
      %v1129 = vpop.f32.mrf.mxu0
      %v1130 = vadd.f32 %v531, %v1129
      %v1131 = vpop.f32.mrf.mxu0
      %1132 = vmatprep.mubr.f32.mxu0 0.0
      %1133 = vmatmul.mubr.f32.gmra.mxu0 %v281
      %v1134 = vpop.f32.mrf.mxu0
      %v1135 = vadd.f32 %v531, %v1134
      %v1136 = vpop.f32.mrf.mxu0
      %1137 = vmatprep.mubr.f32.mxu0 0.0
      %1138 = vmatmul.mubr.f32.gmra.mxu0 %v282
      %v1139 = vpop.f32.mrf.mxu0
      %v1140 = vadd.f32 %v531, %v1139
      %v1141 = vpop.f32.mrf.mxu0
      %1142 = vmatprep.mubr.f32.mxu0 0.0
      %1143 = vmatmul.mubr.f32.gmra.mxu0 %v283
      %v1144 = vpop.f32.mrf.mxu0
      %v1145 = vadd.f32 %v531, %v1144
      %v1146 = vpop.f32.mrf.mxu0
      %1147 = vmatprep.mubr.f32.mxu0 0.0
      %1148 = vmatmul.mubr.f32.gmra.mxu0 %v284
      %v1149 = vpop.f32.mrf.mxu0
      %v1150 = vadd.f32 %v531, %v1149
      %v1151 = vpop.f32.mrf.mxu0
      %1152 = vmatprep.mubr.f32.mxu0 0.0
      %1153 = vmatmul.mubr.f32.gmra.mxu0 %v285
      %v1154 = vpop.f32.mrf.mxu0
      %v1155 = vadd.f32 %v531, %v1154
      %v1156 = vpop.f32.mrf.mxu0
      %1157 = vmatprep.mubr.f32.mxu0 0.0
      %1158 = vmatmul.mubr.f32.gmra.mxu0 %v286
      %v1159 = vpop.f32.mrf.mxu0
      %v1160 = vadd.f32 %v531, %v1159
      %v1161 = vpop.f32.mrf.mxu0
      %1162 = vmatprep.mubr.f32.mxu0 0.0
      %1163 = vmatmul.mubr.f32.gmra.mxu0 %v287
      %v1164 = vpop.f32.mrf.mxu0
      %v1165 = vadd.f32 %v531, %v1164
      %v1166 = vpop.f32.mrf.mxu0
      %1167 = vmatprep.mubr.f32.mxu0 0.0
      %1168 = vmatmul.mubr.f32.gmra.mxu0 %v288
      %v1169 = vpop.f32.mrf.mxu0
      %v1170 = vadd.f32 %v531, %v1169
      %v1171 = vpop.f32.mrf.mxu0
      %1172 = vmatprep.mubr.f32.mxu0 0.0
      %1173 = vmatmul.mubr.f32.gmra.mxu0 %v289
      %v1174 = vpop.f32.mrf.mxu0
      %v1175 = vadd.f32 %v531, %v1174
      %v1176 = vpop.f32.mrf.mxu0
      %1177 = vmatprep.mubr.f32.mxu0 0.0
      %1178 = vmatmul.mubr.f32.gmra.mxu0 %v290
      %v1179 = vpop.f32.mrf.mxu0
      %v1180 = vadd.f32 %v531, %v1179
      %v1181 = vpop.f32.mrf.mxu0
      %1182 = vmatprep.mubr.f32.mxu0 0.0
      %1183 = vmatmul.mubr.f32.gmra.mxu0 %v291
      %v1184 = vpop.f32.mrf.mxu0
      %v1185 = vadd.f32 %v531, %v1184
      %v1186 = vpop.f32.mrf.mxu0
      %1187 = vmatprep.mubr.f32.mxu0 0.0
      %1188 = vmatmul.mubr.f32.gmra.mxu0 %v292
      %v1189 = vpop.f32.mrf.mxu0
      %v1190 = vadd.f32 %v531, %v1189
      %v1191 = vpop.f32.mrf.mxu0
      %1192 = vmatprep.mubr.f32.mxu0 0.0
      %1193 = vmatmul.mubr.f32.gmra.mxu0 %v293
      %v1194 = vpop.f32.mrf.mxu0
      %v1195 = vadd.f32 %v531, %v1194
      %v1196 = vpop.f32.mrf.mxu0
      %1197 = vmatprep.mubr.f32.mxu0 0.0
      %1198 = vmatmul.mubr.f32.gmra.mxu0 %v294
      %v1199 = vpop.f32.mrf.mxu0
      %v1200 = vadd.f32 %v531, %v1199
      %v1201 = vpop.f32.mrf.mxu0
      %1202 = vmatprep.mubr.f32.mxu0 0.0
      %1203 = vmatmul.mubr.f32.gmra.mxu0 %v295
      %v1204 = vpop.f32.mrf.mxu0
      %v1205 = vadd.f32 %v531, %v1204
      %v1206 = vpop.f32.mrf.mxu0
      %1207 = vmatprep.mubr.f32.mxu0 0.0
      %1208 = vmatmul.mubr.f32.gmra.mxu0 %v296
      %v1209 = vpop.f32.mrf.mxu0
      %v1210 = vadd.f32 %v531, %v1209
      %v1211 = vpop.f32.mrf.mxu0
      %1212 = vmatprep.mubr.f32.mxu0 0.0
      %1213 = vmatmul.mubr.f32.gmra.mxu0 %v297
      %v1214 = vpop.f32.mrf.mxu0
      %v1215 = vadd.f32 %v531, %v1214
      %v1216 = vpop.f32.mrf.mxu0
      %1217 = vmatprep.mubr.f32.mxu0 0.0
      %1218 = vmatmul.mubr.f32.gmra.mxu0 %v298
      %v1219 = vpop.f32.mrf.mxu0
      %v1220 = vadd.f32 %v531, %v1219
      %v1221 = vpop.f32.mrf.mxu0
      %1222 = vmatprep.mubr.f32.mxu0 0.0
      %1223 = vmatmul.mubr.f32.gmra.mxu0 %v299
      %v1224 = vpop.f32.mrf.mxu0
      %v1225 = vadd.f32 %v531, %v1224
      %v1226 = vpop.f32.mrf.mxu0
      %1227 = vmatprep.mubr.f32.mxu0 0.0
      %1228 = vmatmul.mubr.f32.gmra.mxu0 %v300
      %v1229 = vpop.f32.mrf.mxu0
      %v1230 = vadd.f32 %v531, %v1229
      %v1231 = vpop.f32.mrf.mxu0
      %1232 = vmatprep.mubr.f32.mxu0 0.0
      %1233 = vmatmul.mubr.f32.gmra.mxu0 %v301
      %v1234 = vpop.f32.mrf.mxu0
      %v1235 = vadd.f32 %v531, %v1234
      %v1236 = vpop.f32.mrf.mxu0
      %1237 = vmatprep.mubr.f32.mxu0 0.0
      %1238 = vmatmul.mubr.f32.gmra.mxu0 %v302
      %v1239 = vpop.f32.mrf.mxu0
      %v1240 = vadd.f32 %v531, %v1239
      %v1241 = vpop.f32.mrf.mxu0
      %1242 = vmatprep.mubr.f32.mxu0 0.0
      %1243 = vmatmul.mubr.f32.gmra.mxu0 %v303
      %v1244 = vpop.f32.mrf.mxu0
      %v1245 = vadd.f32 %v531, %v1244
      %v1246 = vpop.f32.mrf.mxu0
      %1247 = vmatprep.mubr.f32.mxu0 0.0
      %1248 = vmatmul.mubr.f32.gmra.mxu0 %v304
      %v1249 = vpop.f32.mrf.mxu0
      %v1250 = vadd.f32 %v531, %v1249
      %v1251 = vpop.f32.mrf.mxu0
      %1252 = vmatprep.mubr.f32.mxu0 0.0
      %1253 = vmatmul.mubr.f32.gmra.mxu0 %v305
      %v1254 = vpop.f32.mrf.mxu0
      %v1255 = vadd.f32 %v531, %v1254
      %v1256 = vpop.f32.mrf.mxu0
      %1257 = vmatprep.mubr.f32.mxu0 0.0
      %1258 = vmatmul.mubr.f32.gmra.mxu0 %v306
      %v1259 = vpop.f32.mrf.mxu0
      %v1260 = vadd.f32 %v531, %v1259
      %v1261 = vpop.f32.mrf.mxu0
      %1262 = vmatprep.mubr.f32.mxu0 0.0
      %1263 = vmatmul.mubr.f32.gmra.mxu0 %v307
      %v1264 = vpop.f32.mrf.mxu0
      %v1265 = vadd.f32 %v531, %v1264
      %v1266 = vpop.f32.mrf.mxu0
      %1267 = vmatprep.mubr.f32.mxu0 0.0
      %1268 = vmatmul.mubr.f32.gmra.mxu0 %v308
      %v1269 = vpop.f32.mrf.mxu0
      %v1270 = vadd.f32 %v531, %v1269
      %v1271 = vpop.f32.mrf.mxu0
      %1272 = vmatprep.mubr.f32.mxu0 0.0
      %1273 = vmatmul.mubr.f32.gmra.mxu0 %v309
      %v1274 = vpop.f32.mrf.mxu0
      %v1275 = vadd.f32 %v531, %v1274
      %v1276 = vpop.f32.mrf.mxu0
      %1277 = vmatprep.mubr.f32.mxu0 0.0
      %1278 = vmatmul.mubr.f32.gmra.mxu0 %v310
      %v1279 = vpop.f32.mrf.mxu0
      %v1280 = vadd.f32 %v531, %v1279
      %v1281 = vpop.f32.mrf.mxu0
      %1282 = vmatprep.mubr.f32.mxu0 0.0
      %1283 = vmatmul.mubr.f32.gmra.mxu0 %v311
      %v1284 = vpop.f32.mrf.mxu0
      %v1285 = vadd.f32 %v531, %v1284
      %v1286 = vpop.f32.mrf.mxu0
      %1287 = vmatprep.mubr.f32.mxu0 0.0
      %1288 = vmatmul.mubr.f32.gmra.mxu0 %v312
      %v1289 = vpop.f32.mrf.mxu0
      %v1290 = vadd.f32 %v531, %v1289
      %v1291 = vpop.f32.mrf.mxu0
      %1292 = vmatprep.mubr.f32.mxu0 0.0
      %1293 = vmatmul.mubr.f32.gmra.mxu0 %v313
      %v1294 = vpop.f32.mrf.mxu0
      %v1295 = vadd.f32 %v531, %v1294
      %v1296 = vpop.f32.mrf.mxu0
      %1297 = vmatprep.mubr.f32.mxu0 0.0
      %1298 = vmatmul.mubr.f32.gmra.mxu0 %v314
      %v1299 = vpop.f32.mrf.mxu0
      %v1300 = vadd.f32 %v531, %v1299
      %v1301 = vpop.f32.mrf.mxu0
      %1302 = vmatprep.mubr.f32.mxu0 0.0
      %1303 = vmatmul.mubr.f32.gmra.mxu0 %v315
      %v1304 = vpop.f32.mrf.mxu0
      %v1305 = vadd.f32 %v531, %v1304
      %v1306 = vpop.f32.mrf.mxu0
      %1307 = vmatprep.mubr.f32.mxu0 0.0
      %1308 = vmatmul.mubr.f32.gmra.mxu0 %v316
      %v1309 = vpop.f32.mrf.mxu0
      %v1310 = vadd.f32 %v531, %v1309
      %v1311 = vpop.f32.mrf.mxu0
      %1312 = vmatprep.mubr.f32.mxu0 0.0
      %1313 = vmatmul.mubr.f32.gmra.mxu0 %v317
      %v1314 = vpop.f32.mrf.mxu0
      %v1315 = vadd.f32 %v531, %v1314
      %v1316 = vpop.f32.mrf.mxu0
      %1317 = vmatprep.mubr.f32.mxu0 0.0
      %1318 = vmatmul.mubr.f32.gmra.mxu0 %v318
      %v1319 = vpop.f32.mrf.mxu0
      %v1320 = vadd.f32 %v531, %v1319
      %v1321 = vpop.f32.mrf.mxu0
      %1322 = vmatprep.mubr.f32.mxu0 0.0
      %1323 = vmatmul.mubr.f32.gmra.mxu0 %v319
      %v1324 = vpop.f32.mrf.mxu0
      %v1325 = vadd.f32 %v531, %v1324
      %v1326 = vpop.f32.mrf.mxu0
      %1327 = vmatprep.mubr.f32.mxu0 0.0
      %1328 = vmatmul.mubr.f32.gmra.mxu0 %v320
      %v1329 = vpop.f32.mrf.mxu0
      %v1330 = vadd.f32 %v531, %v1329
      %v1331 = vpop.f32.mrf.mxu0
      %1332 = vmatprep.mubr.f32.mxu0 0.0
      %1333 = vmatmul.mubr.f32.gmra.mxu0 %v321
      %v1334 = vpop.f32.mrf.mxu0
      %v1335 = vadd.f32 %v531, %v1334
      %v1336 = vpop.f32.mrf.mxu0
      %1337 = vmatprep.mubr.f32.mxu0 0.0
      %1338 = vmatmul.mubr.f32.gmra.mxu0 %v322
      %v1339 = vpop.f32.mrf.mxu0
      %v1340 = vadd.f32 %v531, %v1339
      %v1341 = vpop.f32.mrf.mxu0
      %1342 = vmatprep.mubr.f32.mxu0 0.0
      %1343 = vmatmul.mubr.f32.gmra.mxu0 %v323
      %v1344 = vpop.f32.mrf.mxu0
      %v1345 = vadd.f32 %v531, %v1344
      %v1346 = vpop.f32.mrf.mxu0
      %1347 = vmatprep.mubr.f32.mxu0 0.0
      %1348 = vmatmul.mubr.f32.gmra.mxu0 %v324
      %v1349 = vpop.f32.mrf.mxu0
      %v1350 = vadd.f32 %v531, %v1349
      %v1351 = vpop.f32.mrf.mxu0
      %1352 = vmatprep.mubr.f32.mxu0 0.0
      %1353 = vmatmul.mubr.f32.gmra.mxu0 %v325
      %v1354 = vpop.f32.mrf.mxu0
      %v1355 = vadd.f32 %v531, %v1354
      %v1356 = vpop.f32.mrf.mxu0
      %1357 = vmatprep.mubr.f32.mxu0 0.0
      %1358 = vmatmul.mubr.f32.gmra.mxu0 %v326
      %v1359 = vpop.f32.mrf.mxu0
      %v1360 = vadd.f32 %v531, %v1359
      %v1361 = vpop.f32.mrf.mxu0
      %1362 = vmatprep.mubr.f32.mxu0 0.0
      %1363 = vmatmul.mubr.f32.gmra.mxu0 %v327
      %v1364 = vpop.f32.mrf.mxu0
      %v1365 = vadd.f32 %v531, %v1364
      %v1366 = vpop.f32.mrf.mxu0
      %1367 = vmatprep.mubr.f32.mxu0 0.0
      %1368 = vmatmul.mubr.f32.gmra.mxu0 %v328
      %v1369 = vpop.f32.mrf.mxu0
      %v1370 = vadd.f32 %v531, %v1369
      %v1371 = vpop.f32.mrf.mxu0
      %1372 = vmatprep.mubr.f32.mxu0 0.0
      %1373 = vmatmul.mubr.f32.gmra.mxu0 %v329
      %v1374 = vpop.f32.mrf.mxu0
      %v1375 = vadd.f32 %v531, %v1374
      %v1376 = vpop.f32.mrf.mxu0
      %1377 = vmatprep.mubr.f32.mxu0 0.0
      %1378 = vmatmul.mubr.f32.gmra.mxu0 %v330
      %v1379 = vpop.f32.mrf.mxu0
      %v1380 = vadd.f32 %v531, %v1379
      %v1381 = vpop.f32.mrf.mxu0
      %1382 = vmatprep.mubr.f32.mxu0 0.0
      %1383 = vmatmul.mubr.f32.gmra.mxu0 %v331
      %v1384 = vpop.f32.mrf.mxu0
      %v1385 = vadd.f32 %v531, %v1384
      %v1386 = vpop.f32.mrf.mxu0
      %1387 = vmatprep.mubr.f32.mxu0 0.0
      %1388 = vmatmul.mubr.f32.gmra.mxu0 %v332
      %v1389 = vpop.f32.mrf.mxu0
      %v1390 = vadd.f32 %v531, %v1389
      %v1391 = vpop.f32.mrf.mxu0
      %1392 = vmatprep.mubr.f32.mxu0 0.0
      %1393 = vmatmul.mubr.f32.gmra.mxu0 %v333
      %v1394 = vpop.f32.mrf.mxu0
      %v1395 = vadd.f32 %v531, %v1394
      %v1396 = vpop.f32.mrf.mxu0
      %1397 = vmatprep.mubr.f32.mxu0 0.0
      %1398 = vmatmul.mubr.f32.gmra.mxu0 %v334
      %v1399 = vpop.f32.mrf.mxu0
      %v1400 = vadd.f32 %v531, %v1399
      %v1401 = vpop.f32.mrf.mxu0
      %1402 = vmatprep.mubr.f32.mxu0 0.0
      %1403 = vmatmul.mubr.f32.gmra.mxu0 %v335
      %v1404 = vpop.f32.mrf.mxu0
      %v1405 = vadd.f32 %v531, %v1404
      %v1406 = vpop.f32.mrf.mxu0
      %1407 = vmatprep.mubr.f32.mxu0 0.0
      %1408 = vmatmul.mubr.f32.gmra.mxu0 %v336
      %v1409 = vpop.f32.mrf.mxu0
      %v1410 = vadd.f32 %v531, %v1409
      %v1411 = vpop.f32.mrf.mxu0
      %1412 = vmatprep.mubr.f32.mxu0 0.0
      %1413 = vmatmul.mubr.f32.gmra.mxu0 %v337
      %v1414 = vpop.f32.mrf.mxu0
      %v1415 = vadd.f32 %v531, %v1414
      %v1416 = vpop.f32.mrf.mxu0
      %1417 = vmatprep.mubr.f32.mxu0 0.0
      %1418 = vmatmul.mubr.f32.gmra.mxu0 %v338
      %v1419 = vpop.f32.mrf.mxu0
      %v1420 = vadd.f32 %v531, %v1419
      %v1421 = vpop.f32.mrf.mxu0
      %1422 = vmatprep.mubr.f32.mxu0 0.0
      %1423 = vmatmul.mubr.f32.gmra.mxu0 %v339
      %v1424 = vpop.f32.mrf.mxu0
      %v1425 = vadd.f32 %v531, %v1424
      %v1426 = vpop.f32.mrf.mxu0
      %1427 = vmatprep.mubr.f32.mxu0 0.0
      %1428 = vmatmul.mubr.f32.gmra.mxu0 %v340
      %v1429 = vpop.f32.mrf.mxu0
      %v1430 = vadd.f32 %v531, %v1429
      %v1431 = vpop.f32.mrf.mxu0
      %1432 = vmatprep.mubr.f32.mxu0 0.0
      %1433 = vmatmul.mubr.f32.gmra.mxu0 %v341
      %v1434 = vpop.f32.mrf.mxu0
      %v1435 = vadd.f32 %v531, %v1434
      %v1436 = vpop.f32.mrf.mxu0
      %1437 = vmatprep.mubr.f32.mxu0 0.0
      %1438 = vmatmul.mubr.f32.gmra.mxu0 %v342
      %v1439 = vpop.f32.mrf.mxu0
      %v1440 = vadd.f32 %v531, %v1439
      %v1441 = vpop.f32.mrf.mxu0
      %1442 = vmatprep.mubr.f32.mxu0 0.0
      %1443 = vmatmul.mubr.f32.gmra.mxu0 %v343
      %v1444 = vpop.f32.mrf.mxu0
      %v1445 = vadd.f32 %v531, %v1444
      %v1446 = vpop.f32.mrf.mxu0
      %1447 = vmatprep.mubr.f32.mxu0 0.0
      %1448 = vmatmul.mubr.f32.gmra.mxu0 %v344
      %v1449 = vpop.f32.mrf.mxu0
      %v1450 = vadd.f32 %v531, %v1449
      %v1451 = vpop.f32.mrf.mxu0
      %1452 = vmatprep.mubr.f32.mxu0 0.0
      %1453 = vmatmul.mubr.f32.gmra.mxu0 %v345
      %v1454 = vpop.f32.mrf.mxu0
      %v1455 = vadd.f32 %v531, %v1454
      %v1456 = vpop.f32.mrf.mxu0
      %1457 = vmatprep.mubr.f32.mxu0 0.0
      %1458 = vmatmul.mubr.f32.gmra.mxu0 %v346
      %v1459 = vpop.f32.mrf.mxu0
      %v1460 = vadd.f32 %v531, %v1459
      %v1461 = vpop.f32.mrf.mxu0
      %1462 = vmatprep.mubr.f32.mxu0 0.0
      %1463 = vmatmul.mubr.f32.gmra.mxu0 %v347
      %v1464 = vpop.f32.mrf.mxu0
      %v1465 = vadd.f32 %v531, %v1464
      %v1466 = vpop.f32.mrf.mxu0
      %1467 = vmatprep.mubr.f32.mxu0 0.0
      %1468 = vmatmul.mubr.f32.gmra.mxu0 %v348
      %v1469 = vpop.f32.mrf.mxu0
      %v1470 = vadd.f32 %v531, %v1469
      %v1471 = vpop.f32.mrf.mxu0
      %1472 = vmatprep.mubr.f32.mxu0 0.0
      %1473 = vmatmul.mubr.f32.gmra.mxu0 %v349
      %v1474 = vpop.f32.mrf.mxu0
      %v1475 = vadd.f32 %v531, %v1474
      %v1476 = vpop.f32.mrf.mxu0
      %1477 = vmatprep.mubr.f32.mxu0 0.0
      %1478 = vmatmul.mubr.f32.gmra.mxu0 %v350
      %v1479 = vpop.f32.mrf.mxu0
      %v1480 = vadd.f32 %v531, %v1479
      %v1481 = vpop.f32.mrf.mxu0
      %1482 = vmatprep.mubr.f32.mxu0 0.0
      %1483 = vmatmul.mubr.f32.gmra.mxu0 %v351
      %v1484 = vpop.f32.mrf.mxu0
      %v1485 = vadd.f32 %v531, %v1484
      %v1486 = vpop.f32.mrf.mxu0
      %1487 = vmatprep.mubr.f32.mxu0 0.0
      %1488 = vmatmul.mubr.f32.gmra.mxu0 %v352
      %v1489 = vpop.f32.mrf.mxu0
      %v1490 = vadd.f32 %v531, %v1489
      %v1491 = vpop.f32.mrf.mxu0
      %1492 = vmatprep.mubr.f32.mxu0 0.0
      %1493 = vmatmul.mubr.f32.gmra.mxu0 %v353
      %v1494 = vpop.f32.mrf.mxu0
      %v1495 = vadd.f32 %v531, %v1494
      %v1496 = vpop.f32.mrf.mxu0
      %1497 = vmatprep.mubr.f32.mxu0 0.0
      %1498 = vmatmul.mubr.f32.gmra.mxu0 %v354
      %v1499 = vpop.f32.mrf.mxu0
      %v1500 = vadd.f32 %v531, %v1499
      %v1501 = vpop.f32.mrf.mxu0
      %1502 = vmatprep.mubr.f32.mxu0 0.0
      %1503 = vmatmul.mubr.f32.gmra.mxu0 %v355
      %v1504 = vpop.f32.mrf.mxu0
      %v1505 = vadd.f32 %v531, %v1504
      %v1506 = vpop.f32.mrf.mxu0
      %1507 = vmatprep.mubr.f32.mxu0 0.0
      %1508 = vmatmul.mubr.f32.gmra.mxu0 %v356
      %v1509 = vpop.f32.mrf.mxu0
      %v1510 = vadd.f32 %v531, %v1509
      %v1511 = vpop.f32.mrf.mxu0
      %1512 = vmatprep.mubr.f32.mxu0 0.0
      %1513 = vmatmul.mubr.f32.gmra.mxu0 %v357
      %v1514 = vpop.f32.mrf.mxu0
      %v1515 = vadd.f32 %v531, %v1514
      %v1516 = vpop.f32.mrf.mxu0
      %1517 = vmatprep.mubr.f32.mxu0 0.0
      %1518 = vmatmul.mubr.f32.gmra.mxu0 %v358
      %v1519 = vpop.f32.mrf.mxu0
      %v1520 = vadd.f32 %v531, %v1519
      %v1521 = vpop.f32.mrf.mxu0
      %1522 = vmatprep.mubr.f32.mxu0 0.0
      %1523 = vmatmul.mubr.f32.gmra.mxu0 %v359
      %v1524 = vpop.f32.mrf.mxu0
      %v1525 = vadd.f32 %v531, %v1524
      %v1526 = vpop.f32.mrf.mxu0
      %1527 = vmatprep.mubr.f32.mxu0 0.0
      %1528 = vmatmul.mubr.f32.gmra.mxu0 %v360
      %v1529 = vpop.f32.mrf.mxu0
      %v1530 = vadd.f32 %v531, %v1529
      %v1531 = vpop.f32.mrf.mxu0
      %1532 = vmatprep.mubr.f32.mxu0 0.0
      %1533 = vmatmul.mubr.f32.gmra.mxu0 %v361
      %v1534 = vpop.f32.mrf.mxu0
      %v1535 = vadd.f32 %v531, %v1534
      %v1536 = vpop.f32.mrf.mxu0
      %1537 = vmatprep.mubr.f32.mxu0 0.0
      %1538 = vmatmul.mubr.f32.gmra.mxu0 %v362
      %v1539 = vpop.f32.mrf.mxu0
      %v1540 = vadd.f32 %v531, %v1539
      %v1541 = vpop.f32.mrf.mxu0
      %1542 = vmatprep.mubr.f32.mxu0 0.0
      %1543 = vmatmul.mubr.f32.gmra.mxu0 %v363
      %v1544 = vpop.f32.mrf.mxu0
      %v1545 = vadd.f32 %v531, %v1544
      %v1546 = vpop.f32.mrf.mxu0
      %1547 = vmatprep.mubr.f32.mxu0 0.0
      %1548 = vmatmul.mubr.f32.gmra.mxu0 %v364
      %v1549 = vpop.f32.mrf.mxu0
      %v1550 = vadd.f32 %v531, %v1549
      %v1551 = vpop.f32.mrf.mxu0
      %1552 = vmatprep.mubr.f32.mxu0 0.0
      %1553 = vmatmul.mubr.f32.gmra.mxu0 %v365
      %v1554 = vpop.f32.mrf.mxu0
      %v1555 = vadd.f32 %v531, %v1554
      %v1556 = vpop.f32.mrf.mxu0
      %1557 = vmatprep.mubr.f32.mxu0 0.0
      %1558 = vmatmul.mubr.f32.gmra.mxu0 %v366
      %v1559 = vpop.f32.mrf.mxu0
      %v1560 = vadd.f32 %v531, %v1559
      %v1561 = vpop.f32.mrf.mxu0
      %1562 = vmatprep.mubr.f32.mxu0 0.0
      %1563 = vmatmul.mubr.f32.gmra.mxu0 %v367
      %v1564 = vpop.f32.mrf.mxu0
      %v1565 = vadd.f32 %v531, %v1564
      %v1566 = vpop.f32.mrf.mxu0
      %1567 = vmatprep.mubr.f32.mxu0 0.0
      %1568 = vmatmul.mubr.f32.gmra.mxu0 %v368
      %v1569 = vpop.f32.mrf.mxu0
      %v1570 = vadd.f32 %v531, %v1569
      %v1571 = vpop.f32.mrf.mxu0
      %1572 = vmatprep.mubr.f32.mxu0 0.0
      %1573 = vmatmul.mubr.f32.gmra.mxu0 %v369
      %v1574 = vpop.f32.mrf.mxu0
      %v1575 = vadd.f32 %v531, %v1574
      %v1576 = vpop.f32.mrf.mxu0
      %1577 = vmatprep.mubr.f32.mxu0 0.0
      %1578 = vmatmul.mubr.f32.gmra.mxu0 %v370
      %v1579 = vpop.f32.mrf.mxu0
      %v1580 = vadd.f32 %v531, %v1579
      %v1581 = vpop.f32.mrf.mxu0
      %1582 = vmatprep.mubr.f32.mxu0 0.0
      %1583 = vmatmul.mubr.f32.gmra.mxu0 %v371
      %v1584 = vpop.f32.mrf.mxu0
      %v1585 = vadd.f32 %v531, %v1584
      %v1586 = vpop.f32.mrf.mxu0
      %1587 = vmatprep.mubr.f32.mxu0 0.0
      %1588 = vmatmul.mubr.f32.gmra.mxu0 %v372
      %v1589 = vpop.f32.mrf.mxu0
      %v1590 = vadd.f32 %v531, %v1589
      %v1591 = vpop.f32.mrf.mxu0
      %1592 = vmatprep.mubr.f32.mxu0 0.0
      %1593 = vmatmul.mubr.f32.gmra.mxu0 %v373
      %v1594 = vpop.f32.mrf.mxu0
      %v1595 = vadd.f32 %v531, %v1594
      %v1596 = vpop.f32.mrf.mxu0
      %1597 = vmatprep.mubr.f32.mxu0 0.0
      %1598 = vmatmul.mubr.f32.gmra.mxu0 %v374
      %v1599 = vpop.f32.mrf.mxu0
      %v1600 = vadd.f32 %v531, %v1599
      %v1601 = vpop.f32.mrf.mxu0
      %1602 = vmatprep.mubr.f32.mxu0 0.0
      %1603 = vmatmul.mubr.f32.gmra.mxu0 %v375
      %v1604 = vpop.f32.mrf.mxu0
      %v1605 = vadd.f32 %v531, %v1604
      %v1606 = vpop.f32.mrf.mxu0
      %1607 = vmatprep.mubr.f32.mxu0 0.0
      %1608 = vmatmul.mubr.f32.gmra.mxu0 %v376
      %v1609 = vpop.f32.mrf.mxu0
      %v1610 = vadd.f32 %v531, %v1609
      %v1611 = vpop.f32.mrf.mxu0
      %1612 = vmatprep.mubr.f32.mxu0 0.0
      %1613 = vmatmul.mubr.f32.gmra.mxu0 %v377
      %v1614 = vpop.f32.mrf.mxu0
      %v1615 = vadd.f32 %v531, %v1614
      %v1616 = vpop.f32.mrf.mxu0
      %1617 = vmatprep.mubr.f32.mxu0 0.0
      %1618 = vmatmul.mubr.f32.gmra.mxu0 %v378
      %v1619 = vpop.f32.mrf.mxu0
      %v1620 = vadd.f32 %v531, %v1619
      %v1621 = vpop.f32.mrf.mxu0
      %1622 = vmatprep.mubr.f32.mxu0 0.0
      %1623 = vmatmul.mubr.f32.gmra.mxu0 %v379
      %v1624 = vpop.f32.mrf.mxu0
      %v1625 = vadd.f32 %v531, %v1624
      %v1626 = vpop.f32.mrf.mxu0
      %1627 = vmatprep.mubr.f32.mxu0 0.0
      %1628 = vmatmul.mubr.f32.gmra.mxu0 %v380
      %v1629 = vpop.f32.mrf.mxu0
      %v1630 = vadd.f32 %v531, %v1629
      %v1631 = vpop.f32.mrf.mxu0
      %1632 = vmatprep.mubr.f32.mxu0 0.0
      %1633 = vmatmul.mubr.f32.gmra.mxu0 %v381
      %v1634 = vpop.f32.mrf.mxu0
      %v1635 = vadd.f32 %v531, %v1634
      %v1636 = vpop.f32.mrf.mxu0
      %1637 = vmatprep.mubr.f32.mxu0 0.0
      %1638 = vmatmul.mubr.f32.gmra.mxu0 %v382
      %v1639 = vpop.f32.mrf.mxu0
      %v1640 = vadd.f32 %v531, %v1639
      %v1641 = vpop.f32.mrf.mxu0
      %1642 = vmatprep.mubr.f32.mxu0 0.0
      %1643 = vmatmul.mubr.f32.gmra.mxu0 %v383
      %v1644 = vpop.f32.mrf.mxu0
      %v1645 = vadd.f32 %v531, %v1644
      %v1646 = vpop.f32.mrf.mxu0
      %1647 = vmatprep.mubr.f32.mxu0 0.0
      %1648 = vmatmul.mubr.f32.gmra.mxu0 %v384
      %v1649 = vpop.f32.mrf.mxu0
      %v1650 = vadd.f32 %v531, %v1649
      %v1651 = vpop.f32.mrf.mxu0
      %1652 = vmatprep.mubr.f32.mxu0 0.0
      %1653 = vmatmul.mubr.f32.gmra.mxu0 %v385
      %v1654 = vpop.f32.mrf.mxu0
      %v1655 = vadd.f32 %v531, %v1654
      %v1656 = vpop.f32.mrf.mxu0
      %1657 = vmatprep.mubr.f32.mxu0 0.0
      %1658 = vmatmul.mubr.f32.gmra.mxu0 %v386
      %v1659 = vpop.f32.mrf.mxu0
      %v1660 = vadd.f32 %v531, %v1659
      %v1661 = vpop.f32.mrf.mxu0
      %1662 = vmatprep.mubr.f32.mxu0 0.0
      %1663 = vmatmul.mubr.f32.gmra.mxu0 %v387
      %v1664 = vpop.f32.mrf.mxu0
      %v1665 = vadd.f32 %v531, %v1664
      %v1666 = vpop.f32.mrf.mxu0
      %1667 = vmatprep.mubr.f32.mxu0 0.0
      %1668 = vmatmul.mubr.f32.gmra.mxu0 %v388
      %v1669 = vpop.f32.mrf.mxu0
      %v1670 = vadd.f32 %v531, %v1669
      %v1671 = vpop.f32.mrf.mxu0
      %1672 = vmatprep.mubr.f32.mxu0 0.0
      %1673 = vmatmul.mubr.f32.gmra.mxu0 %v389
      %v1674 = vpop.f32.mrf.mxu0
      %v1675 = vadd.f32 %v531, %v1674
      %v1676 = vpop.f32.mrf.mxu0
      %1677 = vmatprep.mubr.f32.mxu0 0.0
      %1678 = vmatmul.mubr.f32.gmra.mxu0 %v390
      %v1679 = vpop.f32.mrf.mxu0
      %v1680 = vadd.f32 %v531, %v1679
      %v1681 = vpop.f32.mrf.mxu0
      %1682 = vmatprep.mubr.f32.mxu0 0.0
      %1683 = vmatmul.mubr.f32.gmra.mxu0 %v391
      %v1684 = vpop.f32.mrf.mxu0
      %v1685 = vadd.f32 %v531, %v1684
      %v1686 = vpop.f32.mrf.mxu0
      %1687 = vmatprep.mubr.f32.mxu0 0.0
      %1688 = vmatmul.mubr.f32.gmra.mxu0 %v392
      %v1689 = vpop.f32.mrf.mxu0
      %v1690 = vadd.f32 %v531, %v1689
      %v1691 = vpop.f32.mrf.mxu0
      %1692 = vmatprep.mubr.f32.mxu0 0.0
      %1693 = vmatmul.mubr.f32.gmra.mxu0 %v393
      %v1694 = vpop.f32.mrf.mxu0
      %v1695 = vadd.f32 %v531, %v1694
      %v1696 = vpop.f32.mrf.mxu0
      %1697 = vmatprep.mubr.f32.mxu0 0.0
      %1698 = vmatmul.mubr.f32.gmra.mxu0 %v394
      %v1699 = vpop.f32.mrf.mxu0
      %v1700 = vadd.f32 %v531, %v1699
      %v1701 = vpop.f32.mrf.mxu0
      %1702 = vmatprep.mubr.f32.mxu0 0.0
      %1703 = vmatmul.mubr.f32.gmra.mxu0 %v395
      %v1704 = vpop.f32.mrf.mxu0
      %v1705 = vadd.f32 %v531, %v1704
      %v1706 = vpop.f32.mrf.mxu0
      %1707 = vmatprep.mubr.f32.mxu0 0.0
      %1708 = vmatmul.mubr.f32.gmra.mxu0 %v396
      %v1709 = vpop.f32.mrf.mxu0
      %v1710 = vadd.f32 %v531, %v1709
      %v1711 = vpop.f32.mrf.mxu0
      %1712 = vmatprep.mubr.f32.mxu0 0.0
      %1713 = vmatmul.mubr.f32.gmra.mxu0 %v397
      %v1714 = vpop.f32.mrf.mxu0
      %v1715 = vadd.f32 %v531, %v1714
      %v1716 = vpop.f32.mrf.mxu0
      %1717 = vmatprep.mubr.f32.mxu0 0.0
      %1718 = vmatmul.mubr.f32.gmra.mxu0 %v398
      %v1719 = vpop.f32.mrf.mxu0
      %v1720 = vadd.f32 %v531, %v1719
      %v1721 = vpop.f32.mrf.mxu0
      %1722 = vmatprep.mubr.f32.mxu0 0.0
      %1723 = vmatmul.mubr.f32.gmra.mxu0 %v399
      %v1724 = vpop.f32.mrf.mxu0
      %v1725 = vadd.f32 %v531, %v1724
      %v1726 = vpop.f32.mrf.mxu0
      %1727 = vmatprep.mubr.f32.mxu0 0.0
      %1728 = vmatmul.mubr.f32.gmra.mxu0 %v400
      %v1729 = vpop.f32.mrf.mxu0
      %v1730 = vadd.f32 %v531, %v1729
      %v1731 = vpop.f32.mrf.mxu0
      %1732 = vmatprep.mubr.f32.mxu0 0.0
      %1733 = vmatmul.mubr.f32.gmra.mxu0 %v401
      %v1734 = vpop.f32.mrf.mxu0
      %v1735 = vadd.f32 %v531, %v1734
      %v1736 = vpop.f32.mrf.mxu0
      %1737 = vmatprep.mubr.f32.mxu0 0.0
      %1738 = vmatmul.mubr.f32.gmra.mxu0 %v402
      %v1739 = vpop.f32.mrf.mxu0
      %v1740 = vadd.f32 %v531, %v1739
      %v1741 = vpop.f32.mrf.mxu0
      %1742 = vmatprep.mubr.f32.mxu0 0.0
      %1743 = vmatmul.mubr.f32.gmra.mxu0 %v403
      %v1744 = vpop.f32.mrf.mxu0
      %v1745 = vadd.f32 %v531, %v1744
      %v1746 = vpop.f32.mrf.mxu0
      %1747 = vmatprep.mubr.f32.mxu0 0.0
      %1748 = vmatmul.mubr.f32.gmra.mxu0 %v404
      %v1749 = vpop.f32.mrf.mxu0
      %v1750 = vadd.f32 %v531, %v1749
      %v1751 = vpop.f32.mrf.mxu0
      %1752 = vmatprep.mubr.f32.mxu0 0.0
      %1753 = vmatmul.mubr.f32.gmra.mxu0 %v405
      %v1754 = vpop.f32.mrf.mxu0
      %v1755 = vadd.f32 %v531, %v1754
      %v1756 = vpop.f32.mrf.mxu0
      %1757 = vmatprep.mubr.f32.mxu0 0.0
      %1758 = vmatmul.mubr.f32.gmra.mxu0 %v406
      %v1759 = vpop.f32.mrf.mxu0
      %v1760 = vadd.f32 %v531, %v1759
      %v1761 = vpop.f32.mrf.mxu0
      %1762 = vmatprep.mubr.f32.mxu0 0.0
      %1763 = vmatmul.mubr.f32.gmra.mxu0 %v407
      %v1764 = vpop.f32.mrf.mxu0
      %v1765 = vadd.f32 %v531, %v1764
      %v1766 = vpop.f32.mrf.mxu0
      %1767 = vmatprep.mubr.f32.mxu0 0.0
      %1768 = vmatmul.mubr.f32.gmra.mxu0 %v408
      %v1769 = vpop.f32.mrf.mxu0
      %v1770 = vadd.f32 %v531, %v1769
      %v1771 = vpop.f32.mrf.mxu0
      %1772 = vmatprep.mubr.f32.mxu0 0.0
      %1773 = vmatmul.mubr.f32.gmra.mxu0 %v409
      %v1774 = vpop.f32.mrf.mxu0
      %v1775 = vadd.f32 %v531, %v1774
      %v1776 = vpop.f32.mrf.mxu0
      %1777 = vmatprep.mubr.f32.mxu0 0.0
      %1778 = vmatmul.mubr.f32.gmra.mxu0 %v410
      %v1779 = vpop.f32.mrf.mxu0
      %v1780 = vadd.f32 %v531, %v1779
      %v1781 = vpop.f32.mrf.mxu0
      %1782 = vmatprep.mubr.f32.mxu0 0.0
      %1783 = vmatmul.mubr.f32.gmra.mxu0 %v411
      %v1784 = vpop.f32.mrf.mxu0
      %v1785 = vadd.f32 %v531, %v1784
      %v1786 = vpop.f32.mrf.mxu0
      %1787 = vmatprep.mubr.f32.mxu0 0.0
      %1788 = vmatmul.mubr.f32.gmra.mxu0 %v412
      %v1789 = vpop.f32.mrf.mxu0
      %v1790 = vadd.f32 %v531, %v1789
      %v1791 = vpop.f32.mrf.mxu0
      %1792 = vmatprep.mubr.f32.mxu0 0.0
      %1793 = vmatmul.mubr.f32.gmra.mxu0 %v413
      %v1794 = vpop.f32.mrf.mxu0
      %v1795 = vadd.f32 %v531, %v1794
      %v1796 = vpop.f32.mrf.mxu0
      %1797 = vmatprep.mubr.f32.mxu0 0.0
      %1798 = vmatmul.mubr.f32.gmra.mxu0 %v414
      %v1799 = vpop.f32.mrf.mxu0
      %v1800 = vadd.f32 %v531, %v1799
      %v1801 = vpop.f32.mrf.mxu0
      %1802 = vmatprep.mubr.f32.mxu0 0.0
      %1803 = vmatmul.mubr.f32.gmra.mxu0 %v415
      %v1804 = vpop.f32.mrf.mxu0
      %v1805 = vadd.f32 %v531, %v1804
      %v1806 = vpop.f32.mrf.mxu0
      %1807 = vmatprep.mubr.f32.mxu0 0.0
      %1808 = vmatmul.mubr.f32.gmra.mxu0 %v416
      %v1809 = vpop.f32.mrf.mxu0
      %v1810 = vadd.f32 %v531, %v1809
      %v1811 = vpop.f32.mrf.mxu0
      %1812 = vmatprep.mubr.f32.mxu0 0.0
      %1813 = vmatmul.mubr.f32.gmra.mxu0 %v417
      %v1814 = vpop.f32.mrf.mxu0
      %v1815 = vadd.f32 %v531, %v1814
      %v1816 = vpop.f32.mrf.mxu0
      %1817 = vmatprep.mubr.f32.mxu0 0.0
      %1818 = vmatmul.mubr.f32.gmra.mxu0 %v418
      %v1819 = vpop.f32.mrf.mxu0
      %v1820 = vadd.f32 %v531, %v1819
      %v1821 = vpop.f32.mrf.mxu0
      %1822 = vmatprep.mubr.f32.mxu0 0.0
      %1823 = vmatmul.mubr.f32.gmra.mxu0 %v419
      %v1824 = vpop.f32.mrf.mxu0
      %v1825 = vadd.f32 %v531, %v1824
      %v1826 = vpop.f32.mrf.mxu0
      %1827 = vmatprep.mubr.f32.mxu0 0.0
      %1828 = vmatmul.mubr.f32.gmra.mxu0 %v420
      %v1829 = vpop.f32.mrf.mxu0
      %v1830 = vadd.f32 %v531, %v1829
      %v1831 = vpop.f32.mrf.mxu0
      %1832 = vmatprep.mubr.f32.mxu0 0.0
      %1833 = vmatmul.mubr.f32.gmra.mxu0 %v421
      %v1834 = vpop.f32.mrf.mxu0
      %v1835 = vadd.f32 %v531, %v1834
      %v1836 = vpop.f32.mrf.mxu0
      %1837 = vmatprep.mubr.f32.mxu0 0.0
      %1838 = vmatmul.mubr.f32.gmra.mxu0 %v422
      %v1839 = vpop.f32.mrf.mxu0
      %v1840 = vadd.f32 %v531, %v1839
      %v1841 = vpop.f32.mrf.mxu0
      %1842 = vmatprep.mubr.f32.mxu0 0.0
      %1843 = vmatmul.mubr.f32.gmra.mxu0 %v423
      %v1844 = vpop.f32.mrf.mxu0
      %v1845 = vadd.f32 %v531, %v1844
      %v1846 = vpop.f32.mrf.mxu0
      %1847 = vmatprep.mubr.f32.mxu0 0.0
      %1848 = vmatmul.mubr.f32.gmra.mxu0 %v424
      %v1849 = vpop.f32.mrf.mxu0
      %v1850 = vadd.f32 %v531, %v1849
      %v1851 = vpop.f32.mrf.mxu0
      %1852 = vmatprep.mubr.f32.mxu0 0.0
      %1853 = vmatmul.mubr.f32.gmra.mxu0 %v425
      %v1854 = vpop.f32.mrf.mxu0
      %v1855 = vadd.f32 %v531, %v1854
      %v1856 = vpop.f32.mrf.mxu0
      %1857 = vmatprep.mubr.f32.mxu0 0.0
      %1858 = vmatmul.mubr.f32.gmra.mxu0 %v426
      %v1859 = vpop.f32.mrf.mxu0
      %v1860 = vadd.f32 %v531, %v1859
      %v1861 = vpop.f32.mrf.mxu0
      %1862 = vmatprep.mubr.f32.mxu0 0.0
      %1863 = vmatmul.mubr.f32.gmra.mxu0 %v427
      %v1864 = vpop.f32.mrf.mxu0
      %v1865 = vadd.f32 %v531, %v1864
      %v1866 = vpop.f32.mrf.mxu0
      %1867 = vmatprep.mubr.f32.mxu0 0.0
      %1868 = vmatmul.mubr.f32.gmra.mxu0 %v428
      %v1869 = vpop.f32.mrf.mxu0
      %v1870 = vadd.f32 %v531, %v1869
      %v1871 = vpop.f32.mrf.mxu0
      %1872 = vmatprep.mubr.f32.mxu0 0.0
      %1873 = vmatmul.mubr.f32.gmra.mxu0 %v429
      %v1874 = vpop.f32.mrf.mxu0
      %v1875 = vadd.f32 %v531, %v1874
      %v1876 = vpop.f32.mrf.mxu0
      %1877 = vmatprep.mubr.f32.mxu0 0.0
      %1878 = vmatmul.mubr.f32.gmra.mxu0 %v430
      %v1879 = vpop.f32.mrf.mxu0
      %v1880 = vadd.f32 %v531, %v1879
      %v1881 = vpop.f32.mrf.mxu0
      %1882 = vmatprep.mubr.f32.mxu0 0.0
      %1883 = vmatmul.mubr.f32.gmra.mxu0 %v431
      %v1884 = vpop.f32.mrf.mxu0
      %v1885 = vadd.f32 %v531, %v1884
      %v1886 = vpop.f32.mrf.mxu0
      %1887 = vmatprep.mubr.f32.mxu0 0.0
      %1888 = vmatmul.mubr.f32.gmra.mxu0 %v432
      %v1889 = vpop.f32.mrf.mxu0
      %v1890 = vadd.f32 %v531, %v1889
      %v1891 = vpop.f32.mrf.mxu0
      %1892 = vmatprep.mubr.f32.mxu0 0.0
      %1893 = vmatmul.mubr.f32.gmra.mxu0 %v433
      %v1894 = vpop.f32.mrf.mxu0
      %v1895 = vadd.f32 %v531, %v1894
      %v1896 = vpop.f32.mrf.mxu0
      %1897 = vmatprep.mubr.f32.mxu0 0.0
      %1898 = vmatmul.mubr.f32.gmra.mxu0 %v434
      %v1899 = vpop.f32.mrf.mxu0
      %v1900 = vadd.f32 %v531, %v1899
      %v1901 = vpop.f32.mrf.mxu0
      %1902 = vmatprep.mubr.f32.mxu0 0.0
      %1903 = vmatmul.mubr.f32.gmra.mxu0 %v435
      %v1904 = vpop.f32.mrf.mxu0
      %v1905 = vadd.f32 %v531, %v1904
      %v1906 = vpop.f32.mrf.mxu0
      %1907 = vmatprep.mubr.f32.mxu0 0.0
      %1908 = vmatmul.mubr.f32.gmra.mxu0 %v436
      %v1909 = vpop.f32.mrf.mxu0
      %v1910 = vadd.f32 %v531, %v1909
      %v1911 = vpop.f32.mrf.mxu0
      %1912 = vmatprep.mubr.f32.mxu0 0.0
      %1913 = vmatmul.mubr.f32.gmra.mxu0 %v437
      %v1914 = vpop.f32.mrf.mxu0
      %v1915 = vadd.f32 %v531, %v1914
      %v1916 = vpop.f32.mrf.mxu0
      %1917 = vmatprep.mubr.f32.mxu0 0.0
      %1918 = vmatmul.mubr.f32.gmra.mxu0 %v438
      %v1919 = vpop.f32.mrf.mxu0
      %v1920 = vadd.f32 %v531, %v1919
      %v1921 = vpop.f32.mrf.mxu0
      %1922 = vmatprep.mubr.f32.mxu0 0.0
      %1923 = vmatmul.mubr.f32.gmra.mxu0 %v439
      %v1924 = vpop.f32.mrf.mxu0
      %v1925 = vadd.f32 %v531, %v1924
      %v1926 = vpop.f32.mrf.mxu0
      %1927 = vmatprep.mubr.f32.mxu0 0.0
      %1928 = vmatmul.mubr.f32.gmra.mxu0 %v440
      %v1929 = vpop.f32.mrf.mxu0
      %v1930 = vadd.f32 %v531, %v1929
      %v1931 = vpop.f32.mrf.mxu0
      %1932 = vmatprep.mubr.f32.mxu0 0.0
      %1933 = vmatmul.mubr.f32.gmra.mxu0 %v441
      %v1934 = vpop.f32.mrf.mxu0
      %v1935 = vadd.f32 %v531, %v1934
      %v1936 = vpop.f32.mrf.mxu0
      %1937 = vmatprep.mubr.f32.mxu0 0.0
      %1938 = vmatmul.mubr.f32.gmra.mxu0 %v442
      %v1939 = vpop.f32.mrf.mxu0
      %v1940 = vadd.f32 %v531, %v1939
      %v1941 = vpop.f32.mrf.mxu0
      %1942 = vmatprep.mubr.f32.mxu0 0.0
      %1943 = vmatmul.mubr.f32.gmra.mxu0 %v443
      %v1944 = vpop.f32.mrf.mxu0
      %v1945 = vadd.f32 %v531, %v1944
      %v1946 = vpop.f32.mrf.mxu0
      %1947 = vmatprep.mubr.f32.mxu0 0.0
      %1948 = vmatmul.mubr.f32.gmra.mxu0 %v444
      %v1949 = vpop.f32.mrf.mxu0
      %v1950 = vadd.f32 %v531, %v1949
      %v1951 = vpop.f32.mrf.mxu0
      %1952 = vmatprep.mubr.f32.mxu0 0.0
      %1953 = vmatmul.mubr.f32.gmra.mxu0 %v445
      %v1954 = vpop.f32.mrf.mxu0
      %v1955 = vadd.f32 %v531, %v1954
      %v1956 = vpop.f32.mrf.mxu0
      %1957 = vmatprep.mubr.f32.mxu0 0.0
      %1958 = vmatmul.mubr.f32.gmra.mxu0 %v446
      %v1959 = vpop.f32.mrf.mxu0
      %v1960 = vadd.f32 %v531, %v1959
      %v1961 = vpop.f32.mrf.mxu0
      %1962 = vmatprep.mubr.f32.mxu0 0.0
      %1963 = vmatmul.mubr.f32.gmra.mxu0 %v447
      %v1964 = vpop.f32.mrf.mxu0
      %v1965 = vadd.f32 %v531, %v1964
      %v1966 = vpop.f32.mrf.mxu0
      %1967 = vmatprep.mubr.f32.mxu0 0.0
      %1968 = vmatmul.mubr.f32.gmra.mxu0 %v448
      %v1969 = vpop.f32.mrf.mxu0
      %v1970 = vadd.f32 %v531, %v1969
      %v1971 = vpop.f32.mrf.mxu0
      %1972 = vmatprep.mubr.f32.mxu0 0.0
      %1973 = vmatmul.mubr.f32.gmra.mxu0 %v449
      %v1974 = vpop.f32.mrf.mxu0
      %v1975 = vadd.f32 %v531, %v1974
      %v1976 = vpop.f32.mrf.mxu0
      %1977 = vmatprep.mubr.f32.mxu0 0.0
      %1978 = vmatmul.mubr.f32.gmra.mxu0 %v450
      %v1979 = vpop.f32.mrf.mxu0
      %v1980 = vadd.f32 %v531, %v1979
      %v1981 = vpop.f32.mrf.mxu0
      %1982 = vmatprep.mubr.f32.mxu0 0.0
      %1983 = vmatmul.mubr.f32.gmra.mxu0 %v451
      %v1984 = vpop.f32.mrf.mxu0
      %v1985 = vadd.f32 %v531, %v1984
      %v1986 = vpop.f32.mrf.mxu0
      %1987 = vmatprep.mubr.f32.mxu0 0.0
      %1988 = vmatmul.mubr.f32.gmra.mxu0 %v452
      %v1989 = vpop.f32.mrf.mxu0
      %v1990 = vadd.f32 %v531, %v1989
      %v1991 = vpop.f32.mrf.mxu0
      %1992 = vmatprep.mubr.f32.mxu0 0.0
      %1993 = vmatmul.mubr.f32.gmra.mxu0 %v453
      %v1994 = vpop.f32.mrf.mxu0
      %v1995 = vadd.f32 %v531, %v1994
      %v1996 = vpop.f32.mrf.mxu0
      %1997 = vmatprep.mubr.f32.mxu0 0.0
      %1998 = vmatmul.mubr.f32.gmra.mxu0 %v454
      %v1999 = vpop.f32.mrf.mxu0
      %v2000 = vadd.f32 %v531, %v1999
      %v2001 = vpop.f32.mrf.mxu0
      %2002 = vmatprep.mubr.f32.mxu0 0.0
      %2003 = vmatmul.mubr.f32.gmra.mxu0 %v455
      %v2004 = vpop.f32.mrf.mxu0
      %v2005 = vadd.f32 %v531, %v2004
      %v2006 = vpop.f32.mrf.mxu0
      %2007 = vmatprep.mubr.f32.mxu0 0.0
      %2008 = vmatmul.mubr.f32.gmra.mxu0 %v456
      %v2009 = vpop.f32.mrf.mxu0
      %v2010 = vadd.f32 %v531, %v2009
      %v2011 = vpop.f32.mrf.mxu0
      %2012 = vmatprep.mubr.f32.mxu0 0.0
      %2013 = vmatmul.mubr.f32.gmra.mxu0 %v457
      %v2014 = vpop.f32.mrf.mxu0
      %v2015 = vadd.f32 %v531, %v2014
      %v2016 = vpop.f32.mrf.mxu0
      %2017 = vmatprep.mubr.f32.mxu0 0.0
      %2018 = vmatmul.mubr.f32.gmra.mxu0 %v458
      %v2019 = vpop.f32.mrf.mxu0
      %v2020 = vadd.f32 %v531, %v2019
      %v2021 = vpop.f32.mrf.mxu0
      %2022 = vmatprep.mubr.f32.mxu0 0.0
      %2023 = vmatmul.mubr.f32.gmra.mxu0 %v459
      %v2024 = vpop.f32.mrf.mxu0
      %v2025 = vadd.f32 %v531, %v2024
      %v2026 = vpop.f32.mrf.mxu0
      %2027 = vmatprep.mubr.f32.mxu0 0.0
      %2028 = vmatmul.mubr.f32.gmra.mxu0 %v460
      %v2029 = vpop.f32.mrf.mxu0
      %v2030 = vadd.f32 %v531, %v2029
      %v2031 = vpop.f32.mrf.mxu0
      %2032 = vmatprep.mubr.f32.mxu0 0.0
      %2033 = vmatmul.mubr.f32.gmra.mxu0 %v461
      %v2034 = vpop.f32.mrf.mxu0
      %v2035 = vadd.f32 %v531, %v2034
      %v2036 = vpop.f32.mrf.mxu0
      %2037 = vmatprep.mubr.f32.mxu0 0.0
      %2038 = vmatmul.mubr.f32.gmra.mxu0 %v462
      %v2039 = vpop.f32.mrf.mxu0
      %v2040 = vadd.f32 %v531, %v2039
      %v2041 = vpop.f32.mrf.mxu0
      %2042 = vmatprep.mubr.f32.mxu0 0.0
      %2043 = vmatmul.mubr.f32.gmra.mxu0 %v463
      %v2044 = vpop.f32.mrf.mxu0
      %v2045 = vadd.f32 %v531, %v2044
      %v2046 = vpop.f32.mrf.mxu0
      %2047 = vmatprep.mubr.f32.mxu0 0.0
      %2048 = vmatmul.mubr.f32.gmra.mxu0 %v464
      %v2049 = vpop.f32.mrf.mxu0
      %v2050 = vadd.f32 %v531, %v2049
      %v2051 = vpop.f32.mrf.mxu0
      %2052 = vmatprep.mubr.f32.mxu0 0.0
      %2053 = vmatmul.mubr.f32.gmra.mxu0 %v465
      %v2054 = vpop.f32.mrf.mxu0
      %v2055 = vadd.f32 %v531, %v2054
      %v2056 = vpop.f32.mrf.mxu0
      %2057 = vmatprep.mubr.f32.mxu0 0.0
      %2058 = vmatmul.mubr.f32.gmra.mxu0 %v466
      %v2059 = vpop.f32.mrf.mxu0
      %v2060 = vadd.f32 %v531, %v2059
      %v2061 = vpop.f32.mrf.mxu0
      %2062 = vmatprep.mubr.f32.mxu0 0.0
      %2063 = vmatmul.mubr.f32.gmra.mxu0 %v467
      %v2064 = vpop.f32.mrf.mxu0
      %v2065 = vadd.f32 %v531, %v2064
      %v2066 = vpop.f32.mrf.mxu0
      %2067 = vmatprep.mubr.f32.mxu0 0.0
      %2068 = vmatmul.mubr.f32.gmra.mxu0 %v468
      %v2069 = vpop.f32.mrf.mxu0
      %v2070 = vadd.f32 %v531, %v2069
      %v2071 = vpop.f32.mrf.mxu0
      %2072 = vmatprep.mubr.f32.mxu0 0.0
      %2073 = vmatmul.mubr.f32.gmra.mxu0 %v469
      %v2074 = vpop.f32.mrf.mxu0
      %v2075 = vadd.f32 %v531, %v2074
      %v2076 = vpop.f32.mrf.mxu0
      %2077 = vmatprep.mubr.f32.mxu0 0.0
      %2078 = vmatmul.mubr.f32.gmra.mxu0 %v470
      %v2079 = vpop.f32.mrf.mxu0
      %v2080 = vadd.f32 %v531, %v2079
      %v2081 = vpop.f32.mrf.mxu0
      %2082 = vmatprep.mubr.f32.mxu0 0.0
      %2083 = vmatmul.mubr.f32.gmra.mxu0 %v471
      %v2084 = vpop.f32.mrf.mxu0
      %v2085 = vadd.f32 %v531, %v2084
      %v2086 = vpop.f32.mrf.mxu0
      %2087 = vmatprep.mubr.f32.mxu0 0.0
      %2088 = vmatmul.mubr.f32.gmra.mxu0 %v472
      %v2089 = vpop.f32.mrf.mxu0
      %v2090 = vadd.f32 %v531, %v2089
      %v2091 = vpop.f32.mrf.mxu0
      %2092 = vmatprep.mubr.f32.mxu0 0.0
      %2093 = vmatmul.mubr.f32.gmra.mxu0 %v473
      %v2094 = vpop.f32.mrf.mxu0
      %v2095 = vadd.f32 %v531, %v2094
      %v2096 = vpop.f32.mrf.mxu0
      %2097 = vmatprep.mubr.f32.mxu0 0.0
      %2098 = vmatmul.mubr.f32.gmra.mxu0 %v474
      %v2099 = vpop.f32.mrf.mxu0
      %v2100 = vadd.f32 %v531, %v2099
      %v2101 = vpop.f32.mrf.mxu0
      %2102 = vmatprep.mubr.f32.mxu0 0.0
      %2103 = vmatmul.mubr.f32.gmra.mxu0 %v475
      %v2104 = vpop.f32.mrf.mxu0
      %v2105 = vadd.f32 %v531, %v2104
      %v2106 = vpop.f32.mrf.mxu0
      %2107 = vmatprep.mubr.f32.mxu0 0.0
      %2108 = vmatmul.mubr.f32.gmra.mxu0 %v476
      %v2109 = vpop.f32.mrf.mxu0
      %v2110 = vadd.f32 %v531, %v2109
      %v2111 = vpop.f32.mrf.mxu0
      %2112 = vmatprep.mubr.f32.mxu0 0.0
      %2113 = vmatmul.mubr.f32.gmra.mxu0 %v477
      %v2114 = vpop.f32.mrf.mxu0
      %v2115 = vadd.f32 %v531, %v2114
      %v2116 = vpop.f32.mrf.mxu0
      %2117 = vmatprep.mubr.f32.mxu0 0.0
      %2118 = vmatmul.mubr.f32.gmra.mxu0 %v478
      %v2119 = vpop.f32.mrf.mxu0
      %v2120 = vadd.f32 %v531, %v2119
      %v2121 = vpop.f32.mrf.mxu0
      %2122 = vmatprep.mubr.f32.mxu0 0.0
      %2123 = vmatmul.mubr.f32.gmra.mxu0 %v479
      %v2124 = vpop.f32.mrf.mxu0
      %v2125 = vadd.f32 %v531, %v2124
      %v2126 = vpop.f32.mrf.mxu0
      %2127 = vmatprep.mubr.f32.mxu0 0.0
      %2128 = vmatmul.mubr.f32.gmra.mxu0 %v480
      %v2129 = vpop.f32.mrf.mxu0
      %v2130 = vadd.f32 %v531, %v2129
      %v2131 = vpop.f32.mrf.mxu0
      %2132 = vmatprep.mubr.f32.mxu0 0.0
      %2133 = vmatmul.mubr.f32.gmra.mxu0 %v481
      %v2134 = vpop.f32.mrf.mxu0
      %v2135 = vadd.f32 %v531, %v2134
      %v2136 = vpop.f32.mrf.mxu0
      %2137 = vmatprep.mubr.f32.mxu0 0.0
      %2138 = vmatmul.mubr.f32.gmra.mxu0 %v482
      %v2139 = vpop.f32.mrf.mxu0
      %v2140 = vadd.f32 %v531, %v2139
      %v2141 = vpop.f32.mrf.mxu0
      %2142 = vmatprep.mubr.f32.mxu0 0.0
      %2143 = vmatmul.mubr.f32.gmra.mxu0 %v483
      %v2144 = vpop.f32.mrf.mxu0
      %v2145 = vadd.f32 %v531, %v2144
      %v2146 = vpop.f32.mrf.mxu0
      %2147 = vmatprep.mubr.f32.mxu0 0.0
      %2148 = vmatmul.mubr.f32.gmra.mxu0 %v484
      %v2149 = vpop.f32.mrf.mxu0
      %v2150 = vadd.f32 %v531, %v2149
      %v2151 = vpop.f32.mrf.mxu0
      %2152 = vmatprep.mubr.f32.mxu0 0.0
      %2153 = vmatmul.mubr.f32.gmra.mxu0 %v485
      %v2154 = vpop.f32.mrf.mxu0
      %v2155 = vadd.f32 %v531, %v2154
      %v2156 = vpop.f32.mrf.mxu0
      %2157 = vmatprep.mubr.f32.mxu0 0.0
      %2158 = vmatmul.mubr.f32.gmra.mxu0 %v486
      %v2159 = vpop.f32.mrf.mxu0
      %v2160 = vadd.f32 %v531, %v2159
      %v2161 = vpop.f32.mrf.mxu0
      %2162 = vmatprep.mubr.f32.mxu0 0.0
      %2163 = vmatmul.mubr.f32.gmra.mxu0 %v487
      %v2164 = vpop.f32.mrf.mxu0
      %v2165 = vadd.f32 %v531, %v2164
      %v2166 = vpop.f32.mrf.mxu0
      %2167 = vmatprep.mubr.f32.mxu0 0.0
      %2168 = vmatmul.mubr.f32.gmra.mxu0 %v488
      %v2169 = vpop.f32.mrf.mxu0
      %v2170 = vadd.f32 %v531, %v2169
      %v2171 = vpop.f32.mrf.mxu0
      %2172 = vmatprep.mubr.f32.mxu0 0.0
      %2173 = vmatmul.mubr.f32.gmra.mxu0 %v489
      %v2174 = vpop.f32.mrf.mxu0
      %v2175 = vadd.f32 %v531, %v2174
      %v2176 = vpop.f32.mrf.mxu0
      %2177 = vmatprep.mubr.f32.mxu0 0.0
      %2178 = vmatmul.mubr.f32.gmra.mxu0 %v490
      %v2179 = vpop.f32.mrf.mxu0
      %v2180 = vadd.f32 %v531, %v2179
      %v2181 = vpop.f32.mrf.mxu0
      %2182 = vmatprep.mubr.f32.mxu0 0.0
      %2183 = vmatmul.mubr.f32.gmra.mxu0 %v491
      %v2184 = vpop.f32.mrf.mxu0
      %v2185 = vadd.f32 %v531, %v2184
      %v2186 = vpop.f32.mrf.mxu0
      %2187 = vmatprep.mubr.f32.mxu0 0.0
      %2188 = vmatmul.mubr.f32.gmra.mxu0 %v492
      %v2189 = vpop.f32.mrf.mxu0
      %v2190 = vadd.f32 %v531, %v2189
      %v2191 = vpop.f32.mrf.mxu0
      %2192 = vmatprep.mubr.f32.mxu0 0.0
      %2193 = vmatmul.mubr.f32.gmra.mxu0 %v493
      %v2194 = vpop.f32.mrf.mxu0
      %v2195 = vadd.f32 %v531, %v2194
      %v2196 = vpop.f32.mrf.mxu0
      %2197 = vmatprep.mubr.f32.mxu0 0.0
      %2198 = vmatmul.mubr.f32.gmra.mxu0 %v494
      %v2199 = vpop.f32.mrf.mxu0
      %v2200 = vadd.f32 %v531, %v2199
      %v2201 = vpop.f32.mrf.mxu0
      %2202 = vmatprep.mubr.f32.mxu0 0.0
      %2203 = vmatmul.mubr.f32.gmra.mxu0 %v495
      %v2204 = vpop.f32.mrf.mxu0
      %v2205 = vadd.f32 %v531, %v2204
      %v2206 = vpop.f32.mrf.mxu0
      %2207 = vmatprep.mubr.f32.mxu0 0.0
      %2208 = vmatmul.mubr.f32.gmra.mxu0 %v496
      %v2209 = vpop.f32.mrf.mxu0
      %v2210 = vadd.f32 %v531, %v2209
      %v2211 = vpop.f32.mrf.mxu0
      %2212 = vmatprep.mubr.f32.mxu0 0.0
      %2213 = vmatmul.mubr.f32.gmra.mxu0 %v497
      %v2214 = vpop.f32.mrf.mxu0
      %v2215 = vadd.f32 %v531, %v2214
      %v2216 = vpop.f32.mrf.mxu0
      %2217 = vmatprep.mubr.f32.mxu0 0.0
      %2218 = vmatmul.mubr.f32.gmra.mxu0 %v498
      %v2219 = vpop.f32.mrf.mxu0
      %v2220 = vadd.f32 %v531, %v2219
      %v2221 = vpop.f32.mrf.mxu0
      %2222 = vmatprep.mubr.f32.mxu0 0.0
      %2223 = vmatmul.mubr.f32.gmra.mxu0 %v499
      %v2224 = vpop.f32.mrf.mxu0
      %v2225 = vadd.f32 %v531, %v2224
      %v2226 = vpop.f32.mrf.mxu0
      %2227 = vmatprep.mubr.f32.mxu0 0.0
      %2228 = vmatmul.mubr.f32.gmra.mxu0 %v500
      %v2229 = vpop.f32.mrf.mxu0
      %v2230 = vadd.f32 %v531, %v2229
      %v2231 = vpop.f32.mrf.mxu0
      %2232 = vmatprep.mubr.f32.mxu0 0.0
      %2233 = vmatmul.mubr.f32.gmra.mxu0 %v501
      %v2234 = vpop.f32.mrf.mxu0
      %v2235 = vadd.f32 %v531, %v2234
      %v2236 = vpop.f32.mrf.mxu0
      %2237 = vmatprep.mubr.f32.mxu0 0.0
      %2238 = vmatmul.mubr.f32.gmra.mxu0 %v502
      %v2239 = vpop.f32.mrf.mxu0
      %v2240 = vadd.f32 %v531, %v2239
      %v2241 = vpop.f32.mrf.mxu0
      %2242 = vmatprep.mubr.f32.mxu0 0.0
      %2243 = vmatmul.mubr.f32.gmra.mxu0 %v503
      %v2244 = vpop.f32.mrf.mxu0
      %v2245 = vadd.f32 %v531, %v2244
      %v2246 = vpop.f32.mrf.mxu0
      %2247 = vmatprep.mubr.f32.mxu0 0.0
      %2248 = vmatmul.mubr.f32.gmra.mxu0 %v504
      %v2249 = vpop.f32.mrf.mxu0
      %v2250 = vadd.f32 %v531, %v2249
      %v2251 = vpop.f32.mrf.mxu0
      %2252 = vmatprep.mubr.f32.mxu0 0.0
      %2253 = vmatmul.mubr.f32.gmra.mxu0 %v505
      %v2254 = vpop.f32.mrf.mxu0
      %v2255 = vadd.f32 %v531, %v2254
      %v2256 = vpop.f32.mrf.mxu0
      %2257 = vmatprep.mubr.f32.mxu0 0.0
      %2258 = vmatmul.mubr.f32.gmra.mxu0 %v506
      %v2259 = vpop.f32.mrf.mxu0
      %v2260 = vadd.f32 %v531, %v2259
      %v2261 = vpop.f32.mrf.mxu0
      %2262 = vmatprep.mubr.f32.mxu0 0.0
      %2263 = vmatmul.mubr.f32.gmra.mxu0 %v507
      %v2264 = vpop.f32.mrf.mxu0
      %v2265 = vadd.f32 %v531, %v2264
      %v2266 = vpop.f32.mrf.mxu0
      %2267 = vmatprep.mubr.f32.mxu0 0.0
      %2268 = vmatmul.mubr.f32.gmra.mxu0 %v508
      %v2269 = vpop.f32.mrf.mxu0
      %v2270 = vadd.f32 %v531, %v2269
      %v2271 = vpop.f32.mrf.mxu0
      %2272 = vmatprep.mubr.f32.mxu0 0.0
      %2273 = vmatmul.mubr.f32.gmra.mxu0 %v509
      %v2274 = vpop.f32.mrf.mxu0
      %v2275 = vadd.f32 %v531, %v2274
      %v2276 = vpop.f32.mrf.mxu0
      %2277 = vdwg.mxu0
      %v2278 = vmax.f32 %v600, 0.0
      %v2279 = vmax.f32 %v605, 0.0
      %v2280 = vmax.f32 %v610, 0.0
      %v2281 = vmax.f32 %v615, 0.0
      %v2282 = vmax.f32 %v620, 0.0
      %v2283 = vmax.f32 %v625, 0.0
      %v2284 = vmax.f32 %v630, 0.0
      %v2285 = vmax.f32 %v635, 0.0
      %v2286 = vmax.f32 %v640, 0.0
      %v2287 = vmax.f32 %v645, 0.0
      %v2288 = vmax.f32 %v650, 0.0
      %v2289 = vmax.f32 %v655, 0.0
      %v2290 = vmax.f32 %v660, 0.0
      %v2291 = vmax.f32 %v665, 0.0
      %v2292 = vmax.f32 %v670, 0.0
      %v2293 = vmax.f32 %v675, 0.0
      %v2294 = vmax.f32 %v680, 0.0
      %v2295 = vmax.f32 %v685, 0.0
      %v2296 = vmax.f32 %v690, 0.0
      %v2297 = vmax.f32 %v695, 0.0
      %v2298 = vmax.f32 %v700, 0.0
      %v2299 = vmax.f32 %v705, 0.0
      %v2300 = vmax.f32 %v710, 0.0
      %v2301 = vmax.f32 %v715, 0.0
      %v2302 = vmax.f32 %v720, 0.0
      %v2303 = vmax.f32 %v725, 0.0
      %v2304 = vmax.f32 %v730, 0.0
      %v2305 = vmax.f32 %v735, 0.0
      %v2306 = vmax.f32 %v740, 0.0
      %v2307 = vmax.f32 %v745, 0.0
      %v2308 = vmax.f32 %v750, 0.0
      %v2309 = vmax.f32 %v755, 0.0
      %v2310 = vmax.f32 %v760, 0.0
      %v2311 = vmax.f32 %v765, 0.0
      %v2312 = vmax.f32 %v770, 0.0
      %v2313 = vmax.f32 %v775, 0.0
      %v2314 = vmax.f32 %v780, 0.0
      %v2315 = vmax.f32 %v785, 0.0
      %v2316 = vmax.f32 %v790, 0.0
      %v2317 = vmax.f32 %v795, 0.0
      %v2318 = vmax.f32 %v800, 0.0
      %v2319 = vmax.f32 %v805, 0.0
      %v2320 = vmax.f32 %v810, 0.0
      %v2321 = vmax.f32 %v815, 0.0
      %v2322 = vmax.f32 %v820, 0.0
      %v2323 = vmax.f32 %v825, 0.0
      %v2324 = vmax.f32 %v830, 0.0
      %v2325 = vmax.f32 %v835, 0.0
      %v2326 = vmax.f32 %v840, 0.0
      %v2327 = vmax.f32 %v845, 0.0
      %v2328 = vmax.f32 %v850, 0.0
      %v2329 = vmax.f32 %v855, 0.0
      %v2330 = vmax.f32 %v860, 0.0
      %v2331 = vmax.f32 %v865, 0.0
      %v2332 = vmax.f32 %v870, 0.0
      %v2333 = vmax.f32 %v875, 0.0
      %v2334 = vmax.f32 %v880, 0.0
      %v2335 = vmax.f32 %v885, 0.0
      %v2336 = vmax.f32 %v890, 0.0
      %v2337 = vmax.f32 %v895, 0.0
      %v2338 = vmax.f32 %v900, 0.0
      %v2339 = vmax.f32 %v905, 0.0
      %v2340 = vmax.f32 %v910, 0.0
      %v2341 = vmax.f32 %v915, 0.0
      %v2342 = vmax.f32 %v920, 0.0
      %v2343 = vmax.f32 %v925, 0.0
      %v2344 = vmax.f32 %v930, 0.0
      %v2345 = vmax.f32 %v935, 0.0
      %v2346 = vmax.f32 %v940, 0.0
      %v2347 = vmax.f32 %v945, 0.0
      %v2348 = vmax.f32 %v950, 0.0
      %v2349 = vmax.f32 %v955, 0.0
      %v2350 = vmax.f32 %v960, 0.0
      %v2351 = vmax.f32 %v965, 0.0
      %v2352 = vmax.f32 %v970, 0.0
      %v2353 = vmax.f32 %v975, 0.0
      %v2354 = vmax.f32 %v980, 0.0
      %v2355 = vmax.f32 %v985, 0.0
      %v2356 = vmax.f32 %v990, 0.0
      %v2357 = vmax.f32 %v995, 0.0
      %v2358 = vmax.f32 %v1000, 0.0
      %v2359 = vmax.f32 %v1005, 0.0
      %v2360 = vmax.f32 %v1010, 0.0
      %v2361 = vmax.f32 %v1015, 0.0
      %v2362 = vmax.f32 %v1020, 0.0
      %v2363 = vmax.f32 %v1025, 0.0
      %v2364 = vmax.f32 %v1030, 0.0
      %v2365 = vmax.f32 %v1035, 0.0
      %v2366 = vmax.f32 %v1040, 0.0
      %v2367 = vmax.f32 %v1045, 0.0
      %v2368 = vmax.f32 %v1050, 0.0
      %v2369 = vmax.f32 %v1055, 0.0
      %v2370 = vmax.f32 %v1060, 0.0
      %v2371 = vmax.f32 %v1065, 0.0
      %v2372 = vmax.f32 %v1070, 0.0
      %v2373 = vmax.f32 %v1075, 0.0
      %v2374 = vmax.f32 %v1080, 0.0
      %v2375 = vmax.f32 %v1085, 0.0
      %v2376 = vmax.f32 %v1090, 0.0
      %v2377 = vmax.f32 %v1095, 0.0
      %v2378 = vmax.f32 %v1100, 0.0
      %v2379 = vmax.f32 %v1105, 0.0
      %v2380 = vmax.f32 %v1110, 0.0
      %v2381 = vmax.f32 %v1115, 0.0
      %v2382 = vmax.f32 %v1120, 0.0
      %v2383 = vmax.f32 %v1125, 0.0
      %v2384 = vmax.f32 %v1130, 0.0
      %v2385 = vmax.f32 %v1135, 0.0
      %v2386 = vmax.f32 %v1140, 0.0
      %v2387 = vmax.f32 %v1145, 0.0
      %v2388 = vmax.f32 %v1150, 0.0
      %v2389 = vmax.f32 %v1155, 0.0
      %v2390 = vmax.f32 %v1160, 0.0
      %v2391 = vmax.f32 %v1165, 0.0
      %v2392 = vmax.f32 %v1170, 0.0
      %v2393 = vmax.f32 %v1175, 0.0
      %v2394 = vmax.f32 %v1180, 0.0
      %v2395 = vmax.f32 %v1185, 0.0
      %v2396 = vmax.f32 %v1190, 0.0
      %v2397 = vmax.f32 %v1195, 0.0
      %v2398 = vmax.f32 %v1200, 0.0
      %v2399 = vmax.f32 %v1205, 0.0
      %v2400 = vmax.f32 %v1210, 0.0
      %v2401 = vmax.f32 %v1215, 0.0
      %v2402 = vmax.f32 %v1220, 0.0
      %v2403 = vmax.f32 %v1225, 0.0
      %v2404 = vmax.f32 %v1230, 0.0
      %v2405 = vmax.f32 %v1235, 0.0
      %v2406 = vmax.f32 %v1240, 0.0
      %v2407 = vmax.f32 %v1245, 0.0
      %v2408 = vmax.f32 %v1250, 0.0
      %v2409 = vmax.f32 %v1255, 0.0
      %v2410 = vmax.f32 %v1260, 0.0
      %v2411 = vmax.f32 %v1265, 0.0
      %v2412 = vmax.f32 %v1270, 0.0
      %v2413 = vmax.f32 %v1275, 0.0
      %v2414 = vmax.f32 %v1280, 0.0
      %v2415 = vmax.f32 %v1285, 0.0
      %v2416 = vmax.f32 %v1290, 0.0
      %v2417 = vmax.f32 %v1295, 0.0
      %v2418 = vmax.f32 %v1300, 0.0
      %v2419 = vmax.f32 %v1305, 0.0
      %v2420 = vmax.f32 %v1310, 0.0
      %v2421 = vmax.f32 %v1315, 0.0
      %v2422 = vmax.f32 %v1320, 0.0
      %v2423 = vmax.f32 %v1325, 0.0
      %v2424 = vmax.f32 %v1330, 0.0
      %v2425 = vmax.f32 %v1335, 0.0
      %v2426 = vmax.f32 %v1340, 0.0
      %v2427 = vmax.f32 %v1345, 0.0
      %v2428 = vmax.f32 %v1350, 0.0
      %v2429 = vmax.f32 %v1355, 0.0
      %v2430 = vmax.f32 %v1360, 0.0
      %v2431 = vmax.f32 %v1365, 0.0
      %v2432 = vmax.f32 %v1370, 0.0
      %v2433 = vmax.f32 %v1375, 0.0
      %v2434 = vmax.f32 %v1380, 0.0
      %v2435 = vmax.f32 %v1385, 0.0
      %v2436 = vmax.f32 %v1390, 0.0
      %v2437 = vmax.f32 %v1395, 0.0
      %v2438 = vmax.f32 %v1400, 0.0
      %v2439 = vmax.f32 %v1405, 0.0
      %v2440 = vmax.f32 %v1410, 0.0
      %v2441 = vmax.f32 %v1415, 0.0
      %v2442 = vmax.f32 %v1420, 0.0
      %v2443 = vmax.f32 %v1425, 0.0
      %v2444 = vmax.f32 %v1430, 0.0
      %v2445 = vmax.f32 %v1435, 0.0
      %v2446 = vmax.f32 %v1440, 0.0
      %v2447 = vmax.f32 %v1445, 0.0
      %v2448 = vmax.f32 %v1450, 0.0
      %v2449 = vmax.f32 %v1455, 0.0
      %v2450 = vmax.f32 %v1460, 0.0
      %v2451 = vmax.f32 %v1465, 0.0
      %v2452 = vmax.f32 %v1470, 0.0
      %v2453 = vmax.f32 %v1475, 0.0
      %v2454 = vmax.f32 %v1480, 0.0
      %v2455 = vmax.f32 %v1485, 0.0
      %v2456 = vmax.f32 %v1490, 0.0
      %v2457 = vmax.f32 %v1495, 0.0
      %v2458 = vmax.f32 %v1500, 0.0
      %v2459 = vmax.f32 %v1505, 0.0
      %v2460 = vmax.f32 %v1510, 0.0
      %v2461 = vmax.f32 %v1515, 0.0
      %v2462 = vmax.f32 %v1520, 0.0
      %v2463 = vmax.f32 %v1525, 0.0
      %v2464 = vmax.f32 %v1530, 0.0
      %v2465 = vmax.f32 %v1535, 0.0
      %v2466 = vmax.f32 %v1540, 0.0
      %v2467 = vmax.f32 %v1545, 0.0
      %v2468 = vmax.f32 %v1550, 0.0
      %v2469 = vmax.f32 %v1555, 0.0
      %v2470 = vmax.f32 %v1560, 0.0
      %v2471 = vmax.f32 %v1565, 0.0
      %v2472 = vmax.f32 %v1570, 0.0
      %v2473 = vmax.f32 %v1575, 0.0
      %v2474 = vmax.f32 %v1580, 0.0
      %v2475 = vmax.f32 %v1585, 0.0
      %v2476 = vmax.f32 %v1590, 0.0
      %v2477 = vmax.f32 %v1595, 0.0
      %v2478 = vmax.f32 %v1600, 0.0
      %v2479 = vmax.f32 %v1605, 0.0
      %v2480 = vmax.f32 %v1610, 0.0
      %v2481 = vmax.f32 %v1615, 0.0
      %v2482 = vmax.f32 %v1620, 0.0
      %v2483 = vmax.f32 %v1625, 0.0
      %v2484 = vmax.f32 %v1630, 0.0
      %v2485 = vmax.f32 %v1635, 0.0
      %v2486 = vmax.f32 %v1640, 0.0
      %v2487 = vmax.f32 %v1645, 0.0
      %v2488 = vmax.f32 %v1650, 0.0
      %v2489 = vmax.f32 %v1655, 0.0
      %v2490 = vmax.f32 %v1660, 0.0
      %v2491 = vmax.f32 %v1665, 0.0
      %v2492 = vmax.f32 %v1670, 0.0
      %v2493 = vmax.f32 %v1675, 0.0
      %v2494 = vmax.f32 %v1680, 0.0
      %v2495 = vmax.f32 %v1685, 0.0
      %v2496 = vmax.f32 %v1690, 0.0
      %v2497 = vmax.f32 %v1695, 0.0
      %v2498 = vmax.f32 %v1700, 0.0
      %v2499 = vmax.f32 %v1705, 0.0
      %v2500 = vmax.f32 %v1710, 0.0
      %v2501 = vmax.f32 %v1715, 0.0
      %v2502 = vmax.f32 %v1720, 0.0
      %v2503 = vmax.f32 %v1725, 0.0
      %v2504 = vmax.f32 %v1730, 0.0
      %v2505 = vmax.f32 %v1735, 0.0
      %v2506 = vmax.f32 %v1740, 0.0
      %v2507 = vmax.f32 %v1745, 0.0
      %v2508 = vmax.f32 %v1750, 0.0
      %v2509 = vmax.f32 %v1755, 0.0
      %v2510 = vmax.f32 %v1760, 0.0
      %v2511 = vmax.f32 %v1765, 0.0
      %v2512 = vmax.f32 %v1770, 0.0
      %v2513 = vmax.f32 %v1775, 0.0
      %v2514 = vmax.f32 %v1780, 0.0
      %v2515 = vmax.f32 %v1785, 0.0
      %v2516 = vmax.f32 %v1790, 0.0
      %v2517 = vmax.f32 %v1795, 0.0
      %v2518 = vmax.f32 %v1800, 0.0
      %v2519 = vmax.f32 %v1805, 0.0
      %v2520 = vmax.f32 %v1810, 0.0
      %v2521 = vmax.f32 %v1815, 0.0
      %v2522 = vmax.f32 %v1820, 0.0
      %v2523 = vmax.f32 %v1825, 0.0
      %v2524 = vmax.f32 %v1830, 0.0
      %v2525 = vmax.f32 %v1835, 0.0
      %v2526 = vmax.f32 %v1840, 0.0
      %v2527 = vmax.f32 %v1845, 0.0
      %v2528 = vmax.f32 %v1850, 0.0
      %v2529 = vmax.f32 %v1855, 0.0
      %v2530 = vmax.f32 %v1860, 0.0
      %v2531 = vmax.f32 %v1865, 0.0
      %v2532 = vmax.f32 %v1870, 0.0
      %v2533 = vmax.f32 %v1875, 0.0
      %v2534 = vmax.f32 %v1880, 0.0
      %v2535 = vmax.f32 %v1885, 0.0
      %v2536 = vmax.f32 %v1890, 0.0
      %v2537 = vmax.f32 %v1895, 0.0
      %v2538 = vmax.f32 %v1900, 0.0
      %v2539 = vmax.f32 %v1905, 0.0
      %v2540 = vmax.f32 %v1910, 0.0
      %v2541 = vmax.f32 %v1915, 0.0
      %v2542 = vmax.f32 %v1920, 0.0
      %v2543 = vmax.f32 %v1925, 0.0
      %v2544 = vmax.f32 %v1930, 0.0
      %v2545 = vmax.f32 %v1935, 0.0
      %v2546 = vmax.f32 %v1940, 0.0
      %v2547 = vmax.f32 %v1945, 0.0
      %v2548 = vmax.f32 %v1950, 0.0
      %v2549 = vmax.f32 %v1955, 0.0
      %v2550 = vmax.f32 %v1960, 0.0
      %v2551 = vmax.f32 %v1965, 0.0
      %v2552 = vmax.f32 %v1970, 0.0
      %v2553 = vmax.f32 %v1975, 0.0
      %v2554 = vmax.f32 %v1980, 0.0
      %v2555 = vmax.f32 %v1985, 0.0
      %v2556 = vmax.f32 %v1990, 0.0
      %v2557 = vmax.f32 %v1995, 0.0
      %v2558 = vmax.f32 %v2000, 0.0
      %v2559 = vmax.f32 %v2005, 0.0
      %v2560 = vmax.f32 %v2010, 0.0
      %v2561 = vmax.f32 %v2015, 0.0
      %v2562 = vmax.f32 %v2020, 0.0
      %v2563 = vmax.f32 %v2025, 0.0
      %v2564 = vmax.f32 %v2030, 0.0
      %v2565 = vmax.f32 %v2035, 0.0
      %v2566 = vmax.f32 %v2040, 0.0
      %v2567 = vmax.f32 %v2045, 0.0
      %v2568 = vmax.f32 %v2050, 0.0
      %v2569 = vmax.f32 %v2055, 0.0
      %v2570 = vmax.f32 %v2060, 0.0
      %v2571 = vmax.f32 %v2065, 0.0
      %v2572 = vmax.f32 %v2070, 0.0
      %v2573 = vmax.f32 %v2075, 0.0
      %v2574 = vmax.f32 %v2080, 0.0
      %v2575 = vmax.f32 %v2085, 0.0
      %v2576 = vmax.f32 %v2090, 0.0
      %v2577 = vmax.f32 %v2095, 0.0
      %v2578 = vmax.f32 %v2100, 0.0
      %v2579 = vmax.f32 %v2105, 0.0
      %v2580 = vmax.f32 %v2110, 0.0
      %v2581 = vmax.f32 %v2115, 0.0
      %v2582 = vmax.f32 %v2120, 0.0
      %v2583 = vmax.f32 %v2125, 0.0
      %v2584 = vmax.f32 %v2130, 0.0
      %v2585 = vmax.f32 %v2135, 0.0
      %v2586 = vmax.f32 %v2140, 0.0
      %v2587 = vmax.f32 %v2145, 0.0
      %v2588 = vmax.f32 %v2150, 0.0
      %v2589 = vmax.f32 %v2155, 0.0
      %v2590 = vmax.f32 %v2160, 0.0
      %v2591 = vmax.f32 %v2165, 0.0
      %v2592 = vmax.f32 %v2170, 0.0
      %v2593 = vmax.f32 %v2175, 0.0
      %v2594 = vmax.f32 %v2180, 0.0
      %v2595 = vmax.f32 %v2185, 0.0
      %v2596 = vmax.f32 %v2190, 0.0
      %v2597 = vmax.f32 %v2195, 0.0
      %v2598 = vmax.f32 %v2200, 0.0
      %v2599 = vmax.f32 %v2205, 0.0
      %v2600 = vmax.f32 %v2210, 0.0
      %v2601 = vmax.f32 %v2215, 0.0
      %v2602 = vmax.f32 %v2220, 0.0
      %v2603 = vmax.f32 %v2225, 0.0
      %v2604 = vmax.f32 %v2230, 0.0
      %v2605 = vmax.f32 %v2235, 0.0
      %v2606 = vmax.f32 %v2240, 0.0
      %v2607 = vmax.f32 %v2245, 0.0
      %v2608 = vmax.f32 %v2250, 0.0
      %v2609 = vmax.f32 %v2255, 0.0
      %v2610 = vmax.f32 %v2260, 0.0
      %v2611 = vmax.f32 %v2265, 0.0
      %v2612 = vmax.f32 %v2270, 0.0
      %v2613 = vmax.f32 %v2275, 0.0
      %2614 = vst [vmem:[%s172] sm:$0xff] %v2278
      %2615 = vst [vmem:[%s172 + $0x8] sm:$0xff] %v2279
      %2616 = vst [vmem:[%s172 + $0x10] sm:$0xff] %v2280
      %2617 = vst [vmem:[%s172 + $0x18] sm:$0xff] %v2281
      %2618 = vst [vmem:[%s172 + $0x20] sm:$0xff] %v2282
      %2619 = vst [vmem:[%s172 + $0x28] sm:$0xff] %v2283
      %2620 = vst [vmem:[%s172 + $0x30] sm:$0xff] %v2284
      %2621 = vst [vmem:[%s172 + $0x38] sm:$0xff] %v2285
      %2622 = vst [vmem:[%s172 + $0x40] sm:$0xff] %v2286
      %2623 = vst [vmem:[%s172 + $0x48] sm:$0xff] %v2287
      %2624 = vst [vmem:[%s172 + $0x50] sm:$0xff] %v2288
      %2625 = vst [vmem:[%s172 + $0x58] sm:$0xff] %v2289
      %2626 = vst [vmem:[%s172 + $0x60] sm:$0xff] %v2290
      %2627 = vst [vmem:[%s172 + $0x68] sm:$0xff] %v2291
      %2628 = vst [vmem:[%s172 + $0x70] sm:$0xff] %v2292
      %2629 = vst [vmem:[%s172 + $0x78] sm:$0xff] %v2293
      %2630 = vst [vmem:[%s172 + $0x80] sm:$0xff] %v2294
      %2631 = vst [vmem:[%s172 + $0x88] sm:$0xff] %v2295
      %2632 = vst [vmem:[%s172 + $0x90] sm:$0xff] %v2296
      %2633 = vst [vmem:[%s172 + $0x98] sm:$0xff] %v2297
      %2634 = vst [vmem:[%s172 + $0xa0] sm:$0xff] %v2298
      %2635 = vst [vmem:[%s172 + $0xa8] sm:$0xff] %v2299
      %2636 = vst [vmem:[%s172 + $0xb0] sm:$0xff] %v2300
      %2637 = vst [vmem:[%s172 + $0xb8] sm:$0xff] %v2301
      %2638 = vst [vmem:[%s172 + $0xc0] sm:$0xff] %v2302
      %2639 = vst [vmem:[%s172 + $0xc8] sm:$0xff] %v2303
      %2640 = vst [vmem:[%s172 + $0xd0] sm:$0xff] %v2304
      %2641 = vst [vmem:[%s172 + $0xd8] sm:$0xff] %v2305
      %2642 = vst [vmem:[%s172 + $0xe0] sm:$0xff] %v2306
      %2643 = vst [vmem:[%s172 + $0xe8] sm:$0xff] %v2307
      %2644 = vst [vmem:[%s172 + $0xf0] sm:$0xff] %v2308
      %2645 = vst [vmem:[%s172 + $0xf8] sm:$0xff] %v2309
      %2646 = vst [vmem:[%s172 + $0x100] sm:$0xff] %v2310
      %2647 = vst [vmem:[%s172 + $0x108] sm:$0xff] %v2311
      %2648 = vst [vmem:[%s172 + $0x110] sm:$0xff] %v2312
      %2649 = vst [vmem:[%s172 + $0x118] sm:$0xff] %v2313
      %2650 = vst [vmem:[%s172 + $0x120] sm:$0xff] %v2314
      %2651 = vst [vmem:[%s172 + $0x128] sm:$0xff] %v2315
      %2652 = vst [vmem:[%s172 + $0x130] sm:$0xff] %v2316
      %2653 = vst [vmem:[%s172 + $0x138] sm:$0xff] %v2317
      %2654 = vst [vmem:[%s172 + $0x140] sm:$0xff] %v2318
      %2655 = vst [vmem:[%s172 + $0x148] sm:$0xff] %v2319
      %2656 = vst [vmem:[%s172 + $0x150] sm:$0xff] %v2320
      %2657 = vst [vmem:[%s172 + $0x158] sm:$0xff] %v2321
      %2658 = vst [vmem:[%s172 + $0x160] sm:$0xff] %v2322
      %2659 = vst [vmem:[%s172 + $0x168] sm:$0xff] %v2323
      %2660 = vst [vmem:[%s172 + $0x170] sm:$0xff] %v2324
      %2661 = vst [vmem:[%s172 + $0x178] sm:$0xff] %v2325
      %2662 = vst [vmem:[%s172 + $0x180] sm:$0xff] %v2326
      %2663 = vst [vmem:[%s172 + $0x188] sm:$0xff] %v2327
      %2664 = vst [vmem:[%s172 + $0x190] sm:$0xff] %v2328
      %2665 = vst [vmem:[%s172 + $0x198] sm:$0xff] %v2329
      %2666 = vst [vmem:[%s172 + $0x1a0] sm:$0xff] %v2330
      %2667 = vst [vmem:[%s172 + $0x1a8] sm:$0xff] %v2331
      %2668 = vst [vmem:[%s172 + $0x1b0] sm:$0xff] %v2332
      %2669 = vst [vmem:[%s172 + $0x1b8] sm:$0xff] %v2333
      %2670 = vst [vmem:[%s172 + $0x1c0] sm:$0xff] %v2334
      %2671 = vst [vmem:[%s172 + $0x1c8] sm:$0xff] %v2335
      %2672 = vst [vmem:[%s172 + $0x1d0] sm:$0xff] %v2336
      %2673 = vst [vmem:[%s172 + $0x1d8] sm:$0xff] %v2337
      %2674 = vst [vmem:[%s172 + $0x1e0] sm:$0xff] %v2338
      %2675 = vst [vmem:[%s172 + $0x1e8] sm:$0xff] %v2339
      %2676 = vst [vmem:[%s172 + $0x1f0] sm:$0xff] %v2340
      %2677 = vst [vmem:[%s172 + $0x1f8] sm:$0xff] %v2341
      %2678 = vst [vmem:[%s172 + $0x200] sm:$0xff] %v2342
      %2679 = vst [vmem:[%s172 + $0x208] sm:$0xff] %v2343
      %2680 = vst [vmem:[%s172 + $0x210] sm:$0xff] %v2344
      %2681 = vst [vmem:[%s172 + $0x218] sm:$0xff] %v2345
      %2682 = vst [vmem:[%s172 + $0x220] sm:$0xff] %v2346
      %2683 = vst [vmem:[%s172 + $0x228] sm:$0xff] %v2347
      %2684 = vst [vmem:[%s172 + $0x230] sm:$0xff] %v2348
      %2685 = vst [vmem:[%s172 + $0x238] sm:$0xff] %v2349
      %2686 = vst [vmem:[%s172 + $0x240] sm:$0xff] %v2350
      %2687 = vst [vmem:[%s172 + $0x248] sm:$0xff] %v2351
      %2688 = vst [vmem:[%s172 + $0x250] sm:$0xff] %v2352
      %2689 = vst [vmem:[%s172 + $0x258] sm:$0xff] %v2353
      %2690 = vst [vmem:[%s172 + $0x260] sm:$0xff] %v2354
      %2691 = vst [vmem:[%s172 + $0x268] sm:$0xff] %v2355
      %2692 = vst [vmem:[%s172 + $0x270] sm:$0xff] %v2356
      %2693 = vst [vmem:[%s172 + $0x278] sm:$0xff] %v2357
      %2694 = vst [vmem:[%s172 + $0x280] sm:$0xff] %v2358
      %2695 = vst [vmem:[%s172 + $0x288] sm:$0xff] %v2359
      %2696 = vst [vmem:[%s172 + $0x290] sm:$0xff] %v2360
      %2697 = vst [vmem:[%s172 + $0x298] sm:$0xff] %v2361
      %2698 = vst [vmem:[%s172 + $0x2a0] sm:$0xff] %v2362
      %2699 = vst [vmem:[%s172 + $0x2a8] sm:$0xff] %v2363
      %2700 = vst [vmem:[%s172 + $0x2b0] sm:$0xff] %v2364
      %2701 = vst [vmem:[%s172 + $0x2b8] sm:$0xff] %v2365
      %2702 = vst [vmem:[%s172 + $0x2c0] sm:$0xff] %v2366
      %2703 = vst [vmem:[%s172 + $0x2c8] sm:$0xff] %v2367
      %2704 = vst [vmem:[%s172 + $0x2d0] sm:$0xff] %v2368
      %2705 = vst [vmem:[%s172 + $0x2d8] sm:$0xff] %v2369
      %2706 = vst [vmem:[%s172 + $0x2e0] sm:$0xff] %v2370
      %2707 = vst [vmem:[%s172 + $0x2e8] sm:$0xff] %v2371
      %2708 = vst [vmem:[%s172 + $0x2f0] sm:$0xff] %v2372
      %2709 = vst [vmem:[%s172 + $0x2f8] sm:$0xff] %v2373
      %2710 = vst [vmem:[%s172 + $0x300] sm:$0xff] %v2374
      %2711 = vst [vmem:[%s172 + $0x308] sm:$0xff] %v2375
      %2712 = vst [vmem:[%s172 + $0x310] sm:$0xff] %v2376
      %2713 = vst [vmem:[%s172 + $0x318] sm:$0xff] %v2377
      %2714 = vst [vmem:[%s172 + $0x320] sm:$0xff] %v2378
      %2715 = vst [vmem:[%s172 + $0x328] sm:$0xff] %v2379
      %2716 = vst [vmem:[%s172 + $0x330] sm:$0xff] %v2380
      %2717 = vst [vmem:[%s172 + $0x338] sm:$0xff] %v2381
      %2718 = vst [vmem:[%s172 + $0x340] sm:$0xff] %v2382
      %2719 = vst [vmem:[%s172 + $0x348] sm:$0xff] %v2383
      %2720 = vst [vmem:[%s172 + $0x350] sm:$0xff] %v2384
      %2721 = vst [vmem:[%s172 + $0x358] sm:$0xff] %v2385
      %2722 = vst [vmem:[%s172 + $0x360] sm:$0xff] %v2386
      %2723 = vst [vmem:[%s172 + $0x368] sm:$0xff] %v2387
      %2724 = vst [vmem:[%s172 + $0x370] sm:$0xff] %v2388
      %2725 = vst [vmem:[%s172 + $0x378] sm:$0xff] %v2389
      %2726 = vst [vmem:[%s172 + $0x380] sm:$0xff] %v2390
      %2727 = vst [vmem:[%s172 + $0x388] sm:$0xff] %v2391
      %2728 = vst [vmem:[%s172 + $0x390] sm:$0xff] %v2392
      %2729 = vst [vmem:[%s172 + $0x398] sm:$0xff] %v2393
      %2730 = vst [vmem:[%s172 + $0x3a0] sm:$0xff] %v2394
      %2731 = vst [vmem:[%s172 + $0x3a8] sm:$0xff] %v2395
      %2732 = vst [vmem:[%s172 + $0x3b0] sm:$0xff] %v2396
      %2733 = vst [vmem:[%s172 + $0x3b8] sm:$0xff] %v2397
      %2734 = vst [vmem:[%s172 + $0x3c0] sm:$0xff] %v2398
      %2735 = vst [vmem:[%s172 + $0x3c8] sm:$0xff] %v2399
      %2736 = vst [vmem:[%s172 + $0x3d0] sm:$0xff] %v2400
      %2737 = vst [vmem:[%s172 + $0x3d8] sm:$0xff] %v2401
      %2738 = vst [vmem:[%s172 + $0x3e0] sm:$0xff] %v2402
      %2739 = vst [vmem:[%s172 + $0x3e8] sm:$0xff] %v2403
      %2740 = vst [vmem:[%s172 + $0x3f0] sm:$0xff] %v2404
      %2741 = vst [vmem:[%s172 + $0x3f8] sm:$0xff] %v2405
      %2742 = vst [vmem:[%s172 + $0x400] sm:$0xff] %v2406
      %2743 = vst [vmem:[%s172 + $0x408] sm:$0xff] %v2407
      %2744 = vst [vmem:[%s172 + $0x410] sm:$0xff] %v2408
      %2745 = vst [vmem:[%s172 + $0x418] sm:$0xff] %v2409
      %2746 = vst [vmem:[%s172 + $0x420] sm:$0xff] %v2410
      %2747 = vst [vmem:[%s172 + $0x428] sm:$0xff] %v2411
      %2748 = vst [vmem:[%s172 + $0x430] sm:$0xff] %v2412
      %2749 = vst [vmem:[%s172 + $0x438] sm:$0xff] %v2413
      %2750 = vst [vmem:[%s172 + $0x440] sm:$0xff] %v2414
      %2751 = vst [vmem:[%s172 + $0x448] sm:$0xff] %v2415
      %2752 = vst [vmem:[%s172 + $0x450] sm:$0xff] %v2416
      %2753 = vst [vmem:[%s172 + $0x458] sm:$0xff] %v2417
      %2754 = vst [vmem:[%s172 + $0x460] sm:$0xff] %v2418
      %2755 = vst [vmem:[%s172 + $0x468] sm:$0xff] %v2419
      %2756 = vst [vmem:[%s172 + $0x470] sm:$0xff] %v2420
      %2757 = vst [vmem:[%s172 + $0x478] sm:$0xff] %v2421
      %2758 = vst [vmem:[%s172 + $0x480] sm:$0xff] %v2422
      %2759 = vst [vmem:[%s172 + $0x488] sm:$0xff] %v2423
      %2760 = vst [vmem:[%s172 + $0x490] sm:$0xff] %v2424
      %2761 = vst [vmem:[%s172 + $0x498] sm:$0xff] %v2425
      %2762 = vst [vmem:[%s172 + $0x4a0] sm:$0xff] %v2426
      %2763 = vst [vmem:[%s172 + $0x4a8] sm:$0xff] %v2427
      %2764 = vst [vmem:[%s172 + $0x4b0] sm:$0xff] %v2428
      %2765 = vst [vmem:[%s172 + $0x4b8] sm:$0xff] %v2429
      %2766 = vst [vmem:[%s172 + $0x4c0] sm:$0xff] %v2430
      %2767 = vst [vmem:[%s172 + $0x4c8] sm:$0xff] %v2431
      %2768 = vst [vmem:[%s172 + $0x4d0] sm:$0xff] %v2432
      %2769 = vst [vmem:[%s172 + $0x4d8] sm:$0xff] %v2433
      %2770 = vst [vmem:[%s172 + $0x4e0] sm:$0xff] %v2434
      %2771 = vst [vmem:[%s172 + $0x4e8] sm:$0xff] %v2435
      %2772 = vst [vmem:[%s172 + $0x4f0] sm:$0xff] %v2436
      %2773 = vst [vmem:[%s172 + $0x4f8] sm:$0xff] %v2437
      %2774 = vst [vmem:[%s172 + $0x500] sm:$0xff] %v2438
      %2775 = vst [vmem:[%s172 + $0x508] sm:$0xff] %v2439
      %2776 = vst [vmem:[%s172 + $0x510] sm:$0xff] %v2440
      %2777 = vst [vmem:[%s172 + $0x518] sm:$0xff] %v2441
      %2778 = vst [vmem:[%s172 + $0x520] sm:$0xff] %v2442
      %2779 = vst [vmem:[%s172 + $0x528] sm:$0xff] %v2443
      %2780 = vst [vmem:[%s172 + $0x530] sm:$0xff] %v2444
      %2781 = vst [vmem:[%s172 + $0x538] sm:$0xff] %v2445
      %2782 = vst [vmem:[%s172 + $0x540] sm:$0xff] %v2446
      %2783 = vst [vmem:[%s172 + $0x548] sm:$0xff] %v2447
      %2784 = vst [vmem:[%s172 + $0x550] sm:$0xff] %v2448
      %2785 = vst [vmem:[%s172 + $0x558] sm:$0xff] %v2449
      %2786 = vst [vmem:[%s172 + $0x560] sm:$0xff] %v2450
      %2787 = vst [vmem:[%s172 + $0x568] sm:$0xff] %v2451
      %2788 = vst [vmem:[%s172 + $0x570] sm:$0xff] %v2452
      %2789 = vst [vmem:[%s172 + $0x578] sm:$0xff] %v2453
      %2790 = vst [vmem:[%s172 + $0x580] sm:$0xff] %v2454
      %2791 = vst [vmem:[%s172 + $0x588] sm:$0xff] %v2455
      %2792 = vst [vmem:[%s172 + $0x590] sm:$0xff] %v2456
      %2793 = vst [vmem:[%s172 + $0x598] sm:$0xff] %v2457
      %2794 = vst [vmem:[%s172 + $0x5a0] sm:$0xff] %v2458
      %2795 = vst [vmem:[%s172 + $0x5a8] sm:$0xff] %v2459
      %2796 = vst [vmem:[%s172 + $0x5b0] sm:$0xff] %v2460
      %2797 = vst [vmem:[%s172 + $0x5b8] sm:$0xff] %v2461
      %2798 = vst [vmem:[%s172 + $0x5c0] sm:$0xff] %v2462
      %2799 = vst [vmem:[%s172 + $0x5c8] sm:$0xff] %v2463
      %2800 = vst [vmem:[%s172 + $0x5d0] sm:$0xff] %v2464
      %2801 = vst [vmem:[%s172 + $0x5d8] sm:$0xff] %v2465
      %2802 = vst [vmem:[%s172 + $0x5e0] sm:$0xff] %v2466
      %2803 = vst [vmem:[%s172 + $0x5e8] sm:$0xff] %v2467
      %2804 = vst [vmem:[%s172 + $0x5f0] sm:$0xff] %v2468
      %2805 = vst [vmem:[%s172 + $0x5f8] sm:$0xff] %v2469
      %2806 = vst [vmem:[%s172 + $0x600] sm:$0xff] %v2470
      %2807 = vst [vmem:[%s172 + $0x608] sm:$0xff] %v2471
      %2808 = vst [vmem:[%s172 + $0x610] sm:$0xff] %v2472
      %2809 = vst [vmem:[%s172 + $0x618] sm:$0xff] %v2473
      %2810 = vst [vmem:[%s172 + $0x620] sm:$0xff] %v2474
      %2811 = vst [vmem:[%s172 + $0x628] sm:$0xff] %v2475
      %2812 = vst [vmem:[%s172 + $0x630] sm:$0xff] %v2476
      %2813 = vst [vmem:[%s172 + $0x638] sm:$0xff] %v2477
      %2814 = vst [vmem:[%s172 + $0x640] sm:$0xff] %v2478
      %2815 = vst [vmem:[%s172 + $0x648] sm:$0xff] %v2479
      %2816 = vst [vmem:[%s172 + $0x650] sm:$0xff] %v2480
      %2817 = vst [vmem:[%s172 + $0x658] sm:$0xff] %v2481
      %2818 = vst [vmem:[%s172 + $0x660] sm:$0xff] %v2482
      %2819 = vst [vmem:[%s172 + $0x668] sm:$0xff] %v2483
      %2820 = vst [vmem:[%s172 + $0x670] sm:$0xff] %v2484
      %2821 = vst [vmem:[%s172 + $0x678] sm:$0xff] %v2485
      %2822 = vst [vmem:[%s172 + $0x680] sm:$0xff] %v2486
      %2823 = vst [vmem:[%s172 + $0x688] sm:$0xff] %v2487
      %2824 = vst [vmem:[%s172 + $0x690] sm:$0xff] %v2488
      %2825 = vst [vmem:[%s172 + $0x698] sm:$0xff] %v2489
      %2826 = vst [vmem:[%s172 + $0x6a0] sm:$0xff] %v2490
      %2827 = vst [vmem:[%s172 + $0x6a8] sm:$0xff] %v2491
      %2828 = vst [vmem:[%s172 + $0x6b0] sm:$0xff] %v2492
      %2829 = vst [vmem:[%s172 + $0x6b8] sm:$0xff] %v2493
      %2830 = vst [vmem:[%s172 + $0x6c0] sm:$0xff] %v2494
      %2831 = vst [vmem:[%s172 + $0x6c8] sm:$0xff] %v2495
      %2832 = vst [vmem:[%s172 + $0x6d0] sm:$0xff] %v2496
      %2833 = vst [vmem:[%s172 + $0x6d8] sm:$0xff] %v2497
      %2834 = vst [vmem:[%s172 + $0x6e0] sm:$0xff] %v2498
      %2835 = vst [vmem:[%s172 + $0x6e8] sm:$0xff] %v2499
      %2836 = vst [vmem:[%s172 + $0x6f0] sm:$0xff] %v2500
      %2837 = vst [vmem:[%s172 + $0x6f8] sm:$0xff] %v2501
      %2838 = vst [vmem:[%s172 + $0x700] sm:$0xff] %v2502
      %2839 = vst [vmem:[%s172 + $0x708] sm:$0xff] %v2503
      %2840 = vst [vmem:[%s172 + $0x710] sm:$0xff] %v2504
      %2841 = vst [vmem:[%s172 + $0x718] sm:$0xff] %v2505
      %2842 = vst [vmem:[%s172 + $0x720] sm:$0xff] %v2506
      %2843 = vst [vmem:[%s172 + $0x728] sm:$0xff] %v2507
      %2844 = vst [vmem:[%s172 + $0x730] sm:$0xff] %v2508
      %2845 = vst [vmem:[%s172 + $0x738] sm:$0xff] %v2509
      %2846 = vst [vmem:[%s172 + $0x740] sm:$0xff] %v2510
      %2847 = vst [vmem:[%s172 + $0x748] sm:$0xff] %v2511
      %2848 = vst [vmem:[%s172 + $0x750] sm:$0xff] %v2512
      %2849 = vst [vmem:[%s172 + $0x758] sm:$0xff] %v2513
      %2850 = vst [vmem:[%s172 + $0x760] sm:$0xff] %v2514
      %2851 = vst [vmem:[%s172 + $0x768] sm:$0xff] %v2515
      %2852 = vst [vmem:[%s172 + $0x770] sm:$0xff] %v2516
      %2853 = vst [vmem:[%s172 + $0x778] sm:$0xff] %v2517
      %2854 = vst [vmem:[%s172 + $0x780] sm:$0xff] %v2518
      %2855 = vst [vmem:[%s172 + $0x788] sm:$0xff] %v2519
      %2856 = vst [vmem:[%s172 + $0x790] sm:$0xff] %v2520
      %2857 = vst [vmem:[%s172 + $0x798] sm:$0xff] %v2521
      %2858 = vst [vmem:[%s172 + $0x7a0] sm:$0xff] %v2522
      %2859 = vst [vmem:[%s172 + $0x7a8] sm:$0xff] %v2523
      %2860 = vst [vmem:[%s172 + $0x7b0] sm:$0xff] %v2524
      %2861 = vst [vmem:[%s172 + $0x7b8] sm:$0xff] %v2525
      %2862 = vst [vmem:[%s172 + $0x7c0] sm:$0xff] %v2526
      %2863 = vst [vmem:[%s172 + $0x7c8] sm:$0xff] %v2527
      %2864 = vst [vmem:[%s172 + $0x7d0] sm:$0xff] %v2528
      %2865 = vst [vmem:[%s172 + $0x7d8] sm:$0xff] %v2529
      %2866 = vst [vmem:[%s172 + $0x7e0] sm:$0xff] %v2530
      %2867 = vst [vmem:[%s172 + $0x7e8] sm:$0xff] %v2531
      %2868 = vst [vmem:[%s172 + $0x7f0] sm:$0xff] %v2532
      %2869 = vst [vmem:[%s172 + $0x7f8] sm:$0xff] %v2533
      %2870 = vst [vmem:[%s172 + $0x800] sm:$0xff] %v2534
      %2871 = vst [vmem:[%s172 + $0x808] sm:$0xff] %v2535
      %2872 = vst [vmem:[%s172 + $0x810] sm:$0xff] %v2536
      %2873 = vst [vmem:[%s172 + $0x818] sm:$0xff] %v2537
      %2874 = vst [vmem:[%s172 + $0x820] sm:$0xff] %v2538
      %2875 = vst [vmem:[%s172 + $0x828] sm:$0xff] %v2539
      %2876 = vst [vmem:[%s172 + $0x830] sm:$0xff] %v2540
      %2877 = vst [vmem:[%s172 + $0x838] sm:$0xff] %v2541
      %2878 = vst [vmem:[%s172 + $0x840] sm:$0xff] %v2542
      %2879 = vst [vmem:[%s172 + $0x848] sm:$0xff] %v2543
      %2880 = vst [vmem:[%s172 + $0x850] sm:$0xff] %v2544
      %2881 = vst [vmem:[%s172 + $0x858] sm:$0xff] %v2545
      %2882 = vst [vmem:[%s172 + $0x860] sm:$0xff] %v2546
      %2883 = vst [vmem:[%s172 + $0x868] sm:$0xff] %v2547
      %2884 = vst [vmem:[%s172 + $0x870] sm:$0xff] %v2548
      %2885 = vst [vmem:[%s172 + $0x878] sm:$0xff] %v2549
      %2886 = vst [vmem:[%s172 + $0x880] sm:$0xff] %v2550
      %2887 = vst [vmem:[%s172 + $0x888] sm:$0xff] %v2551
      %2888 = vst [vmem:[%s172 + $0x890] sm:$0xff] %v2552
      %2889 = vst [vmem:[%s172 + $0x898] sm:$0xff] %v2553
      %2890 = vst [vmem:[%s172 + $0x8a0] sm:$0xff] %v2554
      %2891 = vst [vmem:[%s172 + $0x8a8] sm:$0xff] %v2555
      %2892 = vst [vmem:[%s172 + $0x8b0] sm:$0xff] %v2556
      %2893 = vst [vmem:[%s172 + $0x8b8] sm:$0xff] %v2557
      %2894 = vst [vmem:[%s172 + $0x8c0] sm:$0xff] %v2558
      %2895 = vst [vmem:[%s172 + $0x8c8] sm:$0xff] %v2559
      %2896 = vst [vmem:[%s172 + $0x8d0] sm:$0xff] %v2560
      %2897 = vst [vmem:[%s172 + $0x8d8] sm:$0xff] %v2561
      %2898 = vst [vmem:[%s172 + $0x8e0] sm:$0xff] %v2562
      %2899 = vst [vmem:[%s172 + $0x8e8] sm:$0xff] %v2563
      %2900 = vst [vmem:[%s172 + $0x8f0] sm:$0xff] %v2564
      %2901 = vst [vmem:[%s172 + $0x8f8] sm:$0xff] %v2565
      %2902 = vst [vmem:[%s172 + $0x900] sm:$0xff] %v2566
      %2903 = vst [vmem:[%s172 + $0x908] sm:$0xff] %v2567
      %2904 = vst [vmem:[%s172 + $0x910] sm:$0xff] %v2568
      %2905 = vst [vmem:[%s172 + $0x918] sm:$0xff] %v2569
      %2906 = vst [vmem:[%s172 + $0x920] sm:$0xff] %v2570
      %2907 = vst [vmem:[%s172 + $0x928] sm:$0xff] %v2571
      %2908 = vst [vmem:[%s172 + $0x930] sm:$0xff] %v2572
      %2909 = vst [vmem:[%s172 + $0x938] sm:$0xff] %v2573
      %2910 = vst [vmem:[%s172 + $0x940] sm:$0xff] %v2574
      %2911 = vst [vmem:[%s172 + $0x948] sm:$0xff] %v2575
      %2912 = vst [vmem:[%s172 + $0x950] sm:$0xff] %v2576
      %2913 = vst [vmem:[%s172 + $0x958] sm:$0xff] %v2577
      %2914 = vst [vmem:[%s172 + $0x960] sm:$0xff] %v2578
      %2915 = vst [vmem:[%s172 + $0x968] sm:$0xff] %v2579
      %2916 = vst [vmem:[%s172 + $0x970] sm:$0xff] %v2580
      %2917 = vst [vmem:[%s172 + $0x978] sm:$0xff] %v2581
      %2918 = vst [vmem:[%s172 + $0x980] sm:$0xff] %v2582
      %2919 = vst [vmem:[%s172 + $0x988] sm:$0xff] %v2583
      %2920 = vst [vmem:[%s172 + $0x990] sm:$0xff] %v2584
      %2921 = vst [vmem:[%s172 + $0x998] sm:$0xff] %v2585
      %2922 = vst [vmem:[%s172 + $0x9a0] sm:$0xff] %v2586
      %2923 = vst [vmem:[%s172 + $0x9a8] sm:$0xff] %v2587
      %2924 = vst [vmem:[%s172 + $0x9b0] sm:$0xff] %v2588
      %2925 = vst [vmem:[%s172 + $0x9b8] sm:$0xff] %v2589
      %2926 = vst [vmem:[%s172 + $0x9c0] sm:$0xff] %v2590
      %2927 = vst [vmem:[%s172 + $0x9c8] sm:$0xff] %v2591
      %2928 = vst [vmem:[%s172 + $0x9d0] sm:$0xff] %v2592
      %2929 = vst [vmem:[%s172 + $0x9d8] sm:$0xff] %v2593
      %2930 = vst [vmem:[%s172 + $0x9e0] sm:$0xff] %v2594
      %2931 = vst [vmem:[%s172 + $0x9e8] sm:$0xff] %v2595
      %2932 = vst [vmem:[%s172 + $0x9f0] sm:$0xff] %v2596
      %2933 = vst [vmem:[%s172 + $0x9f8] sm:$0xff] %v2597
      %2934 = vst [vmem:[%s172 + $0xa00] sm:$0xff] %v2598
      %2935 = vst [vmem:[%s172 + $0xa08] sm:$0xff] %v2599
      %2936 = vst [vmem:[%s172 + $0xa10] sm:$0xff] %v2600
      %2937 = vst [vmem:[%s172 + $0xa18] sm:$0xff] %v2601
      %2938 = vst [vmem:[%s172 + $0xa20] sm:$0xff] %v2602
      %2939 = vst [vmem:[%s172 + $0xa28] sm:$0xff] %v2603
      %2940 = vst [vmem:[%s172 + $0xa30] sm:$0xff] %v2604
      %2941 = vst [vmem:[%s172 + $0xa38] sm:$0xff] %v2605
      %2942 = vst [vmem:[%s172 + $0xa40] sm:$0xff] %v2606
      %2943 = vst [vmem:[%s172 + $0xa48] sm:$0xff] %v2607
      %2944 = vst [vmem:[%s172 + $0xa50] sm:$0xff] %v2608
      %2945 = vst [vmem:[%s172 + $0xa58] sm:$0xff] %v2609
      %2946 = vst [vmem:[%s172 + $0xa60] sm:$0xff] %v2610
      %2947 = vst [vmem:[%s172 + $0xa68] sm:$0xff] %v2611
      %2948 = vst [vmem:[%s172 + $0xa70] sm:$0xff] %v2612
      %2949 = vst [vmem:[%s172 + $0xa78] sm:$0xff] %v2613
      %s2950 = smul.u32 336, %s14
      %p2951 = scmp.lt.s32.totalorder %s2950, 671
      %s2952 = scalar_select %p2951, %s2950, 671
      %s2953 = smul.addr %s2952, 8
      %s2954 = scalar_lea.vmem %s3, %s2953
      // Predicated region
      $region33: #{pyteen_forward.5} parent=31 // pred_check
        %p2955 = pneg %p100
      $region34: #{pyteen_forward.5} parent=31 // pred_check_branch
        %2957 = sbr.rel (%p2955) target = $region36
      $region35: #{pyteen_forward.5} parent=31 // pred_region
        %s2958 = smul.u32 336, %s14
      $region36: #{pyteen_forward.5} parent=31 // pred_fallthru
        _
    $region32: #{pyteen_forward.5} parent=5 // pred_fallthru
      _
    %p2959 = scmp.le.s32.totalorder 2, %s9
    // Predicated region
    $region37: #{pyteen_forward.5} parent=5 // pred_check
      %p2960 = pneg %p2959
    $region38: #{pyteen_forward.5} parent=5 // pred_check_branch
      %2962 = sbr.rel (%p2960) target = $region40
    $region39: #{pyteen_forward.5} parent=5 // pred_region
      %s2963 = ssub.s32 %s9, 2
      // Predicated region
      $region41: #{pyteen_forward.5} parent=39 // pred_check
        %p2964 = pneg %p106
      $region42: #{pyteen_forward.5} parent=39 // pred_check_branch
        %2966 = sbr.rel (%p2964) target = $region44
      $region43: #{pyteen_forward.5} parent=39 // pred_region
        %s2967 = smul.u32 336, %s15
        %p2968 = scmp.lt.s32.totalorder %s2967, 671
        %s2969 = scalar_select %p2968, %s2967, 671
        %s2970 = smul.addr %s2969, 8
        %s2971 = scalar_lea.vmem %s3, %s2970
      $region44: #{pyteen_forward.5} parent=39 // pred_fallthru
        _
    $region40: #{pyteen_forward.5} parent=5 // pred_fallthru
      _
  $region6: #{pyteen_forward.5} parent=0 // loop_footer
    %s13 = sadd.s32 1, %s9
  $region7: #{pyteen_forward.5} parent=0 // loop_footer_branch
    %8 = sbr.rel target = $region3
  $region8: #{pyteen_forward.5} parent=0 // loop_exit
    _

// kernel: pyteen_forward.6
$region0: #{pyteen_forward.6}
  #allocation0 [shape = 'u32[]', space=smem, size = 0x4, offset = 0x4, fixed_abs, tag = 'smem constant byte address 0x4 - core index']
  #allocation1 [shape = 'u32[144,128]{1,0:T(1,128)}', space=vmem, size = 0x12000, scoped, tag = 'internal scratch']
  %s0 = inlined_call_operand.vmem [shape: f32[56,2,24,256], index: 0, kind: input, shape index: {}]
  %s1 = inlined_call_operand.vmem [shape: f32[56,24,128], index: 1, kind: output, shape index: {}]
  %s2 = sld [smem:[#allocation0]]
  $region37: #{pyteen_forward.6} parent=0
    _
  %s4 = ssub.s32 1, %s2
  %s5 = scalar_select 0, %s4, %s2
  loop: start=0, step=1, limit=4
  $region2: #{pyteen_forward.6} parent=0 // loop_pre_header
    _
  $region3: #{pyteen_forward.6} parent=0 // loop_header
    %s7 = sphi 0, %s11
    %p8 = scmp.ge.s32.totalorder %s7, 4
    %s17 = sphi 0, %s19
    %s20 = sphi 0, %s17
    %s21 = sphi 0, %s20
    %s37 = sphi 0, %s21
    %s43 = sphi 0, %s45
    %s46 = sphi 0, %s43
    %s47 = sphi 0, %s46
    %s63 = sphi 0, %s47
  $region4: #{pyteen_forward.6} parent=0 // loop_header_branch
    %10 = sbr.rel (%p8) target = $region8
  $region5: #{pyteen_forward.6} parent=0 // loop_body
    %s12 = ssub.s32 %s7, 1
    %s13 = ssub.s32 %s7, 2
    %s14 = sadd.s32 %s7, 1
    %s15 = ssub.s32 %s7, %s14
    %p16 = scmp.eq.s32.totalorder %s15, 0
    %s18 = sadd.s32 %s17, 1
    %s19 = scalar_select %p16, %s17, %s18
    %p22 = pneg %p16
    %p23 = scmp.eq.s32.totalorder %s7, 1
    %p24 = por %p22, %p23
    %p25 = scmp.ne.s32.totalorder %s17, %s20
    %p26 = scmp.eq.s32.totalorder %s7, 0
    %p27 = por %p25, %p26
    %p28 = scmp.ne.s32.totalorder %s17, %s20
    %p29 = scmp.eq.s32.totalorder %s12, 1
    %p30 = por %p28, %p29
    %p31 = scmp.ne.s32.totalorder %s20, %s21
    %p32 = scmp.eq.s32.totalorder %s12, 0
    %p33 = por %p31, %p32
    %p34 = scmp.ne.s32.totalorder %s20, %s21
    %p35 = scmp.eq.s32.totalorder %s13, 1
    %p36 = por %p34, %p35
    %p38 = scmp.ne.s32.totalorder %s21, %s37
    %p39 = scmp.eq.s32.totalorder %s13, 0
    %p40 = por %p38, %p39
    %s41 = ssub.s32 %s7, %s14
    %p42 = scmp.eq.s32.totalorder %s41, 0
    %s44 = sadd.s32 %s43, 1
    %s45 = scalar_select %p42, %s43, %s44
    %p48 = pneg %p42
    %p49 = scmp.eq.s32.totalorder %s7, 1
    %p50 = por %p48, %p49
    %p51 = scmp.ne.s32.totalorder %s43, %s46
    %p52 = scmp.eq.s32.totalorder %s7, 0
    %p53 = por %p51, %p52
    %p54 = scmp.ne.s32.totalorder %s43, %s46
    %p55 = scmp.eq.s32.totalorder %s12, 1
    %p56 = por %p54, %p55
    %p57 = scmp.ne.s32.totalorder %s46, %s47
    %p58 = scmp.eq.s32.totalorder %s12, 0
    %p59 = por %p57, %p58
    %p60 = scmp.ne.s32.totalorder %s46, %s47
    %p61 = scmp.eq.s32.totalorder %s13, 1
    %p62 = por %p60, %p61
    %p64 = scmp.ne.s32.totalorder %s47, %s63
    %p65 = scmp.eq.s32.totalorder %s13, 0
    %p66 = por %p64, %p65
    %p67 = scmp.le.s32.totalorder 1, %s7
    %p68 = scmp.lt.s32.totalorder %s7, 3
    %p69 = pnand %p67, %p68
    %p70 = pneg %p69
    // Predicated region
    $region9: #{pyteen_forward.6} parent=5 // pred_check
      _
    $region10: #{pyteen_forward.6} parent=5 // pred_check_branch
      %72 = sbr.rel (%p69) target = $region12
    $region11: #{pyteen_forward.6} parent=5 // pred_region
      %s73 = ssub.s32 %s7, 1
    $region12: #{pyteen_forward.6} parent=5 // pred_fallthru
      _
    %p74 = scmp.lt.s32.totalorder %s7, 2
    // Predicated region
    $region13: #{pyteen_forward.6} parent=5 // pred_check
      %p75 = pneg %p74
    $region14: #{pyteen_forward.6} parent=5 // pred_check_branch
      %77 = sbr.rel (%p75) target = $region16
    $region15: #{pyteen_forward.6} parent=5 // pred_region
      // Predicated region
      $region17: #{pyteen_forward.6} parent=15 // pred_check
        %p78 = pneg %p27
      $region18: #{pyteen_forward.6} parent=15 // pred_check_branch
        %80 = sbr.rel (%p78) target = $region20
      $region19: #{pyteen_forward.6} parent=15 // pred_region
        %s81 = smul.u32 28, %s7
        %p82 = scmp.lt.s32.totalorder %s81, 55
        %s83 = scalar_select %p82, %s81, 55
        %s84 = smul.addr %s83, 12
        %s85 = smul.addr %s84, 8
        %s86 = scalar_lea.vmem %s0, %s85
        %s87 = smul.u32 28, %s7
      $region20: #{pyteen_forward.6} parent=15 // pred_fallthru
        _
    $region16: #{pyteen_forward.6} parent=5 // pred_fallthru
      _
    %p88 = scmp.le.s32.totalorder 1, %s7
    %p89 = scmp.lt.s32.totalorder %s7, 3
    %p90 = pnand %p88, %p89
    %p91 = pneg %p90
    // Predicated region
    $region21: #{pyteen_forward.6} parent=5 // pred_check
      _
    $region22: #{pyteen_forward.6} parent=5 // pred_check_branch
      %93 = sbr.rel (%p90) target = $region24
    $region23: #{pyteen_forward.6} parent=5 // pred_region
      %s94 = ssub.s32 %s7, 1
      %s95 = smul.u32 28, %s12
      %p96 = scmp.lt.s32.totalorder %s95, 55
      %s97 = scalar_select %p96, %s95, 55
      %s98 = smul.addr %s97, 12
      %s99 = smul.addr %s98, 8
      %s100 = scalar_lea.vmem %s0, %s99
      %p101 = pneg %p33
      %p102 = pneg %p30
      %p103 = pneg %p59
      %p104 = pneg %p56
      %s105 = smul.u32 28, %s12
      %p106 = scmp.lt.s32.totalorder %s105, 55
      %s107 = scalar_select %p106, %s105, 55
      %s108 = smul.addr %s107, 3
      %s109 = smul.addr %s108, 8
      %s110 = scalar_lea.vmem %s1, %s109
      %s111 = smul.u32 28, %s12
      %p112 = scmp.lt.s32.totalorder %s111, 55
      %s113 = scalar_select %p112, %s111, 55
      %s114 = smul.addr %s113, 12
      %s115 = smul.addr %s114, 8
      %s116 = scalar_lea.vmem %s0, %s115
      %s117 = smul.u32 28, %s12
      %s118 = smul.u32 28, %s12
      %p119 = scmp.lt.s32.totalorder %s118, 55
      %s120 = scalar_select %p119, %s118, 55
      %s121 = smul.addr %s120, 3
      %s122 = smul.addr %s121, 8
      %s123 = scalar_lea.vmem %s1, %s122
      %s124 = smul.u32 28, %s12
      %v125 = vld [vmem:[%s116] sm:$0xff]
      %v126 = vld [vmem:[%s116 + $0x8] sm:$0xff]
      %v127 = vld [vmem:[%s116 + $0x10] sm:$0xff]
      %v128 = vld [vmem:[%s116 + $0x18] sm:$0xff]
      %v129 = vld [vmem:[%s116 + $0x20] sm:$0xff]
      %v130 = vld [vmem:[%s116 + $0x28] sm:$0xff]
      %v131 = vld [vmem:[%s116 + $0x30] sm:$0xff]
      %v132 = vld [vmem:[%s116 + $0x38] sm:$0xff]
      %v133 = vld [vmem:[%s116 + $0x40] sm:$0xff]
      %v134 = vld [vmem:[%s116 + $0x48] sm:$0xff]
      %v135 = vld [vmem:[%s116 + $0x50] sm:$0xff]
      %v136 = vld [vmem:[%s116 + $0x58] sm:$0xff]
      %v137 = vld [vmem:[%s116 + $0x60] sm:$0xff]
      %v138 = vld [vmem:[%s116 + $0x68] sm:$0xff]
      %v139 = vld [vmem:[%s116 + $0x70] sm:$0xff]
      %v140 = vld [vmem:[%s116 + $0x78] sm:$0xff]
      %v141 = vld [vmem:[%s116 + $0x80] sm:$0xff]
      %v142 = vld [vmem:[%s116 + $0x88] sm:$0xff]
      %v143 = vld [vmem:[%s116 + $0x90] sm:$0xff]
      %v144 = vld [vmem:[%s116 + $0x98] sm:$0xff]
      %v145 = vld [vmem:[%s116 + $0xa0] sm:$0xff]
      %v146 = vld [vmem:[%s116 + $0xa8] sm:$0xff]
      %v147 = vld [vmem:[%s116 + $0xb0] sm:$0xff]
      %v148 = vld [vmem:[%s116 + $0xb8] sm:$0xff]
      %v149 = vld [vmem:[%s116 + $0xc0] sm:$0xff]
      %v150 = vld [vmem:[%s116 + $0xc8] sm:$0xff]
      %v151 = vld [vmem:[%s116 + $0xd0] sm:$0xff]
      %v152 = vld [vmem:[%s116 + $0xd8] sm:$0xff]
      %v153 = vld [vmem:[%s116 + $0xe0] sm:$0xff]
      %v154 = vld [vmem:[%s116 + $0xe8] sm:$0xff]
      %v155 = vld [vmem:[%s116 + $0xf0] sm:$0xff]
      %v156 = vld [vmem:[%s116 + $0xf8] sm:$0xff]
      %v157 = vld [vmem:[%s116 + $0x100] sm:$0xff]
      %v158 = vld [vmem:[%s116 + $0x108] sm:$0xff]
      %v159 = vld [vmem:[%s116 + $0x110] sm:$0xff]
      %v160 = vld [vmem:[%s116 + $0x118] sm:$0xff]
      %v161 = vld [vmem:[%s116 + $0x120] sm:$0xff]
      %v162 = vld [vmem:[%s116 + $0x128] sm:$0xff]
      %v163 = vld [vmem:[%s116 + $0x130] sm:$0xff]
      %v164 = vld [vmem:[%s116 + $0x138] sm:$0xff]
      %v165 = vld [vmem:[%s116 + $0x140] sm:$0xff]
      %v166 = vld [vmem:[%s116 + $0x148] sm:$0xff]
      %v167 = vld [vmem:[%s116 + $0x150] sm:$0xff]
      %v168 = vld [vmem:[%s116 + $0x158] sm:$0xff]
      %v169 = vld [vmem:[%s116 + $0x160] sm:$0xff]
      %v170 = vld [vmem:[%s116 + $0x168] sm:$0xff]
      %v171 = vld [vmem:[%s116 + $0x170] sm:$0xff]
      %v172 = vld [vmem:[%s116 + $0x178] sm:$0xff]
      %v173 = vld [vmem:[%s116 + $0x180] sm:$0xff]
      %v174 = vld [vmem:[%s116 + $0x188] sm:$0xff]
      %v175 = vld [vmem:[%s116 + $0x190] sm:$0xff]
      %v176 = vld [vmem:[%s116 + $0x198] sm:$0xff]
      %v177 = vld [vmem:[%s116 + $0x1a0] sm:$0xff]
      %v178 = vld [vmem:[%s116 + $0x1a8] sm:$0xff]
      %v179 = vld [vmem:[%s116 + $0x1b0] sm:$0xff]
      %v180 = vld [vmem:[%s116 + $0x1b8] sm:$0xff]
      %v181 = vld [vmem:[%s116 + $0x1c0] sm:$0xff]
      %v182 = vld [vmem:[%s116 + $0x1c8] sm:$0xff]
      %v183 = vld [vmem:[%s116 + $0x1d0] sm:$0xff]
      %v184 = vld [vmem:[%s116 + $0x1d8] sm:$0xff]
      %v185 = vld [vmem:[%s116 + $0x1e0] sm:$0xff]
      %v186 = vld [vmem:[%s116 + $0x1e8] sm:$0xff]
      %v187 = vld [vmem:[%s116 + $0x1f0] sm:$0xff]
      %v188 = vld [vmem:[%s116 + $0x1f8] sm:$0xff]
      %v189 = vld [vmem:[%s116 + $0x200] sm:$0xff]
      %v190 = vld [vmem:[%s116 + $0x208] sm:$0xff]
      %v191 = vld [vmem:[%s116 + $0x210] sm:$0xff]
      %v192 = vld [vmem:[%s116 + $0x218] sm:$0xff]
      %v193 = vld [vmem:[%s116 + $0x220] sm:$0xff]
      %v194 = vld [vmem:[%s116 + $0x228] sm:$0xff]
      %v195 = vld [vmem:[%s116 + $0x230] sm:$0xff]
      %v196 = vld [vmem:[%s116 + $0x238] sm:$0xff]
      %v197 = vld [vmem:[%s116 + $0x240] sm:$0xff]
      %v198 = vld [vmem:[%s116 + $0x248] sm:$0xff]
      %v199 = vld [vmem:[%s116 + $0x250] sm:$0xff]
      %v200 = vld [vmem:[%s116 + $0x258] sm:$0xff]
      %v201 = vld [vmem:[%s116 + $0x260] sm:$0xff]
      %v202 = vld [vmem:[%s116 + $0x268] sm:$0xff]
      %v203 = vld [vmem:[%s116 + $0x270] sm:$0xff]
      %v204 = vld [vmem:[%s116 + $0x278] sm:$0xff]
      %v205 = vld [vmem:[%s116 + $0x280] sm:$0xff]
      %v206 = vld [vmem:[%s116 + $0x288] sm:$0xff]
      %v207 = vld [vmem:[%s116 + $0x290] sm:$0xff]
      %v208 = vld [vmem:[%s116 + $0x298] sm:$0xff]
      %v209 = vld [vmem:[%s116 + $0x2a0] sm:$0xff]
      %v210 = vld [vmem:[%s116 + $0x2a8] sm:$0xff]
      %v211 = vld [vmem:[%s116 + $0x2b0] sm:$0xff]
      %v212 = vld [vmem:[%s116 + $0x2b8] sm:$0xff]
      %v213 = vld [vmem:[%s116 + $0x2c0] sm:$0xff]
      %v214 = vld [vmem:[%s116 + $0x2c8] sm:$0xff]
      %v215 = vld [vmem:[%s116 + $0x2d0] sm:$0xff]
      %v216 = vld [vmem:[%s116 + $0x2d8] sm:$0xff]
      %v217 = vld [vmem:[%s116 + $0x2e0] sm:$0xff]
      %v218 = vld [vmem:[%s116 + $0x2e8] sm:$0xff]
      %v219 = vld [vmem:[%s116 + $0x2f0] sm:$0xff]
      %v220 = vld [vmem:[%s116 + $0x2f8] sm:$0xff]
      %v221 = vld [vmem:[%s116 + $0x300] sm:$0xff]
      %v222 = vld [vmem:[%s116 + $0x308] sm:$0xff]
      %v223 = vld [vmem:[%s116 + $0x310] sm:$0xff]
      %v224 = vld [vmem:[%s116 + $0x318] sm:$0xff]
      %v225 = vld [vmem:[%s116 + $0x320] sm:$0xff]
      %v226 = vld [vmem:[%s116 + $0x328] sm:$0xff]
      %v227 = vld [vmem:[%s116 + $0x330] sm:$0xff]
      %v228 = vld [vmem:[%s116 + $0x338] sm:$0xff]
      %v229 = vld [vmem:[%s116 + $0x340] sm:$0xff]
      %v230 = vld [vmem:[%s116 + $0x348] sm:$0xff]
      %v231 = vld [vmem:[%s116 + $0x350] sm:$0xff]
      %v232 = vld [vmem:[%s116 + $0x358] sm:$0xff]
      %v233 = vld [vmem:[%s116 + $0x360] sm:$0xff]
      %v234 = vld [vmem:[%s116 + $0x368] sm:$0xff]
      %v235 = vld [vmem:[%s116 + $0x370] sm:$0xff]
      %v236 = vld [vmem:[%s116 + $0x378] sm:$0xff]
      %v237 = vld [vmem:[%s116 + $0x380] sm:$0xff]
      %v238 = vld [vmem:[%s116 + $0x388] sm:$0xff]
      %v239 = vld [vmem:[%s116 + $0x390] sm:$0xff]
      %v240 = vld [vmem:[%s116 + $0x398] sm:$0xff]
      %v241 = vld [vmem:[%s116 + $0x3a0] sm:$0xff]
      %v242 = vld [vmem:[%s116 + $0x3a8] sm:$0xff]
      %v243 = vld [vmem:[%s116 + $0x3b0] sm:$0xff]
      %v244 = vld [vmem:[%s116 + $0x3b8] sm:$0xff]
      %v245 = vld [vmem:[%s116 + $0x3c0] sm:$0xff]
      %v246 = vld [vmem:[%s116 + $0x3c8] sm:$0xff]
      %v247 = vld [vmem:[%s116 + $0x3d0] sm:$0xff]
      %v248 = vld [vmem:[%s116 + $0x3d8] sm:$0xff]
      %v249 = vld [vmem:[%s116 + $0x3e0] sm:$0xff]
      %v250 = vld [vmem:[%s116 + $0x3e8] sm:$0xff]
      %v251 = vld [vmem:[%s116 + $0x3f0] sm:$0xff]
      %v252 = vld [vmem:[%s116 + $0x3f8] sm:$0xff]
      %v253 = vld [vmem:[%s116 + $0x400] sm:$0xff]
      %v254 = vld [vmem:[%s116 + $0x408] sm:$0xff]
      %v255 = vld [vmem:[%s116 + $0x410] sm:$0xff]
      %v256 = vld [vmem:[%s116 + $0x418] sm:$0xff]
      %v257 = vld [vmem:[%s116 + $0x420] sm:$0xff]
      %v258 = vld [vmem:[%s116 + $0x428] sm:$0xff]
      %v259 = vld [vmem:[%s116 + $0x430] sm:$0xff]
      %v260 = vld [vmem:[%s116 + $0x438] sm:$0xff]
      %v261 = vld [vmem:[%s116 + $0x440] sm:$0xff]
      %v262 = vld [vmem:[%s116 + $0x448] sm:$0xff]
      %v263 = vld [vmem:[%s116 + $0x450] sm:$0xff]
      %v264 = vld [vmem:[%s116 + $0x458] sm:$0xff]
      %v265 = vld [vmem:[%s116 + $0x460] sm:$0xff]
      %v266 = vld [vmem:[%s116 + $0x468] sm:$0xff]
      %v267 = vld [vmem:[%s116 + $0x470] sm:$0xff]
      %v268 = vld [vmem:[%s116 + $0x478] sm:$0xff]
      %v269 = vld [vmem:[%s116 + $0x480] sm:$0xff]
      %v270 = vld [vmem:[%s116 + $0x488] sm:$0xff]
      %v271 = vld [vmem:[%s116 + $0x490] sm:$0xff]
      %v272 = vld [vmem:[%s116 + $0x498] sm:$0xff]
      %v273 = vld [vmem:[%s116 + $0x4a0] sm:$0xff]
      %v274 = vld [vmem:[%s116 + $0x4a8] sm:$0xff]
      %v275 = vld [vmem:[%s116 + $0x4b0] sm:$0xff]
      %v276 = vld [vmem:[%s116 + $0x4b8] sm:$0xff]
      %v277 = vld [vmem:[%s116 + $0x4c0] sm:$0xff]
      %v278 = vld [vmem:[%s116 + $0x4c8] sm:$0xff]
      %v279 = vld [vmem:[%s116 + $0x4d0] sm:$0xff]
      %v280 = vld [vmem:[%s116 + $0x4d8] sm:$0xff]
      %v281 = vld [vmem:[%s116 + $0x4e0] sm:$0xff]
      %v282 = vld [vmem:[%s116 + $0x4e8] sm:$0xff]
      %v283 = vld [vmem:[%s116 + $0x4f0] sm:$0xff]
      %v284 = vld [vmem:[%s116 + $0x4f8] sm:$0xff]
      %v285 = vld [vmem:[%s116 + $0x500] sm:$0xff]
      %v286 = vld [vmem:[%s116 + $0x508] sm:$0xff]
      %v287 = vld [vmem:[%s116 + $0x510] sm:$0xff]
      %v288 = vld [vmem:[%s116 + $0x518] sm:$0xff]
      %v289 = vld [vmem:[%s116 + $0x520] sm:$0xff]
      %v290 = vld [vmem:[%s116 + $0x528] sm:$0xff]
      %v291 = vld [vmem:[%s116 + $0x530] sm:$0xff]
      %v292 = vld [vmem:[%s116 + $0x538] sm:$0xff]
      %v293 = vld [vmem:[%s116 + $0x540] sm:$0xff]
      %v294 = vld [vmem:[%s116 + $0x548] sm:$0xff]
      %v295 = vld [vmem:[%s116 + $0x550] sm:$0xff]
      %v296 = vld [vmem:[%s116 + $0x558] sm:$0xff]
      %v297 = vld [vmem:[%s116 + $0x560] sm:$0xff]
      %v298 = vld [vmem:[%s116 + $0x568] sm:$0xff]
      %v299 = vld [vmem:[%s116 + $0x570] sm:$0xff]
      %v300 = vld [vmem:[%s116 + $0x578] sm:$0xff]
      %v301 = vld [vmem:[%s116 + $0x580] sm:$0xff]
      %v302 = vld [vmem:[%s116 + $0x588] sm:$0xff]
      %v303 = vld [vmem:[%s116 + $0x590] sm:$0xff]
      %v304 = vld [vmem:[%s116 + $0x598] sm:$0xff]
      %v305 = vld [vmem:[%s116 + $0x5a0] sm:$0xff]
      %v306 = vld [vmem:[%s116 + $0x5a8] sm:$0xff]
      %v307 = vld [vmem:[%s116 + $0x5b0] sm:$0xff]
      %v308 = vld [vmem:[%s116 + $0x5b8] sm:$0xff]
      %v309 = vld [vmem:[%s116 + $0x5c0] sm:$0xff]
      %v310 = vld [vmem:[%s116 + $0x5c8] sm:$0xff]
      %v311 = vld [vmem:[%s116 + $0x5d0] sm:$0xff]
      %v312 = vld [vmem:[%s116 + $0x5d8] sm:$0xff]
      %v313 = vld [vmem:[%s116 + $0x5e0] sm:$0xff]
      %v314 = vld [vmem:[%s116 + $0x5e8] sm:$0xff]
      %v315 = vld [vmem:[%s116 + $0x5f0] sm:$0xff]
      %v316 = vld [vmem:[%s116 + $0x5f8] sm:$0xff]
      %v317 = vld [vmem:[%s116 + $0x600] sm:$0xff]
      %v318 = vld [vmem:[%s116 + $0x608] sm:$0xff]
      %v319 = vld [vmem:[%s116 + $0x610] sm:$0xff]
      %v320 = vld [vmem:[%s116 + $0x618] sm:$0xff]
      %v321 = vld [vmem:[%s116 + $0x620] sm:$0xff]
      %v322 = vld [vmem:[%s116 + $0x628] sm:$0xff]
      %v323 = vld [vmem:[%s116 + $0x630] sm:$0xff]
      %v324 = vld [vmem:[%s116 + $0x638] sm:$0xff]
      %v325 = vld [vmem:[%s116 + $0x640] sm:$0xff]
      %v326 = vld [vmem:[%s116 + $0x648] sm:$0xff]
      %v327 = vld [vmem:[%s116 + $0x650] sm:$0xff]
      %v328 = vld [vmem:[%s116 + $0x658] sm:$0xff]
      %v329 = vld [vmem:[%s116 + $0x660] sm:$0xff]
      %v330 = vld [vmem:[%s116 + $0x668] sm:$0xff]
      %v331 = vld [vmem:[%s116 + $0x670] sm:$0xff]
      %v332 = vld [vmem:[%s116 + $0x678] sm:$0xff]
      %v333 = vld [vmem:[%s116 + $0x680] sm:$0xff]
      %v334 = vld [vmem:[%s116 + $0x688] sm:$0xff]
      %v335 = vld [vmem:[%s116 + $0x690] sm:$0xff]
      %v336 = vld [vmem:[%s116 + $0x698] sm:$0xff]
      %v337 = vld [vmem:[%s116 + $0x6a0] sm:$0xff]
      %v338 = vld [vmem:[%s116 + $0x6a8] sm:$0xff]
      %v339 = vld [vmem:[%s116 + $0x6b0] sm:$0xff]
      %v340 = vld [vmem:[%s116 + $0x6b8] sm:$0xff]
      %v341 = vld [vmem:[%s116 + $0x6c0] sm:$0xff]
      %v342 = vld [vmem:[%s116 + $0x6c8] sm:$0xff]
      %v343 = vld [vmem:[%s116 + $0x6d0] sm:$0xff]
      %v344 = vld [vmem:[%s116 + $0x6d8] sm:$0xff]
      %v345 = vld [vmem:[%s116 + $0x6e0] sm:$0xff]
      %v346 = vld [vmem:[%s116 + $0x6e8] sm:$0xff]
      %v347 = vld [vmem:[%s116 + $0x6f0] sm:$0xff]
      %v348 = vld [vmem:[%s116 + $0x6f8] sm:$0xff]
      %v349 = vld [vmem:[%s116 + $0x700] sm:$0xff]
      %v350 = vld [vmem:[%s116 + $0x708] sm:$0xff]
      %v351 = vld [vmem:[%s116 + $0x710] sm:$0xff]
      %v352 = vld [vmem:[%s116 + $0x718] sm:$0xff]
      %v353 = vld [vmem:[%s116 + $0x720] sm:$0xff]
      %v354 = vld [vmem:[%s116 + $0x728] sm:$0xff]
      %v355 = vld [vmem:[%s116 + $0x730] sm:$0xff]
      %v356 = vld [vmem:[%s116 + $0x738] sm:$0xff]
      %v357 = vld [vmem:[%s116 + $0x740] sm:$0xff]
      %v358 = vld [vmem:[%s116 + $0x748] sm:$0xff]
      %v359 = vld [vmem:[%s116 + $0x750] sm:$0xff]
      %v360 = vld [vmem:[%s116 + $0x758] sm:$0xff]
      %v361 = vld [vmem:[%s116 + $0x760] sm:$0xff]
      %v362 = vld [vmem:[%s116 + $0x768] sm:$0xff]
      %v363 = vld [vmem:[%s116 + $0x770] sm:$0xff]
      %v364 = vld [vmem:[%s116 + $0x778] sm:$0xff]
      %v365 = vld [vmem:[%s116 + $0x780] sm:$0xff]
      %v366 = vld [vmem:[%s116 + $0x788] sm:$0xff]
      %v367 = vld [vmem:[%s116 + $0x790] sm:$0xff]
      %v368 = vld [vmem:[%s116 + $0x798] sm:$0xff]
      %v369 = vld [vmem:[%s116 + $0x7a0] sm:$0xff]
      %v370 = vld [vmem:[%s116 + $0x7a8] sm:$0xff]
      %v371 = vld [vmem:[%s116 + $0x7b0] sm:$0xff]
      %v372 = vld [vmem:[%s116 + $0x7b8] sm:$0xff]
      %v373 = vld [vmem:[%s116 + $0x7c0] sm:$0xff]
      %v374 = vld [vmem:[%s116 + $0x7c8] sm:$0xff]
      %v375 = vld [vmem:[%s116 + $0x7d0] sm:$0xff]
      %v376 = vld [vmem:[%s116 + $0x7d8] sm:$0xff]
      %v377 = vld [vmem:[%s116 + $0x7e0] sm:$0xff]
      %v378 = vld [vmem:[%s116 + $0x7e8] sm:$0xff]
      %v379 = vld [vmem:[%s116 + $0x7f0] sm:$0xff]
      %v380 = vld [vmem:[%s116 + $0x7f8] sm:$0xff]
      %v381 = vld [vmem:[%s116 + $0x800] sm:$0xff]
      %v382 = vld [vmem:[%s116 + $0x808] sm:$0xff]
      %v383 = vld [vmem:[%s116 + $0x810] sm:$0xff]
      %v384 = vld [vmem:[%s116 + $0x818] sm:$0xff]
      %v385 = vld [vmem:[%s116 + $0x820] sm:$0xff]
      %v386 = vld [vmem:[%s116 + $0x828] sm:$0xff]
      %v387 = vld [vmem:[%s116 + $0x830] sm:$0xff]
      %v388 = vld [vmem:[%s116 + $0x838] sm:$0xff]
      %v389 = vld [vmem:[%s116 + $0x840] sm:$0xff]
      %v390 = vld [vmem:[%s116 + $0x848] sm:$0xff]
      %v391 = vld [vmem:[%s116 + $0x850] sm:$0xff]
      %v392 = vld [vmem:[%s116 + $0x858] sm:$0xff]
      %v393 = vld [vmem:[%s116 + $0x860] sm:$0xff]
      %v394 = vld [vmem:[%s116 + $0x868] sm:$0xff]
      %v395 = vld [vmem:[%s116 + $0x870] sm:$0xff]
      %v396 = vld [vmem:[%s116 + $0x878] sm:$0xff]
      %v397 = vld [vmem:[%s116 + $0x880] sm:$0xff]
      %v398 = vld [vmem:[%s116 + $0x888] sm:$0xff]
      %v399 = vld [vmem:[%s116 + $0x890] sm:$0xff]
      %v400 = vld [vmem:[%s116 + $0x898] sm:$0xff]
      %v401 = vld [vmem:[%s116 + $0x8a0] sm:$0xff]
      %v402 = vld [vmem:[%s116 + $0x8a8] sm:$0xff]
      %v403 = vld [vmem:[%s116 + $0x8b0] sm:$0xff]
      %v404 = vld [vmem:[%s116 + $0x8b8] sm:$0xff]
      %v405 = vld [vmem:[%s116 + $0x8c0] sm:$0xff]
      %v406 = vld [vmem:[%s116 + $0x8c8] sm:$0xff]
      %v407 = vld [vmem:[%s116 + $0x8d0] sm:$0xff]
      %v408 = vld [vmem:[%s116 + $0x8d8] sm:$0xff]
      %v409 = vld [vmem:[%s116 + $0x8e0] sm:$0xff]
      %v410 = vld [vmem:[%s116 + $0x8e8] sm:$0xff]
      %v411 = vld [vmem:[%s116 + $0x8f0] sm:$0xff]
      %v412 = vld [vmem:[%s116 + $0x8f8] sm:$0xff]
      %v413 = vld [vmem:[%s116 + $0x900] sm:$0xff]
      %v414 = vld [vmem:[%s116 + $0x908] sm:$0xff]
      %v415 = vld [vmem:[%s116 + $0x910] sm:$0xff]
      %v416 = vld [vmem:[%s116 + $0x918] sm:$0xff]
      %v417 = vld [vmem:[%s116 + $0x920] sm:$0xff]
      %v418 = vld [vmem:[%s116 + $0x928] sm:$0xff]
      %v419 = vld [vmem:[%s116 + $0x930] sm:$0xff]
      %v420 = vld [vmem:[%s116 + $0x938] sm:$0xff]
      %v421 = vld [vmem:[%s116 + $0x940] sm:$0xff]
      %v422 = vld [vmem:[%s116 + $0x948] sm:$0xff]
      %v423 = vld [vmem:[%s116 + $0x950] sm:$0xff]
      %v424 = vld [vmem:[%s116 + $0x958] sm:$0xff]
      %v425 = vld [vmem:[%s116 + $0x960] sm:$0xff]
      %v426 = vld [vmem:[%s116 + $0x968] sm:$0xff]
      %v427 = vld [vmem:[%s116 + $0x970] sm:$0xff]
      %v428 = vld [vmem:[%s116 + $0x978] sm:$0xff]
      %v429 = vld [vmem:[%s116 + $0x980] sm:$0xff]
      %v430 = vld [vmem:[%s116 + $0x988] sm:$0xff]
      %v431 = vld [vmem:[%s116 + $0x990] sm:$0xff]
      %v432 = vld [vmem:[%s116 + $0x998] sm:$0xff]
      %v433 = vld [vmem:[%s116 + $0x9a0] sm:$0xff]
      %v434 = vld [vmem:[%s116 + $0x9a8] sm:$0xff]
      %v435 = vld [vmem:[%s116 + $0x9b0] sm:$0xff]
      %v436 = vld [vmem:[%s116 + $0x9b8] sm:$0xff]
      %v437 = vld [vmem:[%s116 + $0x9c0] sm:$0xff]
      %v438 = vld [vmem:[%s116 + $0x9c8] sm:$0xff]
      %v439 = vld [vmem:[%s116 + $0x9d0] sm:$0xff]
      %v440 = vld [vmem:[%s116 + $0x9d8] sm:$0xff]
      %v441 = vld [vmem:[%s116 + $0x9e0] sm:$0xff]
      %v442 = vld [vmem:[%s116 + $0x9e8] sm:$0xff]
      %v443 = vld [vmem:[%s116 + $0x9f0] sm:$0xff]
      %v444 = vld [vmem:[%s116 + $0x9f8] sm:$0xff]
      %v445 = vld [vmem:[%s116 + $0xa00] sm:$0xff]
      %v446 = vld [vmem:[%s116 + $0xa08] sm:$0xff]
      %v447 = vld [vmem:[%s116 + $0xa10] sm:$0xff]
      %v448 = vld [vmem:[%s116 + $0xa18] sm:$0xff]
      %v449 = vld [vmem:[%s116 + $0xa20] sm:$0xff]
      %v450 = vld [vmem:[%s116 + $0xa28] sm:$0xff]
      %v451 = vld [vmem:[%s116 + $0xa30] sm:$0xff]
      %v452 = vld [vmem:[%s116 + $0xa38] sm:$0xff]
      %v453 = vld [vmem:[%s116 + $0xa40] sm:$0xff]
      %v454 = vld [vmem:[%s116 + $0xa48] sm:$0xff]
      %v455 = vld [vmem:[%s116 + $0xa50] sm:$0xff]
      %v456 = vld [vmem:[%s116 + $0xa58] sm:$0xff]
      %v457 = vld [vmem:[%s116 + $0xa60] sm:$0xff]
      %v458 = vld [vmem:[%s116 + $0xa68] sm:$0xff]
      %v459 = vld [vmem:[%s116 + $0xa70] sm:$0xff]
      %v460 = vld [vmem:[%s116 + $0xa78] sm:$0xff]
      %v461 = vmax.f32 %v125, %v131
      %v462 = vmax.f32 %v126, %v132
      %v463 = vmax.f32 %v127, %v133
      %v464 = vmax.f32 %v128, %v134
      %v465 = vmax.f32 %v129, %v135
      %v466 = vmax.f32 %v130, %v136
      %v467 = vmax.f32 %v137, %v143
      %v468 = vmax.f32 %v138, %v144
      %v469 = vmax.f32 %v139, %v145
      %v470 = vmax.f32 %v140, %v146
      %v471 = vmax.f32 %v141, %v147
      %v472 = vmax.f32 %v142, %v148
      %v473 = vmax.f32 %v149, %v155
      %v474 = vmax.f32 %v150, %v156
      %v475 = vmax.f32 %v151, %v157
      %v476 = vmax.f32 %v152, %v158
      %v477 = vmax.f32 %v153, %v159
      %v478 = vmax.f32 %v154, %v160
      %v479 = vmax.f32 %v161, %v167
      %v480 = vmax.f32 %v162, %v168
      %v481 = vmax.f32 %v163, %v169
      %v482 = vmax.f32 %v164, %v170
      %v483 = vmax.f32 %v165, %v171
      %v484 = vmax.f32 %v166, %v172
      %v485 = vmax.f32 %v173, %v179
      %v486 = vmax.f32 %v174, %v180
      %v487 = vmax.f32 %v175, %v181
      %v488 = vmax.f32 %v176, %v182
      %v489 = vmax.f32 %v177, %v183
      %v490 = vmax.f32 %v178, %v184
      %v491 = vmax.f32 %v185, %v191
      %v492 = vmax.f32 %v186, %v192
      %v493 = vmax.f32 %v187, %v193
      %v494 = vmax.f32 %v188, %v194
      %v495 = vmax.f32 %v189, %v195
      %v496 = vmax.f32 %v190, %v196
      %v497 = vmax.f32 %v197, %v203
      %v498 = vmax.f32 %v198, %v204
      %v499 = vmax.f32 %v199, %v205
      %v500 = vmax.f32 %v200, %v206
      %v501 = vmax.f32 %v201, %v207
      %v502 = vmax.f32 %v202, %v208
      %v503 = vmax.f32 %v209, %v215
      %v504 = vmax.f32 %v210, %v216
      %v505 = vmax.f32 %v211, %v217
      %v506 = vmax.f32 %v212, %v218
      %v507 = vmax.f32 %v213, %v219
      %v508 = vmax.f32 %v214, %v220
      %v509 = vmax.f32 %v221, %v227
      %v510 = vmax.f32 %v222, %v228
      %v511 = vmax.f32 %v223, %v229
      %v512 = vmax.f32 %v224, %v230
      %v513 = vmax.f32 %v225, %v231
      %v514 = vmax.f32 %v226, %v232
      %v515 = vmax.f32 %v233, %v239
      %v516 = vmax.f32 %v234, %v240
      %v517 = vmax.f32 %v235, %v241
      %v518 = vmax.f32 %v236, %v242
      %v519 = vmax.f32 %v237, %v243
      %v520 = vmax.f32 %v238, %v244
      %v521 = vmax.f32 %v245, %v251
      %v522 = vmax.f32 %v246, %v252
      %v523 = vmax.f32 %v247, %v253
      %v524 = vmax.f32 %v248, %v254
      %v525 = vmax.f32 %v249, %v255
      %v526 = vmax.f32 %v250, %v256
      %v527 = vmax.f32 %v257, %v263
      %v528 = vmax.f32 %v258, %v264
      %v529 = vmax.f32 %v259, %v265
      %v530 = vmax.f32 %v260, %v266
      %v531 = vmax.f32 %v261, %v267
      %v532 = vmax.f32 %v262, %v268
      %v533 = vmax.f32 %v269, %v275
      %v534 = vmax.f32 %v270, %v276
      %v535 = vmax.f32 %v271, %v277
      %v536 = vmax.f32 %v272, %v278
      %v537 = vmax.f32 %v273, %v279
      %v538 = vmax.f32 %v274, %v280
      %v539 = vmax.f32 %v281, %v287
      %v540 = vmax.f32 %v282, %v288
      %v541 = vmax.f32 %v283, %v289
      %v542 = vmax.f32 %v284, %v290
      %v543 = vmax.f32 %v285, %v291
      %v544 = vmax.f32 %v286, %v292
      %v545 = vmax.f32 %v293, %v299
      %v546 = vmax.f32 %v294, %v300
      %v547 = vmax.f32 %v295, %v301
      %v548 = vmax.f32 %v296, %v302
      %v549 = vmax.f32 %v297, %v303
      %v550 = vmax.f32 %v298, %v304
      %v551 = vmax.f32 %v305, %v311
      %v552 = vmax.f32 %v306, %v312
      %v553 = vmax.f32 %v307, %v313
      %v554 = vmax.f32 %v308, %v314
      %v555 = vmax.f32 %v309, %v315
      %v556 = vmax.f32 %v310, %v316
      %v557 = vmax.f32 %v317, %v323
      %v558 = vmax.f32 %v318, %v324
      %v559 = vmax.f32 %v319, %v325
      %v560 = vmax.f32 %v320, %v326
      %v561 = vmax.f32 %v321, %v327
      %v562 = vmax.f32 %v322, %v328
      %v563 = vmax.f32 %v329, %v335
      %v564 = vmax.f32 %v330, %v336
      %v565 = vmax.f32 %v331, %v337
      %v566 = vmax.f32 %v332, %v338
      %v567 = vmax.f32 %v333, %v339
      %v568 = vmax.f32 %v334, %v340
      %v569 = vmax.f32 %v341, %v347
      %v570 = vmax.f32 %v342, %v348
      %v571 = vmax.f32 %v343, %v349
      %v572 = vmax.f32 %v344, %v350
      %v573 = vmax.f32 %v345, %v351
      %v574 = vmax.f32 %v346, %v352
      %v575 = vmax.f32 %v353, %v359
      %v576 = vmax.f32 %v354, %v360
      %v577 = vmax.f32 %v355, %v361
      %v578 = vmax.f32 %v356, %v362
      %v579 = vmax.f32 %v357, %v363
      %v580 = vmax.f32 %v358, %v364
      %v581 = vmax.f32 %v365, %v371
      %v582 = vmax.f32 %v366, %v372
      %v583 = vmax.f32 %v367, %v373
      %v584 = vmax.f32 %v368, %v374
      %v585 = vmax.f32 %v369, %v375
      %v586 = vmax.f32 %v370, %v376
      %v587 = vmax.f32 %v377, %v383
      %v588 = vmax.f32 %v378, %v384
      %v589 = vmax.f32 %v379, %v385
      %v590 = vmax.f32 %v380, %v386
      %v591 = vmax.f32 %v381, %v387
      %v592 = vmax.f32 %v382, %v388
      %v593 = vmax.f32 %v389, %v395
      %v594 = vmax.f32 %v390, %v396
      %v595 = vmax.f32 %v391, %v397
      %v596 = vmax.f32 %v392, %v398
      %v597 = vmax.f32 %v393, %v399
      %v598 = vmax.f32 %v394, %v400
      %v599 = vmax.f32 %v401, %v407
      %v600 = vmax.f32 %v402, %v408
      %v601 = vmax.f32 %v403, %v409
      %v602 = vmax.f32 %v404, %v410
      %v603 = vmax.f32 %v405, %v411
      %v604 = vmax.f32 %v406, %v412
      %v605 = vmax.f32 %v413, %v419
      %v606 = vmax.f32 %v414, %v420
      %v607 = vmax.f32 %v415, %v421
      %v608 = vmax.f32 %v416, %v422
      %v609 = vmax.f32 %v417, %v423
      %v610 = vmax.f32 %v418, %v424
      %v611 = vmax.f32 %v425, %v431
      %v612 = vmax.f32 %v426, %v432
      %v613 = vmax.f32 %v427, %v433
      %v614 = vmax.f32 %v428, %v434
      %v615 = vmax.f32 %v429, %v435
      %v616 = vmax.f32 %v430, %v436
      %v617 = vmax.f32 %v437, %v443
      %v618 = vmax.f32 %v438, %v444
      %v619 = vmax.f32 %v439, %v445
      %v620 = vmax.f32 %v440, %v446
      %v621 = vmax.f32 %v441, %v447
      %v622 = vmax.f32 %v442, %v448
      %v623 = vmax.f32 %v449, %v455
      %v624 = vmax.f32 %v450, %v456
      %v625 = vmax.f32 %v451, %v457
      %v626 = vmax.f32 %v452, %v458
      %v627 = vmax.f32 %v453, %v459
      %v628 = vmax.f32 %v454, %v460
      %v629 = vmax.f32 %v461, %v462
      %v630 = vmax.f32 %v463, %v464
      %v631 = vmax.f32 %v465, %v466
      %v632 = vmax.f32 %v467, %v468
      %v633 = vmax.f32 %v469, %v470
      %v634 = vmax.f32 %v471, %v472
      %v635 = vmax.f32 %v473, %v474
      %v636 = vmax.f32 %v475, %v476
      %v637 = vmax.f32 %v477, %v478
      %v638 = vmax.f32 %v479, %v480
      %v639 = vmax.f32 %v481, %v482
      %v640 = vmax.f32 %v483, %v484
      %v641 = vmax.f32 %v485, %v486
      %v642 = vmax.f32 %v487, %v488
      %v643 = vmax.f32 %v489, %v490
      %v644 = vmax.f32 %v491, %v492
      %v645 = vmax.f32 %v493, %v494
      %v646 = vmax.f32 %v495, %v496
      %v647 = vmax.f32 %v497, %v498
      %v648 = vmax.f32 %v499, %v500
      %v649 = vmax.f32 %v501, %v502
      %v650 = vmax.f32 %v503, %v504
      %v651 = vmax.f32 %v505, %v506
      %v652 = vmax.f32 %v507, %v508
      %v653 = vmax.f32 %v509, %v510
      %v654 = vmax.f32 %v511, %v512
      %v655 = vmax.f32 %v513, %v514
      %v656 = vmax.f32 %v515, %v516
      %v657 = vmax.f32 %v517, %v518
      %v658 = vmax.f32 %v519, %v520
      %v659 = vmax.f32 %v521, %v522
      %v660 = vmax.f32 %v523, %v524
      %v661 = vmax.f32 %v525, %v526
      %v662 = vmax.f32 %v527, %v528
      %v663 = vmax.f32 %v529, %v530
      %v664 = vmax.f32 %v531, %v532
      %v665 = vmax.f32 %v533, %v534
      %v666 = vmax.f32 %v535, %v536
      %v667 = vmax.f32 %v537, %v538
      %v668 = vmax.f32 %v539, %v540
      %v669 = vmax.f32 %v541, %v542
      %v670 = vmax.f32 %v543, %v544
      %v671 = vmax.f32 %v545, %v546
      %v672 = vmax.f32 %v547, %v548
      %v673 = vmax.f32 %v549, %v550
      %v674 = vmax.f32 %v551, %v552
      %v675 = vmax.f32 %v553, %v554
      %v676 = vmax.f32 %v555, %v556
      %v677 = vmax.f32 %v557, %v558
      %v678 = vmax.f32 %v559, %v560
      %v679 = vmax.f32 %v561, %v562
      %v680 = vmax.f32 %v563, %v564
      %v681 = vmax.f32 %v565, %v566
      %v682 = vmax.f32 %v567, %v568
      %v683 = vmax.f32 %v569, %v570
      %v684 = vmax.f32 %v571, %v572
      %v685 = vmax.f32 %v573, %v574
      %v686 = vmax.f32 %v575, %v576
      %v687 = vmax.f32 %v577, %v578
      %v688 = vmax.f32 %v579, %v580
      %v689 = vmax.f32 %v581, %v582
      %v690 = vmax.f32 %v583, %v584
      %v691 = vmax.f32 %v585, %v586
      %v692 = vmax.f32 %v587, %v588
      %v693 = vmax.f32 %v589, %v590
      %v694 = vmax.f32 %v591, %v592
      %v695 = vmax.f32 %v593, %v594
      %v696 = vmax.f32 %v595, %v596
      %v697 = vmax.f32 %v597, %v598
      %v698 = vmax.f32 %v599, %v600
      %v699 = vmax.f32 %v601, %v602
      %v700 = vmax.f32 %v603, %v604
      %v701 = vmax.f32 %v605, %v606
      %v702 = vmax.f32 %v607, %v608
      %v703 = vmax.f32 %v609, %v610
      %v704 = vmax.f32 %v611, %v612
      %v705 = vmax.f32 %v613, %v614
      %v706 = vmax.f32 %v615, %v616
      %v707 = vmax.f32 %v617, %v618
      %v708 = vmax.f32 %v619, %v620
      %v709 = vmax.f32 %v621, %v622
      %v710 = vmax.f32 %v623, %v624
      %v711 = vmax.f32 %v625, %v626
      %v712 = vmax.f32 %v627, %v628
      %713 = vst [vmem:[%s123] sm:$0xff] %v629
      %714 = vst [vmem:[%s123 + $0x8] sm:$0xff] %v630
      %715 = vst [vmem:[%s123 + $0x10] sm:$0xff] %v631
      %716 = vst [vmem:[%s123 + $0x18] sm:$0xff] %v632
      %717 = vst [vmem:[%s123 + $0x20] sm:$0xff] %v633
      %718 = vst [vmem:[%s123 + $0x28] sm:$0xff] %v634
      %719 = vst [vmem:[%s123 + $0x30] sm:$0xff] %v635
      %720 = vst [vmem:[%s123 + $0x38] sm:$0xff] %v636
      %721 = vst [vmem:[%s123 + $0x40] sm:$0xff] %v637
      %722 = vst [vmem:[%s123 + $0x48] sm:$0xff] %v638
      %723 = vst [vmem:[%s123 + $0x50] sm:$0xff] %v639
      %724 = vst [vmem:[%s123 + $0x58] sm:$0xff] %v640
      %725 = vst [vmem:[%s123 + $0x60] sm:$0xff] %v641
      %726 = vst [vmem:[%s123 + $0x68] sm:$0xff] %v642
      %727 = vst [vmem:[%s123 + $0x70] sm:$0xff] %v643
      %728 = vst [vmem:[%s123 + $0x78] sm:$0xff] %v644
      %729 = vst [vmem:[%s123 + $0x80] sm:$0xff] %v645
      %730 = vst [vmem:[%s123 + $0x88] sm:$0xff] %v646
      %731 = vst [vmem:[%s123 + $0x90] sm:$0xff] %v647
      %732 = vst [vmem:[%s123 + $0x98] sm:$0xff] %v648
      %733 = vst [vmem:[%s123 + $0xa0] sm:$0xff] %v649
      %734 = vst [vmem:[%s123 + $0xa8] sm:$0xff] %v650
      %735 = vst [vmem:[%s123 + $0xb0] sm:$0xff] %v651
      %736 = vst [vmem:[%s123 + $0xb8] sm:$0xff] %v652
      %737 = vst [vmem:[%s123 + $0xc0] sm:$0xff] %v653
      %738 = vst [vmem:[%s123 + $0xc8] sm:$0xff] %v654
      %739 = vst [vmem:[%s123 + $0xd0] sm:$0xff] %v655
      %740 = vst [vmem:[%s123 + $0xd8] sm:$0xff] %v656
      %741 = vst [vmem:[%s123 + $0xe0] sm:$0xff] %v657
      %742 = vst [vmem:[%s123 + $0xe8] sm:$0xff] %v658
      %743 = vst [vmem:[%s123 + $0xf0] sm:$0xff] %v659
      %744 = vst [vmem:[%s123 + $0xf8] sm:$0xff] %v660
      %745 = vst [vmem:[%s123 + $0x100] sm:$0xff] %v661
      %746 = vst [vmem:[%s123 + $0x108] sm:$0xff] %v662
      %747 = vst [vmem:[%s123 + $0x110] sm:$0xff] %v663
      %748 = vst [vmem:[%s123 + $0x118] sm:$0xff] %v664
      %749 = vst [vmem:[%s123 + $0x120] sm:$0xff] %v665
      %750 = vst [vmem:[%s123 + $0x128] sm:$0xff] %v666
      %751 = vst [vmem:[%s123 + $0x130] sm:$0xff] %v667
      %752 = vst [vmem:[%s123 + $0x138] sm:$0xff] %v668
      %753 = vst [vmem:[%s123 + $0x140] sm:$0xff] %v669
      %754 = vst [vmem:[%s123 + $0x148] sm:$0xff] %v670
      %755 = vst [vmem:[%s123 + $0x150] sm:$0xff] %v671
      %756 = vst [vmem:[%s123 + $0x158] sm:$0xff] %v672
      %757 = vst [vmem:[%s123 + $0x160] sm:$0xff] %v673
      %758 = vst [vmem:[%s123 + $0x168] sm:$0xff] %v674
      %759 = vst [vmem:[%s123 + $0x170] sm:$0xff] %v675
      %760 = vst [vmem:[%s123 + $0x178] sm:$0xff] %v676
      %761 = vst [vmem:[%s123 + $0x180] sm:$0xff] %v677
      %762 = vst [vmem:[%s123 + $0x188] sm:$0xff] %v678
      %763 = vst [vmem:[%s123 + $0x190] sm:$0xff] %v679
      %764 = vst [vmem:[%s123 + $0x198] sm:$0xff] %v680
      %765 = vst [vmem:[%s123 + $0x1a0] sm:$0xff] %v681
      %766 = vst [vmem:[%s123 + $0x1a8] sm:$0xff] %v682
      %767 = vst [vmem:[%s123 + $0x1b0] sm:$0xff] %v683
      %768 = vst [vmem:[%s123 + $0x1b8] sm:$0xff] %v684
      %769 = vst [vmem:[%s123 + $0x1c0] sm:$0xff] %v685
      %770 = vst [vmem:[%s123 + $0x1c8] sm:$0xff] %v686
      %771 = vst [vmem:[%s123 + $0x1d0] sm:$0xff] %v687
      %772 = vst [vmem:[%s123 + $0x1d8] sm:$0xff] %v688
      %773 = vst [vmem:[%s123 + $0x1e0] sm:$0xff] %v689
      %774 = vst [vmem:[%s123 + $0x1e8] sm:$0xff] %v690
      %775 = vst [vmem:[%s123 + $0x1f0] sm:$0xff] %v691
      %776 = vst [vmem:[%s123 + $0x1f8] sm:$0xff] %v692
      %777 = vst [vmem:[%s123 + $0x200] sm:$0xff] %v693
      %778 = vst [vmem:[%s123 + $0x208] sm:$0xff] %v694
      %779 = vst [vmem:[%s123 + $0x210] sm:$0xff] %v695
      %780 = vst [vmem:[%s123 + $0x218] sm:$0xff] %v696
      %781 = vst [vmem:[%s123 + $0x220] sm:$0xff] %v697
      %782 = vst [vmem:[%s123 + $0x228] sm:$0xff] %v698
      %783 = vst [vmem:[%s123 + $0x230] sm:$0xff] %v699
      %784 = vst [vmem:[%s123 + $0x238] sm:$0xff] %v700
      %785 = vst [vmem:[%s123 + $0x240] sm:$0xff] %v701
      %786 = vst [vmem:[%s123 + $0x248] sm:$0xff] %v702
      %787 = vst [vmem:[%s123 + $0x250] sm:$0xff] %v703
      %788 = vst [vmem:[%s123 + $0x258] sm:$0xff] %v704
      %789 = vst [vmem:[%s123 + $0x260] sm:$0xff] %v705
      %790 = vst [vmem:[%s123 + $0x268] sm:$0xff] %v706
      %791 = vst [vmem:[%s123 + $0x270] sm:$0xff] %v707
      %792 = vst [vmem:[%s123 + $0x278] sm:$0xff] %v708
      %793 = vst [vmem:[%s123 + $0x280] sm:$0xff] %v709
      %794 = vst [vmem:[%s123 + $0x288] sm:$0xff] %v710
      %795 = vst [vmem:[%s123 + $0x290] sm:$0xff] %v711
      %796 = vst [vmem:[%s123 + $0x298] sm:$0xff] %v712
      %s797 = smul.u32 28, %s12
      %p798 = scmp.lt.s32.totalorder %s797, 55
      %s799 = scalar_select %p798, %s797, 55
      %s800 = smul.addr %s799, 3
      %s801 = smul.addr %s800, 8
      %s802 = scalar_lea.vmem %s1, %s801
      // Predicated region
      $region25: #{pyteen_forward.6} parent=23 // pred_check
        %p803 = pneg %p56
      $region26: #{pyteen_forward.6} parent=23 // pred_check_branch
        %805 = sbr.rel (%p803) target = $region28
      $region27: #{pyteen_forward.6} parent=23 // pred_region
        %s806 = smul.u32 28, %s12
      $region28: #{pyteen_forward.6} parent=23 // pred_fallthru
        _
    $region24: #{pyteen_forward.6} parent=5 // pred_fallthru
      _
    %p807 = scmp.le.s32.totalorder 2, %s7
    // Predicated region
    $region29: #{pyteen_forward.6} parent=5 // pred_check
      %p808 = pneg %p807
    $region30: #{pyteen_forward.6} parent=5 // pred_check_branch
      %810 = sbr.rel (%p808) target = $region32
    $region31: #{pyteen_forward.6} parent=5 // pred_region
      %s811 = ssub.s32 %s7, 2
      // Predicated region
      $region33: #{pyteen_forward.6} parent=31 // pred_check
        %p812 = pneg %p62
      $region34: #{pyteen_forward.6} parent=31 // pred_check_branch
        %814 = sbr.rel (%p812) target = $region36
      $region35: #{pyteen_forward.6} parent=31 // pred_region
        %s815 = smul.u32 28, %s13
        %p816 = scmp.lt.s32.totalorder %s815, 55
        %s817 = scalar_select %p816, %s815, 55
        %s818 = smul.addr %s817, 3
        %s819 = smul.addr %s818, 8
        %s820 = scalar_lea.vmem %s1, %s819
      $region36: #{pyteen_forward.6} parent=31 // pred_fallthru
        _
    $region32: #{pyteen_forward.6} parent=5 // pred_fallthru
      _
  $region6: #{pyteen_forward.6} parent=0 // loop_footer
    %s11 = sadd.s32 1, %s7
  $region7: #{pyteen_forward.6} parent=0 // loop_footer_branch
    %6 = sbr.rel target = $region3
  $region8: #{pyteen_forward.6} parent=0 // loop_exit
    _

// kernel: pyteen_forward.7
$region0: #{pyteen_forward.7}
  #allocation0 [shape = 'u32[]', space=smem, size = 0x4, offset = 0x4, fixed_abs, tag = 'smem constant byte address 0x4 - core index']
  #allocation1 [shape = 'u32[144,128]{1,0:T(1,128)}', space=vmem, size = 0x12000, scoped, tag = 'internal scratch']
  %s0 = inlined_call_operand.vmem [shape: f32[960,256], index: 0, kind: input, shape index: {}]
  %s1 = inlined_call_operand.vmem [shape: f32[256,128], index: 1, kind: input, shape index: {}]
  %s2 = inlined_call_operand.vmem [shape: f32[1,128], index: 2, kind: input, shape index: {}]
  %s3 = inlined_call_operand.vmem [shape: f32[960,128], index: 3, kind: output, shape index: {}]
  %s4 = sld [smem:[#allocation0]]
  $region45: #{pyteen_forward.7} parent=0
    _
  %s6 = ssub.s32 1, %s4
  %s7 = scalar_select 0, %s6, %s4
  loop: start=0, step=1, limit=4
  $region2: #{pyteen_forward.7} parent=0 // loop_pre_header
    _
  $region3: #{pyteen_forward.7} parent=0 // loop_header
    %s9 = sphi 0, %s13
    %p10 = scmp.ge.s32.totalorder %s9, 4
    %s19 = sphi 0, %s21
    %s22 = sphi 0, %s19
    %s23 = sphi 0, %s22
    %s39 = sphi 0, %s23
    %s43 = sphi 0, %s43
    %s45 = sphi 0, %s43
    %s46 = sphi 0, %s45
    %s60 = sphi 0, %s46
    %s64 = sphi 0, %s64
    %s66 = sphi 0, %s64
    %s67 = sphi 0, %s66
    %s81 = sphi 0, %s67
    %s87 = sphi 0, %s89
    %s90 = sphi 0, %s87
    %s91 = sphi 0, %s90
    %s107 = sphi 0, %s91
  $region4: #{pyteen_forward.7} parent=0 // loop_header_branch
    %12 = sbr.rel (%p10) target = $region8
  $region5: #{pyteen_forward.7} parent=0 // loop_body
    %s14 = ssub.s32 %s9, 1
    %s15 = ssub.s32 %s9, 2
    %s16 = sadd.s32 %s9, 1
    %s17 = ssub.s32 %s9, %s16
    %p18 = scmp.eq.s32.totalorder %s17, 0
    %s20 = sadd.s32 %s19, 1
    %s21 = scalar_select %p18, %s19, %s20
    %p24 = pneg %p18
    %p25 = scmp.eq.s32.totalorder %s9, 1
    %p26 = por %p24, %p25
    %p27 = scmp.ne.s32.totalorder %s19, %s22
    %p28 = scmp.eq.s32.totalorder %s9, 0
    %p29 = por %p27, %p28
    %p30 = scmp.ne.s32.totalorder %s19, %s22
    %p31 = scmp.eq.s32.totalorder %s14, 1
    %p32 = por %p30, %p31
    %p33 = scmp.ne.s32.totalorder %s22, %s23
    %p34 = scmp.eq.s32.totalorder %s14, 0
    %p35 = por %p33, %p34
    %p36 = scmp.ne.s32.totalorder %s22, %s23
    %p37 = scmp.eq.s32.totalorder %s15, 1
    %p38 = por %p36, %p37
    %p40 = scmp.ne.s32.totalorder %s23, %s39
    %p41 = scmp.eq.s32.totalorder %s15, 0
    %p42 = por %p40, %p41
    %s44 = sadd.s32 %s43, 1
    %p47 = scmp.eq.s32.totalorder %s9, 1
    %p48 = scmp.ne.s32.totalorder %s43, %s45
    %p49 = scmp.eq.s32.totalorder %s9, 0
    %p50 = por %p48, %p49
    %p51 = scmp.ne.s32.totalorder %s43, %s45
    %p52 = scmp.eq.s32.totalorder %s14, 1
    %p53 = por %p51, %p52
    %p54 = scmp.ne.s32.totalorder %s45, %s46
    %p55 = scmp.eq.s32.totalorder %s14, 0
    %p56 = por %p54, %p55
    %p57 = scmp.ne.s32.totalorder %s45, %s46
    %p58 = scmp.eq.s32.totalorder %s15, 1
    %p59 = por %p57, %p58
    %p61 = scmp.ne.s32.totalorder %s46, %s60
    %p62 = scmp.eq.s32.totalorder %s15, 0
    %p63 = por %p61, %p62
    %s65 = sadd.s32 %s64, 1
    %p68 = scmp.eq.s32.totalorder %s9, 1
    %p69 = scmp.ne.s32.totalorder %s64, %s66
    %p70 = scmp.eq.s32.totalorder %s9, 0
    %p71 = por %p69, %p70
    %p72 = scmp.ne.s32.totalorder %s64, %s66
    %p73 = scmp.eq.s32.totalorder %s14, 1
    %p74 = por %p72, %p73
    %p75 = scmp.ne.s32.totalorder %s66, %s67
    %p76 = scmp.eq.s32.totalorder %s14, 0
    %p77 = por %p75, %p76
    %p78 = scmp.ne.s32.totalorder %s66, %s67
    %p79 = scmp.eq.s32.totalorder %s15, 1
    %p80 = por %p78, %p79
    %p82 = scmp.ne.s32.totalorder %s67, %s81
    %p83 = scmp.eq.s32.totalorder %s15, 0
    %p84 = por %p82, %p83
    %s85 = ssub.s32 %s9, %s16
    %p86 = scmp.eq.s32.totalorder %s85, 0
    %s88 = sadd.s32 %s87, 1
    %s89 = scalar_select %p86, %s87, %s88
    %p92 = pneg %p86
    %p93 = scmp.eq.s32.totalorder %s9, 1
    %p94 = por %p92, %p93
    %p95 = scmp.ne.s32.totalorder %s87, %s90
    %p96 = scmp.eq.s32.totalorder %s9, 0
    %p97 = por %p95, %p96
    %p98 = scmp.ne.s32.totalorder %s87, %s90
    %p99 = scmp.eq.s32.totalorder %s14, 1
    %p100 = por %p98, %p99
    %p101 = scmp.ne.s32.totalorder %s90, %s91
    %p102 = scmp.eq.s32.totalorder %s14, 0
    %p103 = por %p101, %p102
    %p104 = scmp.ne.s32.totalorder %s90, %s91
    %p105 = scmp.eq.s32.totalorder %s15, 1
    %p106 = por %p104, %p105
    %p108 = scmp.ne.s32.totalorder %s91, %s107
    %p109 = scmp.eq.s32.totalorder %s15, 0
    %p110 = por %p108, %p109
    %p111 = scmp.le.s32.totalorder 1, %s9
    %p112 = scmp.lt.s32.totalorder %s9, 3
    %p113 = pnand %p111, %p112
    %p114 = pneg %p113
    // Predicated region
    $region9: #{pyteen_forward.7} parent=5 // pred_check
      _
    $region10: #{pyteen_forward.7} parent=5 // pred_check_branch
      %116 = sbr.rel (%p113) target = $region12
    $region11: #{pyteen_forward.7} parent=5 // pred_region
      %s117 = ssub.s32 %s9, 1
      // Predicated region
      $region13: #{pyteen_forward.7} parent=11 // pred_check
        %p118 = pneg %p56
      $region14: #{pyteen_forward.7} parent=11 // pred_check_branch
        %120 = sbr.rel (%p118) target = $region16
      $region15: #{pyteen_forward.7} parent=11 // pred_region
        _
      $region16: #{pyteen_forward.7} parent=11 // pred_fallthru
        _
      // Predicated region
      $region17: #{pyteen_forward.7} parent=11 // pred_check
        %p121 = pneg %p77
      $region18: #{pyteen_forward.7} parent=11 // pred_check_branch
        %123 = sbr.rel (%p121) target = $region20
      $region19: #{pyteen_forward.7} parent=11 // pred_region
        _
      $region20: #{pyteen_forward.7} parent=11 // pred_fallthru
        _
    $region12: #{pyteen_forward.7} parent=5 // pred_fallthru
      _
    %p124 = scmp.lt.s32.totalorder %s9, 2
    // Predicated region
    $region21: #{pyteen_forward.7} parent=5 // pred_check
      %p125 = pneg %p124
    $region22: #{pyteen_forward.7} parent=5 // pred_check_branch
      %127 = sbr.rel (%p125) target = $region24
    $region23: #{pyteen_forward.7} parent=5 // pred_region
      // Predicated region
      $region25: #{pyteen_forward.7} parent=23 // pred_check
        %p128 = pneg %p29
      $region26: #{pyteen_forward.7} parent=23 // pred_check_branch
        %130 = sbr.rel (%p128) target = $region28
      $region27: #{pyteen_forward.7} parent=23 // pred_region
        %s131 = smul.u32 60, %s9
        %p132 = scmp.lt.s32.totalorder %s131, 119
        %s133 = scalar_select %p132, %s131, 119
        %s134 = smul.addr %s133, 2
        %s135 = smul.addr %s134, 8
        %s136 = scalar_lea.vmem %s0, %s135
        %s137 = smul.u32 60, %s9
      $region28: #{pyteen_forward.7} parent=23 // pred_fallthru
        _
    $region24: #{pyteen_forward.7} parent=5 // pred_fallthru
      _
    %p138 = scmp.le.s32.totalorder 1, %s9
    %p139 = scmp.lt.s32.totalorder %s9, 3
    %p140 = pnand %p138, %p139
    %p141 = pneg %p140
    // Predicated region
    $region29: #{pyteen_forward.7} parent=5 // pred_check
      _
    $region30: #{pyteen_forward.7} parent=5 // pred_check_branch
      %143 = sbr.rel (%p140) target = $region32
    $region31: #{pyteen_forward.7} parent=5 // pred_region
      %s144 = ssub.s32 %s9, 1
      %s145 = smul.u32 60, %s14
      %p146 = scmp.lt.s32.totalorder %s145, 119
      %s147 = scalar_select %p146, %s145, 119
      %s148 = smul.addr %s147, 2
      %s149 = smul.addr %s148, 8
      %s150 = scalar_lea.vmem %s0, %s149
      %p151 = pneg %p35
      %p152 = pneg %p32
      %p153 = pneg %p56
      %p154 = pneg %p53
      %p155 = pneg %p77
      %p156 = pneg %p74
      %p157 = pneg %p103
      %p158 = pneg %p100
      %s159 = smul.u32 60, %s14
      %p160 = scmp.lt.s32.totalorder %s159, 119
      %s161 = scalar_select %p160, %s159, 119
      %s162 = smul.addr %s161, 8
      %s163 = scalar_lea.vmem %s3, %s162
      %s164 = smul.u32 60, %s14
      %p165 = scmp.lt.s32.totalorder %s164, 119
      %s166 = scalar_select %p165, %s164, 119
      %s167 = smul.addr %s166, 2
      %s168 = smul.addr %s167, 8
      %s169 = scalar_lea.vmem %s0, %s168
      %s170 = smul.u32 60, %s14
      %s171 = smul.u32 60, %s14
      %p172 = scmp.lt.s32.totalorder %s171, 119
      %s173 = scalar_select %p172, %s171, 119
      %s174 = smul.addr %s173, 8
      %s175 = scalar_lea.vmem %s3, %s174
      %s176 = smul.u32 60, %s14
      %v177 = vld [vmem:[%s169] sm:$0xff]
      %v178 = vld [vmem:[%s169 + $0x8] sm:$0xff]
      %v179 = vld [vmem:[%s169 + $0x10] sm:$0xff]
      %v180 = vld [vmem:[%s169 + $0x18] sm:$0xff]
      %v181 = vld [vmem:[%s169 + $0x20] sm:$0xff]
      %v182 = vld [vmem:[%s169 + $0x28] sm:$0xff]
      %v183 = vld [vmem:[%s169 + $0x30] sm:$0xff]
      %v184 = vld [vmem:[%s169 + $0x38] sm:$0xff]
      %v185 = vld [vmem:[%s169 + $0x40] sm:$0xff]
      %v186 = vld [vmem:[%s169 + $0x48] sm:$0xff]
      %v187 = vld [vmem:[%s169 + $0x50] sm:$0xff]
      %v188 = vld [vmem:[%s169 + $0x58] sm:$0xff]
      %v189 = vld [vmem:[%s169 + $0x60] sm:$0xff]
      %v190 = vld [vmem:[%s169 + $0x68] sm:$0xff]
      %v191 = vld [vmem:[%s169 + $0x70] sm:$0xff]
      %v192 = vld [vmem:[%s169 + $0x78] sm:$0xff]
      %v193 = vld [vmem:[%s169 + $0x80] sm:$0xff]
      %v194 = vld [vmem:[%s169 + $0x88] sm:$0xff]
      %v195 = vld [vmem:[%s169 + $0x90] sm:$0xff]
      %v196 = vld [vmem:[%s169 + $0x98] sm:$0xff]
      %v197 = vld [vmem:[%s169 + $0xa0] sm:$0xff]
      %v198 = vld [vmem:[%s169 + $0xa8] sm:$0xff]
      %v199 = vld [vmem:[%s169 + $0xb0] sm:$0xff]
      %v200 = vld [vmem:[%s169 + $0xb8] sm:$0xff]
      %v201 = vld [vmem:[%s169 + $0xc0] sm:$0xff]
      %v202 = vld [vmem:[%s169 + $0xc8] sm:$0xff]
      %v203 = vld [vmem:[%s169 + $0xd0] sm:$0xff]
      %v204 = vld [vmem:[%s169 + $0xd8] sm:$0xff]
      %v205 = vld [vmem:[%s169 + $0xe0] sm:$0xff]
      %v206 = vld [vmem:[%s169 + $0xe8] sm:$0xff]
      %v207 = vld [vmem:[%s169 + $0xf0] sm:$0xff]
      %v208 = vld [vmem:[%s169 + $0xf8] sm:$0xff]
      %v209 = vld [vmem:[%s169 + $0x100] sm:$0xff]
      %v210 = vld [vmem:[%s169 + $0x108] sm:$0xff]
      %v211 = vld [vmem:[%s169 + $0x110] sm:$0xff]
      %v212 = vld [vmem:[%s169 + $0x118] sm:$0xff]
      %v213 = vld [vmem:[%s169 + $0x120] sm:$0xff]
      %v214 = vld [vmem:[%s169 + $0x128] sm:$0xff]
      %v215 = vld [vmem:[%s169 + $0x130] sm:$0xff]
      %v216 = vld [vmem:[%s169 + $0x138] sm:$0xff]
      %v217 = vld [vmem:[%s169 + $0x140] sm:$0xff]
      %v218 = vld [vmem:[%s169 + $0x148] sm:$0xff]
      %v219 = vld [vmem:[%s169 + $0x150] sm:$0xff]
      %v220 = vld [vmem:[%s169 + $0x158] sm:$0xff]
      %v221 = vld [vmem:[%s169 + $0x160] sm:$0xff]
      %v222 = vld [vmem:[%s169 + $0x168] sm:$0xff]
      %v223 = vld [vmem:[%s169 + $0x170] sm:$0xff]
      %v224 = vld [vmem:[%s169 + $0x178] sm:$0xff]
      %v225 = vld [vmem:[%s169 + $0x180] sm:$0xff]
      %v226 = vld [vmem:[%s169 + $0x188] sm:$0xff]
      %v227 = vld [vmem:[%s169 + $0x190] sm:$0xff]
      %v228 = vld [vmem:[%s169 + $0x198] sm:$0xff]
      %v229 = vld [vmem:[%s169 + $0x1a0] sm:$0xff]
      %v230 = vld [vmem:[%s169 + $0x1a8] sm:$0xff]
      %v231 = vld [vmem:[%s169 + $0x1b0] sm:$0xff]
      %v232 = vld [vmem:[%s169 + $0x1b8] sm:$0xff]
      %v233 = vld [vmem:[%s169 + $0x1c0] sm:$0xff]
      %v234 = vld [vmem:[%s169 + $0x1c8] sm:$0xff]
      %v235 = vld [vmem:[%s169 + $0x1d0] sm:$0xff]
      %v236 = vld [vmem:[%s169 + $0x1d8] sm:$0xff]
      %v237 = vld [vmem:[%s169 + $0x1e0] sm:$0xff]
      %v238 = vld [vmem:[%s169 + $0x1e8] sm:$0xff]
      %v239 = vld [vmem:[%s169 + $0x1f0] sm:$0xff]
      %v240 = vld [vmem:[%s169 + $0x1f8] sm:$0xff]
      %v241 = vld [vmem:[%s169 + $0x200] sm:$0xff]
      %v242 = vld [vmem:[%s169 + $0x208] sm:$0xff]
      %v243 = vld [vmem:[%s169 + $0x210] sm:$0xff]
      %v244 = vld [vmem:[%s169 + $0x218] sm:$0xff]
      %v245 = vld [vmem:[%s169 + $0x220] sm:$0xff]
      %v246 = vld [vmem:[%s169 + $0x228] sm:$0xff]
      %v247 = vld [vmem:[%s169 + $0x230] sm:$0xff]
      %v248 = vld [vmem:[%s169 + $0x238] sm:$0xff]
      %v249 = vld [vmem:[%s169 + $0x240] sm:$0xff]
      %v250 = vld [vmem:[%s169 + $0x248] sm:$0xff]
      %v251 = vld [vmem:[%s169 + $0x250] sm:$0xff]
      %v252 = vld [vmem:[%s169 + $0x258] sm:$0xff]
      %v253 = vld [vmem:[%s169 + $0x260] sm:$0xff]
      %v254 = vld [vmem:[%s169 + $0x268] sm:$0xff]
      %v255 = vld [vmem:[%s169 + $0x270] sm:$0xff]
      %v256 = vld [vmem:[%s169 + $0x278] sm:$0xff]
      %v257 = vld [vmem:[%s169 + $0x280] sm:$0xff]
      %v258 = vld [vmem:[%s169 + $0x288] sm:$0xff]
      %v259 = vld [vmem:[%s169 + $0x290] sm:$0xff]
      %v260 = vld [vmem:[%s169 + $0x298] sm:$0xff]
      %v261 = vld [vmem:[%s169 + $0x2a0] sm:$0xff]
      %v262 = vld [vmem:[%s169 + $0x2a8] sm:$0xff]
      %v263 = vld [vmem:[%s169 + $0x2b0] sm:$0xff]
      %v264 = vld [vmem:[%s169 + $0x2b8] sm:$0xff]
      %v265 = vld [vmem:[%s169 + $0x2c0] sm:$0xff]
      %v266 = vld [vmem:[%s169 + $0x2c8] sm:$0xff]
      %v267 = vld [vmem:[%s169 + $0x2d0] sm:$0xff]
      %v268 = vld [vmem:[%s169 + $0x2d8] sm:$0xff]
      %v269 = vld [vmem:[%s169 + $0x2e0] sm:$0xff]
      %v270 = vld [vmem:[%s169 + $0x2e8] sm:$0xff]
      %v271 = vld [vmem:[%s169 + $0x2f0] sm:$0xff]
      %v272 = vld [vmem:[%s169 + $0x2f8] sm:$0xff]
      %v273 = vld [vmem:[%s169 + $0x300] sm:$0xff]
      %v274 = vld [vmem:[%s169 + $0x308] sm:$0xff]
      %v275 = vld [vmem:[%s169 + $0x310] sm:$0xff]
      %v276 = vld [vmem:[%s169 + $0x318] sm:$0xff]
      %v277 = vld [vmem:[%s169 + $0x320] sm:$0xff]
      %v278 = vld [vmem:[%s169 + $0x328] sm:$0xff]
      %v279 = vld [vmem:[%s169 + $0x330] sm:$0xff]
      %v280 = vld [vmem:[%s169 + $0x338] sm:$0xff]
      %v281 = vld [vmem:[%s169 + $0x340] sm:$0xff]
      %v282 = vld [vmem:[%s169 + $0x348] sm:$0xff]
      %v283 = vld [vmem:[%s169 + $0x350] sm:$0xff]
      %v284 = vld [vmem:[%s169 + $0x358] sm:$0xff]
      %v285 = vld [vmem:[%s169 + $0x360] sm:$0xff]
      %v286 = vld [vmem:[%s169 + $0x368] sm:$0xff]
      %v287 = vld [vmem:[%s169 + $0x370] sm:$0xff]
      %v288 = vld [vmem:[%s169 + $0x378] sm:$0xff]
      %v289 = vld [vmem:[%s169 + $0x380] sm:$0xff]
      %v290 = vld [vmem:[%s169 + $0x388] sm:$0xff]
      %v291 = vld [vmem:[%s169 + $0x390] sm:$0xff]
      %v292 = vld [vmem:[%s169 + $0x398] sm:$0xff]
      %v293 = vld [vmem:[%s169 + $0x3a0] sm:$0xff]
      %v294 = vld [vmem:[%s169 + $0x3a8] sm:$0xff]
      %v295 = vld [vmem:[%s169 + $0x3b0] sm:$0xff]
      %v296 = vld [vmem:[%s169 + $0x3b8] sm:$0xff]
      %v297 = vld [vmem:[%s1] sm:$0xff]
      %v298 = vld [vmem:[%s1 + $0x8] sm:$0xff]
      %v299 = vld [vmem:[%s1 + $0x10] sm:$0xff]
      %v300 = vld [vmem:[%s1 + $0x18] sm:$0xff]
      %v301 = vld [vmem:[%s1 + $0x20] sm:$0xff]
      %v302 = vld [vmem:[%s1 + $0x28] sm:$0xff]
      %v303 = vld [vmem:[%s1 + $0x30] sm:$0xff]
      %v304 = vld [vmem:[%s1 + $0x38] sm:$0xff]
      %v305 = vld [vmem:[%s1 + $0x40] sm:$0xff]
      %v306 = vld [vmem:[%s1 + $0x48] sm:$0xff]
      %v307 = vld [vmem:[%s1 + $0x50] sm:$0xff]
      %v308 = vld [vmem:[%s1 + $0x58] sm:$0xff]
      %v309 = vld [vmem:[%s1 + $0x60] sm:$0xff]
      %v310 = vld [vmem:[%s1 + $0x68] sm:$0xff]
      %v311 = vld [vmem:[%s1 + $0x70] sm:$0xff]
      %v312 = vld [vmem:[%s1 + $0x78] sm:$0xff]
      %v313 = vld [vmem:[%s1 + $0x80] sm:$0xff]
      %v314 = vld [vmem:[%s1 + $0x88] sm:$0xff]
      %v315 = vld [vmem:[%s1 + $0x90] sm:$0xff]
      %v316 = vld [vmem:[%s1 + $0x98] sm:$0xff]
      %v317 = vld [vmem:[%s1 + $0xa0] sm:$0xff]
      %v318 = vld [vmem:[%s1 + $0xa8] sm:$0xff]
      %v319 = vld [vmem:[%s1 + $0xb0] sm:$0xff]
      %v320 = vld [vmem:[%s1 + $0xb8] sm:$0xff]
      %v321 = vld [vmem:[%s1 + $0xc0] sm:$0xff]
      %v322 = vld [vmem:[%s1 + $0xc8] sm:$0xff]
      %v323 = vld [vmem:[%s1 + $0xd0] sm:$0xff]
      %v324 = vld [vmem:[%s1 + $0xd8] sm:$0xff]
      %v325 = vld [vmem:[%s1 + $0xe0] sm:$0xff]
      %v326 = vld [vmem:[%s1 + $0xe8] sm:$0xff]
      %v327 = vld [vmem:[%s1 + $0xf0] sm:$0xff]
      %v328 = vld [vmem:[%s1 + $0xf8] sm:$0xff]
      %v329 = vld [vmem:[%s2] sm:$0x1]
      %v331 = vlaneseq
      %v332 = vshrl.u32 %v331, 7
      %v333 = vsub.s32 0, %v332
      %v334 = vrot.slane %v329, %v333
      %336 = vmatprep.subr.mxu0 0.0
      %337 = vmatpush1.msra.mxu0 %v312
      %338 = vmatprep.subr.mxu0 0.0
      %339 = vmatpush1.msra.mxu0 %v311
      %340 = vmatprep.subr.mxu0 0.0
      %341 = vmatpush1.msra.mxu0 %v310
      %342 = vmatprep.subr.mxu0 0.0
      %343 = vmatpush1.msra.mxu0 %v309
      %344 = vmatprep.subr.mxu0 0.0
      %345 = vmatpush1.msra.mxu0 %v308
      %346 = vmatprep.subr.mxu0 0.0
      %347 = vmatpush1.msra.mxu0 %v307
      %348 = vmatprep.subr.mxu0 0.0
      %349 = vmatpush1.msra.mxu0 %v306
      %350 = vmatprep.subr.mxu0 0.0
      %351 = vmatpush1.msra.mxu0 %v305
      %352 = vmatprep.subr.mxu0 0.0
      %353 = vmatpush1.msra.mxu0 %v304
      %354 = vmatprep.subr.mxu0 0.0
      %355 = vmatpush1.msra.mxu0 %v303
      %356 = vmatprep.subr.mxu0 0.0
      %357 = vmatpush1.msra.mxu0 %v302
      %358 = vmatprep.subr.mxu0 0.0
      %359 = vmatpush1.msra.mxu0 %v301
      %360 = vmatprep.subr.mxu0 0.0
      %361 = vmatpush1.msra.mxu0 %v300
      %362 = vmatprep.subr.mxu0 0.0
      %363 = vmatpush1.msra.mxu0 %v299
      %364 = vmatprep.subr.mxu0 0.0
      %365 = vmatpush1.msra.mxu0 %v298
      %366 = vmatprep.subr.mxu0 0.0
      %367 = vmatpush1.msra.mxu0 %v297
      %368 = vmatprep.subr.mxu0 0.0
      %369 = vmatpush2.msra.mxu0 %v328
      %370 = vmatprep.subr.mxu0 0.0
      %371 = vmatpush2.msra.mxu0 %v327
      %372 = vmatprep.subr.mxu0 0.0
      %373 = vmatpush2.msra.mxu0 %v326
      %374 = vmatprep.subr.mxu0 0.0
      %375 = vmatpush2.msra.mxu0 %v325
      %376 = vmatprep.subr.mxu0 0.0
      %377 = vmatpush2.msra.mxu0 %v324
      %378 = vmatprep.subr.mxu0 0.0
      %379 = vmatpush2.msra.mxu0 %v323
      %380 = vmatprep.subr.mxu0 0.0
      %381 = vmatpush2.msra.mxu0 %v322
      %382 = vmatprep.subr.mxu0 0.0
      %383 = vmatpush2.msra.mxu0 %v321
      %384 = vmatprep.subr.mxu0 0.0
      %385 = vmatpush2.msra.mxu0 %v320
      %386 = vmatprep.subr.mxu0 0.0
      %387 = vmatpush2.msra.mxu0 %v319
      %388 = vmatprep.subr.mxu0 0.0
      %389 = vmatpush2.msra.mxu0 %v318
      %390 = vmatprep.subr.mxu0 0.0
      %391 = vmatpush2.msra.mxu0 %v317
      %392 = vmatprep.subr.mxu0 0.0
      %393 = vmatpush2.msra.mxu0 %v316
      %394 = vmatprep.subr.mxu0 0.0
      %395 = vmatpush2.msra.mxu0 %v315
      %396 = vmatprep.subr.mxu0 0.0
      %397 = vmatpush2.msra.mxu0 %v314
      %398 = vmatprep.subr.mxu0 0.0
      %399 = vmatpush2.msra.mxu0 %v313
      %400 = vmatprep.mubr.f32.mxu0 %v178
      %401 = vmatmul.mubr.f32.gmra.mxu0 %v177
      %v402 = vpop.f32.mrf.mxu0
      %v403 = vadd.f32 %v334, %v402
      %v404 = vpop.f32.mrf.mxu0
      %405 = vmatprep.mubr.f32.mxu0 %v180
      %406 = vmatmul.mubr.f32.gmra.mxu0 %v179
      %v407 = vpop.f32.mrf.mxu0
      %v408 = vadd.f32 %v334, %v407
      %v409 = vpop.f32.mrf.mxu0
      %410 = vmatprep.mubr.f32.mxu0 %v182
      %411 = vmatmul.mubr.f32.gmra.mxu0 %v181
      %v412 = vpop.f32.mrf.mxu0
      %v413 = vadd.f32 %v334, %v412
      %v414 = vpop.f32.mrf.mxu0
      %415 = vmatprep.mubr.f32.mxu0 %v184
      %416 = vmatmul.mubr.f32.gmra.mxu0 %v183
      %v417 = vpop.f32.mrf.mxu0
      %v418 = vadd.f32 %v334, %v417
      %v419 = vpop.f32.mrf.mxu0
      %420 = vmatprep.mubr.f32.mxu0 %v186
      %421 = vmatmul.mubr.f32.gmra.mxu0 %v185
      %v422 = vpop.f32.mrf.mxu0
      %v423 = vadd.f32 %v334, %v422
      %v424 = vpop.f32.mrf.mxu0
      %425 = vmatprep.mubr.f32.mxu0 %v188
      %426 = vmatmul.mubr.f32.gmra.mxu0 %v187
      %v427 = vpop.f32.mrf.mxu0
      %v428 = vadd.f32 %v334, %v427
      %v429 = vpop.f32.mrf.mxu0
      %430 = vmatprep.mubr.f32.mxu0 %v190
      %431 = vmatmul.mubr.f32.gmra.mxu0 %v189
      %v432 = vpop.f32.mrf.mxu0
      %v433 = vadd.f32 %v334, %v432
      %v434 = vpop.f32.mrf.mxu0
      %435 = vmatprep.mubr.f32.mxu0 %v192
      %436 = vmatmul.mubr.f32.gmra.mxu0 %v191
      %v437 = vpop.f32.mrf.mxu0
      %v438 = vadd.f32 %v334, %v437
      %v439 = vpop.f32.mrf.mxu0
      %440 = vmatprep.mubr.f32.mxu0 %v194
      %441 = vmatmul.mubr.f32.gmra.mxu0 %v193
      %v442 = vpop.f32.mrf.mxu0
      %v443 = vadd.f32 %v334, %v442
      %v444 = vpop.f32.mrf.mxu0
      %445 = vmatprep.mubr.f32.mxu0 %v196
      %446 = vmatmul.mubr.f32.gmra.mxu0 %v195
      %v447 = vpop.f32.mrf.mxu0
      %v448 = vadd.f32 %v334, %v447
      %v449 = vpop.f32.mrf.mxu0
      %450 = vmatprep.mubr.f32.mxu0 %v198
      %451 = vmatmul.mubr.f32.gmra.mxu0 %v197
      %v452 = vpop.f32.mrf.mxu0
      %v453 = vadd.f32 %v334, %v452
      %v454 = vpop.f32.mrf.mxu0
      %455 = vmatprep.mubr.f32.mxu0 %v200
      %456 = vmatmul.mubr.f32.gmra.mxu0 %v199
      %v457 = vpop.f32.mrf.mxu0
      %v458 = vadd.f32 %v334, %v457
      %v459 = vpop.f32.mrf.mxu0
      %460 = vmatprep.mubr.f32.mxu0 %v202
      %461 = vmatmul.mubr.f32.gmra.mxu0 %v201
      %v462 = vpop.f32.mrf.mxu0
      %v463 = vadd.f32 %v334, %v462
      %v464 = vpop.f32.mrf.mxu0
      %465 = vmatprep.mubr.f32.mxu0 %v204
      %466 = vmatmul.mubr.f32.gmra.mxu0 %v203
      %v467 = vpop.f32.mrf.mxu0
      %v468 = vadd.f32 %v334, %v467
      %v469 = vpop.f32.mrf.mxu0
      %470 = vmatprep.mubr.f32.mxu0 %v206
      %471 = vmatmul.mubr.f32.gmra.mxu0 %v205
      %v472 = vpop.f32.mrf.mxu0
      %v473 = vadd.f32 %v334, %v472
      %v474 = vpop.f32.mrf.mxu0
      %475 = vmatprep.mubr.f32.mxu0 %v208
      %476 = vmatmul.mubr.f32.gmra.mxu0 %v207
      %v477 = vpop.f32.mrf.mxu0
      %v478 = vadd.f32 %v334, %v477
      %v479 = vpop.f32.mrf.mxu0
      %480 = vmatprep.mubr.f32.mxu0 %v210
      %481 = vmatmul.mubr.f32.gmra.mxu0 %v209
      %v482 = vpop.f32.mrf.mxu0
      %v483 = vadd.f32 %v334, %v482
      %v484 = vpop.f32.mrf.mxu0
      %485 = vmatprep.mubr.f32.mxu0 %v212
      %486 = vmatmul.mubr.f32.gmra.mxu0 %v211
      %v487 = vpop.f32.mrf.mxu0
      %v488 = vadd.f32 %v334, %v487
      %v489 = vpop.f32.mrf.mxu0
      %490 = vmatprep.mubr.f32.mxu0 %v214
      %491 = vmatmul.mubr.f32.gmra.mxu0 %v213
      %v492 = vpop.f32.mrf.mxu0
      %v493 = vadd.f32 %v334, %v492
      %v494 = vpop.f32.mrf.mxu0
      %495 = vmatprep.mubr.f32.mxu0 %v216
      %496 = vmatmul.mubr.f32.gmra.mxu0 %v215
      %v497 = vpop.f32.mrf.mxu0
      %v498 = vadd.f32 %v334, %v497
      %v499 = vpop.f32.mrf.mxu0
      %500 = vmatprep.mubr.f32.mxu0 %v218
      %501 = vmatmul.mubr.f32.gmra.mxu0 %v217
      %v502 = vpop.f32.mrf.mxu0
      %v503 = vadd.f32 %v334, %v502
      %v504 = vpop.f32.mrf.mxu0
      %505 = vmatprep.mubr.f32.mxu0 %v220
      %506 = vmatmul.mubr.f32.gmra.mxu0 %v219
      %v507 = vpop.f32.mrf.mxu0
      %v508 = vadd.f32 %v334, %v507
      %v509 = vpop.f32.mrf.mxu0
      %510 = vmatprep.mubr.f32.mxu0 %v222
      %511 = vmatmul.mubr.f32.gmra.mxu0 %v221
      %v512 = vpop.f32.mrf.mxu0
      %v513 = vadd.f32 %v334, %v512
      %v514 = vpop.f32.mrf.mxu0
      %515 = vmatprep.mubr.f32.mxu0 %v224
      %516 = vmatmul.mubr.f32.gmra.mxu0 %v223
      %v517 = vpop.f32.mrf.mxu0
      %v518 = vadd.f32 %v334, %v517
      %v519 = vpop.f32.mrf.mxu0
      %520 = vmatprep.mubr.f32.mxu0 %v226
      %521 = vmatmul.mubr.f32.gmra.mxu0 %v225
      %v522 = vpop.f32.mrf.mxu0
      %v523 = vadd.f32 %v334, %v522
      %v524 = vpop.f32.mrf.mxu0
      %525 = vmatprep.mubr.f32.mxu0 %v228
      %526 = vmatmul.mubr.f32.gmra.mxu0 %v227
      %v527 = vpop.f32.mrf.mxu0
      %v528 = vadd.f32 %v334, %v527
      %v529 = vpop.f32.mrf.mxu0
      %530 = vmatprep.mubr.f32.mxu0 %v230
      %531 = vmatmul.mubr.f32.gmra.mxu0 %v229
      %v532 = vpop.f32.mrf.mxu0
      %v533 = vadd.f32 %v334, %v532
      %v534 = vpop.f32.mrf.mxu0
      %535 = vmatprep.mubr.f32.mxu0 %v232
      %536 = vmatmul.mubr.f32.gmra.mxu0 %v231
      %v537 = vpop.f32.mrf.mxu0
      %v538 = vadd.f32 %v334, %v537
      %v539 = vpop.f32.mrf.mxu0
      %540 = vmatprep.mubr.f32.mxu0 %v234
      %541 = vmatmul.mubr.f32.gmra.mxu0 %v233
      %v542 = vpop.f32.mrf.mxu0
      %v543 = vadd.f32 %v334, %v542
      %v544 = vpop.f32.mrf.mxu0
      %545 = vmatprep.mubr.f32.mxu0 %v236
      %546 = vmatmul.mubr.f32.gmra.mxu0 %v235
      %v547 = vpop.f32.mrf.mxu0
      %v548 = vadd.f32 %v334, %v547
      %v549 = vpop.f32.mrf.mxu0
      %550 = vmatprep.mubr.f32.mxu0 %v238
      %551 = vmatmul.mubr.f32.gmra.mxu0 %v237
      %v552 = vpop.f32.mrf.mxu0
      %v553 = vadd.f32 %v334, %v552
      %v554 = vpop.f32.mrf.mxu0
      %555 = vmatprep.mubr.f32.mxu0 %v240
      %556 = vmatmul.mubr.f32.gmra.mxu0 %v239
      %v557 = vpop.f32.mrf.mxu0
      %v558 = vadd.f32 %v334, %v557
      %v559 = vpop.f32.mrf.mxu0
      %560 = vmatprep.mubr.f32.mxu0 %v242
      %561 = vmatmul.mubr.f32.gmra.mxu0 %v241
      %v562 = vpop.f32.mrf.mxu0
      %v563 = vadd.f32 %v334, %v562
      %v564 = vpop.f32.mrf.mxu0
      %565 = vmatprep.mubr.f32.mxu0 %v244
      %566 = vmatmul.mubr.f32.gmra.mxu0 %v243
      %v567 = vpop.f32.mrf.mxu0
      %v568 = vadd.f32 %v334, %v567
      %v569 = vpop.f32.mrf.mxu0
      %570 = vmatprep.mubr.f32.mxu0 %v246
      %571 = vmatmul.mubr.f32.gmra.mxu0 %v245
      %v572 = vpop.f32.mrf.mxu0
      %v573 = vadd.f32 %v334, %v572
      %v574 = vpop.f32.mrf.mxu0
      %575 = vmatprep.mubr.f32.mxu0 %v248
      %576 = vmatmul.mubr.f32.gmra.mxu0 %v247
      %v577 = vpop.f32.mrf.mxu0
      %v578 = vadd.f32 %v334, %v577
      %v579 = vpop.f32.mrf.mxu0
      %580 = vmatprep.mubr.f32.mxu0 %v250
      %581 = vmatmul.mubr.f32.gmra.mxu0 %v249
      %v582 = vpop.f32.mrf.mxu0
      %v583 = vadd.f32 %v334, %v582
      %v584 = vpop.f32.mrf.mxu0
      %585 = vmatprep.mubr.f32.mxu0 %v252
      %586 = vmatmul.mubr.f32.gmra.mxu0 %v251
      %v587 = vpop.f32.mrf.mxu0
      %v588 = vadd.f32 %v334, %v587
      %v589 = vpop.f32.mrf.mxu0
      %590 = vmatprep.mubr.f32.mxu0 %v254
      %591 = vmatmul.mubr.f32.gmra.mxu0 %v253
      %v592 = vpop.f32.mrf.mxu0
      %v593 = vadd.f32 %v334, %v592
      %v594 = vpop.f32.mrf.mxu0
      %595 = vmatprep.mubr.f32.mxu0 %v256
      %596 = vmatmul.mubr.f32.gmra.mxu0 %v255
      %v597 = vpop.f32.mrf.mxu0
      %v598 = vadd.f32 %v334, %v597
      %v599 = vpop.f32.mrf.mxu0
      %600 = vmatprep.mubr.f32.mxu0 %v258
      %601 = vmatmul.mubr.f32.gmra.mxu0 %v257
      %v602 = vpop.f32.mrf.mxu0
      %v603 = vadd.f32 %v334, %v602
      %v604 = vpop.f32.mrf.mxu0
      %605 = vmatprep.mubr.f32.mxu0 %v260
      %606 = vmatmul.mubr.f32.gmra.mxu0 %v259
      %v607 = vpop.f32.mrf.mxu0
      %v608 = vadd.f32 %v334, %v607
      %v609 = vpop.f32.mrf.mxu0
      %610 = vmatprep.mubr.f32.mxu0 %v262
      %611 = vmatmul.mubr.f32.gmra.mxu0 %v261
      %v612 = vpop.f32.mrf.mxu0
      %v613 = vadd.f32 %v334, %v612
      %v614 = vpop.f32.mrf.mxu0
      %615 = vmatprep.mubr.f32.mxu0 %v264
      %616 = vmatmul.mubr.f32.gmra.mxu0 %v263
      %v617 = vpop.f32.mrf.mxu0
      %v618 = vadd.f32 %v334, %v617
      %v619 = vpop.f32.mrf.mxu0
      %620 = vmatprep.mubr.f32.mxu0 %v266
      %621 = vmatmul.mubr.f32.gmra.mxu0 %v265
      %v622 = vpop.f32.mrf.mxu0
      %v623 = vadd.f32 %v334, %v622
      %v624 = vpop.f32.mrf.mxu0
      %625 = vmatprep.mubr.f32.mxu0 %v268
      %626 = vmatmul.mubr.f32.gmra.mxu0 %v267
      %v627 = vpop.f32.mrf.mxu0
      %v628 = vadd.f32 %v334, %v627
      %v629 = vpop.f32.mrf.mxu0
      %630 = vmatprep.mubr.f32.mxu0 %v270
      %631 = vmatmul.mubr.f32.gmra.mxu0 %v269
      %v632 = vpop.f32.mrf.mxu0
      %v633 = vadd.f32 %v334, %v632
      %v634 = vpop.f32.mrf.mxu0
      %635 = vmatprep.mubr.f32.mxu0 %v272
      %636 = vmatmul.mubr.f32.gmra.mxu0 %v271
      %v637 = vpop.f32.mrf.mxu0
      %v638 = vadd.f32 %v334, %v637
      %v639 = vpop.f32.mrf.mxu0
      %640 = vmatprep.mubr.f32.mxu0 %v274
      %641 = vmatmul.mubr.f32.gmra.mxu0 %v273
      %v642 = vpop.f32.mrf.mxu0
      %v643 = vadd.f32 %v334, %v642
      %v644 = vpop.f32.mrf.mxu0
      %645 = vmatprep.mubr.f32.mxu0 %v276
      %646 = vmatmul.mubr.f32.gmra.mxu0 %v275
      %v647 = vpop.f32.mrf.mxu0
      %v648 = vadd.f32 %v334, %v647
      %v649 = vpop.f32.mrf.mxu0
      %650 = vmatprep.mubr.f32.mxu0 %v278
      %651 = vmatmul.mubr.f32.gmra.mxu0 %v277
      %v652 = vpop.f32.mrf.mxu0
      %v653 = vadd.f32 %v334, %v652
      %v654 = vpop.f32.mrf.mxu0
      %655 = vmatprep.mubr.f32.mxu0 %v280
      %656 = vmatmul.mubr.f32.gmra.mxu0 %v279
      %v657 = vpop.f32.mrf.mxu0
      %v658 = vadd.f32 %v334, %v657
      %v659 = vpop.f32.mrf.mxu0
      %660 = vmatprep.mubr.f32.mxu0 %v282
      %661 = vmatmul.mubr.f32.gmra.mxu0 %v281
      %v662 = vpop.f32.mrf.mxu0
      %v663 = vadd.f32 %v334, %v662
      %v664 = vpop.f32.mrf.mxu0
      %665 = vmatprep.mubr.f32.mxu0 %v284
      %666 = vmatmul.mubr.f32.gmra.mxu0 %v283
      %v667 = vpop.f32.mrf.mxu0
      %v668 = vadd.f32 %v334, %v667
      %v669 = vpop.f32.mrf.mxu0
      %670 = vmatprep.mubr.f32.mxu0 %v286
      %671 = vmatmul.mubr.f32.gmra.mxu0 %v285
      %v672 = vpop.f32.mrf.mxu0
      %v673 = vadd.f32 %v334, %v672
      %v674 = vpop.f32.mrf.mxu0
      %675 = vmatprep.mubr.f32.mxu0 %v288
      %676 = vmatmul.mubr.f32.gmra.mxu0 %v287
      %v677 = vpop.f32.mrf.mxu0
      %v678 = vadd.f32 %v334, %v677
      %v679 = vpop.f32.mrf.mxu0
      %680 = vmatprep.mubr.f32.mxu0 %v290
      %681 = vmatmul.mubr.f32.gmra.mxu0 %v289
      %v682 = vpop.f32.mrf.mxu0
      %v683 = vadd.f32 %v334, %v682
      %v684 = vpop.f32.mrf.mxu0
      %685 = vmatprep.mubr.f32.mxu0 %v292
      %686 = vmatmul.mubr.f32.gmra.mxu0 %v291
      %v687 = vpop.f32.mrf.mxu0
      %v688 = vadd.f32 %v334, %v687
      %v689 = vpop.f32.mrf.mxu0
      %690 = vmatprep.mubr.f32.mxu0 %v294
      %691 = vmatmul.mubr.f32.gmra.mxu0 %v293
      %v692 = vpop.f32.mrf.mxu0
      %v693 = vadd.f32 %v334, %v692
      %v694 = vpop.f32.mrf.mxu0
      %695 = vmatprep.mubr.f32.mxu0 %v296
      %696 = vmatmul.mubr.f32.gmra.mxu0 %v295
      %v697 = vpop.f32.mrf.mxu0
      %v698 = vadd.f32 %v334, %v697
      %v699 = vpop.f32.mrf.mxu0
      %700 = vdwg.mxu0
      %v701 = vmax.f32 %v403, 0.0
      %v702 = vmax.f32 %v408, 0.0
      %v703 = vmax.f32 %v413, 0.0
      %v704 = vmax.f32 %v418, 0.0
      %v705 = vmax.f32 %v423, 0.0
      %v706 = vmax.f32 %v428, 0.0
      %v707 = vmax.f32 %v433, 0.0
      %v708 = vmax.f32 %v438, 0.0
      %v709 = vmax.f32 %v443, 0.0
      %v710 = vmax.f32 %v448, 0.0
      %v711 = vmax.f32 %v453, 0.0
      %v712 = vmax.f32 %v458, 0.0
      %v713 = vmax.f32 %v463, 0.0
      %v714 = vmax.f32 %v468, 0.0
      %v715 = vmax.f32 %v473, 0.0
      %v716 = vmax.f32 %v478, 0.0
      %v717 = vmax.f32 %v483, 0.0
      %v718 = vmax.f32 %v488, 0.0
      %v719 = vmax.f32 %v493, 0.0
      %v720 = vmax.f32 %v498, 0.0
      %v721 = vmax.f32 %v503, 0.0
      %v722 = vmax.f32 %v508, 0.0
      %v723 = vmax.f32 %v513, 0.0
      %v724 = vmax.f32 %v518, 0.0
      %v725 = vmax.f32 %v523, 0.0
      %v726 = vmax.f32 %v528, 0.0
      %v727 = vmax.f32 %v533, 0.0
      %v728 = vmax.f32 %v538, 0.0
      %v729 = vmax.f32 %v543, 0.0
      %v730 = vmax.f32 %v548, 0.0
      %v731 = vmax.f32 %v553, 0.0
      %v732 = vmax.f32 %v558, 0.0
      %v733 = vmax.f32 %v563, 0.0
      %v734 = vmax.f32 %v568, 0.0
      %v735 = vmax.f32 %v573, 0.0
      %v736 = vmax.f32 %v578, 0.0
      %v737 = vmax.f32 %v583, 0.0
      %v738 = vmax.f32 %v588, 0.0
      %v739 = vmax.f32 %v593, 0.0
      %v740 = vmax.f32 %v598, 0.0
      %v741 = vmax.f32 %v603, 0.0
      %v742 = vmax.f32 %v608, 0.0
      %v743 = vmax.f32 %v613, 0.0
      %v744 = vmax.f32 %v618, 0.0
      %v745 = vmax.f32 %v623, 0.0
      %v746 = vmax.f32 %v628, 0.0
      %v747 = vmax.f32 %v633, 0.0
      %v748 = vmax.f32 %v638, 0.0
      %v749 = vmax.f32 %v643, 0.0
      %v750 = vmax.f32 %v648, 0.0
      %v751 = vmax.f32 %v653, 0.0
      %v752 = vmax.f32 %v658, 0.0
      %v753 = vmax.f32 %v663, 0.0
      %v754 = vmax.f32 %v668, 0.0
      %v755 = vmax.f32 %v673, 0.0
      %v756 = vmax.f32 %v678, 0.0
      %v757 = vmax.f32 %v683, 0.0
      %v758 = vmax.f32 %v688, 0.0
      %v759 = vmax.f32 %v693, 0.0
      %v760 = vmax.f32 %v698, 0.0
      %761 = vst [vmem:[%s175] sm:$0xff] %v701
      %762 = vst [vmem:[%s175 + $0x8] sm:$0xff] %v702
      %763 = vst [vmem:[%s175 + $0x10] sm:$0xff] %v703
      %764 = vst [vmem:[%s175 + $0x18] sm:$0xff] %v704
      %765 = vst [vmem:[%s175 + $0x20] sm:$0xff] %v705
      %766 = vst [vmem:[%s175 + $0x28] sm:$0xff] %v706
      %767 = vst [vmem:[%s175 + $0x30] sm:$0xff] %v707
      %768 = vst [vmem:[%s175 + $0x38] sm:$0xff] %v708
      %769 = vst [vmem:[%s175 + $0x40] sm:$0xff] %v709
      %770 = vst [vmem:[%s175 + $0x48] sm:$0xff] %v710
      %771 = vst [vmem:[%s175 + $0x50] sm:$0xff] %v711
      %772 = vst [vmem:[%s175 + $0x58] sm:$0xff] %v712
      %773 = vst [vmem:[%s175 + $0x60] sm:$0xff] %v713
      %774 = vst [vmem:[%s175 + $0x68] sm:$0xff] %v714
      %775 = vst [vmem:[%s175 + $0x70] sm:$0xff] %v715
      %776 = vst [vmem:[%s175 + $0x78] sm:$0xff] %v716
      %777 = vst [vmem:[%s175 + $0x80] sm:$0xff] %v717
      %778 = vst [vmem:[%s175 + $0x88] sm:$0xff] %v718
      %779 = vst [vmem:[%s175 + $0x90] sm:$0xff] %v719
      %780 = vst [vmem:[%s175 + $0x98] sm:$0xff] %v720
      %781 = vst [vmem:[%s175 + $0xa0] sm:$0xff] %v721
      %782 = vst [vmem:[%s175 + $0xa8] sm:$0xff] %v722
      %783 = vst [vmem:[%s175 + $0xb0] sm:$0xff] %v723
      %784 = vst [vmem:[%s175 + $0xb8] sm:$0xff] %v724
      %785 = vst [vmem:[%s175 + $0xc0] sm:$0xff] %v725
      %786 = vst [vmem:[%s175 + $0xc8] sm:$0xff] %v726
      %787 = vst [vmem:[%s175 + $0xd0] sm:$0xff] %v727
      %788 = vst [vmem:[%s175 + $0xd8] sm:$0xff] %v728
      %789 = vst [vmem:[%s175 + $0xe0] sm:$0xff] %v729
      %790 = vst [vmem:[%s175 + $0xe8] sm:$0xff] %v730
      %791 = vst [vmem:[%s175 + $0xf0] sm:$0xff] %v731
      %792 = vst [vmem:[%s175 + $0xf8] sm:$0xff] %v732
      %793 = vst [vmem:[%s175 + $0x100] sm:$0xff] %v733
      %794 = vst [vmem:[%s175 + $0x108] sm:$0xff] %v734
      %795 = vst [vmem:[%s175 + $0x110] sm:$0xff] %v735
      %796 = vst [vmem:[%s175 + $0x118] sm:$0xff] %v736
      %797 = vst [vmem:[%s175 + $0x120] sm:$0xff] %v737
      %798 = vst [vmem:[%s175 + $0x128] sm:$0xff] %v738
      %799 = vst [vmem:[%s175 + $0x130] sm:$0xff] %v739
      %800 = vst [vmem:[%s175 + $0x138] sm:$0xff] %v740
      %801 = vst [vmem:[%s175 + $0x140] sm:$0xff] %v741
      %802 = vst [vmem:[%s175 + $0x148] sm:$0xff] %v742
      %803 = vst [vmem:[%s175 + $0x150] sm:$0xff] %v743
      %804 = vst [vmem:[%s175 + $0x158] sm:$0xff] %v744
      %805 = vst [vmem:[%s175 + $0x160] sm:$0xff] %v745
      %806 = vst [vmem:[%s175 + $0x168] sm:$0xff] %v746
      %807 = vst [vmem:[%s175 + $0x170] sm:$0xff] %v747
      %808 = vst [vmem:[%s175 + $0x178] sm:$0xff] %v748
      %809 = vst [vmem:[%s175 + $0x180] sm:$0xff] %v749
      %810 = vst [vmem:[%s175 + $0x188] sm:$0xff] %v750
      %811 = vst [vmem:[%s175 + $0x190] sm:$0xff] %v751
      %812 = vst [vmem:[%s175 + $0x198] sm:$0xff] %v752
      %813 = vst [vmem:[%s175 + $0x1a0] sm:$0xff] %v753
      %814 = vst [vmem:[%s175 + $0x1a8] sm:$0xff] %v754
      %815 = vst [vmem:[%s175 + $0x1b0] sm:$0xff] %v755
      %816 = vst [vmem:[%s175 + $0x1b8] sm:$0xff] %v756
      %817 = vst [vmem:[%s175 + $0x1c0] sm:$0xff] %v757
      %818 = vst [vmem:[%s175 + $0x1c8] sm:$0xff] %v758
      %819 = vst [vmem:[%s175 + $0x1d0] sm:$0xff] %v759
      %820 = vst [vmem:[%s175 + $0x1d8] sm:$0xff] %v760
      %s821 = smul.u32 60, %s14
      %p822 = scmp.lt.s32.totalorder %s821, 119
      %s823 = scalar_select %p822, %s821, 119
      %s824 = smul.addr %s823, 8
      %s825 = scalar_lea.vmem %s3, %s824
      // Predicated region
      $region33: #{pyteen_forward.7} parent=31 // pred_check
        %p826 = pneg %p100
      $region34: #{pyteen_forward.7} parent=31 // pred_check_branch
        %828 = sbr.rel (%p826) target = $region36
      $region35: #{pyteen_forward.7} parent=31 // pred_region
        %s829 = smul.u32 60, %s14
      $region36: #{pyteen_forward.7} parent=31 // pred_fallthru
        _
    $region32: #{pyteen_forward.7} parent=5 // pred_fallthru
      _
    %p830 = scmp.le.s32.totalorder 2, %s9
    // Predicated region
    $region37: #{pyteen_forward.7} parent=5 // pred_check
      %p831 = pneg %p830
    $region38: #{pyteen_forward.7} parent=5 // pred_check_branch
      %833 = sbr.rel (%p831) target = $region40
    $region39: #{pyteen_forward.7} parent=5 // pred_region
      %s834 = ssub.s32 %s9, 2
      // Predicated region
      $region41: #{pyteen_forward.7} parent=39 // pred_check
        %p835 = pneg %p106
      $region42: #{pyteen_forward.7} parent=39 // pred_check_branch
        %837 = sbr.rel (%p835) target = $region44
      $region43: #{pyteen_forward.7} parent=39 // pred_region
        %s838 = smul.u32 60, %s15
        %p839 = scmp.lt.s32.totalorder %s838, 119
        %s840 = scalar_select %p839, %s838, 119
        %s841 = smul.addr %s840, 8
        %s842 = scalar_lea.vmem %s3, %s841
      $region44: #{pyteen_forward.7} parent=39 // pred_fallthru
        _
    $region40: #{pyteen_forward.7} parent=5 // pred_fallthru
      _
  $region6: #{pyteen_forward.7} parent=0 // loop_footer
    %s13 = sadd.s32 1, %s9
  $region7: #{pyteen_forward.7} parent=0 // loop_footer_branch
    %8 = sbr.rel target = $region3
  $region8: #{pyteen_forward.7} parent=0 // loop_exit
    _

// kernel: pyteen_forward.8
$region0: #{pyteen_forward.8}
  #allocation0 [shape = 'u32[]', space=smem, size = 0x4, offset = 0x4, fixed_abs, tag = 'smem constant byte address 0x4 - core index']
  #allocation1 [shape = 'u32[144,128]{1,0:T(1,128)}', space=vmem, size = 0x12000, scoped, tag = 'internal scratch']
  %s0 = inlined_call_operand.vmem [shape: f32[24,2,10,256], index: 0, kind: input, shape index: {}]
  %s1 = inlined_call_operand.vmem [shape: f32[24,10,128], index: 1, kind: output, shape index: {}]
  %s2 = sld [smem:[#allocation0]]
  $region37: #{pyteen_forward.8} parent=0
    _
  %s4 = ssub.s32 1, %s2
  %s5 = scalar_select 0, %s4, %s2
  loop: start=0, step=1, limit=4
  $region2: #{pyteen_forward.8} parent=0 // loop_pre_header
    _
  $region3: #{pyteen_forward.8} parent=0 // loop_header
    %s7 = sphi 0, %s11
    %p8 = scmp.ge.s32.totalorder %s7, 4
    %s17 = sphi 0, %s19
    %s20 = sphi 0, %s17
    %s21 = sphi 0, %s20
    %s37 = sphi 0, %s21
    %s43 = sphi 0, %s45
    %s46 = sphi 0, %s43
    %s47 = sphi 0, %s46
    %s63 = sphi 0, %s47
  $region4: #{pyteen_forward.8} parent=0 // loop_header_branch
    %10 = sbr.rel (%p8) target = $region8
  $region5: #{pyteen_forward.8} parent=0 // loop_body
    %s12 = ssub.s32 %s7, 1
    %s13 = ssub.s32 %s7, 2
    %s14 = sadd.s32 %s7, 1
    %s15 = ssub.s32 %s7, %s14
    %p16 = scmp.eq.s32.totalorder %s15, 0
    %s18 = sadd.s32 %s17, 1
    %s19 = scalar_select %p16, %s17, %s18
    %p22 = pneg %p16
    %p23 = scmp.eq.s32.totalorder %s7, 1
    %p24 = por %p22, %p23
    %p25 = scmp.ne.s32.totalorder %s17, %s20
    %p26 = scmp.eq.s32.totalorder %s7, 0
    %p27 = por %p25, %p26
    %p28 = scmp.ne.s32.totalorder %s17, %s20
    %p29 = scmp.eq.s32.totalorder %s12, 1
    %p30 = por %p28, %p29
    %p31 = scmp.ne.s32.totalorder %s20, %s21
    %p32 = scmp.eq.s32.totalorder %s12, 0
    %p33 = por %p31, %p32
    %p34 = scmp.ne.s32.totalorder %s20, %s21
    %p35 = scmp.eq.s32.totalorder %s13, 1
    %p36 = por %p34, %p35
    %p38 = scmp.ne.s32.totalorder %s21, %s37
    %p39 = scmp.eq.s32.totalorder %s13, 0
    %p40 = por %p38, %p39
    %s41 = ssub.s32 %s7, %s14
    %p42 = scmp.eq.s32.totalorder %s41, 0
    %s44 = sadd.s32 %s43, 1
    %s45 = scalar_select %p42, %s43, %s44
    %p48 = pneg %p42
    %p49 = scmp.eq.s32.totalorder %s7, 1
    %p50 = por %p48, %p49
    %p51 = scmp.ne.s32.totalorder %s43, %s46
    %p52 = scmp.eq.s32.totalorder %s7, 0
    %p53 = por %p51, %p52
    %p54 = scmp.ne.s32.totalorder %s43, %s46
    %p55 = scmp.eq.s32.totalorder %s12, 1
    %p56 = por %p54, %p55
    %p57 = scmp.ne.s32.totalorder %s46, %s47
    %p58 = scmp.eq.s32.totalorder %s12, 0
    %p59 = por %p57, %p58
    %p60 = scmp.ne.s32.totalorder %s46, %s47
    %p61 = scmp.eq.s32.totalorder %s13, 1
    %p62 = por %p60, %p61
    %p64 = scmp.ne.s32.totalorder %s47, %s63
    %p65 = scmp.eq.s32.totalorder %s13, 0
    %p66 = por %p64, %p65
    %p67 = scmp.le.s32.totalorder 1, %s7
    %p68 = scmp.lt.s32.totalorder %s7, 3
    %p69 = pnand %p67, %p68
    %p70 = pneg %p69
    // Predicated region
    $region9: #{pyteen_forward.8} parent=5 // pred_check
      _
    $region10: #{pyteen_forward.8} parent=5 // pred_check_branch
      %72 = sbr.rel (%p69) target = $region12
    $region11: #{pyteen_forward.8} parent=5 // pred_region
      %s73 = ssub.s32 %s7, 1
    $region12: #{pyteen_forward.8} parent=5 // pred_fallthru
      _
    %p74 = scmp.lt.s32.totalorder %s7, 2
    // Predicated region
    $region13: #{pyteen_forward.8} parent=5 // pred_check
      %p75 = pneg %p74
    $region14: #{pyteen_forward.8} parent=5 // pred_check_branch
      %77 = sbr.rel (%p75) target = $region16
    $region15: #{pyteen_forward.8} parent=5 // pred_region
      // Predicated region
      $region17: #{pyteen_forward.8} parent=15 // pred_check
        %p78 = pneg %p27
      $region18: #{pyteen_forward.8} parent=15 // pred_check_branch
        %80 = sbr.rel (%p78) target = $region20
      $region19: #{pyteen_forward.8} parent=15 // pred_region
        %s81 = smul.u32 12, %s7
        %p82 = scmp.lt.s32.totalorder %s81, 23
        %s83 = scalar_select %p82, %s81, 23
        %s84 = smul.addr %s83, 8
        %s85 = smul.addr %s84, 8
        %s86 = scalar_lea.vmem %s0, %s85
        %s87 = smul.u32 12, %s7
      $region20: #{pyteen_forward.8} parent=15 // pred_fallthru
        _
    $region16: #{pyteen_forward.8} parent=5 // pred_fallthru
      _
    %p88 = scmp.le.s32.totalorder 1, %s7
    %p89 = scmp.lt.s32.totalorder %s7, 3
    %p90 = pnand %p88, %p89
    %p91 = pneg %p90
    // Predicated region
    $region21: #{pyteen_forward.8} parent=5 // pred_check
      _
    $region22: #{pyteen_forward.8} parent=5 // pred_check_branch
      %93 = sbr.rel (%p90) target = $region24
    $region23: #{pyteen_forward.8} parent=5 // pred_region
      %s94 = ssub.s32 %s7, 1
      %s95 = smul.u32 12, %s12
      %p96 = scmp.lt.s32.totalorder %s95, 23
      %s97 = scalar_select %p96, %s95, 23
      %s98 = smul.addr %s97, 8
      %s99 = smul.addr %s98, 8
      %s100 = scalar_lea.vmem %s0, %s99
      %p101 = pneg %p33
      %p102 = pneg %p30
      %p103 = pneg %p59
      %p104 = pneg %p56
      %s105 = smul.u32 12, %s12
      %p106 = scmp.lt.s32.totalorder %s105, 23
      %s107 = scalar_select %p106, %s105, 23
      %s108 = smul.addr %s107, 2
      %s109 = smul.addr %s108, 8
      %s110 = scalar_lea.vmem %s1, %s109
      %s111 = smul.u32 12, %s12
      %p112 = scmp.lt.s32.totalorder %s111, 23
      %s113 = scalar_select %p112, %s111, 23
      %s114 = smul.addr %s113, 8
      %s115 = smul.addr %s114, 8
      %s116 = scalar_lea.vmem %s0, %s115
      %s117 = smul.u32 12, %s12
      %s118 = smul.u32 12, %s12
      %p119 = scmp.lt.s32.totalorder %s118, 23
      %s120 = scalar_select %p119, %s118, 23
      %s121 = smul.addr %s120, 2
      %s122 = smul.addr %s121, 8
      %s123 = scalar_lea.vmem %s1, %s122
      %s124 = smul.u32 12, %s12
      %v125 = vld [vmem:[%s116] sm:$0xff]
      %v126 = vld [vmem:[%s116 + $0x8] sm:$0xff]
      %v127 = vld [vmem:[%s116 + $0x10] sm:$0x3]
      %v128 = vld [vmem:[%s116 + $0x18] sm:$0x3]
      %v129 = vld [vmem:[%s116 + $0x20] sm:$0xff]
      %v130 = vld [vmem:[%s116 + $0x28] sm:$0xff]
      %v131 = vld [vmem:[%s116 + $0x30] sm:$0x3]
      %v132 = vld [vmem:[%s116 + $0x38] sm:$0x3]
      %v133 = vld [vmem:[%s116 + $0x40] sm:$0xff]
      %v134 = vld [vmem:[%s116 + $0x48] sm:$0xff]
      %v135 = vld [vmem:[%s116 + $0x50] sm:$0x3]
      %v136 = vld [vmem:[%s116 + $0x58] sm:$0x3]
      %v137 = vld [vmem:[%s116 + $0x60] sm:$0xff]
      %v138 = vld [vmem:[%s116 + $0x68] sm:$0xff]
      %v139 = vld [vmem:[%s116 + $0x70] sm:$0x3]
      %v140 = vld [vmem:[%s116 + $0x78] sm:$0x3]
      %v141 = vld [vmem:[%s116 + $0x80] sm:$0xff]
      %v142 = vld [vmem:[%s116 + $0x88] sm:$0xff]
      %v143 = vld [vmem:[%s116 + $0x90] sm:$0x3]
      %v144 = vld [vmem:[%s116 + $0x98] sm:$0x3]
      %v145 = vld [vmem:[%s116 + $0xa0] sm:$0xff]
      %v146 = vld [vmem:[%s116 + $0xa8] sm:$0xff]
      %v147 = vld [vmem:[%s116 + $0xb0] sm:$0x3]
      %v148 = vld [vmem:[%s116 + $0xb8] sm:$0x3]
      %v149 = vld [vmem:[%s116 + $0xc0] sm:$0xff]
      %v150 = vld [vmem:[%s116 + $0xc8] sm:$0xff]
      %v151 = vld [vmem:[%s116 + $0xd0] sm:$0x3]
      %v152 = vld [vmem:[%s116 + $0xd8] sm:$0x3]
      %v153 = vld [vmem:[%s116 + $0xe0] sm:$0xff]
      %v154 = vld [vmem:[%s116 + $0xe8] sm:$0xff]
      %v155 = vld [vmem:[%s116 + $0xf0] sm:$0x3]
      %v156 = vld [vmem:[%s116 + $0xf8] sm:$0x3]
      %v157 = vld [vmem:[%s116 + $0x100] sm:$0xff]
      %v158 = vld [vmem:[%s116 + $0x108] sm:$0xff]
      %v159 = vld [vmem:[%s116 + $0x110] sm:$0x3]
      %v160 = vld [vmem:[%s116 + $0x118] sm:$0x3]
      %v161 = vld [vmem:[%s116 + $0x120] sm:$0xff]
      %v162 = vld [vmem:[%s116 + $0x128] sm:$0xff]
      %v163 = vld [vmem:[%s116 + $0x130] sm:$0x3]
      %v164 = vld [vmem:[%s116 + $0x138] sm:$0x3]
      %v165 = vld [vmem:[%s116 + $0x140] sm:$0xff]
      %v166 = vld [vmem:[%s116 + $0x148] sm:$0xff]
      %v167 = vld [vmem:[%s116 + $0x150] sm:$0x3]
      %v168 = vld [vmem:[%s116 + $0x158] sm:$0x3]
      %v169 = vld [vmem:[%s116 + $0x160] sm:$0xff]
      %v170 = vld [vmem:[%s116 + $0x168] sm:$0xff]
      %v171 = vld [vmem:[%s116 + $0x170] sm:$0x3]
      %v172 = vld [vmem:[%s116 + $0x178] sm:$0x3]
      %v173 = vld [vmem:[%s116 + $0x180] sm:$0xff]
      %v174 = vld [vmem:[%s116 + $0x188] sm:$0xff]
      %v175 = vld [vmem:[%s116 + $0x190] sm:$0x3]
      %v176 = vld [vmem:[%s116 + $0x198] sm:$0x3]
      %v177 = vld [vmem:[%s116 + $0x1a0] sm:$0xff]
      %v178 = vld [vmem:[%s116 + $0x1a8] sm:$0xff]
      %v179 = vld [vmem:[%s116 + $0x1b0] sm:$0x3]
      %v180 = vld [vmem:[%s116 + $0x1b8] sm:$0x3]
      %v181 = vld [vmem:[%s116 + $0x1c0] sm:$0xff]
      %v182 = vld [vmem:[%s116 + $0x1c8] sm:$0xff]
      %v183 = vld [vmem:[%s116 + $0x1d0] sm:$0x3]
      %v184 = vld [vmem:[%s116 + $0x1d8] sm:$0x3]
      %v185 = vld [vmem:[%s116 + $0x1e0] sm:$0xff]
      %v186 = vld [vmem:[%s116 + $0x1e8] sm:$0xff]
      %v187 = vld [vmem:[%s116 + $0x1f0] sm:$0x3]
      %v188 = vld [vmem:[%s116 + $0x1f8] sm:$0x3]
      %v189 = vld [vmem:[%s116 + $0x200] sm:$0xff]
      %v190 = vld [vmem:[%s116 + $0x208] sm:$0xff]
      %v191 = vld [vmem:[%s116 + $0x210] sm:$0x3]
      %v192 = vld [vmem:[%s116 + $0x218] sm:$0x3]
      %v193 = vld [vmem:[%s116 + $0x220] sm:$0xff]
      %v194 = vld [vmem:[%s116 + $0x228] sm:$0xff]
      %v195 = vld [vmem:[%s116 + $0x230] sm:$0x3]
      %v196 = vld [vmem:[%s116 + $0x238] sm:$0x3]
      %v197 = vld [vmem:[%s116 + $0x240] sm:$0xff]
      %v198 = vld [vmem:[%s116 + $0x248] sm:$0xff]
      %v199 = vld [vmem:[%s116 + $0x250] sm:$0x3]
      %v200 = vld [vmem:[%s116 + $0x258] sm:$0x3]
      %v201 = vld [vmem:[%s116 + $0x260] sm:$0xff]
      %v202 = vld [vmem:[%s116 + $0x268] sm:$0xff]
      %v203 = vld [vmem:[%s116 + $0x270] sm:$0x3]
      %v204 = vld [vmem:[%s116 + $0x278] sm:$0x3]
      %v205 = vld [vmem:[%s116 + $0x280] sm:$0xff]
      %v206 = vld [vmem:[%s116 + $0x288] sm:$0xff]
      %v207 = vld [vmem:[%s116 + $0x290] sm:$0x3]
      %v208 = vld [vmem:[%s116 + $0x298] sm:$0x3]
      %v209 = vld [vmem:[%s116 + $0x2a0] sm:$0xff]
      %v210 = vld [vmem:[%s116 + $0x2a8] sm:$0xff]
      %v211 = vld [vmem:[%s116 + $0x2b0] sm:$0x3]
      %v212 = vld [vmem:[%s116 + $0x2b8] sm:$0x3]
      %v213 = vld [vmem:[%s116 + $0x2c0] sm:$0xff]
      %v214 = vld [vmem:[%s116 + $0x2c8] sm:$0xff]
      %v215 = vld [vmem:[%s116 + $0x2d0] sm:$0x3]
      %v216 = vld [vmem:[%s116 + $0x2d8] sm:$0x3]
      %v217 = vld [vmem:[%s116 + $0x2e0] sm:$0xff]
      %v218 = vld [vmem:[%s116 + $0x2e8] sm:$0xff]
      %v219 = vld [vmem:[%s116 + $0x2f0] sm:$0x3]
      %v220 = vld [vmem:[%s116 + $0x2f8] sm:$0x3]
      %v221 = vmax.f32 %v125, %v129
      %v222 = vmax.f32 %v126, %v130
      %v223 = vmax.f32 %v127, %v131
      %v224 = vmax.f32 %v128, %v132
      %v225 = vmax.f32 %v133, %v137
      %v226 = vmax.f32 %v134, %v138
      %v227 = vmax.f32 %v135, %v139
      %v228 = vmax.f32 %v136, %v140
      %v229 = vmax.f32 %v141, %v145
      %v230 = vmax.f32 %v142, %v146
      %v231 = vmax.f32 %v143, %v147
      %v232 = vmax.f32 %v144, %v148
      %v233 = vmax.f32 %v149, %v153
      %v234 = vmax.f32 %v150, %v154
      %v235 = vmax.f32 %v151, %v155
      %v236 = vmax.f32 %v152, %v156
      %v237 = vmax.f32 %v157, %v161
      %v238 = vmax.f32 %v158, %v162
      %v239 = vmax.f32 %v159, %v163
      %v240 = vmax.f32 %v160, %v164
      %v241 = vmax.f32 %v165, %v169
      %v242 = vmax.f32 %v166, %v170
      %v243 = vmax.f32 %v167, %v171
      %v244 = vmax.f32 %v168, %v172
      %v245 = vmax.f32 %v173, %v177
      %v246 = vmax.f32 %v174, %v178
      %v247 = vmax.f32 %v175, %v179
      %v248 = vmax.f32 %v176, %v180
      %v249 = vmax.f32 %v181, %v185
      %v250 = vmax.f32 %v182, %v186
      %v251 = vmax.f32 %v183, %v187
      %v252 = vmax.f32 %v184, %v188
      %v253 = vmax.f32 %v189, %v193
      %v254 = vmax.f32 %v190, %v194
      %v255 = vmax.f32 %v191, %v195
      %v256 = vmax.f32 %v192, %v196
      %v257 = vmax.f32 %v197, %v201
      %v258 = vmax.f32 %v198, %v202
      %v259 = vmax.f32 %v199, %v203
      %v260 = vmax.f32 %v200, %v204
      %v261 = vmax.f32 %v205, %v209
      %v262 = vmax.f32 %v206, %v210
      %v263 = vmax.f32 %v207, %v211
      %v264 = vmax.f32 %v208, %v212
      %v265 = vmax.f32 %v213, %v217
      %v266 = vmax.f32 %v214, %v218
      %v267 = vmax.f32 %v215, %v219
      %v268 = vmax.f32 %v216, %v220
      %v269 = vmax.f32 %v221, %v222
      %v270 = vmax.f32 %v223, %v224
      %v271 = vmax.f32 %v225, %v226
      %v272 = vmax.f32 %v227, %v228
      %v273 = vmax.f32 %v229, %v230
      %v274 = vmax.f32 %v231, %v232
      %v275 = vmax.f32 %v233, %v234
      %v276 = vmax.f32 %v235, %v236
      %v277 = vmax.f32 %v237, %v238
      %v278 = vmax.f32 %v239, %v240
      %v279 = vmax.f32 %v241, %v242
      %v280 = vmax.f32 %v243, %v244
      %v281 = vmax.f32 %v245, %v246
      %v282 = vmax.f32 %v247, %v248
      %v283 = vmax.f32 %v249, %v250
      %v284 = vmax.f32 %v251, %v252
      %v285 = vmax.f32 %v253, %v254
      %v286 = vmax.f32 %v255, %v256
      %v287 = vmax.f32 %v257, %v258
      %v288 = vmax.f32 %v259, %v260
      %v289 = vmax.f32 %v261, %v262
      %v290 = vmax.f32 %v263, %v264
      %v291 = vmax.f32 %v265, %v266
      %v292 = vmax.f32 %v267, %v268
      %293 = vst [vmem:[%s123] sm:$0xff] %v269
      %294 = vst [vmem:[%s123 + $0x8] sm:$0x3] %v270
      %295 = vst [vmem:[%s123 + $0x10] sm:$0xff] %v271
      %296 = vst [vmem:[%s123 + $0x18] sm:$0x3] %v272
      %297 = vst [vmem:[%s123 + $0x20] sm:$0xff] %v273
      %298 = vst [vmem:[%s123 + $0x28] sm:$0x3] %v274
      %299 = vst [vmem:[%s123 + $0x30] sm:$0xff] %v275
      %300 = vst [vmem:[%s123 + $0x38] sm:$0x3] %v276
      %301 = vst [vmem:[%s123 + $0x40] sm:$0xff] %v277
      %302 = vst [vmem:[%s123 + $0x48] sm:$0x3] %v278
      %303 = vst [vmem:[%s123 + $0x50] sm:$0xff] %v279
      %304 = vst [vmem:[%s123 + $0x58] sm:$0x3] %v280
      %305 = vst [vmem:[%s123 + $0x60] sm:$0xff] %v281
      %306 = vst [vmem:[%s123 + $0x68] sm:$0x3] %v282
      %307 = vst [vmem:[%s123 + $0x70] sm:$0xff] %v283
      %308 = vst [vmem:[%s123 + $0x78] sm:$0x3] %v284
      %309 = vst [vmem:[%s123 + $0x80] sm:$0xff] %v285
      %310 = vst [vmem:[%s123 + $0x88] sm:$0x3] %v286
      %311 = vst [vmem:[%s123 + $0x90] sm:$0xff] %v287
      %312 = vst [vmem:[%s123 + $0x98] sm:$0x3] %v288
      %313 = vst [vmem:[%s123 + $0xa0] sm:$0xff] %v289
      %314 = vst [vmem:[%s123 + $0xa8] sm:$0x3] %v290
      %315 = vst [vmem:[%s123 + $0xb0] sm:$0xff] %v291
      %316 = vst [vmem:[%s123 + $0xb8] sm:$0x3] %v292
      %s317 = smul.u32 12, %s12
      %p318 = scmp.lt.s32.totalorder %s317, 23
      %s319 = scalar_select %p318, %s317, 23
      %s320 = smul.addr %s319, 2
      %s321 = smul.addr %s320, 8
      %s322 = scalar_lea.vmem %s1, %s321
      // Predicated region
      $region25: #{pyteen_forward.8} parent=23 // pred_check
        %p323 = pneg %p56
      $region26: #{pyteen_forward.8} parent=23 // pred_check_branch
        %325 = sbr.rel (%p323) target = $region28
      $region27: #{pyteen_forward.8} parent=23 // pred_region
        %s326 = smul.u32 12, %s12
      $region28: #{pyteen_forward.8} parent=23 // pred_fallthru
        _
    $region24: #{pyteen_forward.8} parent=5 // pred_fallthru
      _
    %p327 = scmp.le.s32.totalorder 2, %s7
    // Predicated region
    $region29: #{pyteen_forward.8} parent=5 // pred_check
      %p328 = pneg %p327
    $region30: #{pyteen_forward.8} parent=5 // pred_check_branch
      %330 = sbr.rel (%p328) target = $region32
    $region31: #{pyteen_forward.8} parent=5 // pred_region
      %s331 = ssub.s32 %s7, 2
      // Predicated region
      $region33: #{pyteen_forward.8} parent=31 // pred_check
        %p332 = pneg %p62
      $region34: #{pyteen_forward.8} parent=31 // pred_check_branch
        %334 = sbr.rel (%p332) target = $region36
      $region35: #{pyteen_forward.8} parent=31 // pred_region
        %s335 = smul.u32 12, %s13
        %p336 = scmp.lt.s32.totalorder %s335, 23
        %s337 = scalar_select %p336, %s335, 23
        %s338 = smul.addr %s337, 2
        %s339 = smul.addr %s338, 8
        %s340 = scalar_lea.vmem %s1, %s339
      $region36: #{pyteen_forward.8} parent=31 // pred_fallthru
        _
    $region32: #{pyteen_forward.8} parent=5 // pred_fallthru
      _
  $region6: #{pyteen_forward.8} parent=0 // loop_footer
    %s11 = sadd.s32 1, %s7
  $region7: #{pyteen_forward.8} parent=0 // loop_footer_branch
    %6 = sbr.rel target = $region3
  $region8: #{pyteen_forward.8} parent=0 // loop_exit
    _

// kernel: pyteen_forward.9
$region0: #{pyteen_forward.9}
  #allocation0 [shape = 'u32[]', space=smem, size = 0x4, offset = 0x4, fixed_abs, tag = 'smem constant byte address 0x4 - core index']
  #allocation1 [shape = 'u32[144,128]{1,0:T(1,128)}', space=vmem, size = 0x12000, scoped, tag = 'internal scratch']
  %s0 = inlined_call_operand.vmem [shape: f32[2,1920], index: 0, kind: input, shape index: {}]
  %s1 = inlined_call_operand.vmem [shape: f32[1920,128], index: 1, kind: input, shape index: {}]
  %s2 = inlined_call_operand.vmem [shape: f32[1,128], index: 2, kind: input, shape index: {}]
  %s3 = inlined_call_operand.vmem [shape: f32[128,128], index: 3, kind: input, shape index: {}]
  %s4 = inlined_call_operand.vmem [shape: f32[1,128], index: 4, kind: input, shape index: {}]
  %s5 = inlined_call_operand.vmem [shape: f32[128,128], index: 5, kind: input, shape index: {}]
  %s6 = inlined_call_operand.vmem [shape: f32[1,128], index: 6, kind: input, shape index: {}]
  %s7 = inlined_call_operand.hbm [shape: f32[2,128], index: 7, kind: output, shape index: {}]
  %s8 = sld [smem:[#allocation0]]
  $region38: #{pyteen_forward.9} parent=0
    _
  %s10 = ssub.s32 1, %s8
  %s11 = scalar_select 0, %s10, %s8
  $region1: #{pyteen_forward.9} parent=0
    #allocation2 [shape = 'u8[1024]{0}', space=vmem, size = 0x400, scoped, tag = 'output window, operand 0, single buffered']
    #allocation3 [shape = 's32[1]{0}', space=sflag, size = 0x4, scoped, tag = 'scoped memory for pyteen_forward.9']
    %12 = vsyncpa [#allocation3], 0
    // Predicated region
    $region2: #{pyteen_forward.9} parent=1 // pred_check
      _
    $region3: #{pyteen_forward.9} parent=1 // pred_check_branch
      %14 = sbr.rel (0) target = $region5
    $region4: #{pyteen_forward.9} parent=1 // pred_region
      _
    $region5: #{pyteen_forward.9} parent=1 // pred_fallthru
      _
    // Predicated region
    $region6: #{pyteen_forward.9} parent=1 // pred_check
      _
    $region7: #{pyteen_forward.9} parent=1 // pred_check_branch
      %16 = sbr.rel (0) target = $region9
    $region8: #{pyteen_forward.9} parent=1 // pred_region
      _
    $region9: #{pyteen_forward.9} parent=1 // pred_fallthru
      _
    // Predicated region
    $region10: #{pyteen_forward.9} parent=1 // pred_check
      _
    $region11: #{pyteen_forward.9} parent=1 // pred_check_branch
      %18 = sbr.rel (0) target = $region13
    $region12: #{pyteen_forward.9} parent=1 // pred_region
      _
    $region13: #{pyteen_forward.9} parent=1 // pred_fallthru
      _
    // Predicated region
    $region14: #{pyteen_forward.9} parent=1 // pred_check
      _
    $region15: #{pyteen_forward.9} parent=1 // pred_check_branch
      %20 = sbr.rel (0) target = $region17
    $region16: #{pyteen_forward.9} parent=1 // pred_region
      _
    $region17: #{pyteen_forward.9} parent=1 // pred_fallthru
      _
    // Predicated region
    $region18: #{pyteen_forward.9} parent=1 // pred_check
      _
    $region19: #{pyteen_forward.9} parent=1 // pred_check_branch
      %22 = sbr.rel (0) target = $region21
    $region20: #{pyteen_forward.9} parent=1 // pred_region
      _
    $region21: #{pyteen_forward.9} parent=1 // pred_fallthru
      _
    // Predicated region
    $region22: #{pyteen_forward.9} parent=1 // pred_check
      _
    $region23: #{pyteen_forward.9} parent=1 // pred_check_branch
      %24 = sbr.rel (0) target = $region25
    $region24: #{pyteen_forward.9} parent=1 // pred_region
      _
    $region25: #{pyteen_forward.9} parent=1 // pred_fallthru
      _
    // Predicated region
    $region26: #{pyteen_forward.9} parent=1 // pred_check
      _
    $region27: #{pyteen_forward.9} parent=1 // pred_check_branch
      %26 = sbr.rel (0) target = $region29
    $region28: #{pyteen_forward.9} parent=1 // pred_region
      _
    $region29: #{pyteen_forward.9} parent=1 // pred_fallthru
      _
    %v27 = vld [vmem:[%s0] sm:$0xff]
    %v28 = vld [vmem:[%s0 + $0x8] sm:$0xff]
    %v29 = vld [vmem:[%s0 + $0x10] sm:$0xff]
    %v30 = vld [vmem:[%s0 + $0x18] sm:$0x3f]
    %v31 = vld [vmem:[%s1] sm:$0xff]
    %v32 = vld [vmem:[%s1 + $0x8] sm:$0xff]
    %v33 = vld [vmem:[%s1 + $0x10] sm:$0xff]
    %v34 = vld [vmem:[%s1 + $0x18] sm:$0xff]
    %v35 = vld [vmem:[%s1 + $0x20] sm:$0xff]
    %v36 = vld [vmem:[%s1 + $0x28] sm:$0xff]
    %v37 = vld [vmem:[%s1 + $0x30] sm:$0xff]
    %v38 = vld [vmem:[%s1 + $0x38] sm:$0xff]
    %v39 = vld [vmem:[%s1 + $0x40] sm:$0xff]
    %v40 = vld [vmem:[%s1 + $0x48] sm:$0xff]
    %v41 = vld [vmem:[%s1 + $0x50] sm:$0xff]
    %v42 = vld [vmem:[%s1 + $0x58] sm:$0xff]
    %v43 = vld [vmem:[%s1 + $0x60] sm:$0xff]
    %v44 = vld [vmem:[%s1 + $0x68] sm:$0xff]
    %v45 = vld [vmem:[%s1 + $0x70] sm:$0xff]
    %v46 = vld [vmem:[%s1 + $0x78] sm:$0xff]
    %v47 = vld [vmem:[%s1 + $0x80] sm:$0xff]
    %v48 = vld [vmem:[%s1 + $0x88] sm:$0xff]
    %v49 = vld [vmem:[%s1 + $0x90] sm:$0xff]
    %v50 = vld [vmem:[%s1 + $0x98] sm:$0xff]
    %v51 = vld [vmem:[%s1 + $0xa0] sm:$0xff]
    %v52 = vld [vmem:[%s1 + $0xa8] sm:$0xff]
    %v53 = vld [vmem:[%s1 + $0xb0] sm:$0xff]
    %v54 = vld [vmem:[%s1 + $0xb8] sm:$0xff]
    %v55 = vld [vmem:[%s1 + $0xc0] sm:$0xff]
    %v56 = vld [vmem:[%s1 + $0xc8] sm:$0xff]
    %v57 = vld [vmem:[%s1 + $0xd0] sm:$0xff]
    %v58 = vld [vmem:[%s1 + $0xd8] sm:$0xff]
    %v59 = vld [vmem:[%s1 + $0xe0] sm:$0xff]
    %v60 = vld [vmem:[%s1 + $0xe8] sm:$0xff]
    %v61 = vld [vmem:[%s1 + $0xf0] sm:$0xff]
    %v62 = vld [vmem:[%s1 + $0xf8] sm:$0xff]
    %v63 = vld [vmem:[%s1 + $0x100] sm:$0xff]
    %v64 = vld [vmem:[%s1 + $0x108] sm:$0xff]
    %v65 = vld [vmem:[%s1 + $0x110] sm:$0xff]
    %v66 = vld [vmem:[%s1 + $0x118] sm:$0xff]
    %v67 = vld [vmem:[%s1 + $0x120] sm:$0xff]
    %v68 = vld [vmem:[%s1 + $0x128] sm:$0xff]
    %v69 = vld [vmem:[%s1 + $0x130] sm:$0xff]
    %v70 = vld [vmem:[%s1 + $0x138] sm:$0xff]
    %v71 = vld [vmem:[%s1 + $0x140] sm:$0xff]
    %v72 = vld [vmem:[%s1 + $0x148] sm:$0xff]
    %v73 = vld [vmem:[%s1 + $0x150] sm:$0xff]
    %v74 = vld [vmem:[%s1 + $0x158] sm:$0xff]
    %v75 = vld [vmem:[%s1 + $0x160] sm:$0xff]
    %v76 = vld [vmem:[%s1 + $0x168] sm:$0xff]
    %v77 = vld [vmem:[%s1 + $0x170] sm:$0xff]
    %v78 = vld [vmem:[%s1 + $0x178] sm:$0xff]
    %v79 = vld [vmem:[%s1 + $0x180] sm:$0xff]
    %v80 = vld [vmem:[%s1 + $0x188] sm:$0xff]
    %v81 = vld [vmem:[%s1 + $0x190] sm:$0xff]
    %v82 = vld [vmem:[%s1 + $0x198] sm:$0xff]
    %v83 = vld [vmem:[%s1 + $0x1a0] sm:$0xff]
    %v84 = vld [vmem:[%s1 + $0x1a8] sm:$0xff]
    %v85 = vld [vmem:[%s1 + $0x1b0] sm:$0xff]
    %v86 = vld [vmem:[%s1 + $0x1b8] sm:$0xff]
    %v87 = vld [vmem:[%s1 + $0x1c0] sm:$0xff]
    %v88 = vld [vmem:[%s1 + $0x1c8] sm:$0xff]
    %v89 = vld [vmem:[%s1 + $0x1d0] sm:$0xff]
    %v90 = vld [vmem:[%s1 + $0x1d8] sm:$0xff]
    %v91 = vld [vmem:[%s1 + $0x1e0] sm:$0xff]
    %v92 = vld [vmem:[%s1 + $0x1e8] sm:$0xff]
    %v93 = vld [vmem:[%s1 + $0x1f0] sm:$0xff]
    %v94 = vld [vmem:[%s1 + $0x1f8] sm:$0xff]
    %v95 = vld [vmem:[%s1 + $0x200] sm:$0xff]
    %v96 = vld [vmem:[%s1 + $0x208] sm:$0xff]
    %v97 = vld [vmem:[%s1 + $0x210] sm:$0xff]
    %v98 = vld [vmem:[%s1 + $0x218] sm:$0xff]
    %v99 = vld [vmem:[%s1 + $0x220] sm:$0xff]
    %v100 = vld [vmem:[%s1 + $0x228] sm:$0xff]
    %v101 = vld [vmem:[%s1 + $0x230] sm:$0xff]
    %v102 = vld [vmem:[%s1 + $0x238] sm:$0xff]
    %v103 = vld [vmem:[%s1 + $0x240] sm:$0xff]
    %v104 = vld [vmem:[%s1 + $0x248] sm:$0xff]
    %v105 = vld [vmem:[%s1 + $0x250] sm:$0xff]
    %v106 = vld [vmem:[%s1 + $0x258] sm:$0xff]
    %v107 = vld [vmem:[%s1 + $0x260] sm:$0xff]
    %v108 = vld [vmem:[%s1 + $0x268] sm:$0xff]
    %v109 = vld [vmem:[%s1 + $0x270] sm:$0xff]
    %v110 = vld [vmem:[%s1 + $0x278] sm:$0xff]
    %v111 = vld [vmem:[%s1 + $0x280] sm:$0xff]
    %v112 = vld [vmem:[%s1 + $0x288] sm:$0xff]
    %v113 = vld [vmem:[%s1 + $0x290] sm:$0xff]
    %v114 = vld [vmem:[%s1 + $0x298] sm:$0xff]
    %v115 = vld [vmem:[%s1 + $0x2a0] sm:$0xff]
    %v116 = vld [vmem:[%s1 + $0x2a8] sm:$0xff]
    %v117 = vld [vmem:[%s1 + $0x2b0] sm:$0xff]
    %v118 = vld [vmem:[%s1 + $0x2b8] sm:$0xff]
    %v119 = vld [vmem:[%s1 + $0x2c0] sm:$0xff]
    %v120 = vld [vmem:[%s1 + $0x2c8] sm:$0xff]
    %v121 = vld [vmem:[%s1 + $0x2d0] sm:$0xff]
    %v122 = vld [vmem:[%s1 + $0x2d8] sm:$0xff]
    %v123 = vld [vmem:[%s1 + $0x2e0] sm:$0xff]
    %v124 = vld [vmem:[%s1 + $0x2e8] sm:$0xff]
    %v125 = vld [vmem:[%s1 + $0x2f0] sm:$0xff]
    %v126 = vld [vmem:[%s1 + $0x2f8] sm:$0xff]
    %v127 = vld [vmem:[%s1 + $0x300] sm:$0xff]
    %v128 = vld [vmem:[%s1 + $0x308] sm:$0xff]
    %v129 = vld [vmem:[%s1 + $0x310] sm:$0xff]
    %v130 = vld [vmem:[%s1 + $0x318] sm:$0xff]
    %v131 = vld [vmem:[%s1 + $0x320] sm:$0xff]
    %v132 = vld [vmem:[%s1 + $0x328] sm:$0xff]
    %v133 = vld [vmem:[%s1 + $0x330] sm:$0xff]
    %v134 = vld [vmem:[%s1 + $0x338] sm:$0xff]
    %v135 = vld [vmem:[%s1 + $0x340] sm:$0xff]
    %v136 = vld [vmem:[%s1 + $0x348] sm:$0xff]
    %v137 = vld [vmem:[%s1 + $0x350] sm:$0xff]
    %v138 = vld [vmem:[%s1 + $0x358] sm:$0xff]
    %v139 = vld [vmem:[%s1 + $0x360] sm:$0xff]
    %v140 = vld [vmem:[%s1 + $0x368] sm:$0xff]
    %v141 = vld [vmem:[%s1 + $0x370] sm:$0xff]
    %v142 = vld [vmem:[%s1 + $0x378] sm:$0xff]
    %v143 = vld [vmem:[%s1 + $0x380] sm:$0xff]
    %v144 = vld [vmem:[%s1 + $0x388] sm:$0xff]
    %v145 = vld [vmem:[%s1 + $0x390] sm:$0xff]
    %v146 = vld [vmem:[%s1 + $0x398] sm:$0xff]
    %v147 = vld [vmem:[%s1 + $0x3a0] sm:$0xff]
    %v148 = vld [vmem:[%s1 + $0x3a8] sm:$0xff]
    %v149 = vld [vmem:[%s1 + $0x3b0] sm:$0xff]
    %v150 = vld [vmem:[%s1 + $0x3b8] sm:$0xff]
    %v151 = vld [vmem:[%s1 + $0x3c0] sm:$0xff]
    %v152 = vld [vmem:[%s1 + $0x3c8] sm:$0xff]
    %v153 = vld [vmem:[%s1 + $0x3d0] sm:$0xff]
    %v154 = vld [vmem:[%s1 + $0x3d8] sm:$0xff]
    %v155 = vld [vmem:[%s1 + $0x3e0] sm:$0xff]
    %v156 = vld [vmem:[%s1 + $0x3e8] sm:$0xff]
    %v157 = vld [vmem:[%s1 + $0x3f0] sm:$0xff]
    %v158 = vld [vmem:[%s1 + $0x3f8] sm:$0xff]
    %v159 = vld [vmem:[%s1 + $0x400] sm:$0xff]
    %v160 = vld [vmem:[%s1 + $0x408] sm:$0xff]
    %v161 = vld [vmem:[%s1 + $0x410] sm:$0xff]
    %v162 = vld [vmem:[%s1 + $0x418] sm:$0xff]
    %v163 = vld [vmem:[%s1 + $0x420] sm:$0xff]
    %v164 = vld [vmem:[%s1 + $0x428] sm:$0xff]
    %v165 = vld [vmem:[%s1 + $0x430] sm:$0xff]
    %v166 = vld [vmem:[%s1 + $0x438] sm:$0xff]
    %v167 = vld [vmem:[%s1 + $0x440] sm:$0xff]
    %v168 = vld [vmem:[%s1 + $0x448] sm:$0xff]
    %v169 = vld [vmem:[%s1 + $0x450] sm:$0xff]
    %v170 = vld [vmem:[%s1 + $0x458] sm:$0xff]
    %v171 = vld [vmem:[%s1 + $0x460] sm:$0xff]
    %v172 = vld [vmem:[%s1 + $0x468] sm:$0xff]
    %v173 = vld [vmem:[%s1 + $0x470] sm:$0xff]
    %v174 = vld [vmem:[%s1 + $0x478] sm:$0xff]
    %v175 = vld [vmem:[%s1 + $0x480] sm:$0xff]
    %v176 = vld [vmem:[%s1 + $0x488] sm:$0xff]
    %v177 = vld [vmem:[%s1 + $0x490] sm:$0xff]
    %v178 = vld [vmem:[%s1 + $0x498] sm:$0xff]
    %v179 = vld [vmem:[%s1 + $0x4a0] sm:$0xff]
    %v180 = vld [vmem:[%s1 + $0x4a8] sm:$0xff]
    %v181 = vld [vmem:[%s1 + $0x4b0] sm:$0xff]
    %v182 = vld [vmem:[%s1 + $0x4b8] sm:$0xff]
    %v183 = vld [vmem:[%s1 + $0x4c0] sm:$0xff]
    %v184 = vld [vmem:[%s1 + $0x4c8] sm:$0xff]
    %v185 = vld [vmem:[%s1 + $0x4d0] sm:$0xff]
    %v186 = vld [vmem:[%s1 + $0x4d8] sm:$0xff]
    %v187 = vld [vmem:[%s1 + $0x4e0] sm:$0xff]
    %v188 = vld [vmem:[%s1 + $0x4e8] sm:$0xff]
    %v189 = vld [vmem:[%s1 + $0x4f0] sm:$0xff]
    %v190 = vld [vmem:[%s1 + $0x4f8] sm:$0xff]
    %v191 = vld [vmem:[%s1 + $0x500] sm:$0xff]
    %v192 = vld [vmem:[%s1 + $0x508] sm:$0xff]
    %v193 = vld [vmem:[%s1 + $0x510] sm:$0xff]
    %v194 = vld [vmem:[%s1 + $0x518] sm:$0xff]
    %v195 = vld [vmem:[%s1 + $0x520] sm:$0xff]
    %v196 = vld [vmem:[%s1 + $0x528] sm:$0xff]
    %v197 = vld [vmem:[%s1 + $0x530] sm:$0xff]
    %v198 = vld [vmem:[%s1 + $0x538] sm:$0xff]
    %v199 = vld [vmem:[%s1 + $0x540] sm:$0xff]
    %v200 = vld [vmem:[%s1 + $0x548] sm:$0xff]
    %v201 = vld [vmem:[%s1 + $0x550] sm:$0xff]
    %v202 = vld [vmem:[%s1 + $0x558] sm:$0xff]
    %v203 = vld [vmem:[%s1 + $0x560] sm:$0xff]
    %v204 = vld [vmem:[%s1 + $0x568] sm:$0xff]
    %v205 = vld [vmem:[%s1 + $0x570] sm:$0xff]
    %v206 = vld [vmem:[%s1 + $0x578] sm:$0xff]
    %v207 = vld [vmem:[%s1 + $0x580] sm:$0xff]
    %v208 = vld [vmem:[%s1 + $0x588] sm:$0xff]
    %v209 = vld [vmem:[%s1 + $0x590] sm:$0xff]
    %v210 = vld [vmem:[%s1 + $0x598] sm:$0xff]
    %v211 = vld [vmem:[%s1 + $0x5a0] sm:$0xff]
    %v212 = vld [vmem:[%s1 + $0x5a8] sm:$0xff]
    %v213 = vld [vmem:[%s1 + $0x5b0] sm:$0xff]
    %v214 = vld [vmem:[%s1 + $0x5b8] sm:$0xff]
    %v215 = vld [vmem:[%s1 + $0x5c0] sm:$0xff]
    %v216 = vld [vmem:[%s1 + $0x5c8] sm:$0xff]
    %v217 = vld [vmem:[%s1 + $0x5d0] sm:$0xff]
    %v218 = vld [vmem:[%s1 + $0x5d8] sm:$0xff]
    %v219 = vld [vmem:[%s1 + $0x5e0] sm:$0xff]
    %v220 = vld [vmem:[%s1 + $0x5e8] sm:$0xff]
    %v221 = vld [vmem:[%s1 + $0x5f0] sm:$0xff]
    %v222 = vld [vmem:[%s1 + $0x5f8] sm:$0xff]
    %v223 = vld [vmem:[%s1 + $0x600] sm:$0xff]
    %v224 = vld [vmem:[%s1 + $0x608] sm:$0xff]
    %v225 = vld [vmem:[%s1 + $0x610] sm:$0xff]
    %v226 = vld [vmem:[%s1 + $0x618] sm:$0xff]
    %v227 = vld [vmem:[%s1 + $0x620] sm:$0xff]
    %v228 = vld [vmem:[%s1 + $0x628] sm:$0xff]
    %v229 = vld [vmem:[%s1 + $0x630] sm:$0xff]
    %v230 = vld [vmem:[%s1 + $0x638] sm:$0xff]
    %v231 = vld [vmem:[%s1 + $0x640] sm:$0xff]
    %v232 = vld [vmem:[%s1 + $0x648] sm:$0xff]
    %v233 = vld [vmem:[%s1 + $0x650] sm:$0xff]
    %v234 = vld [vmem:[%s1 + $0x658] sm:$0xff]
    %v235 = vld [vmem:[%s1 + $0x660] sm:$0xff]
    %v236 = vld [vmem:[%s1 + $0x668] sm:$0xff]
    %v237 = vld [vmem:[%s1 + $0x670] sm:$0xff]
    %v238 = vld [vmem:[%s1 + $0x678] sm:$0xff]
    %v239 = vld [vmem:[%s1 + $0x680] sm:$0xff]
    %v240 = vld [vmem:[%s1 + $0x688] sm:$0xff]
    %v241 = vld [vmem:[%s1 + $0x690] sm:$0xff]
    %v242 = vld [vmem:[%s1 + $0x698] sm:$0xff]
    %v243 = vld [vmem:[%s1 + $0x6a0] sm:$0xff]
    %v244 = vld [vmem:[%s1 + $0x6a8] sm:$0xff]
    %v245 = vld [vmem:[%s1 + $0x6b0] sm:$0xff]
    %v246 = vld [vmem:[%s1 + $0x6b8] sm:$0xff]
    %v247 = vld [vmem:[%s1 + $0x6c0] sm:$0xff]
    %v248 = vld [vmem:[%s1 + $0x6c8] sm:$0xff]
    %v249 = vld [vmem:[%s1 + $0x6d0] sm:$0xff]
    %v250 = vld [vmem:[%s1 + $0x6d8] sm:$0xff]
    %v251 = vld [vmem:[%s1 + $0x6e0] sm:$0xff]
    %v252 = vld [vmem:[%s1 + $0x6e8] sm:$0xff]
    %v253 = vld [vmem:[%s1 + $0x6f0] sm:$0xff]
    %v254 = vld [vmem:[%s1 + $0x6f8] sm:$0xff]
    %v255 = vld [vmem:[%s1 + $0x700] sm:$0xff]
    %v256 = vld [vmem:[%s1 + $0x708] sm:$0xff]
    %v257 = vld [vmem:[%s1 + $0x710] sm:$0xff]
    %v258 = vld [vmem:[%s1 + $0x718] sm:$0xff]
    %v259 = vld [vmem:[%s1 + $0x720] sm:$0xff]
    %v260 = vld [vmem:[%s1 + $0x728] sm:$0xff]
    %v261 = vld [vmem:[%s1 + $0x730] sm:$0xff]
    %v262 = vld [vmem:[%s1 + $0x738] sm:$0xff]
    %v263 = vld [vmem:[%s1 + $0x740] sm:$0xff]
    %v264 = vld [vmem:[%s1 + $0x748] sm:$0xff]
    %v265 = vld [vmem:[%s1 + $0x750] sm:$0xff]
    %v266 = vld [vmem:[%s1 + $0x758] sm:$0xff]
    %v267 = vld [vmem:[%s1 + $0x760] sm:$0xff]
    %v268 = vld [vmem:[%s1 + $0x768] sm:$0xff]
    %v269 = vld [vmem:[%s1 + $0x770] sm:$0xff]
    %v270 = vld [vmem:[%s1 + $0x778] sm:$0xff]
    %v271 = vld [vmem:[%s2] sm:$0x1]
    %v273 = vlaneseq
    %v274 = vshrl.u32 %v273, 7
    %v275 = vsub.s32 0, %v274
    %v276 = vrot.slane %v271, %v275
    %v282 = vcombine.high %v27, %v27
    %v284 = vunpack.c.l.s4 1983009808
    %v285 = vunpack.c.0.s8 %v284
    %v286 = vlaneseq
    %v287 = vshrl.u32 %v286, 7
    %v288 = vsub.s32 %v285, %v287
    %v289 = vrot.slane %v27, %v288
    %v291 = vunpack.c.l.s4 1983009808
    %v292 = vunpack.c.0.s8 %v291
    %v293 = vlaneseq
    %v294 = vshrl.u32 %v293, 7
    %v295 = vsub.s32 %v292, %v294
    %v296 = vrot.slane %v282, %v295
    %v297 = vcombine.high %v289, %v289
    %v298 = vcombine.high %v296, %v296
    %v299 = vcombine.high %v28, %v28
    %v301 = vunpack.c.l.s4 1983009808
    %v302 = vunpack.c.0.s8 %v301
    %v303 = vlaneseq
    %v304 = vshrl.u32 %v303, 7
    %v305 = vsub.s32 %v302, %v304
    %v306 = vrot.slane %v28, %v305
    %v308 = vunpack.c.l.s4 1983009808
    %v309 = vunpack.c.0.s8 %v308
    %v310 = vlaneseq
    %v311 = vshrl.u32 %v310, 7
    %v312 = vsub.s32 %v309, %v311
    %v313 = vrot.slane %v299, %v312
    %v314 = vcombine.high %v306, %v306
    %v315 = vcombine.high %v313, %v313
    %v316 = vcombine.high %v29, %v29
    %v318 = vunpack.c.l.s4 1983009808
    %v319 = vunpack.c.0.s8 %v318
    %v320 = vlaneseq
    %v321 = vshrl.u32 %v320, 7
    %v322 = vsub.s32 %v319, %v321
    %v323 = vrot.slane %v29, %v322
    %v325 = vunpack.c.l.s4 1983009808
    %v326 = vunpack.c.0.s8 %v325
    %v327 = vlaneseq
    %v328 = vshrl.u32 %v327, 7
    %v329 = vsub.s32 %v326, %v328
    %v330 = vrot.slane %v316, %v329
    %v331 = vcombine.high %v323, %v323
    %v332 = vcombine.high %v330, %v330
    %v333 = vcombine.high %v30, %v30
    %v335 = vunpack.c.l.s4 1983009808
    %v336 = vunpack.c.0.s8 %v335
    %v337 = vlaneseq
    %v338 = vshrl.u32 %v337, 7
    %v339 = vsub.s32 %v336, %v338
    %v340 = vrot.slane %v30, %v339
    %v342 = vunpack.c.l.s4 1983009808
    %v343 = vunpack.c.0.s8 %v342
    %v344 = vlaneseq
    %v345 = vshrl.u32 %v344, 7
    %v346 = vsub.s32 %v343, %v345
    %v347 = vrot.slane %v333, %v346
    %v348 = vcombine.high %v340, %v340
    %364 = vmatprep.subr.mxu0 0.0
    %365 = vmatpush1.msra.mxu0 %v46
    %366 = vmatprep.subr.mxu0 0.0
    %367 = vmatpush1.msra.mxu0 %v45
    %368 = vmatprep.subr.mxu0 0.0
    %369 = vmatpush1.msra.mxu0 %v44
    %370 = vmatprep.subr.mxu0 0.0
    %371 = vmatpush1.msra.mxu0 %v43
    %372 = vmatprep.subr.mxu0 0.0
    %373 = vmatpush1.msra.mxu0 %v42
    %374 = vmatprep.subr.mxu0 0.0
    %375 = vmatpush1.msra.mxu0 %v41
    %376 = vmatprep.subr.mxu0 0.0
    %377 = vmatpush1.msra.mxu0 %v40
    %378 = vmatprep.subr.mxu0 0.0
    %379 = vmatpush1.msra.mxu0 %v39
    %380 = vmatprep.subr.mxu0 0.0
    %381 = vmatpush1.msra.mxu0 %v38
    %382 = vmatprep.subr.mxu0 0.0
    %383 = vmatpush1.msra.mxu0 %v37
    %384 = vmatprep.subr.mxu0 0.0
    %385 = vmatpush1.msra.mxu0 %v36
    %386 = vmatprep.subr.mxu0 0.0
    %387 = vmatpush1.msra.mxu0 %v35
    %388 = vmatprep.subr.mxu0 0.0
    %389 = vmatpush1.msra.mxu0 %v34
    %390 = vmatprep.subr.mxu0 0.0
    %391 = vmatpush1.msra.mxu0 %v33
    %392 = vmatprep.subr.mxu0 0.0
    %393 = vmatpush1.msra.mxu0 %v32
    %394 = vmatprep.subr.mxu0 0.0
    %395 = vmatpush1.msra.mxu0 %v31
    %396 = vmatprep.subr.mxu0 0.0
    %397 = vmatpush2.msra.mxu0 %v62
    %398 = vmatprep.subr.mxu0 0.0
    %399 = vmatpush2.msra.mxu0 %v61
    %400 = vmatprep.subr.mxu0 0.0
    %401 = vmatpush2.msra.mxu0 %v60
    %402 = vmatprep.subr.mxu0 0.0
    %403 = vmatpush2.msra.mxu0 %v59
    %404 = vmatprep.subr.mxu0 0.0
    %405 = vmatpush2.msra.mxu0 %v58
    %406 = vmatprep.subr.mxu0 0.0
    %407 = vmatpush2.msra.mxu0 %v57
    %408 = vmatprep.subr.mxu0 0.0
    %409 = vmatpush2.msra.mxu0 %v56
    %410 = vmatprep.subr.mxu0 0.0
    %411 = vmatpush2.msra.mxu0 %v55
    %412 = vmatprep.subr.mxu0 0.0
    %413 = vmatpush2.msra.mxu0 %v54
    %414 = vmatprep.subr.mxu0 0.0
    %415 = vmatpush2.msra.mxu0 %v53
    %416 = vmatprep.subr.mxu0 0.0
    %417 = vmatpush2.msra.mxu0 %v52
    %418 = vmatprep.subr.mxu0 0.0
    %419 = vmatpush2.msra.mxu0 %v51
    %420 = vmatprep.subr.mxu0 0.0
    %421 = vmatpush2.msra.mxu0 %v50
    %422 = vmatprep.subr.mxu0 0.0
    %423 = vmatpush2.msra.mxu0 %v49
    %424 = vmatprep.subr.mxu0 0.0
    %425 = vmatpush2.msra.mxu0 %v48
    %426 = vmatprep.subr.mxu0 0.0
    %427 = vmatpush2.msra.mxu0 %v47
    %428 = vmatprep.mubr.f32.mxu0 %v297
    %429 = vmatmul.mubr.f32.gmra.mxu0 %v289
    %v430 = vpop.f32.mrf.mxu0
    %v431 = vadd.f32 %v276, %v430
    %v432 = vpop.f32.mrf.mxu0
    %433 = vdwg.mxu0
    %434 = vmatprep.subr.mxu0 0.0
    %435 = vmatpush1.msra.mxu0 %v78
    %436 = vmatprep.subr.mxu0 0.0
    %437 = vmatpush1.msra.mxu0 %v77
    %438 = vmatprep.subr.mxu0 0.0
    %439 = vmatpush1.msra.mxu0 %v76
    %440 = vmatprep.subr.mxu0 0.0
    %441 = vmatpush1.msra.mxu0 %v75
    %442 = vmatprep.subr.mxu0 0.0
    %443 = vmatpush1.msra.mxu0 %v74
    %444 = vmatprep.subr.mxu0 0.0
    %445 = vmatpush1.msra.mxu0 %v73
    %446 = vmatprep.subr.mxu0 0.0
    %447 = vmatpush1.msra.mxu0 %v72
    %448 = vmatprep.subr.mxu0 0.0
    %449 = vmatpush1.msra.mxu0 %v71
    %450 = vmatprep.subr.mxu0 0.0
    %451 = vmatpush1.msra.mxu0 %v70
    %452 = vmatprep.subr.mxu0 0.0
    %453 = vmatpush1.msra.mxu0 %v69
    %454 = vmatprep.subr.mxu0 0.0
    %455 = vmatpush1.msra.mxu0 %v68
    %456 = vmatprep.subr.mxu0 0.0
    %457 = vmatpush1.msra.mxu0 %v67
    %458 = vmatprep.subr.mxu0 0.0
    %459 = vmatpush1.msra.mxu0 %v66
    %460 = vmatprep.subr.mxu0 0.0
    %461 = vmatpush1.msra.mxu0 %v65
    %462 = vmatprep.subr.mxu0 0.0
    %463 = vmatpush1.msra.mxu0 %v64
    %464 = vmatprep.subr.mxu0 0.0
    %465 = vmatpush1.msra.mxu0 %v63
    %466 = vmatprep.subr.mxu0 0.0
    %467 = vmatpush2.msra.mxu0 %v94
    %468 = vmatprep.subr.mxu0 0.0
    %469 = vmatpush2.msra.mxu0 %v93
    %470 = vmatprep.subr.mxu0 0.0
    %471 = vmatpush2.msra.mxu0 %v92
    %472 = vmatprep.subr.mxu0 0.0
    %473 = vmatpush2.msra.mxu0 %v91
    %474 = vmatprep.subr.mxu0 0.0
    %475 = vmatpush2.msra.mxu0 %v90
    %476 = vmatprep.subr.mxu0 0.0
    %477 = vmatpush2.msra.mxu0 %v89
    %478 = vmatprep.subr.mxu0 0.0
    %479 = vmatpush2.msra.mxu0 %v88
    %480 = vmatprep.subr.mxu0 0.0
    %481 = vmatpush2.msra.mxu0 %v87
    %482 = vmatprep.subr.mxu0 0.0
    %483 = vmatpush2.msra.mxu0 %v86
    %484 = vmatprep.subr.mxu0 0.0
    %485 = vmatpush2.msra.mxu0 %v85
    %486 = vmatprep.subr.mxu0 0.0
    %487 = vmatpush2.msra.mxu0 %v84
    %488 = vmatprep.subr.mxu0 0.0
    %489 = vmatpush2.msra.mxu0 %v83
    %490 = vmatprep.subr.mxu0 0.0
    %491 = vmatpush2.msra.mxu0 %v82
    %492 = vmatprep.subr.mxu0 0.0
    %493 = vmatpush2.msra.mxu0 %v81
    %494 = vmatprep.subr.mxu0 0.0
    %495 = vmatpush2.msra.mxu0 %v80
    %496 = vmatprep.subr.mxu0 0.0
    %497 = vmatpush2.msra.mxu0 %v79
    %498 = vmatprep.mubr.f32.mxu0 %v298
    %499 = vmatmul.mubr.f32.gmra.mxu0 %v296
    %v500 = vpop.f32.mrf.mxu0
    %v501 = vadd.f32 %v431, %v500
    %v502 = vpop.f32.mrf.mxu0
    %503 = vdwg.mxu0
    %504 = vmatprep.subr.mxu0 0.0
    %505 = vmatpush1.msra.mxu0 %v110
    %506 = vmatprep.subr.mxu0 0.0
    %507 = vmatpush1.msra.mxu0 %v109
    %508 = vmatprep.subr.mxu0 0.0
    %509 = vmatpush1.msra.mxu0 %v108
    %510 = vmatprep.subr.mxu0 0.0
    %511 = vmatpush1.msra.mxu0 %v107
    %512 = vmatprep.subr.mxu0 0.0
    %513 = vmatpush1.msra.mxu0 %v106
    %514 = vmatprep.subr.mxu0 0.0
    %515 = vmatpush1.msra.mxu0 %v105
    %516 = vmatprep.subr.mxu0 0.0
    %517 = vmatpush1.msra.mxu0 %v104
    %518 = vmatprep.subr.mxu0 0.0
    %519 = vmatpush1.msra.mxu0 %v103
    %520 = vmatprep.subr.mxu0 0.0
    %521 = vmatpush1.msra.mxu0 %v102
    %522 = vmatprep.subr.mxu0 0.0
    %523 = vmatpush1.msra.mxu0 %v101
    %524 = vmatprep.subr.mxu0 0.0
    %525 = vmatpush1.msra.mxu0 %v100
    %526 = vmatprep.subr.mxu0 0.0
    %527 = vmatpush1.msra.mxu0 %v99
    %528 = vmatprep.subr.mxu0 0.0
    %529 = vmatpush1.msra.mxu0 %v98
    %530 = vmatprep.subr.mxu0 0.0
    %531 = vmatpush1.msra.mxu0 %v97
    %532 = vmatprep.subr.mxu0 0.0
    %533 = vmatpush1.msra.mxu0 %v96
    %534 = vmatprep.subr.mxu0 0.0
    %535 = vmatpush1.msra.mxu0 %v95
    %536 = vmatprep.subr.mxu0 0.0
    %537 = vmatpush2.msra.mxu0 %v126
    %538 = vmatprep.subr.mxu0 0.0
    %539 = vmatpush2.msra.mxu0 %v125
    %540 = vmatprep.subr.mxu0 0.0
    %541 = vmatpush2.msra.mxu0 %v124
    %542 = vmatprep.subr.mxu0 0.0
    %543 = vmatpush2.msra.mxu0 %v123
    %544 = vmatprep.subr.mxu0 0.0
    %545 = vmatpush2.msra.mxu0 %v122
    %546 = vmatprep.subr.mxu0 0.0
    %547 = vmatpush2.msra.mxu0 %v121
    %548 = vmatprep.subr.mxu0 0.0
    %549 = vmatpush2.msra.mxu0 %v120
    %550 = vmatprep.subr.mxu0 0.0
    %551 = vmatpush2.msra.mxu0 %v119
    %552 = vmatprep.subr.mxu0 0.0
    %553 = vmatpush2.msra.mxu0 %v118
    %554 = vmatprep.subr.mxu0 0.0
    %555 = vmatpush2.msra.mxu0 %v117
    %556 = vmatprep.subr.mxu0 0.0
    %557 = vmatpush2.msra.mxu0 %v116
    %558 = vmatprep.subr.mxu0 0.0
    %559 = vmatpush2.msra.mxu0 %v115
    %560 = vmatprep.subr.mxu0 0.0
    %561 = vmatpush2.msra.mxu0 %v114
    %562 = vmatprep.subr.mxu0 0.0
    %563 = vmatpush2.msra.mxu0 %v113
    %564 = vmatprep.subr.mxu0 0.0
    %565 = vmatpush2.msra.mxu0 %v112
    %566 = vmatprep.subr.mxu0 0.0
    %567 = vmatpush2.msra.mxu0 %v111
    %568 = vmatprep.mubr.f32.mxu0 %v314
    %569 = vmatmul.mubr.f32.gmra.mxu0 %v306
    %v570 = vpop.f32.mrf.mxu0
    %v571 = vadd.f32 %v501, %v570
    %v572 = vpop.f32.mrf.mxu0
    %573 = vdwg.mxu0
    %574 = vmatprep.subr.mxu0 0.0
    %575 = vmatpush1.msra.mxu0 %v142
    %576 = vmatprep.subr.mxu0 0.0
    %577 = vmatpush1.msra.mxu0 %v141
    %578 = vmatprep.subr.mxu0 0.0
    %579 = vmatpush1.msra.mxu0 %v140
    %580 = vmatprep.subr.mxu0 0.0
    %581 = vmatpush1.msra.mxu0 %v139
    %582 = vmatprep.subr.mxu0 0.0
    %583 = vmatpush1.msra.mxu0 %v138
    %584 = vmatprep.subr.mxu0 0.0
    %585 = vmatpush1.msra.mxu0 %v137
    %586 = vmatprep.subr.mxu0 0.0
    %587 = vmatpush1.msra.mxu0 %v136
    %588 = vmatprep.subr.mxu0 0.0
    %589 = vmatpush1.msra.mxu0 %v135
    %590 = vmatprep.subr.mxu0 0.0
    %591 = vmatpush1.msra.mxu0 %v134
    %592 = vmatprep.subr.mxu0 0.0
    %593 = vmatpush1.msra.mxu0 %v133
    %594 = vmatprep.subr.mxu0 0.0
    %595 = vmatpush1.msra.mxu0 %v132
    %596 = vmatprep.subr.mxu0 0.0
    %597 = vmatpush1.msra.mxu0 %v131
    %598 = vmatprep.subr.mxu0 0.0
    %599 = vmatpush1.msra.mxu0 %v130
    %600 = vmatprep.subr.mxu0 0.0
    %601 = vmatpush1.msra.mxu0 %v129
    %602 = vmatprep.subr.mxu0 0.0
    %603 = vmatpush1.msra.mxu0 %v128
    %604 = vmatprep.subr.mxu0 0.0
    %605 = vmatpush1.msra.mxu0 %v127
    %606 = vmatprep.subr.mxu0 0.0
    %607 = vmatpush2.msra.mxu0 %v158
    %608 = vmatprep.subr.mxu0 0.0
    %609 = vmatpush2.msra.mxu0 %v157
    %610 = vmatprep.subr.mxu0 0.0
    %611 = vmatpush2.msra.mxu0 %v156
    %612 = vmatprep.subr.mxu0 0.0
    %613 = vmatpush2.msra.mxu0 %v155
    %614 = vmatprep.subr.mxu0 0.0
    %615 = vmatpush2.msra.mxu0 %v154
    %616 = vmatprep.subr.mxu0 0.0
    %617 = vmatpush2.msra.mxu0 %v153
    %618 = vmatprep.subr.mxu0 0.0
    %619 = vmatpush2.msra.mxu0 %v152
    %620 = vmatprep.subr.mxu0 0.0
    %621 = vmatpush2.msra.mxu0 %v151
    %622 = vmatprep.subr.mxu0 0.0
    %623 = vmatpush2.msra.mxu0 %v150
    %624 = vmatprep.subr.mxu0 0.0
    %625 = vmatpush2.msra.mxu0 %v149
    %626 = vmatprep.subr.mxu0 0.0
    %627 = vmatpush2.msra.mxu0 %v148
    %628 = vmatprep.subr.mxu0 0.0
    %629 = vmatpush2.msra.mxu0 %v147
    %630 = vmatprep.subr.mxu0 0.0
    %631 = vmatpush2.msra.mxu0 %v146
    %632 = vmatprep.subr.mxu0 0.0
    %633 = vmatpush2.msra.mxu0 %v145
    %634 = vmatprep.subr.mxu0 0.0
    %635 = vmatpush2.msra.mxu0 %v144
    %636 = vmatprep.subr.mxu0 0.0
    %637 = vmatpush2.msra.mxu0 %v143
    %638 = vmatprep.mubr.f32.mxu0 %v315
    %639 = vmatmul.mubr.f32.gmra.mxu0 %v313
    %v640 = vpop.f32.mrf.mxu0
    %v641 = vadd.f32 %v571, %v640
    %v642 = vpop.f32.mrf.mxu0
    %643 = vdwg.mxu0
    %644 = vmatprep.subr.mxu0 0.0
    %645 = vmatpush1.msra.mxu0 %v174
    %646 = vmatprep.subr.mxu0 0.0
    %647 = vmatpush1.msra.mxu0 %v173
    %648 = vmatprep.subr.mxu0 0.0
    %649 = vmatpush1.msra.mxu0 %v172
    %650 = vmatprep.subr.mxu0 0.0
    %651 = vmatpush1.msra.mxu0 %v171
    %652 = vmatprep.subr.mxu0 0.0
    %653 = vmatpush1.msra.mxu0 %v170
    %654 = vmatprep.subr.mxu0 0.0
    %655 = vmatpush1.msra.mxu0 %v169
    %656 = vmatprep.subr.mxu0 0.0
    %657 = vmatpush1.msra.mxu0 %v168
    %658 = vmatprep.subr.mxu0 0.0
    %659 = vmatpush1.msra.mxu0 %v167
    %660 = vmatprep.subr.mxu0 0.0
    %661 = vmatpush1.msra.mxu0 %v166
    %662 = vmatprep.subr.mxu0 0.0
    %663 = vmatpush1.msra.mxu0 %v165
    %664 = vmatprep.subr.mxu0 0.0
    %665 = vmatpush1.msra.mxu0 %v164
    %666 = vmatprep.subr.mxu0 0.0
    %667 = vmatpush1.msra.mxu0 %v163
    %668 = vmatprep.subr.mxu0 0.0
    %669 = vmatpush1.msra.mxu0 %v162
    %670 = vmatprep.subr.mxu0 0.0
    %671 = vmatpush1.msra.mxu0 %v161
    %672 = vmatprep.subr.mxu0 0.0
    %673 = vmatpush1.msra.mxu0 %v160
    %674 = vmatprep.subr.mxu0 0.0
    %675 = vmatpush1.msra.mxu0 %v159
    %676 = vmatprep.subr.mxu0 0.0
    %677 = vmatpush2.msra.mxu0 %v190
    %678 = vmatprep.subr.mxu0 0.0
    %679 = vmatpush2.msra.mxu0 %v189
    %680 = vmatprep.subr.mxu0 0.0
    %681 = vmatpush2.msra.mxu0 %v188
    %682 = vmatprep.subr.mxu0 0.0
    %683 = vmatpush2.msra.mxu0 %v187
    %684 = vmatprep.subr.mxu0 0.0
    %685 = vmatpush2.msra.mxu0 %v186
    %686 = vmatprep.subr.mxu0 0.0
    %687 = vmatpush2.msra.mxu0 %v185
    %688 = vmatprep.subr.mxu0 0.0
    %689 = vmatpush2.msra.mxu0 %v184
    %690 = vmatprep.subr.mxu0 0.0
    %691 = vmatpush2.msra.mxu0 %v183
    %692 = vmatprep.subr.mxu0 0.0
    %693 = vmatpush2.msra.mxu0 %v182
    %694 = vmatprep.subr.mxu0 0.0
    %695 = vmatpush2.msra.mxu0 %v181
    %696 = vmatprep.subr.mxu0 0.0
    %697 = vmatpush2.msra.mxu0 %v180
    %698 = vmatprep.subr.mxu0 0.0
    %699 = vmatpush2.msra.mxu0 %v179
    %700 = vmatprep.subr.mxu0 0.0
    %701 = vmatpush2.msra.mxu0 %v178
    %702 = vmatprep.subr.mxu0 0.0
    %703 = vmatpush2.msra.mxu0 %v177
    %704 = vmatprep.subr.mxu0 0.0
    %705 = vmatpush2.msra.mxu0 %v176
    %706 = vmatprep.subr.mxu0 0.0
    %707 = vmatpush2.msra.mxu0 %v175
    %708 = vmatprep.mubr.f32.mxu0 %v331
    %709 = vmatmul.mubr.f32.gmra.mxu0 %v323
    %v710 = vpop.f32.mrf.mxu0
    %v711 = vadd.f32 %v641, %v710
    %v712 = vpop.f32.mrf.mxu0
    %713 = vdwg.mxu0
    %714 = vmatprep.subr.mxu0 0.0
    %715 = vmatpush1.msra.mxu0 %v206
    %716 = vmatprep.subr.mxu0 0.0
    %717 = vmatpush1.msra.mxu0 %v205
    %718 = vmatprep.subr.mxu0 0.0
    %719 = vmatpush1.msra.mxu0 %v204
    %720 = vmatprep.subr.mxu0 0.0
    %721 = vmatpush1.msra.mxu0 %v203
    %722 = vmatprep.subr.mxu0 0.0
    %723 = vmatpush1.msra.mxu0 %v202
    %724 = vmatprep.subr.mxu0 0.0
    %725 = vmatpush1.msra.mxu0 %v201
    %726 = vmatprep.subr.mxu0 0.0
    %727 = vmatpush1.msra.mxu0 %v200
    %728 = vmatprep.subr.mxu0 0.0
    %729 = vmatpush1.msra.mxu0 %v199
    %730 = vmatprep.subr.mxu0 0.0
    %731 = vmatpush1.msra.mxu0 %v198
    %732 = vmatprep.subr.mxu0 0.0
    %733 = vmatpush1.msra.mxu0 %v197
    %734 = vmatprep.subr.mxu0 0.0
    %735 = vmatpush1.msra.mxu0 %v196
    %736 = vmatprep.subr.mxu0 0.0
    %737 = vmatpush1.msra.mxu0 %v195
    %738 = vmatprep.subr.mxu0 0.0
    %739 = vmatpush1.msra.mxu0 %v194
    %740 = vmatprep.subr.mxu0 0.0
    %741 = vmatpush1.msra.mxu0 %v193
    %742 = vmatprep.subr.mxu0 0.0
    %743 = vmatpush1.msra.mxu0 %v192
    %744 = vmatprep.subr.mxu0 0.0
    %745 = vmatpush1.msra.mxu0 %v191
    %746 = vmatprep.subr.mxu0 0.0
    %747 = vmatpush2.msra.mxu0 %v222
    %748 = vmatprep.subr.mxu0 0.0
    %749 = vmatpush2.msra.mxu0 %v221
    %750 = vmatprep.subr.mxu0 0.0
    %751 = vmatpush2.msra.mxu0 %v220
    %752 = vmatprep.subr.mxu0 0.0
    %753 = vmatpush2.msra.mxu0 %v219
    %754 = vmatprep.subr.mxu0 0.0
    %755 = vmatpush2.msra.mxu0 %v218
    %756 = vmatprep.subr.mxu0 0.0
    %757 = vmatpush2.msra.mxu0 %v217
    %758 = vmatprep.subr.mxu0 0.0
    %759 = vmatpush2.msra.mxu0 %v216
    %760 = vmatprep.subr.mxu0 0.0
    %761 = vmatpush2.msra.mxu0 %v215
    %762 = vmatprep.subr.mxu0 0.0
    %763 = vmatpush2.msra.mxu0 %v214
    %764 = vmatprep.subr.mxu0 0.0
    %765 = vmatpush2.msra.mxu0 %v213
    %766 = vmatprep.subr.mxu0 0.0
    %767 = vmatpush2.msra.mxu0 %v212
    %768 = vmatprep.subr.mxu0 0.0
    %769 = vmatpush2.msra.mxu0 %v211
    %770 = vmatprep.subr.mxu0 0.0
    %771 = vmatpush2.msra.mxu0 %v210
    %772 = vmatprep.subr.mxu0 0.0
    %773 = vmatpush2.msra.mxu0 %v209
    %774 = vmatprep.subr.mxu0 0.0
    %775 = vmatpush2.msra.mxu0 %v208
    %776 = vmatprep.subr.mxu0 0.0
    %777 = vmatpush2.msra.mxu0 %v207
    %778 = vmatprep.mubr.f32.mxu0 %v332
    %779 = vmatmul.mubr.f32.gmra.mxu0 %v330
    %v780 = vpop.f32.mrf.mxu0
    %v781 = vadd.f32 %v711, %v780
    %v782 = vpop.f32.mrf.mxu0
    %783 = vdwg.mxu0
    %784 = vmatprep.subr.mxu0 0.0
    %785 = vmatpush1.msra.mxu0 %v238
    %786 = vmatprep.subr.mxu0 0.0
    %787 = vmatpush1.msra.mxu0 %v237
    %788 = vmatprep.subr.mxu0 0.0
    %789 = vmatpush1.msra.mxu0 %v236
    %790 = vmatprep.subr.mxu0 0.0
    %791 = vmatpush1.msra.mxu0 %v235
    %792 = vmatprep.subr.mxu0 0.0
    %793 = vmatpush1.msra.mxu0 %v234
    %794 = vmatprep.subr.mxu0 0.0
    %795 = vmatpush1.msra.mxu0 %v233
    %796 = vmatprep.subr.mxu0 0.0
    %797 = vmatpush1.msra.mxu0 %v232
    %798 = vmatprep.subr.mxu0 0.0
    %799 = vmatpush1.msra.mxu0 %v231
    %800 = vmatprep.subr.mxu0 0.0
    %801 = vmatpush1.msra.mxu0 %v230
    %802 = vmatprep.subr.mxu0 0.0
    %803 = vmatpush1.msra.mxu0 %v229
    %804 = vmatprep.subr.mxu0 0.0
    %805 = vmatpush1.msra.mxu0 %v228
    %806 = vmatprep.subr.mxu0 0.0
    %807 = vmatpush1.msra.mxu0 %v227
    %808 = vmatprep.subr.mxu0 0.0
    %809 = vmatpush1.msra.mxu0 %v226
    %810 = vmatprep.subr.mxu0 0.0
    %811 = vmatpush1.msra.mxu0 %v225
    %812 = vmatprep.subr.mxu0 0.0
    %813 = vmatpush1.msra.mxu0 %v224
    %814 = vmatprep.subr.mxu0 0.0
    %815 = vmatpush1.msra.mxu0 %v223
    %816 = vmatprep.subr.mxu0 0.0
    %817 = vmatpush2.msra.mxu0 %v254
    %818 = vmatprep.subr.mxu0 0.0
    %819 = vmatpush2.msra.mxu0 %v253
    %820 = vmatprep.subr.mxu0 0.0
    %821 = vmatpush2.msra.mxu0 %v252
    %822 = vmatprep.subr.mxu0 0.0
    %823 = vmatpush2.msra.mxu0 %v251
    %824 = vmatprep.subr.mxu0 0.0
    %825 = vmatpush2.msra.mxu0 %v250
    %826 = vmatprep.subr.mxu0 0.0
    %827 = vmatpush2.msra.mxu0 %v249
    %828 = vmatprep.subr.mxu0 0.0
    %829 = vmatpush2.msra.mxu0 %v248
    %830 = vmatprep.subr.mxu0 0.0
    %831 = vmatpush2.msra.mxu0 %v247
    %832 = vmatprep.subr.mxu0 0.0
    %833 = vmatpush2.msra.mxu0 %v246
    %834 = vmatprep.subr.mxu0 0.0
    %835 = vmatpush2.msra.mxu0 %v245
    %836 = vmatprep.subr.mxu0 0.0
    %837 = vmatpush2.msra.mxu0 %v244
    %838 = vmatprep.subr.mxu0 0.0
    %839 = vmatpush2.msra.mxu0 %v243
    %840 = vmatprep.subr.mxu0 0.0
    %841 = vmatpush2.msra.mxu0 %v242
    %842 = vmatprep.subr.mxu0 0.0
    %843 = vmatpush2.msra.mxu0 %v241
    %844 = vmatprep.subr.mxu0 0.0
    %845 = vmatpush2.msra.mxu0 %v240
    %846 = vmatprep.subr.mxu0 0.0
    %847 = vmatpush2.msra.mxu0 %v239
    %848 = vmatprep.mubr.f32.mxu0 %v348
    %849 = vmatmul.mubr.f32.gmra.mxu0 %v340
    %v850 = vpop.f32.mrf.mxu0
    %v851 = vadd.f32 %v781, %v850
    %v852 = vpop.f32.mrf.mxu0
    %853 = vdwg.mxu0
    %854 = vmatprep.subr.mxu0 0.0
    %855 = vmatpush1.msra.mxu0 %v270
    %856 = vmatprep.subr.mxu0 0.0
    %857 = vmatpush1.msra.mxu0 %v269
    %858 = vmatprep.subr.mxu0 0.0
    %859 = vmatpush1.msra.mxu0 %v268
    %860 = vmatprep.subr.mxu0 0.0
    %861 = vmatpush1.msra.mxu0 %v267
    %862 = vmatprep.subr.mxu0 0.0
    %863 = vmatpush1.msra.mxu0 %v266
    %864 = vmatprep.subr.mxu0 0.0
    %865 = vmatpush1.msra.mxu0 %v265
    %866 = vmatprep.subr.mxu0 0.0
    %867 = vmatpush1.msra.mxu0 %v264
    %868 = vmatprep.subr.mxu0 0.0
    %869 = vmatpush1.msra.mxu0 %v263
    %870 = vmatprep.subr.mxu0 0.0
    %871 = vmatpush1.msra.mxu0 %v262
    %872 = vmatprep.subr.mxu0 0.0
    %873 = vmatpush1.msra.mxu0 %v261
    %874 = vmatprep.subr.mxu0 0.0
    %875 = vmatpush1.msra.mxu0 %v260
    %876 = vmatprep.subr.mxu0 0.0
    %877 = vmatpush1.msra.mxu0 %v259
    %878 = vmatprep.subr.mxu0 0.0
    %879 = vmatpush1.msra.mxu0 %v258
    %880 = vmatprep.subr.mxu0 0.0
    %881 = vmatpush1.msra.mxu0 %v257
    %882 = vmatprep.subr.mxu0 0.0
    %883 = vmatpush1.msra.mxu0 %v256
    %884 = vmatprep.subr.mxu0 0.0
    %885 = vmatpush1.msra.mxu0 %v255
    %886 = vmatprep.subr.mxu0 0.0
    %887 = vmatpush2.msra.mxu0 0.0
    %888 = vmatprep.subr.mxu0 0.0
    %889 = vmatpush2.msra.mxu0 0.0
    %890 = vmatprep.subr.mxu0 0.0
    %891 = vmatpush2.msra.mxu0 0.0
    %892 = vmatprep.subr.mxu0 0.0
    %893 = vmatpush2.msra.mxu0 0.0
    %894 = vmatprep.subr.mxu0 0.0
    %895 = vmatpush2.msra.mxu0 0.0
    %896 = vmatprep.subr.mxu0 0.0
    %897 = vmatpush2.msra.mxu0 0.0
    %898 = vmatprep.subr.mxu0 0.0
    %899 = vmatpush2.msra.mxu0 0.0
    %900 = vmatprep.subr.mxu0 0.0
    %901 = vmatpush2.msra.mxu0 0.0
    %902 = vmatprep.subr.mxu0 0.0
    %903 = vmatpush2.msra.mxu0 0.0
    %904 = vmatprep.subr.mxu0 0.0
    %905 = vmatpush2.msra.mxu0 0.0
    %906 = vmatprep.subr.mxu0 0.0
    %907 = vmatpush2.msra.mxu0 0.0
    %908 = vmatprep.subr.mxu0 0.0
    %909 = vmatpush2.msra.mxu0 0.0
    %910 = vmatprep.subr.mxu0 0.0
    %911 = vmatpush2.msra.mxu0 0.0
    %912 = vmatprep.subr.mxu0 0.0
    %913 = vmatpush2.msra.mxu0 0.0
    %914 = vmatprep.subr.mxu0 0.0
    %915 = vmatpush2.msra.mxu0 0.0
    %916 = vmatprep.subr.mxu0 0.0
    %917 = vmatpush2.msra.mxu0 0.0
    %918 = vmatprep.mubr.f32.mxu0 0.0
    %919 = vmatmul.mubr.f32.gmra.mxu0 %v347
    %v920 = vpop.f32.mrf.mxu0
    %v921 = vadd.f32 %v851, %v920
    %v922 = vpop.f32.mrf.mxu0
    %923 = vdwg.mxu0
    %v924 = vmax.f32 %v921, 0.0
    %v925 = vld [vmem:[%s3] sm:$0xff]
    %v926 = vld [vmem:[%s3 + $0x8] sm:$0xff]
    %v927 = vld [vmem:[%s3 + $0x10] sm:$0xff]
    %v928 = vld [vmem:[%s3 + $0x18] sm:$0xff]
    %v929 = vld [vmem:[%s3 + $0x20] sm:$0xff]
    %v930 = vld [vmem:[%s3 + $0x28] sm:$0xff]
    %v931 = vld [vmem:[%s3 + $0x30] sm:$0xff]
    %v932 = vld [vmem:[%s3 + $0x38] sm:$0xff]
    %v933 = vld [vmem:[%s3 + $0x40] sm:$0xff]
    %v934 = vld [vmem:[%s3 + $0x48] sm:$0xff]
    %v935 = vld [vmem:[%s3 + $0x50] sm:$0xff]
    %v936 = vld [vmem:[%s3 + $0x58] sm:$0xff]
    %v937 = vld [vmem:[%s3 + $0x60] sm:$0xff]
    %v938 = vld [vmem:[%s3 + $0x68] sm:$0xff]
    %v939 = vld [vmem:[%s3 + $0x70] sm:$0xff]
    %v940 = vld [vmem:[%s3 + $0x78] sm:$0xff]
    %v941 = vld [vmem:[%s4] sm:$0x1]
    %v943 = vlaneseq
    %v944 = vshrl.u32 %v943, 7
    %v945 = vsub.s32 0, %v944
    %v946 = vrot.slane %v941, %v945
    %948 = vmatprep.subr.mxu0 0.0
    %949 = vmatpush1.msra.mxu0 %v940
    %950 = vmatprep.subr.mxu0 0.0
    %951 = vmatpush1.msra.mxu0 %v939
    %952 = vmatprep.subr.mxu0 0.0
    %953 = vmatpush1.msra.mxu0 %v938
    %954 = vmatprep.subr.mxu0 0.0
    %955 = vmatpush1.msra.mxu0 %v937
    %956 = vmatprep.subr.mxu0 0.0
    %957 = vmatpush1.msra.mxu0 %v936
    %958 = vmatprep.subr.mxu0 0.0
    %959 = vmatpush1.msra.mxu0 %v935
    %960 = vmatprep.subr.mxu0 0.0
    %961 = vmatpush1.msra.mxu0 %v934
    %962 = vmatprep.subr.mxu0 0.0
    %963 = vmatpush1.msra.mxu0 %v933
    %964 = vmatprep.subr.mxu0 0.0
    %965 = vmatpush1.msra.mxu0 %v932
    %966 = vmatprep.subr.mxu0 0.0
    %967 = vmatpush1.msra.mxu0 %v931
    %968 = vmatprep.subr.mxu0 0.0
    %969 = vmatpush1.msra.mxu0 %v930
    %970 = vmatprep.subr.mxu0 0.0
    %971 = vmatpush1.msra.mxu0 %v929
    %972 = vmatprep.subr.mxu0 0.0
    %973 = vmatpush1.msra.mxu0 %v928
    %974 = vmatprep.subr.mxu0 0.0
    %975 = vmatpush1.msra.mxu0 %v927
    %976 = vmatprep.subr.mxu0 0.0
    %977 = vmatpush1.msra.mxu0 %v926
    %978 = vmatprep.subr.mxu0 0.0
    %979 = vmatpush1.msra.mxu0 %v925
    %980 = vmatprep.subr.mxu0 0.0
    %981 = vmatpush2.msra.mxu0 0.0
    %982 = vmatprep.subr.mxu0 0.0
    %983 = vmatpush2.msra.mxu0 0.0
    %984 = vmatprep.subr.mxu0 0.0
    %985 = vmatpush2.msra.mxu0 0.0
    %986 = vmatprep.subr.mxu0 0.0
    %987 = vmatpush2.msra.mxu0 0.0
    %988 = vmatprep.subr.mxu0 0.0
    %989 = vmatpush2.msra.mxu0 0.0
    %990 = vmatprep.subr.mxu0 0.0
    %991 = vmatpush2.msra.mxu0 0.0
    %992 = vmatprep.subr.mxu0 0.0
    %993 = vmatpush2.msra.mxu0 0.0
    %994 = vmatprep.subr.mxu0 0.0
    %995 = vmatpush2.msra.mxu0 0.0
    %996 = vmatprep.subr.mxu0 0.0
    %997 = vmatpush2.msra.mxu0 0.0
    %998 = vmatprep.subr.mxu0 0.0
    %999 = vmatpush2.msra.mxu0 0.0
    %1000 = vmatprep.subr.mxu0 0.0
    %1001 = vmatpush2.msra.mxu0 0.0
    %1002 = vmatprep.subr.mxu0 0.0
    %1003 = vmatpush2.msra.mxu0 0.0
    %1004 = vmatprep.subr.mxu0 0.0
    %1005 = vmatpush2.msra.mxu0 0.0
    %1006 = vmatprep.subr.mxu0 0.0
    %1007 = vmatpush2.msra.mxu0 0.0
    %1008 = vmatprep.subr.mxu0 0.0
    %1009 = vmatpush2.msra.mxu0 0.0
    %1010 = vmatprep.subr.mxu0 0.0
    %1011 = vmatpush2.msra.mxu0 0.0
    %1012 = vmatprep.mubr.f32.mxu0 0.0
    %1013 = vmatmul.mubr.f32.gmra.mxu0 %v924
    %v1014 = vpop.f32.mrf.mxu0
    %v1015 = vadd.f32 %v946, %v1014
    %v1016 = vpop.f32.mrf.mxu0
    %1017 = vdwg.mxu0
    %v1018 = vmax.f32 %v1015, 0.0
    %v1019 = vld [vmem:[%s5] sm:$0xff]
    %v1020 = vld [vmem:[%s5 + $0x8] sm:$0xff]
    %v1021 = vld [vmem:[%s5 + $0x10] sm:$0xff]
    %v1022 = vld [vmem:[%s5 + $0x18] sm:$0xff]
    %v1023 = vld [vmem:[%s5 + $0x20] sm:$0xff]
    %v1024 = vld [vmem:[%s5 + $0x28] sm:$0xff]
    %v1025 = vld [vmem:[%s5 + $0x30] sm:$0xff]
    %v1026 = vld [vmem:[%s5 + $0x38] sm:$0xff]
    %v1027 = vld [vmem:[%s5 + $0x40] sm:$0xff]
    %v1028 = vld [vmem:[%s5 + $0x48] sm:$0xff]
    %v1029 = vld [vmem:[%s5 + $0x50] sm:$0xff]
    %v1030 = vld [vmem:[%s5 + $0x58] sm:$0xff]
    %v1031 = vld [vmem:[%s5 + $0x60] sm:$0xff]
    %v1032 = vld [vmem:[%s5 + $0x68] sm:$0xff]
    %v1033 = vld [vmem:[%s5 + $0x70] sm:$0xff]
    %v1034 = vld [vmem:[%s5 + $0x78] sm:$0xff]
    %v1035 = vld [vmem:[%s6] sm:$0x1]
    %v1037 = vlaneseq
    %v1038 = vshrl.u32 %v1037, 7
    %v1039 = vsub.s32 0, %v1038
    %v1040 = vrot.slane %v1035, %v1039
    %1042 = vmatprep.subr.mxu0 0.0
    %1043 = vmatpush1.msra.mxu0 %v1034
    %1044 = vmatprep.subr.mxu0 0.0
    %1045 = vmatpush1.msra.mxu0 %v1033
    %1046 = vmatprep.subr.mxu0 0.0
    %1047 = vmatpush1.msra.mxu0 %v1032
    %1048 = vmatprep.subr.mxu0 0.0
    %1049 = vmatpush1.msra.mxu0 %v1031
    %1050 = vmatprep.subr.mxu0 0.0
    %1051 = vmatpush1.msra.mxu0 %v1030
    %1052 = vmatprep.subr.mxu0 0.0
    %1053 = vmatpush1.msra.mxu0 %v1029
    %1054 = vmatprep.subr.mxu0 0.0
    %1055 = vmatpush1.msra.mxu0 %v1028
    %1056 = vmatprep.subr.mxu0 0.0
    %1057 = vmatpush1.msra.mxu0 %v1027
    %1058 = vmatprep.subr.mxu0 0.0
    %1059 = vmatpush1.msra.mxu0 %v1026
    %1060 = vmatprep.subr.mxu0 0.0
    %1061 = vmatpush1.msra.mxu0 %v1025
    %1062 = vmatprep.subr.mxu0 0.0
    %1063 = vmatpush1.msra.mxu0 %v1024
    %1064 = vmatprep.subr.mxu0 0.0
    %1065 = vmatpush1.msra.mxu0 %v1023
    %1066 = vmatprep.subr.mxu0 0.0
    %1067 = vmatpush1.msra.mxu0 %v1022
    %1068 = vmatprep.subr.mxu0 0.0
    %1069 = vmatpush1.msra.mxu0 %v1021
    %1070 = vmatprep.subr.mxu0 0.0
    %1071 = vmatpush1.msra.mxu0 %v1020
    %1072 = vmatprep.subr.mxu0 0.0
    %1073 = vmatpush1.msra.mxu0 %v1019
    %1074 = vmatprep.subr.mxu0 0.0
    %1075 = vmatpush2.msra.mxu0 0.0
    %1076 = vmatprep.subr.mxu0 0.0
    %1077 = vmatpush2.msra.mxu0 0.0
    %1078 = vmatprep.subr.mxu0 0.0
    %1079 = vmatpush2.msra.mxu0 0.0
    %1080 = vmatprep.subr.mxu0 0.0
    %1081 = vmatpush2.msra.mxu0 0.0
    %1082 = vmatprep.subr.mxu0 0.0
    %1083 = vmatpush2.msra.mxu0 0.0
    %1084 = vmatprep.subr.mxu0 0.0
    %1085 = vmatpush2.msra.mxu0 0.0
    %1086 = vmatprep.subr.mxu0 0.0
    %1087 = vmatpush2.msra.mxu0 0.0
    %1088 = vmatprep.subr.mxu0 0.0
    %1089 = vmatpush2.msra.mxu0 0.0
    %1090 = vmatprep.subr.mxu0 0.0
    %1091 = vmatpush2.msra.mxu0 0.0
    %1092 = vmatprep.subr.mxu0 0.0
    %1093 = vmatpush2.msra.mxu0 0.0
    %1094 = vmatprep.subr.mxu0 0.0
    %1095 = vmatpush2.msra.mxu0 0.0
    %1096 = vmatprep.subr.mxu0 0.0
    %1097 = vmatpush2.msra.mxu0 0.0
    %1098 = vmatprep.subr.mxu0 0.0
    %1099 = vmatpush2.msra.mxu0 0.0
    %1100 = vmatprep.subr.mxu0 0.0
    %1101 = vmatpush2.msra.mxu0 0.0
    %1102 = vmatprep.subr.mxu0 0.0
    %1103 = vmatpush2.msra.mxu0 0.0
    %1104 = vmatprep.subr.mxu0 0.0
    %1105 = vmatpush2.msra.mxu0 0.0
    %1106 = vmatprep.mubr.f32.mxu0 0.0
    %1107 = vmatmul.mubr.f32.gmra.mxu0 %v1018
    %v1108 = vpop.f32.mrf.mxu0
    %v1109 = vadd.f32 %v1040, %v1108
    %v1110 = vpop.f32.mrf.mxu0
    %1111 = vdwg.mxu0
    %1112 = vst [vmem:[#allocation2] sm:$0x3] %v1109
    // Predicated region
    $region30: #{pyteen_forward.9} parent=1 // pred_check
      _
    $region31: #{pyteen_forward.9} parent=1 // pred_check_branch
      %1114 = sbr.rel (0) target = $region33
    $region32: #{pyteen_forward.9} parent=1 // pred_region
      %s1116 = ssub.s32 32, 32
      %1117 = vsyncadd [#allocation3], %s1116
      %s1119 = sshll.u32 [#allocation2], 4
      %s1120 = int_to_ptr.vmem [resolvable:$true] %s1119
      %1122 = dma.vmem_to_hbm [thread:$0]  %s1120, 32, %s7, [#allocation3]
    $region33: #{pyteen_forward.9} parent=1 // pred_fallthru
      _
    // Predicated region
    $region34: #{pyteen_forward.9} parent=1 // pred_check
      _
    $region35: #{pyteen_forward.9} parent=1 // pred_check_branch
      %1124 = sbr.rel (0) target = $region37
    $region36: #{pyteen_forward.9} parent=1 // pred_region
      %1125 = dma.done [#allocation3], 32
    $region37: #{pyteen_forward.9} parent=1 // pred_fallthru
      _
    %1126 = vsyncpa [#allocation3], 1

</llo_original>
